<compile_context>
chip_gen: v5e
topology: v5e:2x2
jax: 0.10.0
libtpu: 0.0.40
codegen_flags: <defaults>
</compile_context>

<pallas_src>
import jax
import jax.numpy as jnp
from jax import lax
from jax.experimental import pallas as pl
from jax.experimental.pallas import tpu as pltpu

MAX_PAD = 12   # largest dilation/padding among branches
LANE = 128     # TPU lane width; channel dims are padded to multiples of this


def _round_up(n, m):
    return (n + m - 1) // m * m


def _pad_axis(a, axis, target):
    if a.shape[axis] == target:
        return a
    pad = [(0, 0)] * a.ndim
    pad[axis] = (0, target - a.shape[axis])
    return jnp.pad(a, pad)


def _aspp_kernel(xpad_ref, w_img_ref, w_center_ref, w6_ref, w12_ref, w18_ref,
                 b_ref, o_ref):
    P = MAX_PAD
    H = o_ref.shape[1]
    W = o_ref.shape[2]
    depth = o_ref.shape[3]
    cin = xpad_ref.shape[3]
    HW = H * W

    xp = xpad_ref[0]                         # (H+2P, W+2P, Cin) bf16, zero padded
    x_center = xp[P:P + H, P:P + W, :]       # (H, W, Cin) original input
    xm = x_center.reshape(HW, cin)           # flatten spatial; channel stays lane-dense

    # --- branch 0: global average pool -> (folded) 1x1 conv -> constant broadcast ---
    # Mean over HW as a ones-row matmul on the MXU (keeps the XLU free); scale in f32.
    ones_row = jnp.ones((1, HW), dtype=xm.dtype)
    col_sum = jnp.dot(ones_row, xm, preferred_element_type=jnp.float32)      # (1, Cin)
    mean = (col_sum * (1.0 / HW)).astype(xm.dtype)
    img = jnp.dot(mean, w_img_ref[...], preferred_element_type=jnp.float32)  # (1, depth)

    # --- single f32 accumulator ---
    # w_center already contains: 1x1-branch weight + center taps of all dilated convs.
    # Biases of every branch + b_out are pre-folded into b_ref (wrapper, f32).
    acc = jnp.dot(xm, w_center_ref[...], preferred_element_type=jnp.float32) \
        + (img + b_ref[...])                                                  # (HW, depth)

    # --- dilated 3x3 convs (folded): 8 shifted-window matmuls each (center skipped) ---
    for w_ref, d in ((w6_ref, 4), (w12_ref, 8), (w18_ref, 12)):
        for ky in range(3):
            for kx in range(3):
                if ky == 1 and kx == 1:
                    continue                   # center tap already folded into w_center
                oy = P + (ky - 1) * d
                ox = P + (kx - 1) * d
                patch = xp[oy:oy + H, ox:ox + W, :].reshape(HW, cin)
                acc = acc + jnp.dot(patch, w_ref[ky, kx],
                                    preferred_element_type=jnp.float32)

    o_ref[0] = acc.reshape(H, W, depth).astype(o_ref.dtype)


def aspp_pallas(x_nchw, params):
    """x_nchw: (B, Cin, H, W) float32.  Returns (B, depth, H, W) float32."""
    B, Cin, H, W = x_nchw.shape
    depth = params["b1"].shape[-1]
    P = MAX_PAD

    # --- fold the final 1x1 conv (w_out, b_out) into each branch (done in f32) ---
    w_out = params["w_out"]                                        # (5, depth, depth)
    w_img_f = params["w_img"] @ w_out[0]                           # (Cin, depth)
    w1_f = params["w1"] @ w_out[1]                                 # (Cin, depth)
    w6_f = jnp.einsum("khcd,de->khce", params["w6"], w_out[2])     # (3,3,Cin,depth)
    w12_f = jnp.einsum("khcd,de->khce", params["w12"], w_out[3])
    w18_f = jnp.einsum("khcd,de->khce", params["w18"], w_out[4])
    b_f = (params["b_img"] @ w_out[0] + params["b1"] @ w_out[1]
           + params["b6"] @ w_out[2] + params["b12"] @ w_out[3]
           + params["b18"] @ w_out[4] + params["b_out"])           # (1, depth), f32

    # Center-tap fold: 1x1 branch + center tap of every dilated conv share the same
    # (un-shifted) input window -> one combined matmul in the kernel (f32 sum here).
    w_center_f = w1_f + w6_f[1, 1] + w12_f[1, 1] + w18_f[1, 1]     # (Cin, depth)

    # --- lane-dense channel padding (Cin / depth -> multiples of 128), bf16 operands ---
    cin_p = _round_up(Cin, LANE)
    depth_p = _round_up(depth, LANE)

    w_img_p = _pad_axis(_pad_axis(w_img_f, 0, cin_p), 1, depth_p).astype(jnp.bfloat16)
    w_center_p = _pad_axis(_pad_axis(w_center_f, 0, cin_p), 1, depth_p).astype(jnp.bfloat16)
    w6_p = _pad_axis(_pad_axis(w6_f, 2, cin_p), 3, depth_p).astype(jnp.bfloat16)
    w12_p = _pad_axis(_pad_axis(w12_f, 2, cin_p), 3, depth_p).astype(jnp.bfloat16)
    w18_p = _pad_axis(_pad_axis(w18_f, 2, cin_p), 3, depth_p).astype(jnp.bfloat16)
    b_p = _pad_axis(b_f, 1, depth_p).astype(jnp.float32)           # bias/acc stay f32

    x = jnp.transpose(x_nchw, (0, 2, 3, 1))                        # NCHW -> NHWC
    x = _pad_axis(x, 3, cin_p).astype(jnp.bfloat16)
    xpad = jnp.pad(x, ((0, 0), (P, P), (P, P), (0, 0)))

    full = lambda shape: pl.BlockSpec(shape, lambda b: (0,) * len(shape))

    # TODO(synk): for production-size H,W add a halo'd spatial row-tile grid axis
    # (overlapping input windows via manual DMA) so only a tile is resident in VMEM
    # (fits v7x's 64 MiB) and both TensorCores get work even when B is small.
    out_nhwc = pl.pallas_call(
        _aspp_kernel,
        out_shape=jax.ShapeDtypeStruct((B, H, W, depth_p), jnp.float32),
        grid_spec=pltpu.PrefetchScalarGridSpec(
            num_scalar_prefetch=0,
            grid=(B,),
            in_specs=[
                pl.BlockSpec((1, H + 2 * P, W + 2 * P, cin_p), lambda b: (b, 0, 0, 0)),
                full(w_img_p.shape), full(w_center_p.shape),
                full(w6_p.shape), full(w12_p.shape), full(w18_p.shape),
                full(b_p.shape),
            ],
            out_specs=pl.BlockSpec((1, H, W, depth_p), lambda b: (b, 0, 0, 0)),
        ),
        compiler_params=pltpu.CompilerParams(
            dimension_semantics=("parallel",),
            vmem_limit_bytes=32 * 1024 * 1024),
    )(xpad, w_img_p, w_center_p, w6_p, w12_p, w18_p, b_p)

    out_nhwc = out_nhwc[..., :depth]                               # drop lane padding
    return jnp.transpose(out_nhwc, (0, 3, 1, 2))                   # NHWC -> NCHW


def aspp_reference(x_nchw, params):
    """Pure-JAX f32 reference (unfolded, NHWC math) for validation."""
    x = jnp.transpose(x_nchw, (0, 2, 3, 1))
    B, H, W, Cin = x.shape
    depth = params["b1"].shape[-1]
    dn = ("NHWC", "HWIO", "NHWC")

    mean = jnp.mean(x, axis=(1, 2), keepdims=True)                     # (B,1,1,Cin)
    img = jnp.einsum("bijc,cd->bijd", mean, params["w_img"]) + params["b_img"]
    img = jnp.broadcast_to(img, (B, H, W, depth))

    br1 = jnp.einsum("bhwc,cd->bhwd", x, params["w1"]) + params["b1"]

    def dil(w, b, d):
        y = lax.conv_general_dilated(x, w, window_strides=(1, 1),
                                     padding=((d, d), (d, d)),
                                     rhs_dilation=(d, d),
                                     dimension_numbers=dn)
        return y + b

    br6 = dil(params["w6"], params["b6"], 4)
    br12 = dil(params["w12"], params["b12"], 8)
    br18 = dil(params["w18"], params["b18"], 12)

    cat = jnp.concatenate([img, br1, br6, br12, br18], axis=-1)        # (B,H,W,5*depth)
    w_out_flat = params["w_out"].reshape(5 * depth, depth)
    out = jnp.einsum("bhwc,cd->bhwd", cat, w_out_flat) + params["b_out"]
    return jnp.transpose(out, (0, 3, 1, 2))


def init_params(key, in_channel, depth):
    ks = jax.random.split(key, 12)
    scale = 0.1
    return {
        "w_img": scale * jax.random.normal(ks[0], (in_channel, depth), jnp.float32),
        "b_img": scale * jax.random.normal(ks[1], (1, depth), jnp.float32),
        "w1":    scale * jax.random.normal(ks[2], (in_channel, depth), jnp.float32),
        "b1":    scale * jax.random.normal(ks[3], (1, depth), jnp.float32),
        "w6":    scale * jax.random.normal(ks[4], (3, 3, in_channel, depth), jnp.float32),
        "b6":    scale * jax.random.normal(ks[5], (1, depth), jnp.float32),
        "w12":   scale * jax.random.normal(ks[6], (3, 3, in_channel, depth), jnp.float32),
        "b12":   scale * jax.random.normal(ks[7], (1, depth), jnp.float32),
        "w18":   scale * jax.random.normal(ks[8], (3, 3, in_channel, depth), jnp.float32),
        "b18":   scale * jax.random.normal(ks[9], (1, depth), jnp.float32),
        # branch order for the 5*depth concat: [image_features, block1, block6, block12, block18]
        "w_out": scale * jax.random.normal(ks[10], (5, depth, depth), jnp.float32),
        "b_out": scale * jax.random.normal(ks[11], (1, depth), jnp.float32),
    }


if __name__ == "__main__":
    key = jax.random.PRNGKey(0)
    k_x, k_p = jax.random.split(key)

    B, Cin, H, W = 2, 4, 16, 16
    depth = 8

    x = jax.random.normal(k_x, (B, Cin, H, W), jnp.float32)
    params = init_params(k_p, Cin, depth)

    out = jax.block_until_ready(aspp_pallas(x, params))
    ref = jax.block_until_ready(aspp_reference(x, params))

    assert out.shape == (B, depth, H, W), out.shape
    max_err = float(jnp.max(jnp.abs(out - ref)))
    # bf16 MXU operands (f32 accumulation) -> slightly looser tolerance than pure f32.
    assert jnp.allclose(out, ref, rtol=2e-2, atol=2e-2), max_err

    print("KERNEL_OK")
</pallas_src>

<mosaic_0001>
module attributes {stable_mosaic.version = 11 : i64} {
  func.func @_aspp_kernel(%arg0: i32, %arg1: memref<1x40x40x128xbf16, #tpu.memory_space<vmem>>, %arg2: memref<128x128xbf16, #tpu.memory_space<vmem>>, %arg3: memref<128x128xbf16, #tpu.memory_space<vmem>>, %arg4: memref<3x3x128x128xbf16, #tpu.memory_space<vmem>>, %arg5: memref<3x3x128x128xbf16, #tpu.memory_space<vmem>>, %arg6: memref<3x3x128x128xbf16, #tpu.memory_space<vmem>>, %arg7: memref<1x128xf32, #tpu.memory_space<vmem>>, %arg8: memref<1x16x16x128xf32, #tpu.memory_space<vmem>>) attributes {dimension_semantics = [#tpu.dimension_semantics<parallel>], iteration_bounds = array<i64: 2>, scalar_prefetch = 0 : i64, scratch_operands = 0 : i64, tpu.core_type = #tpu.core_type<tc>, window_params = [{transform_indices = @transform_0, window_bounds = array<i64: 1, 40, 40, 128>}, {pipeline_mode = #tpu.pipeline_mode<synchronous>, transform_indices = @transform_1, window_bounds = array<i64: 128, 128>}, {pipeline_mode = #tpu.pipeline_mode<synchronous>, transform_indices = @transform_2, window_bounds = array<i64: 128, 128>}, {pipeline_mode = #tpu.pipeline_mode<synchronous>, transform_indices = @transform_3, window_bounds = array<i64: 3, 3, 128, 128>}, {pipeline_mode = #tpu.pipeline_mode<synchronous>, transform_indices = @transform_4, window_bounds = array<i64: 3, 3, 128, 128>}, {pipeline_mode = #tpu.pipeline_mode<synchronous>, transform_indices = @transform_5, window_bounds = array<i64: 3, 3, 128, 128>}, {pipeline_mode = #tpu.pipeline_mode<synchronous>, transform_indices = @transform_6, window_bounds = array<i64: 1, 128>}, {transform_indices = @transform_7, window_bounds = array<i64: 1, 16, 16, 128>}]} {
    %c0 = arith.constant 0 : index
    %c0_0 = arith.constant 0 : index
    %c0_1 = arith.constant 0 : index
    %c0_2 = arith.constant 0 : index
    %0 = vector.load %arg1[%c0, %c0_0, %c0_1, %c0_2] : memref<1x40x40x128xbf16, #tpu.memory_space<vmem>>, vector<1x40x40x128xbf16>
    %1 = vector.shape_cast %0 : vector<1x40x40x128xbf16> to vector<40x40x128xbf16>
    %2 = vector.extract_strided_slice %1 {offsets = [12, 12, 0], sizes = [16, 16, 128], strides = [1, 1, 1]} : vector<40x40x128xbf16> to vector<16x16x128xbf16>
    %3 = vector.shape_cast %2 : vector<16x16x128xbf16> to vector<256x128xbf16>
    %cst = arith.constant 1.000000e+00 : bf16
    %4 = vector.broadcast %cst : bf16 to vector<1x256xbf16>
    %cst_3 = arith.constant dense<0.000000e+00> : vector<1x128xf32>
    %5 = tpu.matmul %4, %3, %cst_3 {dimension_numbers = #tpu.dot_dimension_numbers<[1], [0], [0], [1], [0, 0, 1, 1], [], []>} : vector<1x256xbf16>, vector<256x128xbf16>, vector<1x128xf32> -> vector<1x128xf32>
    %cst_4 = arith.constant 3.906250e-03 : f32
    %6 = vector.broadcast %cst_4 : f32 to vector<1x128xf32>
    %7 = arith.mulf %5, %6 : vector<1x128xf32>
    %8 = arith.truncf %7 : vector<1x128xf32> to vector<1x128xbf16>
    %c0_5 = arith.constant 0 : index
    %c0_6 = arith.constant 0 : index
    %9 = vector.load %arg2[%c0_5, %c0_6] : memref<128x128xbf16, #tpu.memory_space<vmem>>, vector<128x128xbf16>
    %cst_7 = arith.constant dense<0.000000e+00> : vector<1x128xf32>
    %10 = tpu.matmul %8, %9, %cst_7 {dimension_numbers = #tpu.dot_dimension_numbers<[1], [0], [0], [1], [0, 0, 1, 1], [], []>} : vector<1x128xbf16>, vector<128x128xbf16>, vector<1x128xf32> -> vector<1x128xf32>
    %c0_8 = arith.constant 0 : index
    %c0_9 = arith.constant 0 : index
    %11 = vector.load %arg3[%c0_8, %c0_9] : memref<128x128xbf16, #tpu.memory_space<vmem>>, vector<128x128xbf16>
    %cst_10 = arith.constant dense<0.000000e+00> : vector<256x128xf32>
    %12 = tpu.matmul %3, %11, %cst_10 {dimension_numbers = #tpu.dot_dimension_numbers<[1], [0], [0], [1], [0, 0, 1, 1], [], []>} : vector<256x128xbf16>, vector<128x128xbf16>, vector<256x128xf32> -> vector<256x128xf32>
    %c0_11 = arith.constant 0 : index
    %c0_12 = arith.constant 0 : index
    %13 = vector.load %arg7[%c0_11, %c0_12] : memref<1x128xf32, #tpu.memory_space<vmem>>, vector<1x128xf32>
    %14 = arith.addf %10, %13 : vector<1x128xf32>
    %15 = vector.broadcast %14 : vector<1x128xf32> to vector<256x128xf32>
    %16 = arith.addf %12, %15 : vector<256x128xf32>
    %17 = vector.extract_strided_slice %1 {offsets = [8, 8, 0], sizes = [16, 16, 128], strides = [1, 1, 1]} : vector<40x40x128xbf16> to vector<16x16x128xbf16>
    %18 = vector.shape_cast %17 : vector<16x16x128xbf16> to vector<256x128xbf16>
    %c0_13 = arith.constant 0 : index
    %c0_14 = arith.constant 0 : index
    %c0_15 = arith.constant 0 : index
    %c0_16 = arith.constant 0 : index
    %19 = vector.load %arg4[%c0_13, %c0_14, %c0_15, %c0_16] : memref<3x3x128x128xbf16, #tpu.memory_space<vmem>>, vector<1x1x128x128xbf16>
    %20 = vector.shape_cast %19 : vector<1x1x128x128xbf16> to vector<128x128xbf16>
    %cst_17 = arith.constant dense<0.000000e+00> : vector<256x128xf32>
    %21 = tpu.matmul %18, %20, %cst_17 {dimension_numbers = #tpu.dot_dimension_numbers<[1], [0], [0], [1], [0, 0, 1, 1], [], []>} : vector<256x128xbf16>, vector<128x128xbf16>, vector<256x128xf32> -> vector<256x128xf32>
    %22 = arith.addf %16, %21 : vector<256x128xf32>
    %23 = vector.extract_strided_slice %1 {offsets = [8, 12, 0], sizes = [16, 16, 128], strides = [1, 1, 1]} : vector<40x40x128xbf16> to vector<16x16x128xbf16>
    %24 = vector.shape_cast %23 : vector<16x16x128xbf16> to vector<256x128xbf16>
    %c0_18 = arith.constant 0 : index
    %c1 = arith.constant 1 : index
    %c0_19 = arith.constant 0 : index
    %c0_20 = arith.constant 0 : index
    %25 = vector.load %arg4[%c0_18, %c1, %c0_19, %c0_20] : memref<3x3x128x128xbf16, #tpu.memory_space<vmem>>, vector<1x1x128x128xbf16>
    %26 = vector.shape_cast %25 : vector<1x1x128x128xbf16> to vector<128x128xbf16>
    %cst_21 = arith.constant dense<0.000000e+00> : vector<256x128xf32>
    %27 = tpu.matmul %24, %26, %cst_21 {dimension_numbers = #tpu.dot_dimension_numbers<[1], [0], [0], [1], [0, 0, 1, 1], [], []>} : vector<256x128xbf16>, vector<128x128xbf16>, vector<256x128xf32> -> vector<256x128xf32>
    %28 = arith.addf %22, %27 : vector<256x128xf32>
    %29 = vector.extract_strided_slice %1 {offsets = [8, 16, 0], sizes = [16, 16, 128], strides = [1, 1, 1]} : vector<40x40x128xbf16> to vector<16x16x128xbf16>
    %30 = vector.shape_cast %29 : vector<16x16x128xbf16> to vector<256x128xbf16>
    %c0_22 = arith.constant 0 : index
    %c2 = arith.constant 2 : index
    %c0_23 = arith.constant 0 : index
    %c0_24 = arith.constant 0 : index
    %31 = vector.load %arg4[%c0_22, %c2, %c0_23, %c0_24] : memref<3x3x128x128xbf16, #tpu.memory_space<vmem>>, vector<1x1x128x128xbf16>
    %32 = vector.shape_cast %31 : vector<1x1x128x128xbf16> to vector<128x128xbf16>
    %cst_25 = arith.constant dense<0.000000e+00> : vector<256x128xf32>
    %33 = tpu.matmul %30, %32, %cst_25 {dimension_numbers = #tpu.dot_dimension_numbers<[1], [0], [0], [1], [0, 0, 1, 1], [], []>} : vector<256x128xbf16>, vector<128x128xbf16>, vector<256x128xf32> -> vector<256x128xf32>
    %34 = arith.addf %28, %33 : vector<256x128xf32>
    %35 = vector.extract_strided_slice %1 {offsets = [12, 8, 0], sizes = [16, 16, 128], strides = [1, 1, 1]} : vector<40x40x128xbf16> to vector<16x16x128xbf16>
    %36 = vector.shape_cast %35 : vector<16x16x128xbf16> to vector<256x128xbf16>
    %c1_26 = arith.constant 1 : index
    %c0_27 = arith.constant 0 : index
    %c0_28 = arith.constant 0 : index
    %c0_29 = arith.constant 0 : index
    %37 = vector.load %arg4[%c1_26, %c0_27, %c0_28, %c0_29] : memref<3x3x128x128xbf16, #tpu.memory_space<vmem>>, vector<1x1x128x128xbf16>
    %38 = vector.shape_cast %37 : vector<1x1x128x128xbf16> to vector<128x128xbf16>
    %cst_30 = arith.constant dense<0.000000e+00> : vector<256x128xf32>
    %39 = tpu.matmul %36, %38, %cst_30 {dimension_numbers = #tpu.dot_dimension_numbers<[1], [0], [0], [1], [0, 0, 1, 1], [], []>} : vector<256x128xbf16>, vector<128x128xbf16>, vector<256x128xf32> -> vector<256x128xf32>
    %40 = arith.addf %34, %39 : vector<256x128xf32>
    %41 = vector.extract_strided_slice %1 {offsets = [12, 16, 0], sizes = [16, 16, 128], strides = [1, 1, 1]} : vector<40x40x128xbf16> to vector<16x16x128xbf16>
    %42 = vector.shape_cast %41 : vector<16x16x128xbf16> to vector<256x128xbf16>
    %c1_31 = arith.constant 1 : index
    %c2_32 = arith.constant 2 : index
    %c0_33 = arith.constant 0 : index
    %c0_34 = arith.constant 0 : index
    %43 = vector.load %arg4[%c1_31, %c2_32, %c0_33, %c0_34] : memref<3x3x128x128xbf16, #tpu.memory_space<vmem>>, vector<1x1x128x128xbf16>
    %44 = vector.shape_cast %43 : vector<1x1x128x128xbf16> to vector<128x128xbf16>
    %cst_35 = arith.constant dense<0.000000e+00> : vector<256x128xf32>
    %45 = tpu.matmul %42, %44, %cst_35 {dimension_numbers = #tpu.dot_dimension_numbers<[1], [0], [0], [1], [0, 0, 1, 1], [], []>} : vector<256x128xbf16>, vector<128x128xbf16>, vector<256x128xf32> -> vector<256x128xf32>
    %46 = arith.addf %40, %45 : vector<256x128xf32>
    %47 = vector.extract_strided_slice %1 {offsets = [16, 8, 0], sizes = [16, 16, 128], strides = [1, 1, 1]} : vector<40x40x128xbf16> to vector<16x16x128xbf16>
    %48 = vector.shape_cast %47 : vector<16x16x128xbf16> to vector<256x128xbf16>
    %c2_36 = arith.constant 2 : index
    %c0_37 = arith.constant 0 : index
    %c0_38 = arith.constant 0 : index
    %c0_39 = arith.constant 0 : index
    %49 = vector.load %arg4[%c2_36, %c0_37, %c0_38, %c0_39] : memref<3x3x128x128xbf16, #tpu.memory_space<vmem>>, vector<1x1x128x128xbf16>
    %50 = vector.shape_cast %49 : vector<1x1x128x128xbf16> to vector<128x128xbf16>
    %cst_40 = arith.constant dense<0.000000e+00> : vector<256x128xf32>
    %51 = tpu.matmul %48, %50, %cst_40 {dimension_numbers = #tpu.dot_dimension_numbers<[1], [0], [0], [1], [0, 0, 1, 1], [], []>} : vector<256x128xbf16>, vector<128x128xbf16>, vector<256x128xf32> -> vector<256x128xf32>
    %52 = arith.addf %46, %51 : vector<256x128xf32>
    %53 = vector.extract_strided_slice %1 {offsets = [16, 12, 0], sizes = [16, 16, 128], strides = [1, 1, 1]} : vector<40x40x128xbf16> to vector<16x16x128xbf16>
    %54 = vector.shape_cast %53 : vector<16x16x128xbf16> to vector<256x128xbf16>
    %c2_41 = arith.constant 2 : index
    %c1_42 = arith.constant 1 : index
    %c0_43 = arith.constant 0 : index
    %c0_44 = arith.constant 0 : index
    %55 = vector.load %arg4[%c2_41, %c1_42, %c0_43, %c0_44] : memref<3x3x128x128xbf16, #tpu.memory_space<vmem>>, vector<1x1x128x128xbf16>
    %56 = vector.shape_cast %55 : vector<1x1x128x128xbf16> to vector<128x128xbf16>
    %cst_45 = arith.constant dense<0.000000e+00> : vector<256x128xf32>
    %57 = tpu.matmul %54, %56, %cst_45 {dimension_numbers = #tpu.dot_dimension_numbers<[1], [0], [0], [1], [0, 0, 1, 1], [], []>} : vector<256x128xbf16>, vector<128x128xbf16>, vector<256x128xf32> -> vector<256x128xf32>
    %58 = arith.addf %52, %57 : vector<256x128xf32>
    %59 = vector.extract_strided_slice %1 {offsets = [16, 16, 0], sizes = [16, 16, 128], strides = [1, 1, 1]} : vector<40x40x128xbf16> to vector<16x16x128xbf16>
    %60 = vector.shape_cast %59 : vector<16x16x128xbf16> to vector<256x128xbf16>
    %c2_46 = arith.constant 2 : index
    %c2_47 = arith.constant 2 : index
    %c0_48 = arith.constant 0 : index
    %c0_49 = arith.constant 0 : index
    %61 = vector.load %arg4[%c2_46, %c2_47, %c0_48, %c0_49] : memref<3x3x128x128xbf16, #tpu.memory_space<vmem>>, vector<1x1x128x128xbf16>
    %62 = vector.shape_cast %61 : vector<1x1x128x128xbf16> to vector<128x128xbf16>
    %cst_50 = arith.constant dense<0.000000e+00> : vector<256x128xf32>
    %63 = tpu.matmul %60, %62, %cst_50 {dimension_numbers = #tpu.dot_dimension_numbers<[1], [0], [0], [1], [0, 0, 1, 1], [], []>} : vector<256x128xbf16>, vector<128x128xbf16>, vector<256x128xf32> -> vector<256x128xf32>
    %64 = arith.addf %58, %63 : vector<256x128xf32>
    %65 = vector.extract_strided_slice %1 {offsets = [4, 4, 0], sizes = [16, 16, 128], strides = [1, 1, 1]} : vector<40x40x128xbf16> to vector<16x16x128xbf16>
    %66 = vector.shape_cast %65 : vector<16x16x128xbf16> to vector<256x128xbf16>
    %c0_51 = arith.constant 0 : index
    %c0_52 = arith.constant 0 : index
    %c0_53 = arith.constant 0 : index
    %c0_54 = arith.constant 0 : index
    %67 = vector.load %arg5[%c0_51, %c0_52, %c0_53, %c0_54] : memref<3x3x128x128xbf16, #tpu.memory_space<vmem>>, vector<1x1x128x128xbf16>
    %68 = vector.shape_cast %67 : vector<1x1x128x128xbf16> to vector<128x128xbf16>
    %cst_55 = arith.constant dense<0.000000e+00> : vector<256x128xf32>
    %69 = tpu.matmul %66, %68, %cst_55 {dimension_numbers = #tpu.dot_dimension_numbers<[1], [0], [0], [1], [0, 0, 1, 1], [], []>} : vector<256x128xbf16>, vector<128x128xbf16>, vector<256x128xf32> -> vector<256x128xf32>
    %70 = arith.addf %64, %69 : vector<256x128xf32>
    %71 = vector.extract_strided_slice %1 {offsets = [4, 12, 0], sizes = [16, 16, 128], strides = [1, 1, 1]} : vector<40x40x128xbf16> to vector<16x16x128xbf16>
    %72 = vector.shape_cast %71 : vector<16x16x128xbf16> to vector<256x128xbf16>
    %c0_56 = arith.constant 0 : index
    %c1_57 = arith.constant 1 : index
    %c0_58 = arith.constant 0 : index
    %c0_59 = arith.constant 0 : index
    %73 = vector.load %arg5[%c0_56, %c1_57, %c0_58, %c0_59] : memref<3x3x128x128xbf16, #tpu.memory_space<vmem>>, vector<1x1x128x128xbf16>
    %74 = vector.shape_cast %73 : vector<1x1x128x128xbf16> to vector<128x128xbf16>
    %cst_60 = arith.constant dense<0.000000e+00> : vector<256x128xf32>
    %75 = tpu.matmul %72, %74, %cst_60 {dimension_numbers = #tpu.dot_dimension_numbers<[1], [0], [0], [1], [0, 0, 1, 1], [], []>} : vector<256x128xbf16>, vector<128x128xbf16>, vector<256x128xf32> -> vector<256x128xf32>
    %76 = arith.addf %70, %75 : vector<256x128xf32>
    %77 = vector.extract_strided_slice %1 {offsets = [4, 20, 0], sizes = [16, 16, 128], strides = [1, 1, 1]} : vector<40x40x128xbf16> to vector<16x16x128xbf16>
    %78 = vector.shape_cast %77 : vector<16x16x128xbf16> to vector<256x128xbf16>
    %c0_61 = arith.constant 0 : index
    %c2_62 = arith.constant 2 : index
    %c0_63 = arith.constant 0 : index
    %c0_64 = arith.constant 0 : index
    %79 = vector.load %arg5[%c0_61, %c2_62, %c0_63, %c0_64] : memref<3x3x128x128xbf16, #tpu.memory_space<vmem>>, vector<1x1x128x128xbf16>
    %80 = vector.shape_cast %79 : vector<1x1x128x128xbf16> to vector<128x128xbf16>
    %cst_65 = arith.constant dense<0.000000e+00> : vector<256x128xf32>
    %81 = tpu.matmul %78, %80, %cst_65 {dimension_numbers = #tpu.dot_dimension_numbers<[1], [0], [0], [1], [0, 0, 1, 1], [], []>} : vector<256x128xbf16>, vector<128x128xbf16>, vector<256x128xf32> -> vector<256x128xf32>
    %82 = arith.addf %76, %81 : vector<256x128xf32>
    %83 = vector.extract_strided_slice %1 {offsets = [12, 4, 0], sizes = [16, 16, 128], strides = [1, 1, 1]} : vector<40x40x128xbf16> to vector<16x16x128xbf16>
    %84 = vector.shape_cast %83 : vector<16x16x128xbf16> to vector<256x128xbf16>
    %c1_66 = arith.constant 1 : index
    %c0_67 = arith.constant 0 : index
    %c0_68 = arith.constant 0 : index
    %c0_69 = arith.constant 0 : index
    %85 = vector.load %arg5[%c1_66, %c0_67, %c0_68, %c0_69] : memref<3x3x128x128xbf16, #tpu.memory_space<vmem>>, vector<1x1x128x128xbf16>
    %86 = vector.shape_cast %85 : vector<1x1x128x128xbf16> to vector<128x128xbf16>
    %cst_70 = arith.constant dense<0.000000e+00> : vector<256x128xf32>
    %87 = tpu.matmul %84, %86, %cst_70 {dimension_numbers = #tpu.dot_dimension_numbers<[1], [0], [0], [1], [0, 0, 1, 1], [], []>} : vector<256x128xbf16>, vector<128x128xbf16>, vector<256x128xf32> -> vector<256x128xf32>
    %88 = arith.addf %82, %87 : vector<256x128xf32>
    %89 = vector.extract_strided_slice %1 {offsets = [12, 20, 0], sizes = [16, 16, 128], strides = [1, 1, 1]} : vector<40x40x128xbf16> to vector<16x16x128xbf16>
    %90 = vector.shape_cast %89 : vector<16x16x128xbf16> to vector<256x128xbf16>
    %c1_71 = arith.constant 1 : index
    %c2_72 = arith.constant 2 : index
    %c0_73 = arith.constant 0 : index
    %c0_74 = arith.constant 0 : index
    %91 = vector.load %arg5[%c1_71, %c2_72, %c0_73, %c0_74] : memref<3x3x128x128xbf16, #tpu.memory_space<vmem>>, vector<1x1x128x128xbf16>
    %92 = vector.shape_cast %91 : vector<1x1x128x128xbf16> to vector<128x128xbf16>
    %cst_75 = arith.constant dense<0.000000e+00> : vector<256x128xf32>
    %93 = tpu.matmul %90, %92, %cst_75 {dimension_numbers = #tpu.dot_dimension_numbers<[1], [0], [0], [1], [0, 0, 1, 1], [], []>} : vector<256x128xbf16>, vector<128x128xbf16>, vector<256x128xf32> -> vector<256x128xf32>
    %94 = arith.addf %88, %93 : vector<256x128xf32>
    %95 = vector.extract_strided_slice %1 {offsets = [20, 4, 0], sizes = [16, 16, 128], strides = [1, 1, 1]} : vector<40x40x128xbf16> to vector<16x16x128xbf16>
    %96 = vector.shape_cast %95 : vector<16x16x128xbf16> to vector<256x128xbf16>
    %c2_76 = arith.constant 2 : index
    %c0_77 = arith.constant 0 : index
    %c0_78 = arith.constant 0 : index
    %c0_79 = arith.constant 0 : index
    %97 = vector.load %arg5[%c2_76, %c0_77, %c0_78, %c0_79] : memref<3x3x128x128xbf16, #tpu.memory_space<vmem>>, vector<1x1x128x128xbf16>
    %98 = vector.shape_cast %97 : vector<1x1x128x128xbf16> to vector<128x128xbf16>
    %cst_80 = arith.constant dense<0.000000e+00> : vector<256x128xf32>
    %99 = tpu.matmul %96, %98, %cst_80 {dimension_numbers = #tpu.dot_dimension_numbers<[1], [0], [0], [1], [0, 0, 1, 1], [], []>} : vector<256x128xbf16>, vector<128x128xbf16>, vector<256x128xf32> -> vector<256x128xf32>
    %100 = arith.addf %94, %99 : vector<256x128xf32>
    %101 = vector.extract_strided_slice %1 {offsets = [20, 12, 0], sizes = [16, 16, 128], strides = [1, 1, 1]} : vector<40x40x128xbf16> to vector<16x16x128xbf16>
    %102 = vector.shape_cast %101 : vector<16x16x128xbf16> to vector<256x128xbf16>
    %c2_81 = arith.constant 2 : index
    %c1_82 = arith.constant 1 : index
    %c0_83 = arith.constant 0 : index
    %c0_84 = arith.constant 0 : index
    %103 = vector.load %arg5[%c2_81, %c1_82, %c0_83, %c0_84] : memref<3x3x128x128xbf16, #tpu.memory_space<vmem>>, vector<1x1x128x128xbf16>
    %104 = vector.shape_cast %103 : vector<1x1x128x128xbf16> to vector<128x128xbf16>
    %cst_85 = arith.constant dense<0.000000e+00> : vector<256x128xf32>
    %105 = tpu.matmul %102, %104, %cst_85 {dimension_numbers = #tpu.dot_dimension_numbers<[1], [0], [0], [1], [0, 0, 1, 1], [], []>} : vector<256x128xbf16>, vector<128x128xbf16>, vector<256x128xf32> -> vector<256x128xf32>
    %106 = arith.addf %100, %105 : vector<256x128xf32>
    %107 = vector.extract_strided_slice %1 {offsets = [20, 20, 0], sizes = [16, 16, 128], strides = [1, 1, 1]} : vector<40x40x128xbf16> to vector<16x16x128xbf16>
    %108 = vector.shape_cast %107 : vector<16x16x128xbf16> to vector<256x128xbf16>
    %c2_86 = arith.constant 2 : index
    %c2_87 = arith.constant 2 : index
    %c0_88 = arith.constant 0 : index
    %c0_89 = arith.constant 0 : index
    %109 = vector.load %arg5[%c2_86, %c2_87, %c0_88, %c0_89] : memref<3x3x128x128xbf16, #tpu.memory_space<vmem>>, vector<1x1x128x128xbf16>
    %110 = vector.shape_cast %109 : vector<1x1x128x128xbf16> to vector<128x128xbf16>
    %cst_90 = arith.constant dense<0.000000e+00> : vector<256x128xf32>
    %111 = tpu.matmul %108, %110, %cst_90 {dimension_numbers = #tpu.dot_dimension_numbers<[1], [0], [0], [1], [0, 0, 1, 1], [], []>} : vector<256x128xbf16>, vector<128x128xbf16>, vector<256x128xf32> -> vector<256x128xf32>
    %112 = arith.addf %106, %111 : vector<256x128xf32>
    %113 = vector.extract_strided_slice %1 {offsets = [0, 0, 0], sizes = [16, 16, 128], strides = [1, 1, 1]} : vector<40x40x128xbf16> to vector<16x16x128xbf16>
    %114 = vector.shape_cast %113 : vector<16x16x128xbf16> to vector<256x128xbf16>
    %c0_91 = arith.constant 0 : index
    %c0_92 = arith.constant 0 : index
    %c0_93 = arith.constant 0 : index
    %c0_94 = arith.constant 0 : index
    %115 = vector.load %arg6[%c0_91, %c0_92, %c0_93, %c0_94] : memref<3x3x128x128xbf16, #tpu.memory_space<vmem>>, vector<1x1x128x128xbf16>
    %116 = vector.shape_cast %115 : vector<1x1x128x128xbf16> to vector<128x128xbf16>
    %cst_95 = arith.constant dense<0.000000e+00> : vector<256x128xf32>
    %117 = tpu.matmul %114, %116, %cst_95 {dimension_numbers = #tpu.dot_dimension_numbers<[1], [0], [0], [1], [0, 0, 1, 1], [], []>} : vector<256x128xbf16>, vector<128x128xbf16>, vector<256x128xf32> -> vector<256x128xf32>
    %118 = arith.addf %112, %117 : vector<256x128xf32>
    %119 = vector.extract_strided_slice %1 {offsets = [0, 12, 0], sizes = [16, 16, 128], strides = [1, 1, 1]} : vector<40x40x128xbf16> to vector<16x16x128xbf16>
    %120 = vector.shape_cast %119 : vector<16x16x128xbf16> to vector<256x128xbf16>
    %c0_96 = arith.constant 0 : index
    %c1_97 = arith.constant 1 : index
    %c0_98 = arith.constant 0 : index
    %c0_99 = arith.constant 0 : index
    %121 = vector.load %arg6[%c0_96, %c1_97, %c0_98, %c0_99] : memref<3x3x128x128xbf16, #tpu.memory_space<vmem>>, vector<1x1x128x128xbf16>
    %122 = vector.shape_cast %121 : vector<1x1x128x128xbf16> to vector<128x128xbf16>
    %cst_100 = arith.constant dense<0.000000e+00> : vector<256x128xf32>
    %123 = tpu.matmul %120, %122, %cst_100 {dimension_numbers = #tpu.dot_dimension_numbers<[1], [0], [0], [1], [0, 0, 1, 1], [], []>} : vector<256x128xbf16>, vector<128x128xbf16>, vector<256x128xf32> -> vector<256x128xf32>
    %124 = arith.addf %118, %123 : vector<256x128xf32>
    %125 = vector.extract_strided_slice %1 {offsets = [0, 24, 0], sizes = [16, 16, 128], strides = [1, 1, 1]} : vector<40x40x128xbf16> to vector<16x16x128xbf16>
    %126 = vector.shape_cast %125 : vector<16x16x128xbf16> to vector<256x128xbf16>
    %c0_101 = arith.constant 0 : index
    %c2_102 = arith.constant 2 : index
    %c0_103 = arith.constant 0 : index
    %c0_104 = arith.constant 0 : index
    %127 = vector.load %arg6[%c0_101, %c2_102, %c0_103, %c0_104] : memref<3x3x128x128xbf16, #tpu.memory_space<vmem>>, vector<1x1x128x128xbf16>
    %128 = vector.shape_cast %127 : vector<1x1x128x128xbf16> to vector<128x128xbf16>
    %cst_105 = arith.constant dense<0.000000e+00> : vector<256x128xf32>
    %129 = tpu.matmul %126, %128, %cst_105 {dimension_numbers = #tpu.dot_dimension_numbers<[1], [0], [0], [1], [0, 0, 1, 1], [], []>} : vector<256x128xbf16>, vector<128x128xbf16>, vector<256x128xf32> -> vector<256x128xf32>
    %130 = arith.addf %124, %129 : vector<256x128xf32>
    %131 = vector.extract_strided_slice %1 {offsets = [12, 0, 0], sizes = [16, 16, 128], strides = [1, 1, 1]} : vector<40x40x128xbf16> to vector<16x16x128xbf16>
    %132 = vector.shape_cast %131 : vector<16x16x128xbf16> to vector<256x128xbf16>
    %c1_106 = arith.constant 1 : index
    %c0_107 = arith.constant 0 : index
    %c0_108 = arith.constant 0 : index
    %c0_109 = arith.constant 0 : index
    %133 = vector.load %arg6[%c1_106, %c0_107, %c0_108, %c0_109] : memref<3x3x128x128xbf16, #tpu.memory_space<vmem>>, vector<1x1x128x128xbf16>
    %134 = vector.shape_cast %133 : vector<1x1x128x128xbf16> to vector<128x128xbf16>
    %cst_110 = arith.constant dense<0.000000e+00> : vector<256x128xf32>
    %135 = tpu.matmul %132, %134, %cst_110 {dimension_numbers = #tpu.dot_dimension_numbers<[1], [0], [0], [1], [0, 0, 1, 1], [], []>} : vector<256x128xbf16>, vector<128x128xbf16>, vector<256x128xf32> -> vector<256x128xf32>
    %136 = arith.addf %130, %135 : vector<256x128xf32>
    %137 = vector.extract_strided_slice %1 {offsets = [12, 24, 0], sizes = [16, 16, 128], strides = [1, 1, 1]} : vector<40x40x128xbf16> to vector<16x16x128xbf16>
    %138 = vector.shape_cast %137 : vector<16x16x128xbf16> to vector<256x128xbf16>
    %c1_111 = arith.constant 1 : index
    %c2_112 = arith.constant 2 : index
    %c0_113 = arith.constant 0 : index
    %c0_114 = arith.constant 0 : index
    %139 = vector.load %arg6[%c1_111, %c2_112, %c0_113, %c0_114] : memref<3x3x128x128xbf16, #tpu.memory_space<vmem>>, vector<1x1x128x128xbf16>
    %140 = vector.shape_cast %139 : vector<1x1x128x128xbf16> to vector<128x128xbf16>
    %cst_115 = arith.constant dense<0.000000e+00> : vector<256x128xf32>
    %141 = tpu.matmul %138, %140, %cst_115 {dimension_numbers = #tpu.dot_dimension_numbers<[1], [0], [0], [1], [0, 0, 1, 1], [], []>} : vector<256x128xbf16>, vector<128x128xbf16>, vector<256x128xf32> -> vector<256x128xf32>
    %142 = arith.addf %136, %141 : vector<256x128xf32>
    %143 = vector.extract_strided_slice %1 {offsets = [24, 0, 0], sizes = [16, 16, 128], strides = [1, 1, 1]} : vector<40x40x128xbf16> to vector<16x16x128xbf16>
    %144 = vector.shape_cast %143 : vector<16x16x128xbf16> to vector<256x128xbf16>
    %c2_116 = arith.constant 2 : index
    %c0_117 = arith.constant 0 : index
    %c0_118 = arith.constant 0 : index
    %c0_119 = arith.constant 0 : index
    %145 = vector.load %arg6[%c2_116, %c0_117, %c0_118, %c0_119] : memref<3x3x128x128xbf16, #tpu.memory_space<vmem>>, vector<1x1x128x128xbf16>
    %146 = vector.shape_cast %145 : vector<1x1x128x128xbf16> to vector<128x128xbf16>
    %cst_120 = arith.constant dense<0.000000e+00> : vector<256x128xf32>
    %147 = tpu.matmul %144, %146, %cst_120 {dimension_numbers = #tpu.dot_dimension_numbers<[1], [0], [0], [1], [0, 0, 1, 1], [], []>} : vector<256x128xbf16>, vector<128x128xbf16>, vector<256x128xf32> -> vector<256x128xf32>
    %148 = arith.addf %142, %147 : vector<256x128xf32>
    %149 = vector.extract_strided_slice %1 {offsets = [24, 12, 0], sizes = [16, 16, 128], strides = [1, 1, 1]} : vector<40x40x128xbf16> to vector<16x16x128xbf16>
    %150 = vector.shape_cast %149 : vector<16x16x128xbf16> to vector<256x128xbf16>
    %c2_121 = arith.constant 2 : index
    %c1_122 = arith.constant 1 : index
    %c0_123 = arith.constant 0 : index
    %c0_124 = arith.constant 0 : index
    %151 = vector.load %arg6[%c2_121, %c1_122, %c0_123, %c0_124] : memref<3x3x128x128xbf16, #tpu.memory_space<vmem>>, vector<1x1x128x128xbf16>
    %152 = vector.shape_cast %151 : vector<1x1x128x128xbf16> to vector<128x128xbf16>
    %cst_125 = arith.constant dense<0.000000e+00> : vector<256x128xf32>
    %153 = tpu.matmul %150, %152, %cst_125 {dimension_numbers = #tpu.dot_dimension_numbers<[1], [0], [0], [1], [0, 0, 1, 1], [], []>} : vector<256x128xbf16>, vector<128x128xbf16>, vector<256x128xf32> -> vector<256x128xf32>
    %154 = arith.addf %148, %153 : vector<256x128xf32>
    %155 = vector.extract_strided_slice %1 {offsets = [24, 24, 0], sizes = [16, 16, 128], strides = [1, 1, 1]} : vector<40x40x128xbf16> to vector<16x16x128xbf16>
    %156 = vector.shape_cast %155 : vector<16x16x128xbf16> to vector<256x128xbf16>
    %c2_126 = arith.constant 2 : index
    %c2_127 = arith.constant 2 : index
    %c0_128 = arith.constant 0 : index
    %c0_129 = arith.constant 0 : index
    %157 = vector.load %arg6[%c2_126, %c2_127, %c0_128, %c0_129] : memref<3x3x128x128xbf16, #tpu.memory_space<vmem>>, vector<1x1x128x128xbf16>
    %158 = vector.shape_cast %157 : vector<1x1x128x128xbf16> to vector<128x128xbf16>
    %cst_130 = arith.constant dense<0.000000e+00> : vector<256x128xf32>
    %159 = tpu.matmul %156, %158, %cst_130 {dimension_numbers = #tpu.dot_dimension_numbers<[1], [0], [0], [1], [0, 0, 1, 1], [], []>} : vector<256x128xbf16>, vector<128x128xbf16>, vector<256x128xf32> -> vector<256x128xf32>
    %160 = arith.addf %154, %159 : vector<256x128xf32>
    %161 = vector.shape_cast %160 : vector<256x128xf32> to vector<16x16x128xf32>
    %c0_131 = arith.constant 0 : index
    %c0_132 = arith.constant 0 : index
    %c0_133 = arith.constant 0 : index
    %c0_134 = arith.constant 0 : index
    %162 = vector.load %arg8[%c0_131, %c0_132, %c0_133, %c0_134] : memref<1x16x16x128xf32, #tpu.memory_space<vmem>>, vector<1x16x16x128xf32>
    %163 = vector.shape_cast %162 : vector<1x16x16x128xf32> to vector<16x16x128xf32>
    %164 = vector.shape_cast %161 : vector<16x16x128xf32> to vector<1x16x16x128xf32>
    tpu.vector_store %arg8[%c0_131, %c0_132, %c0_133, %c0_134], %164 {strides = array<i32>} : memref<1x16x16x128xf32, #tpu.memory_space<vmem>>, vector<1x16x16x128xf32>,
    return
  }
  func.func @transform_0(%arg0: i32) -> (i32, i32, i32, i32) {
    %c0_i32 = arith.constant 0 : i32
    %c0_i32_0 = arith.constant 0 : i32
    %c0_i32_1 = arith.constant 0 : i32
    %c0_i32_2 = arith.constant 0 : i32
    return %arg0, %c0_i32, %c0_i32_0, %c0_i32_1 : i32, i32, i32, i32
  }
  func.func @transform_1(%arg0: i32) -> (i32, i32) {
    %c0_i32 = arith.constant 0 : i32
    %c0_i32_0 = arith.constant 0 : i32
    %c0_i32_1 = arith.constant 0 : i32
    return %c0_i32, %c0_i32_0 : i32, i32
  }
  func.func @transform_2(%arg0: i32) -> (i32, i32) {
    %c0_i32 = arith.constant 0 : i32
    %c0_i32_0 = arith.constant 0 : i32
    %c0_i32_1 = arith.constant 0 : i32
    return %c0_i32, %c0_i32_0 : i32, i32
  }
  func.func @transform_3(%arg0: i32) -> (i32, i32, i32, i32) {
    %c0_i32 = arith.constant 0 : i32
    %c0_i32_0 = arith.constant 0 : i32
    %c0_i32_1 = arith.constant 0 : i32
    %c0_i32_2 = arith.constant 0 : i32
    %c0_i32_3 = arith.constant 0 : i32
    return %c0_i32, %c0_i32_0, %c0_i32_1, %c0_i32_2 : i32, i32, i32, i32
  }
  func.func @transform_4(%arg0: i32) -> (i32, i32, i32, i32) {
    %c0_i32 = arith.constant 0 : i32
    %c0_i32_0 = arith.constant 0 : i32
    %c0_i32_1 = arith.constant 0 : i32
    %c0_i32_2 = arith.constant 0 : i32
    %c0_i32_3 = arith.constant 0 : i32
    return %c0_i32, %c0_i32_0, %c0_i32_1, %c0_i32_2 : i32, i32, i32, i32
  }
  func.func @transform_5(%arg0: i32) -> (i32, i32, i32, i32) {
    %c0_i32 = arith.constant 0 : i32
    %c0_i32_0 = arith.constant 0 : i32
    %c0_i32_1 = arith.constant 0 : i32
    %c0_i32_2 = arith.constant 0 : i32
    %c0_i32_3 = arith.constant 0 : i32
    return %c0_i32, %c0_i32_0, %c0_i32_1, %c0_i32_2 : i32, i32, i32, i32
  }
  func.func @transform_6(%arg0: i32) -> (i32, i32) {
    %c0_i32 = arith.constant 0 : i32
    %c0_i32_0 = arith.constant 0 : i32
    %c0_i32_1 = arith.constant 0 : i32
    return %c0_i32, %c0_i32_0 : i32, i32
  }
  func.func @transform_7(%arg0: i32) -> (i32, i32, i32, i32) {
    %c0_i32 = arith.constant 0 : i32
    %c0_i32_0 = arith.constant 0 : i32
    %c0_i32_1 = arith.constant 0 : i32
    %c0_i32_2 = arith.constant 0 : i32
    return %arg0, %c0_i32, %c0_i32_0, %c0_i32_1 : i32, i32, i32, i32
  }
}

</mosaic_0001>

<llo_original>
// kernel: tpu_custom_call.1
$region0: #{tpu_custom_call.1}
  #allocation0 [shape = 'u32[]', space=smem, size = 0x4, offset = 0x4, fixed_abs, tag = 'smem constant byte address 0x4 - core index']
  #allocation1 [shape = 'u32[72,128]{1,0:T(1,128)}', space=vmem, size = 0x9000, scoped, tag = 'internal scratch']
  %s0 = inlined_call_operand.hbm [shape: bf16[2,40,40,128], index: 0, kind: input, shape index: {}]
  %s1 = inlined_call_operand.hbm [shape: bf16[128,128], index: 1, kind: input, shape index: {}]
  %s2 = inlined_call_operand.hbm [shape: bf16[128,128], index: 2, kind: input, shape index: {}]
  %s3 = inlined_call_operand.hbm [shape: bf16[3,3,128,128], index: 3, kind: input, shape index: {}]
  %s4 = inlined_call_operand.hbm [shape: bf16[3,3,128,128], index: 4, kind: input, shape index: {}]
  %s5 = inlined_call_operand.hbm [shape: bf16[3,3,128,128], index: 5, kind: input, shape index: {}]
  %s6 = inlined_call_operand.vmem [shape: f32[1,128], index: 6, kind: input, shape index: {}]
  %s7 = inlined_call_operand.hbm [shape: f32[2,16,16,128], index: 7, kind: output, shape index: {}]
  %s8 = sld [smem:[#allocation0]]
  $region85: #{tpu_custom_call.1} parent=0
    _
  %s10 = ssub.s32 1, %s8
  %s11 = scalar_select 0, %s10, %s8
  $region1: #{tpu_custom_call.1} parent=0
    #allocation2 [shape = 'u8[819200]{0}', space=vmem, size = 0xc8000, scoped, tag = 'input window, operand 0']
    #allocation3 [shape = 's32[2]{0}', space=sflag, size = 0x8, scoped, tag = 'scoped memory for tpu_custom_call.1']
    #allocation4 [shape = 's32[2]{0}', space=sflag, size = 0x8, scoped, tag = 'scoped memory for tpu_custom_call.1']
    #allocation5 [shape = 'u8[32768]{0}', space=vmem, size = 0x8000, scoped, tag = 'input window, operand 1, single buffered']
    #allocation6 [shape = 's32[1]{0}', space=sflag, size = 0x4, scoped, tag = 'scoped memory for tpu_custom_call.1']
    #allocation7 [shape = 'u8[32768]{0}', space=vmem, size = 0x8000, scoped, tag = 'input window, operand 2, single buffered']
    #allocation8 [shape = 'u8[294912]{0}', space=vmem, size = 0x48000, scoped, tag = 'input window, operand 3, single buffered']
    #allocation9 [shape = 's32[1]{0}', space=sflag, size = 0x4, scoped, tag = 'scoped memory for tpu_custom_call.1']
    #allocation10 [shape = 'u8[294912]{0}', space=vmem, size = 0x48000, scoped, tag = 'input window, operand 4, single buffered']
    #allocation11 [shape = 'u8[294912]{0}', space=vmem, size = 0x48000, scoped, tag = 'input window, operand 5, single buffered']
    #allocation12 [shape = 's32[1]{0}', space=sflag, size = 0x4, scoped, tag = 'scoped memory for tpu_custom_call.1']
    #allocation13 [shape = 'u8[262144]{0}', space=vmem, size = 0x40000, scoped, tag = 'output window, operand 0']
    %12 = vsyncpa [#allocation3], 0
    %s13 = scalar_lea.sflag [#allocation3], 1
    %14 = vsyncpa %s13, 0
    %15 = vsyncpa [#allocation6], 0
    %16 = vsyncpa [#allocation9], 0
    %17 = vsyncpa [#allocation12], 0
    %18 = vsyncpa [#allocation4], 0
    %s19 = scalar_lea.sflag [#allocation4], 1
    %20 = vsyncpa %s19, 0
    loop: start=0, step=1, limit=4
    $region2: #{tpu_custom_call.1} parent=1 // loop_pre_header
      _
    $region3: #{tpu_custom_call.1} parent=1 // loop_header
      %s22 = sphi 0, %s26
      %p23 = scmp.ge.s32.totalorder %s22, 4
      %s32 = sphi 0, %s34
      %s35 = sphi 0, %s32
      %s36 = sphi 0, %s35
      %s52 = sphi 0, %s36
      %s56 = sphi 0, %s56
      %s58 = sphi 0, %s56
      %s59 = sphi 0, %s58
      %s73 = sphi 0, %s59
      %s77 = sphi 0, %s77
      %s79 = sphi 0, %s77
      %s80 = sphi 0, %s79
      %s94 = sphi 0, %s80
      %s98 = sphi 0, %s98
      %s100 = sphi 0, %s98
      %s101 = sphi 0, %s100
      %s115 = sphi 0, %s101
      %s119 = sphi 0, %s119
      %s121 = sphi 0, %s119
      %s122 = sphi 0, %s121
      %s136 = sphi 0, %s122
      %s140 = sphi 0, %s140
      %s142 = sphi 0, %s140
      %s143 = sphi 0, %s142
      %s157 = sphi 0, %s143
      %s161 = sphi 0, %s161
      %s163 = sphi 0, %s161
      %s164 = sphi 0, %s163
      %s178 = sphi 0, %s164
      %s184 = sphi 0, %s186
      %s187 = sphi 0, %s184
      %s188 = sphi 0, %s187
      %s204 = sphi 0, %s188
    $region4: #{tpu_custom_call.1} parent=1 // loop_header_branch
      %25 = sbr.rel (%p23) target = $region8
    $region5: #{tpu_custom_call.1} parent=1 // loop_body
      %s27 = ssub.s32 %s22, 1
      %s28 = ssub.s32 %s22, 2
      %s29 = sadd.s32 %s22, 1
      %s30 = ssub.s32 %s22, %s29
      %p31 = scmp.eq.s32.totalorder %s30, 0
      %s33 = sadd.s32 %s32, 1
      %s34 = scalar_select %p31, %s32, %s33
      %p37 = pneg %p31
      %p38 = scmp.eq.s32.totalorder %s22, 1
      %p39 = por %p37, %p38
      %p40 = scmp.ne.s32.totalorder %s32, %s35
      %p41 = scmp.eq.s32.totalorder %s22, 0
      %p42 = por %p40, %p41
      %p43 = scmp.ne.s32.totalorder %s32, %s35
      %p44 = scmp.eq.s32.totalorder %s27, 1
      %p45 = por %p43, %p44
      %p46 = scmp.ne.s32.totalorder %s35, %s36
      %p47 = scmp.eq.s32.totalorder %s27, 0
      %p48 = por %p46, %p47
      %p49 = scmp.ne.s32.totalorder %s35, %s36
      %p50 = scmp.eq.s32.totalorder %s28, 1
      %p51 = por %p49, %p50
      %p53 = scmp.ne.s32.totalorder %s36, %s52
      %p54 = scmp.eq.s32.totalorder %s28, 0
      %p55 = por %p53, %p54
      %s57 = sadd.s32 %s56, 1
      %p60 = scmp.eq.s32.totalorder %s22, 1
      %p61 = scmp.ne.s32.totalorder %s56, %s58
      %p62 = scmp.eq.s32.totalorder %s22, 0
      %p63 = por %p61, %p62
      %p64 = scmp.ne.s32.totalorder %s56, %s58
      %p65 = scmp.eq.s32.totalorder %s27, 1
      %p66 = por %p64, %p65
      %p67 = scmp.ne.s32.totalorder %s58, %s59
      %p68 = scmp.eq.s32.totalorder %s27, 0
      %p69 = por %p67, %p68
      %p70 = scmp.ne.s32.totalorder %s58, %s59
      %p71 = scmp.eq.s32.totalorder %s28, 1
      %p72 = por %p70, %p71
      %p74 = scmp.ne.s32.totalorder %s59, %s73
      %p75 = scmp.eq.s32.totalorder %s28, 0
      %p76 = por %p74, %p75
      %s78 = sadd.s32 %s77, 1
      %p81 = scmp.eq.s32.totalorder %s22, 1
      %p82 = scmp.ne.s32.totalorder %s77, %s79
      %p83 = scmp.eq.s32.totalorder %s22, 0
      %p84 = por %p82, %p83
      %p85 = scmp.ne.s32.totalorder %s77, %s79
      %p86 = scmp.eq.s32.totalorder %s27, 1
      %p87 = por %p85, %p86
      %p88 = scmp.ne.s32.totalorder %s79, %s80
      %p89 = scmp.eq.s32.totalorder %s27, 0
      %p90 = por %p88, %p89
      %p91 = scmp.ne.s32.totalorder %s79, %s80
      %p92 = scmp.eq.s32.totalorder %s28, 1
      %p93 = por %p91, %p92
      %p95 = scmp.ne.s32.totalorder %s80, %s94
      %p96 = scmp.eq.s32.totalorder %s28, 0
      %p97 = por %p95, %p96
      %s99 = sadd.s32 %s98, 1
      %p102 = scmp.eq.s32.totalorder %s22, 1
      %p103 = scmp.ne.s32.totalorder %s98, %s100
      %p104 = scmp.eq.s32.totalorder %s22, 0
      %p105 = por %p103, %p104
      %p106 = scmp.ne.s32.totalorder %s98, %s100
      %p107 = scmp.eq.s32.totalorder %s27, 1
      %p108 = por %p106, %p107
      %p109 = scmp.ne.s32.totalorder %s100, %s101
      %p110 = scmp.eq.s32.totalorder %s27, 0
      %p111 = por %p109, %p110
      %p112 = scmp.ne.s32.totalorder %s100, %s101
      %p113 = scmp.eq.s32.totalorder %s28, 1
      %p114 = por %p112, %p113
      %p116 = scmp.ne.s32.totalorder %s101, %s115
      %p117 = scmp.eq.s32.totalorder %s28, 0
      %p118 = por %p116, %p117
      %s120 = sadd.s32 %s119, 1
      %p123 = scmp.eq.s32.totalorder %s22, 1
      %p124 = scmp.ne.s32.totalorder %s119, %s121
      %p125 = scmp.eq.s32.totalorder %s22, 0
      %p126 = por %p124, %p125
      %p127 = scmp.ne.s32.totalorder %s119, %s121
      %p128 = scmp.eq.s32.totalorder %s27, 1
      %p129 = por %p127, %p128
      %p130 = scmp.ne.s32.totalorder %s121, %s122
      %p131 = scmp.eq.s32.totalorder %s27, 0
      %p132 = por %p130, %p131
      %p133 = scmp.ne.s32.totalorder %s121, %s122
      %p134 = scmp.eq.s32.totalorder %s28, 1
      %p135 = por %p133, %p134
      %p137 = scmp.ne.s32.totalorder %s122, %s136
      %p138 = scmp.eq.s32.totalorder %s28, 0
      %p139 = por %p137, %p138
      %s141 = sadd.s32 %s140, 1
      %p144 = scmp.eq.s32.totalorder %s22, 1
      %p145 = scmp.ne.s32.totalorder %s140, %s142
      %p146 = scmp.eq.s32.totalorder %s22, 0
      %p147 = por %p145, %p146
      %p148 = scmp.ne.s32.totalorder %s140, %s142
      %p149 = scmp.eq.s32.totalorder %s27, 1
      %p150 = por %p148, %p149
      %p151 = scmp.ne.s32.totalorder %s142, %s143
      %p152 = scmp.eq.s32.totalorder %s27, 0
      %p153 = por %p151, %p152
      %p154 = scmp.ne.s32.totalorder %s142, %s143
      %p155 = scmp.eq.s32.totalorder %s28, 1
      %p156 = por %p154, %p155
      %p158 = scmp.ne.s32.totalorder %s143, %s157
      %p159 = scmp.eq.s32.totalorder %s28, 0
      %p160 = por %p158, %p159
      %s162 = sadd.s32 %s161, 1
      %p165 = scmp.eq.s32.totalorder %s22, 1
      %p166 = scmp.ne.s32.totalorder %s161, %s163
      %p167 = scmp.eq.s32.totalorder %s22, 0
      %p168 = por %p166, %p167
      %p169 = scmp.ne.s32.totalorder %s161, %s163
      %p170 = scmp.eq.s32.totalorder %s27, 1
      %p171 = por %p169, %p170
      %p172 = scmp.ne.s32.totalorder %s163, %s164
      %p173 = scmp.eq.s32.totalorder %s27, 0
      %p174 = por %p172, %p173
      %p175 = scmp.ne.s32.totalorder %s163, %s164
      %p176 = scmp.eq.s32.totalorder %s28, 1
      %p177 = por %p175, %p176
      %p179 = scmp.ne.s32.totalorder %s164, %s178
      %p180 = scmp.eq.s32.totalorder %s28, 0
      %p181 = por %p179, %p180
      %s182 = ssub.s32 %s22, %s29
      %p183 = scmp.eq.s32.totalorder %s182, 0
      %s185 = sadd.s32 %s184, 1
      %s186 = scalar_select %p183, %s184, %s185
      %p189 = pneg %p183
      %p190 = scmp.eq.s32.totalorder %s22, 1
      %p191 = por %p189, %p190
      %p192 = scmp.ne.s32.totalorder %s184, %s187
      %p193 = scmp.eq.s32.totalorder %s22, 0
      %p194 = por %p192, %p193
      %p195 = scmp.ne.s32.totalorder %s184, %s187
      %p196 = scmp.eq.s32.totalorder %s27, 1
      %p197 = por %p195, %p196
      %p198 = scmp.ne.s32.totalorder %s187, %s188
      %p199 = scmp.eq.s32.totalorder %s27, 0
      %p200 = por %p198, %p199
      %p201 = scmp.ne.s32.totalorder %s187, %s188
      %p202 = scmp.eq.s32.totalorder %s28, 1
      %p203 = por %p201, %p202
      %p205 = scmp.ne.s32.totalorder %s188, %s204
      %p206 = scmp.eq.s32.totalorder %s28, 0
      %p207 = por %p205, %p206
      %p208 = scmp.le.s32.totalorder 1, %s22
      %p209 = scmp.lt.s32.totalorder %s22, 3
      %p210 = pnand %p208, %p209
      %p211 = pneg %p210
      // Predicated region
      $region9: #{tpu_custom_call.1} parent=5 // pred_check
        _
      $region10: #{tpu_custom_call.1} parent=5 // pred_check_branch
        %213 = sbr.rel (%p210) target = $region12
      $region11: #{tpu_custom_call.1} parent=5 // pred_region
        %s214 = ssub.s32 %s22, 1
        // Predicated region
        $region13: #{tpu_custom_call.1} parent=11 // pred_check
          %p215 = pneg %p69
        $region14: #{tpu_custom_call.1} parent=11 // pred_check_branch
          %217 = sbr.rel (%p215) target = $region16
        $region15: #{tpu_custom_call.1} parent=11 // pred_region
          %219 = vsyncadd [#allocation6], 0
          %s220 = sshll.u32 %s1, 4
          %s221 = int_to_ptr.hbm [resolvable:$true] %s220
          %s222 = sshll.u32 [#allocation5], 4
          %s223 = int_to_ptr.vmem [resolvable:$true] %s222
          %228 = dma.hbm_to_vmem [thread:$0]  %s221, 1024, %s223, [#allocation6], 64, 64, 4
        $region16: #{tpu_custom_call.1} parent=11 // pred_fallthru
          _
        // Predicated region
        $region17: #{tpu_custom_call.1} parent=11 // pred_check
          %p229 = pneg %p90
        $region18: #{tpu_custom_call.1} parent=11 // pred_check_branch
          %231 = sbr.rel (%p229) target = $region20
        $region19: #{tpu_custom_call.1} parent=11 // pred_region
          %233 = vsyncadd [#allocation6], 0
          %s234 = sshll.u32 %s2, 4
          %s235 = int_to_ptr.hbm [resolvable:$true] %s234
          %s236 = sshll.u32 [#allocation7], 4
          %s237 = int_to_ptr.vmem [resolvable:$true] %s236
          %242 = dma.hbm_to_vmem [thread:$0]  %s235, 1024, %s237, [#allocation6], 64, 64, 4
        $region20: #{tpu_custom_call.1} parent=11 // pred_fallthru
          _
        // Predicated region
        $region21: #{tpu_custom_call.1} parent=11 // pred_check
          %p243 = pneg %p111
        $region22: #{tpu_custom_call.1} parent=11 // pred_check_branch
          %245 = sbr.rel (%p243) target = $region24
        $region23: #{tpu_custom_call.1} parent=11 // pred_region
          %247 = vsyncadd [#allocation9], 0
          %s248 = sshll.u32 %s3, 4
          %s249 = int_to_ptr.hbm [resolvable:$true] %s248
          %s250 = sshll.u32 [#allocation8], 4
          %s251 = int_to_ptr.vmem [resolvable:$true] %s250
          %256 = dma.hbm_to_vmem [thread:$0]  %s249, 9216, %s251, [#allocation9], 64, 64, 4
        $region24: #{tpu_custom_call.1} parent=11 // pred_fallthru
          _
        // Predicated region
        $region25: #{tpu_custom_call.1} parent=11 // pred_check
          %p257 = pneg %p132
        $region26: #{tpu_custom_call.1} parent=11 // pred_check_branch
          %259 = sbr.rel (%p257) target = $region28
        $region27: #{tpu_custom_call.1} parent=11 // pred_region
          %261 = vsyncadd [#allocation9], 0
          %s262 = sshll.u32 %s4, 4
          %s263 = int_to_ptr.hbm [resolvable:$true] %s262
          %s264 = sshll.u32 [#allocation10], 4
          %s265 = int_to_ptr.vmem [resolvable:$true] %s264
          %270 = dma.hbm_to_vmem [thread:$0]  %s263, 9216, %s265, [#allocation9], 64, 64, 4
        $region28: #{tpu_custom_call.1} parent=11 // pred_fallthru
          _
        // Predicated region
        $region29: #{tpu_custom_call.1} parent=11 // pred_check
          %p271 = pneg %p153
        $region30: #{tpu_custom_call.1} parent=11 // pred_check_branch
          %273 = sbr.rel (%p271) target = $region32
        $region31: #{tpu_custom_call.1} parent=11 // pred_region
          %275 = vsyncadd [#allocation12], 0
          %s276 = sshll.u32 %s5, 4
          %s277 = int_to_ptr.hbm [resolvable:$true] %s276
          %s278 = sshll.u32 [#allocation11], 4
          %s279 = int_to_ptr.vmem [resolvable:$true] %s278
          %284 = dma.hbm_to_vmem [thread:$0]  %s277, 9216, %s279, [#allocation12], 64, 64, 4
        $region32: #{tpu_custom_call.1} parent=11 // pred_fallthru
          _
        // Predicated region
        $region33: #{tpu_custom_call.1} parent=11 // pred_check
          %p285 = pneg %p174
        $region34: #{tpu_custom_call.1} parent=11 // pred_check_branch
          %287 = sbr.rel (%p285) target = $region36
        $region35: #{tpu_custom_call.1} parent=11 // pred_region
          _
        $region36: #{tpu_custom_call.1} parent=11 // pred_fallthru
          _
      $region12: #{tpu_custom_call.1} parent=5 // pred_fallthru
        _
      %p288 = scmp.lt.s32.totalorder %s22, 2
      // Predicated region
      $region37: #{tpu_custom_call.1} parent=5 // pred_check
        %p289 = pneg %p288
      $region38: #{tpu_custom_call.1} parent=5 // pred_check_branch
        %291 = sbr.rel (%p289) target = $region40
      $region39: #{tpu_custom_call.1} parent=5 // pred_region
        // Predicated region
        $region41: #{tpu_custom_call.1} parent=39 // pred_check
          %p292 = pneg %p42
        $region42: #{tpu_custom_call.1} parent=39 // pred_check_branch
          %294 = sbr.rel (%p292) target = $region44
        $region43: #{tpu_custom_call.1} parent=39 // pred_region
          %s295 = sand.u32 %s32, 1
          %s296 = scalar_lea.sflag [#allocation3], %s295
          %s297 = sand.u32 %s32, 1
          %s298 = smul.addr %s297, 800
          %s299 = scalar_lea.vmem [#allocation2], %s298
          %301 = vsyncadd %s296, 0
          %s302 = smul.addr %s22, 200
          %s303 = smul.addr %s302, 4
          %s304 = scalar_lea.hbm %s0, %s303
          %s305 = sshll.u32 %s304, 4
          %s306 = int_to_ptr.hbm [resolvable:$true] %s305
          %s307 = sshll.u32 %s299, 4
          %s308 = int_to_ptr.vmem [resolvable:$true] %s307
          %313 = dma.hbm_to_vmem [thread:$0]  %s306, 12800, %s308, %s296, 64, 64, 4
        $region44: #{tpu_custom_call.1} parent=39 // pred_fallthru
          _
      $region40: #{tpu_custom_call.1} parent=5 // pred_fallthru
        _
      %p314 = scmp.le.s32.totalorder 1, %s22
      %p315 = scmp.lt.s32.totalorder %s22, 3
      %p316 = pnand %p314, %p315
      %p317 = pneg %p316
      // Predicated region
      $region45: #{tpu_custom_call.1} parent=5 // pred_check
        _
      $region46: #{tpu_custom_call.1} parent=5 // pred_check_branch
        %319 = sbr.rel (%p316) target = $region48
      $region47: #{tpu_custom_call.1} parent=5 // pred_region
        %s320 = ssub.s32 %s22, 1
        %s321 = sand.u32 %s35, 1
        %s322 = scalar_lea.sflag [#allocation3], %s321
        %s323 = sand.u32 %s35, 1
        %s324 = smul.addr %s323, 800
        %s325 = scalar_lea.vmem [#allocation2], %s324
        // Predicated region
        $region49: #{tpu_custom_call.1} parent=47 // pred_check
          %p326 = pneg %p48
        $region50: #{tpu_custom_call.1} parent=47 // pred_check_branch
          %328 = sbr.rel (%p326) target = $region52
        $region51: #{tpu_custom_call.1} parent=47 // pred_region
          %330 = dma.done %s322, 12800
        $region52: #{tpu_custom_call.1} parent=47 // pred_fallthru
          _
        // Predicated region
        $region53: #{tpu_custom_call.1} parent=47 // pred_check
          %p331 = pneg %p69
        $region54: #{tpu_custom_call.1} parent=47 // pred_check_branch
          %333 = sbr.rel (%p331) target = $region56
        $region55: #{tpu_custom_call.1} parent=47 // pred_region
          %335 = dma.done [#allocation6], 1024
        $region56: #{tpu_custom_call.1} parent=47 // pred_fallthru
          _
        // Predicated region
        $region57: #{tpu_custom_call.1} parent=47 // pred_check
          %p336 = pneg %p90
        $region58: #{tpu_custom_call.1} parent=47 // pred_check_branch
          %338 = sbr.rel (%p336) target = $region60
        $region59: #{tpu_custom_call.1} parent=47 // pred_region
          %340 = dma.done [#allocation6], 1024
        $region60: #{tpu_custom_call.1} parent=47 // pred_fallthru
          _
        // Predicated region
        $region61: #{tpu_custom_call.1} parent=47 // pred_check
          %p341 = pneg %p111
        $region62: #{tpu_custom_call.1} parent=47 // pred_check_branch
          %343 = sbr.rel (%p341) target = $region64
        $region63: #{tpu_custom_call.1} parent=47 // pred_region
          %345 = dma.done [#allocation9], 9216
        $region64: #{tpu_custom_call.1} parent=47 // pred_fallthru
          _
        // Predicated region
        $region65: #{tpu_custom_call.1} parent=47 // pred_check
          %p346 = pneg %p132
        $region66: #{tpu_custom_call.1} parent=47 // pred_check_branch
          %348 = sbr.rel (%p346) target = $region68
        $region67: #{tpu_custom_call.1} parent=47 // pred_region
          %350 = dma.done [#allocation9], 9216
        $region68: #{tpu_custom_call.1} parent=47 // pred_fallthru
          _
        // Predicated region
        $region69: #{tpu_custom_call.1} parent=47 // pred_check
          %p351 = pneg %p153
        $region70: #{tpu_custom_call.1} parent=47 // pred_check_branch
          %353 = sbr.rel (%p351) target = $region72
        $region71: #{tpu_custom_call.1} parent=47 // pred_region
          %355 = dma.done [#allocation12], 9216
        $region72: #{tpu_custom_call.1} parent=47 // pred_fallthru
          _
        %s356 = sand.u32 %s35, 1
        %s357 = scalar_lea.sflag [#allocation3], %s356
        %s358 = sand.u32 %s35, 1
        %s359 = smul.addr %s358, 800
        %s360 = scalar_lea.vmem [#allocation2], %s359
        %p361 = pneg %p48
        %p362 = pneg %p45
        %p363 = pneg %p69
        %p364 = pneg %p66
        %p365 = pneg %p90
        %p366 = pneg %p87
        %p367 = pneg %p111
        %p368 = pneg %p108
        %p369 = pneg %p132
        %p370 = pneg %p129
        %p371 = pneg %p153
        %p372 = pneg %p150
        %p373 = pneg %p174
        %p374 = pneg %p171
        %p375 = pneg %p200
        %p376 = pneg %p197
        %s377 = sand.u32 %s187, 1
        %s378 = scalar_lea.sflag [#allocation4], %s377
        %s379 = sand.u32 %s187, 1
        %s380 = smul.addr %s379, 256
        %s381 = scalar_lea.vmem [#allocation13], %s380
        %v383 = vld [vmem:[%s325] sm:$0xf]
        %v384 = vld [vmem:[%s325 + $0x4] sm:$0xf]
        %v385 = vld [vmem:[%s325 + $0x8] sm:$0xf]
        %v386 = vld [vmem:[%s325 + $0xc] sm:$0xf]
        %v387 = vld [vmem:[%s325 + $0x10] sm:$0xf]
        %v388 = vld [vmem:[%s325 + $0x14] sm:$0xf]
        %v389 = vld [vmem:[%s325 + $0x18] sm:$0xf]
        %v390 = vld [vmem:[%s325 + $0x1c] sm:$0xf]
        %v391 = vld [vmem:[%s325 + $0x20] sm:$0xf]
        %v392 = vld [vmem:[%s325 + $0x24] sm:$0xf]
        %v393 = vld [vmem:[%s325 + $0x28] sm:$0xf]
        %v394 = vld [vmem:[%s325 + $0x2c] sm:$0xf]
        %v395 = vld [vmem:[%s325 + $0x30] sm:$0xf]
        %v396 = vld [vmem:[%s325 + $0x34] sm:$0xf]
        %v397 = vld [vmem:[%s325 + $0x38] sm:$0xf]
        %v398 = vld [vmem:[%s325 + $0x3c] sm:$0xf]
        %v399 = vld [vmem:[%s325 + $0x40] sm:$0xf]
        %v400 = vld [vmem:[%s325 + $0x44] sm:$0xf]
        %v401 = vld [vmem:[%s325 + $0x48] sm:$0xf]
        %v402 = vld [vmem:[%s325 + $0x4c] sm:$0xf]
        %v403 = vld [vmem:[%s325 + $0x50] sm:$0xf]
        %v404 = vld [vmem:[%s325 + $0x54] sm:$0xf]
        %v405 = vld [vmem:[%s325 + $0x58] sm:$0xf]
        %v406 = vld [vmem:[%s325 + $0x5c] sm:$0xf]
        %v407 = vld [vmem:[%s325 + $0x60] sm:$0xf]
        %v408 = vld [vmem:[%s325 + $0x64] sm:$0xf]
        %v409 = vld [vmem:[%s325 + $0x68] sm:$0xf]
        %v410 = vld [vmem:[%s325 + $0x6c] sm:$0xf]
        %v411 = vld [vmem:[%s325 + $0x70] sm:$0xf]
        %v412 = vld [vmem:[%s325 + $0x74] sm:$0xf]
        %v413 = vld [vmem:[%s325 + $0x78] sm:$0xf]
        %v414 = vld [vmem:[%s325 + $0x7c] sm:$0xf]
        %v415 = vld [vmem:[%s325 + $0x80] sm:$0xf]
        %v416 = vld [vmem:[%s325 + $0x84] sm:$0xf]
        %v417 = vld [vmem:[%s325 + $0x88] sm:$0xf]
        %v418 = vld [vmem:[%s325 + $0x8c] sm:$0xf]
        %v419 = vld [vmem:[%s325 + $0x90] sm:$0xf]
        %v420 = vld [vmem:[%s325 + $0x94] sm:$0xf]
        %v421 = vld [vmem:[%s325 + $0x98] sm:$0xf]
        %v422 = vld [vmem:[%s325 + $0x9c] sm:$0xf]
        %v423 = vld [vmem:[%s325 + $0xa0] sm:$0xf]
        %v424 = vld [vmem:[%s325 + $0xa4] sm:$0xf]
        %v425 = vld [vmem:[%s325 + $0xa8] sm:$0xf]
        %v426 = vld [vmem:[%s325 + $0xac] sm:$0xf]
        %v427 = vld [vmem:[%s325 + $0xb0] sm:$0xf]
        %v428 = vld [vmem:[%s325 + $0xb4] sm:$0xf]
        %v429 = vld [vmem:[%s325 + $0xb8] sm:$0xf]
        %v430 = vld [vmem:[%s325 + $0xbc] sm:$0xf]
        %v431 = vld [vmem:[%s325 + $0xc0] sm:$0xf]
        %v432 = vld [vmem:[%s325 + $0xc4] sm:$0xf]
        %v433 = vld [vmem:[%s325 + $0xc8] sm:$0xf]
        %v434 = vld [vmem:[%s325 + $0xcc] sm:$0xf]
        %v435 = vld [vmem:[%s325 + $0xd0] sm:$0xf]
        %v436 = vld [vmem:[%s325 + $0xd4] sm:$0xf]
        %v437 = vld [vmem:[%s325 + $0xd8] sm:$0xf]
        %v438 = vld [vmem:[%s325 + $0xdc] sm:$0xf]
        %v439 = vld [vmem:[%s325 + $0xe0] sm:$0xf]
        %v440 = vld [vmem:[%s325 + $0xe4] sm:$0xf]
        %v441 = vld [vmem:[%s325 + $0xe8] sm:$0xf]
        %v442 = vld [vmem:[%s325 + $0xec] sm:$0xf]
        %v443 = vld [vmem:[%s325 + $0xf0] sm:$0xf]
        %v444 = vld [vmem:[%s325 + $0xf4] sm:$0xf]
        %v445 = vld [vmem:[%s325 + $0xf8] sm:$0xf]
        %v446 = vld [vmem:[%s325 + $0xfc] sm:$0xf]
        %v447 = vld [vmem:[%s325 + $0x100] sm:$0xf]
        %v448 = vld [vmem:[%s325 + $0x104] sm:$0xf]
        %v449 = vld [vmem:[%s325 + $0x108] sm:$0xf]
        %v450 = vld [vmem:[%s325 + $0x10c] sm:$0xf]
        %v451 = vld [vmem:[%s325 + $0x110] sm:$0xf]
        %v452 = vld [vmem:[%s325 + $0x114] sm:$0xf]
        %v453 = vld [vmem:[%s325 + $0x118] sm:$0xf]
        %v454 = vld [vmem:[%s325 + $0x11c] sm:$0xf]
        %v455 = vld [vmem:[%s325 + $0x120] sm:$0xf]
        %v456 = vld [vmem:[%s325 + $0x124] sm:$0xf]
        %v457 = vld [vmem:[%s325 + $0x128] sm:$0xf]
        %v458 = vld [vmem:[%s325 + $0x12c] sm:$0xf]
        %v459 = vld [vmem:[%s325 + $0x130] sm:$0xf]
        %v460 = vld [vmem:[%s325 + $0x134] sm:$0xf]
        %v461 = vld [vmem:[%s325 + $0x138] sm:$0xf]
        %v462 = vld [vmem:[%s325 + $0x13c] sm:$0xf]
        %v463 = vld [vmem:[%s325 + $0x140] sm:$0xf]
        %v464 = vld [vmem:[%s325 + $0x144] sm:$0xf]
        %v465 = vld [vmem:[%s325 + $0x148] sm:$0xf]
        %v466 = vld [vmem:[%s325 + $0x14c] sm:$0xf]
        %v467 = vld [vmem:[%s325 + $0x150] sm:$0xf]
        %v468 = vld [vmem:[%s325 + $0x154] sm:$0xf]
        %v469 = vld [vmem:[%s325 + $0x158] sm:$0xf]
        %v470 = vld [vmem:[%s325 + $0x15c] sm:$0xf]
        %v471 = vld [vmem:[%s325 + $0x160] sm:$0xf]
        %v472 = vld [vmem:[%s325 + $0x164] sm:$0xf]
        %v473 = vld [vmem:[%s325 + $0x168] sm:$0xf]
        %v474 = vld [vmem:[%s325 + $0x16c] sm:$0xf]
        %v475 = vld [vmem:[%s325 + $0x170] sm:$0xf]
        %v476 = vld [vmem:[%s325 + $0x174] sm:$0xf]
        %v477 = vld [vmem:[%s325 + $0x178] sm:$0xf]
        %v478 = vld [vmem:[%s325 + $0x17c] sm:$0xf]
        %v479 = vld [vmem:[%s325 + $0x180] sm:$0xf]
        %v480 = vld [vmem:[%s325 + $0x184] sm:$0xf]
        %v481 = vld [vmem:[%s325 + $0x188] sm:$0xf]
        %v482 = vld [vmem:[%s325 + $0x18c] sm:$0xf]
        %v483 = vld [vmem:[%s325 + $0x190] sm:$0xf]
        %v484 = vld [vmem:[%s325 + $0x194] sm:$0xf]
        %v485 = vld [vmem:[%s325 + $0x198] sm:$0xf]
        %v486 = vld [vmem:[%s325 + $0x19c] sm:$0xf]
        %v487 = vld [vmem:[%s325 + $0x1a0] sm:$0xf]
        %v488 = vld [vmem:[%s325 + $0x1a4] sm:$0xf]
        %v489 = vld [vmem:[%s325 + $0x1a8] sm:$0xf]
        %v490 = vld [vmem:[%s325 + $0x1ac] sm:$0xf]
        %v491 = vld [vmem:[%s325 + $0x1b0] sm:$0xf]
        %v492 = vld [vmem:[%s325 + $0x1b4] sm:$0xf]
        %v493 = vld [vmem:[%s325 + $0x1b8] sm:$0xf]
        %v494 = vld [vmem:[%s325 + $0x1bc] sm:$0xf]
        %v495 = vld [vmem:[%s325 + $0x1c0] sm:$0xf]
        %v496 = vld [vmem:[%s325 + $0x1c4] sm:$0xf]
        %v497 = vld [vmem:[%s325 + $0x1c8] sm:$0xf]
        %v498 = vld [vmem:[%s325 + $0x1cc] sm:$0xf]
        %v499 = vld [vmem:[%s325 + $0x1d0] sm:$0xf]
        %v500 = vld [vmem:[%s325 + $0x1d4] sm:$0xf]
        %v501 = vld [vmem:[%s325 + $0x1d8] sm:$0xf]
        %v502 = vld [vmem:[%s325 + $0x1dc] sm:$0xf]
        %v503 = vld [vmem:[%s325 + $0x1e0] sm:$0xf]
        %v504 = vld [vmem:[%s325 + $0x1e4] sm:$0xf]
        %v505 = vld [vmem:[%s325 + $0x1e8] sm:$0xf]
        %v506 = vld [vmem:[%s325 + $0x1ec] sm:$0xf]
        %v507 = vld [vmem:[%s325 + $0x1f0] sm:$0xf]
        %v508 = vld [vmem:[%s325 + $0x1f4] sm:$0xf]
        %v509 = vld [vmem:[%s325 + $0x1f8] sm:$0xf]
        %v510 = vld [vmem:[%s325 + $0x1fc] sm:$0xf]
        %v511 = vld [vmem:[%s325 + $0x200] sm:$0xf]
        %v512 = vld [vmem:[%s325 + $0x204] sm:$0xf]
        %v513 = vld [vmem:[%s325 + $0x208] sm:$0xf]
        %v514 = vld [vmem:[%s325 + $0x20c] sm:$0xf]
        %v515 = vld [vmem:[%s325 + $0x210] sm:$0xf]
        %v516 = vld [vmem:[%s325 + $0x214] sm:$0xf]
        %v517 = vld [vmem:[%s325 + $0x218] sm:$0xf]
        %v518 = vld [vmem:[%s325 + $0x21c] sm:$0xf]
        %v519 = vld [vmem:[%s325 + $0x220] sm:$0xf]
        %v520 = vld [vmem:[%s325 + $0x224] sm:$0xf]
        %v521 = vld [vmem:[%s325 + $0x228] sm:$0xf]
        %v522 = vld [vmem:[%s325 + $0x22c] sm:$0xf]
        %v523 = vld [vmem:[%s325 + $0x230] sm:$0xf]
        %v524 = vld [vmem:[%s325 + $0x234] sm:$0xf]
        %v525 = vld [vmem:[%s325 + $0x238] sm:$0xf]
        %v526 = vld [vmem:[%s325 + $0x23c] sm:$0xf]
        %v527 = vld [vmem:[%s325 + $0x240] sm:$0xf]
        %v528 = vld [vmem:[%s325 + $0x244] sm:$0xf]
        %v529 = vld [vmem:[%s325 + $0x248] sm:$0xf]
        %v530 = vld [vmem:[%s325 + $0x24c] sm:$0xf]
        %v531 = vld [vmem:[%s325 + $0x250] sm:$0xf]
        %v532 = vld [vmem:[%s325 + $0x254] sm:$0xf]
        %v533 = vld [vmem:[%s325 + $0x258] sm:$0xf]
        %v534 = vld [vmem:[%s325 + $0x25c] sm:$0xf]
        %v535 = vld [vmem:[%s325 + $0x260] sm:$0xf]
        %v536 = vld [vmem:[%s325 + $0x264] sm:$0xf]
        %v537 = vld [vmem:[%s325 + $0x268] sm:$0xf]
        %v538 = vld [vmem:[%s325 + $0x26c] sm:$0xf]
        %v539 = vld [vmem:[%s325 + $0x270] sm:$0xf]
        %v540 = vld [vmem:[%s325 + $0x274] sm:$0xf]
        %v541 = vld [vmem:[%s325 + $0x278] sm:$0xf]
        %v542 = vld [vmem:[%s325 + $0x27c] sm:$0xf]
        %v543 = vld [vmem:[%s325 + $0x280] sm:$0xf]
        %v544 = vld [vmem:[%s325 + $0x284] sm:$0xf]
        %v545 = vld [vmem:[%s325 + $0x288] sm:$0xf]
        %v546 = vld [vmem:[%s325 + $0x28c] sm:$0xf]
        %v547 = vld [vmem:[%s325 + $0x290] sm:$0xf]
        %v548 = vld [vmem:[%s325 + $0x294] sm:$0xf]
        %v549 = vld [vmem:[%s325 + $0x298] sm:$0xf]
        %v550 = vld [vmem:[%s325 + $0x29c] sm:$0xf]
        %v551 = vld [vmem:[%s325 + $0x2a0] sm:$0xf]
        %v552 = vld [vmem:[%s325 + $0x2a4] sm:$0xf]
        %v553 = vld [vmem:[%s325 + $0x2a8] sm:$0xf]
        %v554 = vld [vmem:[%s325 + $0x2ac] sm:$0xf]
        %v555 = vld [vmem:[%s325 + $0x2b0] sm:$0xf]
        %v556 = vld [vmem:[%s325 + $0x2b4] sm:$0xf]
        %v557 = vld [vmem:[%s325 + $0x2b8] sm:$0xf]
        %v558 = vld [vmem:[%s325 + $0x2bc] sm:$0xf]
        %v559 = vld [vmem:[%s325 + $0x2c0] sm:$0xf]
        %v560 = vld [vmem:[%s325 + $0x2c4] sm:$0xf]
        %v561 = vld [vmem:[%s325 + $0x2c8] sm:$0xf]
        %v562 = vld [vmem:[%s325 + $0x2cc] sm:$0xf]
        %v563 = vld [vmem:[%s325 + $0x2d0] sm:$0xf]
        %v564 = vld [vmem:[%s325 + $0x2d4] sm:$0xf]
        %v565 = vld [vmem:[%s325 + $0x2d8] sm:$0xf]
        %v566 = vld [vmem:[%s325 + $0x2dc] sm:$0xf]
        %v567 = vld [vmem:[%s325 + $0x2e0] sm:$0xf]
        %v568 = vld [vmem:[%s325 + $0x2e4] sm:$0xf]
        %v569 = vld [vmem:[%s325 + $0x2e8] sm:$0xf]
        %v570 = vld [vmem:[%s325 + $0x2ec] sm:$0xf]
        %v571 = vld [vmem:[%s325 + $0x2f0] sm:$0xf]
        %v572 = vld [vmem:[%s325 + $0x2f4] sm:$0xf]
        %v573 = vld [vmem:[%s325 + $0x2f8] sm:$0xf]
        %v574 = vld [vmem:[%s325 + $0x2fc] sm:$0xf]
        %v575 = vld [vmem:[%s325 + $0x300] sm:$0xf]
        %v576 = vld [vmem:[%s325 + $0x304] sm:$0xf]
        %v577 = vld [vmem:[%s325 + $0x308] sm:$0xf]
        %v578 = vld [vmem:[%s325 + $0x30c] sm:$0xf]
        %v579 = vld [vmem:[%s325 + $0x310] sm:$0xf]
        %v580 = vld [vmem:[%s325 + $0x314] sm:$0xf]
        %v581 = vld [vmem:[%s325 + $0x318] sm:$0xf]
        %v582 = vld [vmem:[%s325 + $0x31c] sm:$0xf]
        %vm631 = vcmask 1041408
        %vm632 = vcmask 1045508
        %vm633 = vmor %vm631, %vm632
        %v634 = vrot.slane %v444, 6
        %v635 = vrot.slane %v634, 4
        %v636 = vrot.slane %v445, 6
        %v637 = vsel %vm633, %v635, %v636
        %v638 = vrot.slane %v636, 4
        %v639 = vrot.slane %v446, 6
        %v640 = vsel %vm633, %v638, %v639
        %v641 = vrot.slane %v449, 6
        %v642 = vrot.slane %v641, 4
        %v643 = vrot.slane %v450, 6
        %v644 = vsel %vm633, %v642, %v643
        %v645 = vrot.slane %v643, 4
        %v646 = vrot.slane %v451, 6
        %v647 = vsel %vm633, %v645, %v646
        %v648 = vrot.slane %v454, 6
        %v649 = vrot.slane %v648, 4
        %v650 = vrot.slane %v455, 6
        %v651 = vsel %vm633, %v649, %v650
        %v652 = vrot.slane %v650, 4
        %v653 = vrot.slane %v456, 6
        %v654 = vsel %vm633, %v652, %v653
        %v655 = vrot.slane %v459, 6
        %v656 = vrot.slane %v655, 4
        %v657 = vrot.slane %v460, 6
        %v658 = vsel %vm633, %v656, %v657
        %v659 = vrot.slane %v657, 4
        %v660 = vrot.slane %v461, 6
        %v661 = vsel %vm633, %v659, %v660
        %v662 = vrot.slane %v464, 6
        %v663 = vrot.slane %v662, 4
        %v664 = vrot.slane %v465, 6
        %v665 = vsel %vm633, %v663, %v664
        %v666 = vrot.slane %v664, 4
        %v667 = vrot.slane %v466, 6
        %v668 = vsel %vm633, %v666, %v667
        %v669 = vrot.slane %v469, 6
        %v670 = vrot.slane %v669, 4
        %v671 = vrot.slane %v470, 6
        %v672 = vsel %vm633, %v670, %v671
        %v673 = vrot.slane %v671, 4
        %v674 = vrot.slane %v471, 6
        %v675 = vsel %vm633, %v673, %v674
        %v676 = vrot.slane %v474, 6
        %v677 = vrot.slane %v676, 4
        %v678 = vrot.slane %v475, 6
        %v679 = vsel %vm633, %v677, %v678
        %v680 = vrot.slane %v678, 4
        %v681 = vrot.slane %v476, 6
        %v682 = vsel %vm633, %v680, %v681
        %v683 = vrot.slane %v479, 6
        %v684 = vrot.slane %v683, 4
        %v685 = vrot.slane %v480, 6
        %v686 = vsel %vm633, %v684, %v685
        %v687 = vrot.slane %v685, 4
        %v688 = vrot.slane %v481, 6
        %v689 = vsel %vm633, %v687, %v688
        %v690 = vrot.slane %v484, 6
        %v691 = vrot.slane %v690, 4
        %v692 = vrot.slane %v485, 6
        %v693 = vsel %vm633, %v691, %v692
        %v694 = vrot.slane %v692, 4
        %v695 = vrot.slane %v486, 6
        %v696 = vsel %vm633, %v694, %v695
        %v697 = vrot.slane %v489, 6
        %v698 = vrot.slane %v697, 4
        %v699 = vrot.slane %v490, 6
        %v700 = vsel %vm633, %v698, %v699
        %v701 = vrot.slane %v699, 4
        %v702 = vrot.slane %v491, 6
        %v703 = vsel %vm633, %v701, %v702
        %v704 = vrot.slane %v494, 6
        %v705 = vrot.slane %v704, 4
        %v706 = vrot.slane %v495, 6
        %v707 = vsel %vm633, %v705, %v706
        %v708 = vrot.slane %v706, 4
        %v709 = vrot.slane %v496, 6
        %v710 = vsel %vm633, %v708, %v709
        %v711 = vrot.slane %v499, 6
        %v712 = vrot.slane %v711, 4
        %v713 = vrot.slane %v500, 6
        %v714 = vsel %vm633, %v712, %v713
        %v715 = vrot.slane %v713, 4
        %v716 = vrot.slane %v501, 6
        %v717 = vsel %vm633, %v715, %v716
        %v718 = vrot.slane %v504, 6
        %v719 = vrot.slane %v718, 4
        %v720 = vrot.slane %v505, 6
        %v721 = vsel %vm633, %v719, %v720
        %v722 = vrot.slane %v720, 4
        %v723 = vrot.slane %v506, 6
        %v724 = vsel %vm633, %v722, %v723
        %v725 = vrot.slane %v509, 6
        %v726 = vrot.slane %v725, 4
        %v727 = vrot.slane %v510, 6
        %v728 = vsel %vm633, %v726, %v727
        %v729 = vrot.slane %v727, 4
        %v730 = vrot.slane %v511, 6
        %v731 = vsel %vm633, %v729, %v730
        %v732 = vrot.slane %v514, 6
        %v733 = vrot.slane %v732, 4
        %v734 = vrot.slane %v515, 6
        %v735 = vsel %vm633, %v733, %v734
        %v736 = vrot.slane %v734, 4
        %v737 = vrot.slane %v516, 6
        %v738 = vsel %vm633, %v736, %v737
        %v739 = vrot.slane %v519, 6
        %v740 = vrot.slane %v739, 4
        %v741 = vrot.slane %v520, 6
        %v742 = vsel %vm633, %v740, %v741
        %v743 = vrot.slane %v741, 4
        %v744 = vrot.slane %v521, 6
        %v745 = vsel %vm633, %v743, %v744
        %v746 = vunpack.c.l.b16 %v637
        %v747 = vunpack.c.l.b16 %v640
        %v748 = vunpack.c.l.b16 %v644
        %v749 = vunpack.c.l.b16 %v647
        %v750 = vunpack.c.l.b16 %v651
        %v751 = vunpack.c.l.b16 %v654
        %v752 = vunpack.c.l.b16 %v658
        %v753 = vunpack.c.l.b16 %v661
        %v754 = vunpack.c.l.b16 %v665
        %v755 = vunpack.c.l.b16 %v668
        %v756 = vunpack.c.l.b16 %v672
        %v757 = vunpack.c.l.b16 %v675
        %v758 = vunpack.c.l.b16 %v679
        %v759 = vunpack.c.l.b16 %v682
        %v760 = vunpack.c.l.b16 %v686
        %v761 = vunpack.c.l.b16 %v689
        %v762 = vunpack.c.l.b16 %v693
        %v763 = vunpack.c.l.b16 %v696
        %v764 = vunpack.c.l.b16 %v700
        %v765 = vunpack.c.l.b16 %v703
        %v766 = vunpack.c.l.b16 %v707
        %v767 = vunpack.c.l.b16 %v710
        %v768 = vunpack.c.l.b16 %v714
        %v769 = vunpack.c.l.b16 %v717
        %v770 = vunpack.c.l.b16 %v721
        %v771 = vunpack.c.l.b16 %v724
        %v772 = vunpack.c.l.b16 %v728
        %v773 = vunpack.c.l.b16 %v731
        %v774 = vunpack.c.l.b16 %v735
        %v775 = vunpack.c.l.b16 %v738
        %v776 = vunpack.c.l.b16 %v742
        %v777 = vunpack.c.l.b16 %v745
        %v778 = vpack.c.b16 %v747, %v746
        %v779 = vpack.c.b16 %v749, %v748
        %v780 = vpack.c.b16 %v751, %v750
        %v781 = vpack.c.b16 %v753, %v752
        %v782 = vpack.c.b16 %v755, %v754
        %v783 = vpack.c.b16 %v757, %v756
        %v784 = vpack.c.b16 %v759, %v758
        %v785 = vpack.c.b16 %v761, %v760
        %v786 = vpack.c.b16 %v763, %v762
        %v787 = vpack.c.b16 %v765, %v764
        %v788 = vpack.c.b16 %v767, %v766
        %v789 = vpack.c.b16 %v769, %v768
        %v790 = vpack.c.b16 %v771, %v770
        %v791 = vpack.c.b16 %v773, %v772
        %v792 = vpack.c.b16 %v775, %v774
        %v793 = vpack.c.b16 %v777, %v776
        %810 = vmatpush.bf16.msra.mxu0 %v785
        %811 = vmatpush.bf16.msra.mxu0 %v784
        %812 = vmatpush.bf16.msra.mxu0 %v783
        %813 = vmatpush.bf16.msra.mxu0 %v782
        %814 = vmatpush.bf16.msra.mxu0 %v781
        %815 = vmatpush.bf16.msra.mxu0 %v780
        %816 = vmatpush.bf16.msra.mxu0 %v779
        %817 = vmatpush.bf16.msra.mxu0 %v778
        %818 = vmatmul.bf16.gmra.mxu0 1065369472
        %v819 = vpop.f32.mrf.mxu0
        %v820 = vadd.f32 0.0, %v819
        %v821 = vpop.f32.mrf.mxu0
        %822 = vdwg.mxu0
        %823 = vmatpush.bf16.msra.mxu0 %v793
        %824 = vmatpush.bf16.msra.mxu0 %v792
        %825 = vmatpush.bf16.msra.mxu0 %v791
        %826 = vmatpush.bf16.msra.mxu0 %v790
        %827 = vmatpush.bf16.msra.mxu0 %v789
        %828 = vmatpush.bf16.msra.mxu0 %v788
        %829 = vmatpush.bf16.msra.mxu0 %v787
        %830 = vmatpush.bf16.msra.mxu0 %v786
        %831 = vmatmul.bf16.gmra.mxu0 1065369472
        %v832 = vpop.f32.mrf.mxu0
        %v833 = vadd.f32 %v820, %v832
        %v834 = vpop.f32.mrf.mxu0
        %835 = vdwg.mxu0
        %v836 = vmul.f32 %v833, 0.00390625
        %v837 = vpack.c.bf16 %v836, %v836
        %v838 = vld [vmem:[#allocation5] sm:$0xf]
        %v839 = vld [vmem:[#allocation5 + $0x4] sm:$0xf]
        %v840 = vld [vmem:[#allocation5 + $0x8] sm:$0xf]
        %v841 = vld [vmem:[#allocation5 + $0xc] sm:$0xf]
        %v842 = vld [vmem:[#allocation5 + $0x10] sm:$0xf]
        %v843 = vld [vmem:[#allocation5 + $0x14] sm:$0xf]
        %v844 = vld [vmem:[#allocation5 + $0x18] sm:$0xf]
        %v845 = vld [vmem:[#allocation5 + $0x1c] sm:$0xf]
        %v846 = vld [vmem:[#allocation5 + $0x20] sm:$0xf]
        %v847 = vld [vmem:[#allocation5 + $0x24] sm:$0xf]
        %v848 = vld [vmem:[#allocation5 + $0x28] sm:$0xf]
        %v849 = vld [vmem:[#allocation5 + $0x2c] sm:$0xf]
        %v850 = vld [vmem:[#allocation5 + $0x30] sm:$0xf]
        %v851 = vld [vmem:[#allocation5 + $0x34] sm:$0xf]
        %v852 = vld [vmem:[#allocation5 + $0x38] sm:$0xf]
        %v853 = vld [vmem:[#allocation5 + $0x3c] sm:$0xf]
        %v854 = vld [vmem:[#allocation7] sm:$0xf]
        %v855 = vld [vmem:[#allocation7 + $0x4] sm:$0xf]
        %v856 = vld [vmem:[#allocation7 + $0x8] sm:$0xf]
        %v857 = vld [vmem:[#allocation7 + $0xc] sm:$0xf]
        %v858 = vld [vmem:[#allocation7 + $0x10] sm:$0xf]
        %v859 = vld [vmem:[#allocation7 + $0x14] sm:$0xf]
        %v860 = vld [vmem:[#allocation7 + $0x18] sm:$0xf]
        %v861 = vld [vmem:[#allocation7 + $0x1c] sm:$0xf]
        %v862 = vld [vmem:[#allocation7 + $0x20] sm:$0xf]
        %v863 = vld [vmem:[#allocation7 + $0x24] sm:$0xf]
        %v864 = vld [vmem:[#allocation7 + $0x28] sm:$0xf]
        %v865 = vld [vmem:[#allocation7 + $0x2c] sm:$0xf]
        %v866 = vld [vmem:[#allocation7 + $0x30] sm:$0xf]
        %v867 = vld [vmem:[#allocation7 + $0x34] sm:$0xf]
        %v868 = vld [vmem:[#allocation7 + $0x38] sm:$0xf]
        %v869 = vld [vmem:[#allocation7 + $0x3c] sm:$0xf]
        %v870 = vld [vmem:[%s6] sm:$0x1]
        %v887 = vunpack.c.l.b16 %v838
        %v888 = vunpack.c.l.b16 %v839
        %v889 = vunpack.c.l.b16 %v840
        %v890 = vunpack.c.l.b16 %v841
        %v891 = vunpack.c.l.b16 %v842
        %v892 = vunpack.c.l.b16 %v843
        %v893 = vunpack.c.l.b16 %v844
        %v894 = vunpack.c.l.b16 %v845
        %v895 = vunpack.c.l.b16 %v846
        %v896 = vunpack.c.l.b16 %v847
        %v897 = vunpack.c.l.b16 %v848
        %v898 = vunpack.c.l.b16 %v849
        %v899 = vunpack.c.l.b16 %v850
        %v900 = vunpack.c.l.b16 %v851
        %v901 = vunpack.c.l.b16 %v852
        %v902 = vunpack.c.l.b16 %v853
        %v903 = vpack.c.b16 %v888, %v887
        %v904 = vpack.c.b16 %v890, %v889
        %v905 = vpack.c.b16 %v892, %v891
        %v906 = vpack.c.b16 %v894, %v893
        %v907 = vpack.c.b16 %v896, %v895
        %v908 = vpack.c.b16 %v898, %v897
        %v909 = vpack.c.b16 %v900, %v899
        %v910 = vpack.c.b16 %v902, %v901
        %919 = vmatpush.bf16.msra.mxu0 %v910
        %920 = vmatpush.bf16.msra.mxu0 %v909
        %921 = vmatpush.bf16.msra.mxu0 %v908
        %922 = vmatpush.bf16.msra.mxu0 %v907
        %923 = vmatpush.bf16.msra.mxu0 %v906
        %924 = vmatpush.bf16.msra.mxu0 %v905
        %925 = vmatpush.bf16.msra.mxu0 %v904
        %926 = vmatpush.bf16.msra.mxu0 %v903
        %927 = vmatmul.bf16.gmra.mxu0 %v837
        %v928 = vpop.f32.mrf.mxu0
        %v929 = vadd.f32 %v870, %v928
        %v930 = vpop.f32.mrf.mxu0
        %931 = vdwg.mxu0
        %v932 = vperm.slane %v929, 0
        %v949 = vunpack.c.l.b16 %v854
        %v950 = vunpack.c.l.b16 %v855
        %v951 = vunpack.c.l.b16 %v856
        %v952 = vunpack.c.l.b16 %v857
        %v953 = vunpack.c.l.b16 %v858
        %v954 = vunpack.c.l.b16 %v859
        %v955 = vunpack.c.l.b16 %v860
        %v956 = vunpack.c.l.b16 %v861
        %v957 = vunpack.c.l.b16 %v862
        %v958 = vunpack.c.l.b16 %v863
        %v959 = vunpack.c.l.b16 %v864
        %v960 = vunpack.c.l.b16 %v865
        %v961 = vunpack.c.l.b16 %v866
        %v962 = vunpack.c.l.b16 %v867
        %v963 = vunpack.c.l.b16 %v868
        %v964 = vunpack.c.l.b16 %v869
        %v965 = vpack.c.b16 %v950, %v949
        %v966 = vpack.c.b16 %v952, %v951
        %v967 = vpack.c.b16 %v954, %v953
        %v968 = vpack.c.b16 %v956, %v955
        %v969 = vpack.c.b16 %v958, %v957
        %v970 = vpack.c.b16 %v960, %v959
        %v971 = vpack.c.b16 %v962, %v961
        %v972 = vpack.c.b16 %v964, %v963
        %981 = vmatpush.bf16.msra.mxu0 %v972
        %982 = vmatpush.bf16.msra.mxu0 %v971
        %983 = vmatpush.bf16.msra.mxu0 %v970
        %984 = vmatpush.bf16.msra.mxu0 %v969
        %985 = vmatpush.bf16.msra.mxu0 %v968
        %986 = vmatpush.bf16.msra.mxu0 %v967
        %987 = vmatpush.bf16.msra.mxu0 %v966
        %988 = vmatpush.bf16.msra.mxu0 %v965
        %989 = vmatmul.bf16.gmra.mxu0 %v778
        %v990 = vpop.f32.mrf.mxu0
        %v991 = vadd.f32 %v932, %v990
        %v992 = vpop.f32.mrf.mxu0
        %v993 = vadd.f32 %v932, %v992
        %994 = vmatmul.bf16.gmra.mxu0 %v779
        %v995 = vpop.f32.mrf.mxu0
        %v996 = vadd.f32 %v932, %v995
        %v997 = vpop.f32.mrf.mxu0
        %v998 = vadd.f32 %v932, %v997
        %999 = vmatmul.bf16.gmra.mxu0 %v780
        %v1000 = vpop.f32.mrf.mxu0
        %v1001 = vadd.f32 %v932, %v1000
        %v1002 = vpop.f32.mrf.mxu0
        %v1003 = vadd.f32 %v932, %v1002
        %1004 = vmatmul.bf16.gmra.mxu0 %v781
        %v1005 = vpop.f32.mrf.mxu0
        %v1006 = vadd.f32 %v932, %v1005
        %v1007 = vpop.f32.mrf.mxu0
        %v1008 = vadd.f32 %v932, %v1007
        %1009 = vmatmul.bf16.gmra.mxu0 %v782
        %v1010 = vpop.f32.mrf.mxu0
        %v1011 = vadd.f32 %v932, %v1010
        %v1012 = vpop.f32.mrf.mxu0
        %v1013 = vadd.f32 %v932, %v1012
        %1014 = vmatmul.bf16.gmra.mxu0 %v783
        %v1015 = vpop.f32.mrf.mxu0
        %v1016 = vadd.f32 %v932, %v1015
        %v1017 = vpop.f32.mrf.mxu0
        %v1018 = vadd.f32 %v932, %v1017
        %1019 = vmatmul.bf16.gmra.mxu0 %v784
        %v1020 = vpop.f32.mrf.mxu0
        %v1021 = vadd.f32 %v932, %v1020
        %v1022 = vpop.f32.mrf.mxu0
        %v1023 = vadd.f32 %v932, %v1022
        %1024 = vmatmul.bf16.gmra.mxu0 %v785
        %v1025 = vpop.f32.mrf.mxu0
        %v1026 = vadd.f32 %v932, %v1025
        %v1027 = vpop.f32.mrf.mxu0
        %v1028 = vadd.f32 %v932, %v1027
        %1029 = vmatmul.bf16.gmra.mxu0 %v786
        %v1030 = vpop.f32.mrf.mxu0
        %v1031 = vadd.f32 %v932, %v1030
        %v1032 = vpop.f32.mrf.mxu0
        %v1033 = vadd.f32 %v932, %v1032
        %1034 = vmatmul.bf16.gmra.mxu0 %v787
        %v1035 = vpop.f32.mrf.mxu0
        %v1036 = vadd.f32 %v932, %v1035
        %v1037 = vpop.f32.mrf.mxu0
        %v1038 = vadd.f32 %v932, %v1037
        %1039 = vmatmul.bf16.gmra.mxu0 %v788
        %v1040 = vpop.f32.mrf.mxu0
        %v1041 = vadd.f32 %v932, %v1040
        %v1042 = vpop.f32.mrf.mxu0
        %v1043 = vadd.f32 %v932, %v1042
        %1044 = vmatmul.bf16.gmra.mxu0 %v789
        %v1045 = vpop.f32.mrf.mxu0
        %v1046 = vadd.f32 %v932, %v1045
        %v1047 = vpop.f32.mrf.mxu0
        %v1048 = vadd.f32 %v932, %v1047
        %1049 = vmatmul.bf16.gmra.mxu0 %v790
        %v1050 = vpop.f32.mrf.mxu0
        %v1051 = vadd.f32 %v932, %v1050
        %v1052 = vpop.f32.mrf.mxu0
        %v1053 = vadd.f32 %v932, %v1052
        %1054 = vmatmul.bf16.gmra.mxu0 %v791
        %v1055 = vpop.f32.mrf.mxu0
        %v1056 = vadd.f32 %v932, %v1055
        %v1057 = vpop.f32.mrf.mxu0
        %v1058 = vadd.f32 %v932, %v1057
        %1059 = vmatmul.bf16.gmra.mxu0 %v792
        %v1060 = vpop.f32.mrf.mxu0
        %v1061 = vadd.f32 %v932, %v1060
        %v1062 = vpop.f32.mrf.mxu0
        %v1063 = vadd.f32 %v932, %v1062
        %1064 = vmatmul.bf16.gmra.mxu0 %v793
        %v1065 = vpop.f32.mrf.mxu0
        %v1066 = vadd.f32 %v932, %v1065
        %v1067 = vpop.f32.mrf.mxu0
        %v1068 = vadd.f32 %v932, %v1067
        %1069 = vdwg.mxu0
        %v1070 = vld [vmem:[#allocation8] sm:$0xf]
        %v1071 = vld [vmem:[#allocation8 + $0x4] sm:$0xf]
        %v1072 = vld [vmem:[#allocation8 + $0x8] sm:$0xf]
        %v1073 = vld [vmem:[#allocation8 + $0xc] sm:$0xf]
        %v1074 = vld [vmem:[#allocation8 + $0x10] sm:$0xf]
        %v1075 = vld [vmem:[#allocation8 + $0x14] sm:$0xf]
        %v1076 = vld [vmem:[#allocation8 + $0x18] sm:$0xf]
        %v1077 = vld [vmem:[#allocation8 + $0x1c] sm:$0xf]
        %v1078 = vld [vmem:[#allocation8 + $0x20] sm:$0xf]
        %v1079 = vld [vmem:[#allocation8 + $0x24] sm:$0xf]
        %v1080 = vld [vmem:[#allocation8 + $0x28] sm:$0xf]
        %v1081 = vld [vmem:[#allocation8 + $0x2c] sm:$0xf]
        %v1082 = vld [vmem:[#allocation8 + $0x30] sm:$0xf]
        %v1083 = vld [vmem:[#allocation8 + $0x34] sm:$0xf]
        %v1084 = vld [vmem:[#allocation8 + $0x38] sm:$0xf]
        %v1085 = vld [vmem:[#allocation8 + $0x3c] sm:$0xf]
        %v1094 = vunpack.c.l.b16 %v424
        %v1095 = vunpack.c.l.b16 %v425
        %v1096 = vunpack.c.l.b16 %v429
        %v1097 = vunpack.c.l.b16 %v430
        %v1098 = vunpack.c.l.b16 %v434
        %v1099 = vunpack.c.l.b16 %v435
        %v1100 = vunpack.c.l.b16 %v439
        %v1101 = vunpack.c.l.b16 %v440
        %v1102 = vunpack.c.l.b16 %v444
        %v1103 = vunpack.c.l.b16 %v445
        %v1104 = vunpack.c.l.b16 %v449
        %v1105 = vunpack.c.l.b16 %v450
        %v1106 = vunpack.c.l.b16 %v454
        %v1107 = vunpack.c.l.b16 %v455
        %v1108 = vunpack.c.l.b16 %v459
        %v1109 = vunpack.c.l.b16 %v460
        %v1110 = vunpack.c.l.b16 %v464
        %v1111 = vunpack.c.l.b16 %v465
        %v1112 = vunpack.c.l.b16 %v469
        %v1113 = vunpack.c.l.b16 %v470
        %v1114 = vunpack.c.l.b16 %v474
        %v1115 = vunpack.c.l.b16 %v475
        %v1116 = vunpack.c.l.b16 %v479
        %v1117 = vunpack.c.l.b16 %v480
        %v1118 = vunpack.c.l.b16 %v484
        %v1119 = vunpack.c.l.b16 %v485
        %v1120 = vunpack.c.l.b16 %v489
        %v1121 = vunpack.c.l.b16 %v490
        %v1122 = vunpack.c.l.b16 %v494
        %v1123 = vunpack.c.l.b16 %v495
        %v1124 = vunpack.c.l.b16 %v499
        %v1125 = vunpack.c.l.b16 %v500
        %v1126 = vpack.c.b16 %v1095, %v1094
        %v1127 = vpack.c.b16 %v1097, %v1096
        %v1128 = vpack.c.b16 %v1099, %v1098
        %v1129 = vpack.c.b16 %v1101, %v1100
        %v1130 = vpack.c.b16 %v1103, %v1102
        %v1131 = vpack.c.b16 %v1105, %v1104
        %v1132 = vpack.c.b16 %v1107, %v1106
        %v1133 = vpack.c.b16 %v1109, %v1108
        %v1134 = vpack.c.b16 %v1111, %v1110
        %v1135 = vpack.c.b16 %v1113, %v1112
        %v1136 = vpack.c.b16 %v1115, %v1114
        %v1137 = vpack.c.b16 %v1117, %v1116
        %v1138 = vpack.c.b16 %v1119, %v1118
        %v1139 = vpack.c.b16 %v1121, %v1120
        %v1140 = vpack.c.b16 %v1123, %v1122
        %v1141 = vpack.c.b16 %v1125, %v1124
        %v1174 = vunpack.c.l.b16 %v1070
        %v1175 = vunpack.c.l.b16 %v1071
        %v1176 = vunpack.c.l.b16 %v1072
        %v1177 = vunpack.c.l.b16 %v1073
        %v1178 = vunpack.c.l.b16 %v1074
        %v1179 = vunpack.c.l.b16 %v1075
        %v1180 = vunpack.c.l.b16 %v1076
        %v1181 = vunpack.c.l.b16 %v1077
        %v1182 = vunpack.c.l.b16 %v1078
        %v1183 = vunpack.c.l.b16 %v1079
        %v1184 = vunpack.c.l.b16 %v1080
        %v1185 = vunpack.c.l.b16 %v1081
        %v1186 = vunpack.c.l.b16 %v1082
        %v1187 = vunpack.c.l.b16 %v1083
        %v1188 = vunpack.c.l.b16 %v1084
        %v1189 = vunpack.c.l.b16 %v1085
        %v1190 = vpack.c.b16 %v1175, %v1174
        %v1191 = vpack.c.b16 %v1177, %v1176
        %v1192 = vpack.c.b16 %v1179, %v1178
        %v1193 = vpack.c.b16 %v1181, %v1180
        %v1194 = vpack.c.b16 %v1183, %v1182
        %v1195 = vpack.c.b16 %v1185, %v1184
        %v1196 = vpack.c.b16 %v1187, %v1186
        %v1197 = vpack.c.b16 %v1189, %v1188
        %1206 = vmatpush.bf16.msra.mxu0 %v1197
        %1207 = vmatpush.bf16.msra.mxu0 %v1196
        %1208 = vmatpush.bf16.msra.mxu0 %v1195
        %1209 = vmatpush.bf16.msra.mxu0 %v1194
        %1210 = vmatpush.bf16.msra.mxu0 %v1193
        %1211 = vmatpush.bf16.msra.mxu0 %v1192
        %1212 = vmatpush.bf16.msra.mxu0 %v1191
        %1213 = vmatpush.bf16.msra.mxu0 %v1190
        %1214 = vmatmul.bf16.gmra.mxu0 %v1126
        %v1215 = vpop.f32.mrf.mxu0
        %v1216 = vadd.f32 0.0, %v1215
        %v1217 = vpop.f32.mrf.mxu0
        %v1218 = vadd.f32 0.0, %v1217
        %1219 = vmatmul.bf16.gmra.mxu0 %v1127
        %v1220 = vpop.f32.mrf.mxu0
        %v1221 = vadd.f32 0.0, %v1220
        %v1222 = vpop.f32.mrf.mxu0
        %v1223 = vadd.f32 0.0, %v1222
        %1224 = vmatmul.bf16.gmra.mxu0 %v1128
        %v1225 = vpop.f32.mrf.mxu0
        %v1226 = vadd.f32 0.0, %v1225
        %v1227 = vpop.f32.mrf.mxu0
        %v1228 = vadd.f32 0.0, %v1227
        %1229 = vmatmul.bf16.gmra.mxu0 %v1129
        %v1230 = vpop.f32.mrf.mxu0
        %v1231 = vadd.f32 0.0, %v1230
        %v1232 = vpop.f32.mrf.mxu0
        %v1233 = vadd.f32 0.0, %v1232
        %1234 = vmatmul.bf16.gmra.mxu0 %v1130
        %v1235 = vpop.f32.mrf.mxu0
        %v1236 = vadd.f32 0.0, %v1235
        %v1237 = vpop.f32.mrf.mxu0
        %v1238 = vadd.f32 0.0, %v1237
        %1239 = vmatmul.bf16.gmra.mxu0 %v1131
        %v1240 = vpop.f32.mrf.mxu0
        %v1241 = vadd.f32 0.0, %v1240
        %v1242 = vpop.f32.mrf.mxu0
        %v1243 = vadd.f32 0.0, %v1242
        %1244 = vmatmul.bf16.gmra.mxu0 %v1132
        %v1245 = vpop.f32.mrf.mxu0
        %v1246 = vadd.f32 0.0, %v1245
        %v1247 = vpop.f32.mrf.mxu0
        %v1248 = vadd.f32 0.0, %v1247
        %1249 = vmatmul.bf16.gmra.mxu0 %v1133
        %v1250 = vpop.f32.mrf.mxu0
        %v1251 = vadd.f32 0.0, %v1250
        %v1252 = vpop.f32.mrf.mxu0
        %v1253 = vadd.f32 0.0, %v1252
        %1254 = vmatmul.bf16.gmra.mxu0 %v1134
        %v1255 = vpop.f32.mrf.mxu0
        %v1256 = vadd.f32 0.0, %v1255
        %v1257 = vpop.f32.mrf.mxu0
        %v1258 = vadd.f32 0.0, %v1257
        %1259 = vmatmul.bf16.gmra.mxu0 %v1135
        %v1260 = vpop.f32.mrf.mxu0
        %v1261 = vadd.f32 0.0, %v1260
        %v1262 = vpop.f32.mrf.mxu0
        %v1263 = vadd.f32 0.0, %v1262
        %1264 = vmatmul.bf16.gmra.mxu0 %v1136
        %v1265 = vpop.f32.mrf.mxu0
        %v1266 = vadd.f32 0.0, %v1265
        %v1267 = vpop.f32.mrf.mxu0
        %v1268 = vadd.f32 0.0, %v1267
        %1269 = vmatmul.bf16.gmra.mxu0 %v1137
        %v1270 = vpop.f32.mrf.mxu0
        %v1271 = vadd.f32 0.0, %v1270
        %v1272 = vpop.f32.mrf.mxu0
        %v1273 = vadd.f32 0.0, %v1272
        %1274 = vmatmul.bf16.gmra.mxu0 %v1138
        %v1275 = vpop.f32.mrf.mxu0
        %v1276 = vadd.f32 0.0, %v1275
        %v1277 = vpop.f32.mrf.mxu0
        %v1278 = vadd.f32 0.0, %v1277
        %1279 = vmatmul.bf16.gmra.mxu0 %v1139
        %v1280 = vpop.f32.mrf.mxu0
        %v1281 = vadd.f32 0.0, %v1280
        %v1282 = vpop.f32.mrf.mxu0
        %v1283 = vadd.f32 0.0, %v1282
        %1284 = vmatmul.bf16.gmra.mxu0 %v1140
        %v1285 = vpop.f32.mrf.mxu0
        %v1286 = vadd.f32 0.0, %v1285
        %v1287 = vpop.f32.mrf.mxu0
        %v1288 = vadd.f32 0.0, %v1287
        %1289 = vmatmul.bf16.gmra.mxu0 %v1141
        %v1290 = vpop.f32.mrf.mxu0
        %v1291 = vadd.f32 0.0, %v1290
        %v1292 = vpop.f32.mrf.mxu0
        %v1293 = vadd.f32 0.0, %v1292
        %1294 = vdwg.mxu0
        %v1295 = vadd.f32 %v991, %v1216
        %v1296 = vadd.f32 %v993, %v1218
        %v1297 = vadd.f32 %v996, %v1221
        %v1298 = vadd.f32 %v998, %v1223
        %v1299 = vadd.f32 %v1001, %v1226
        %v1300 = vadd.f32 %v1003, %v1228
        %v1301 = vadd.f32 %v1006, %v1231
        %v1302 = vadd.f32 %v1008, %v1233
        %v1303 = vadd.f32 %v1011, %v1236
        %v1304 = vadd.f32 %v1013, %v1238
        %v1305 = vadd.f32 %v1016, %v1241
        %v1306 = vadd.f32 %v1018, %v1243
        %v1307 = vadd.f32 %v1021, %v1246
        %v1308 = vadd.f32 %v1023, %v1248
        %v1309 = vadd.f32 %v1026, %v1251
        %v1310 = vadd.f32 %v1028, %v1253
        %v1311 = vadd.f32 %v1031, %v1256
        %v1312 = vadd.f32 %v1033, %v1258
        %v1313 = vadd.f32 %v1036, %v1261
        %v1314 = vadd.f32 %v1038, %v1263
        %v1315 = vadd.f32 %v1041, %v1266
        %v1316 = vadd.f32 %v1043, %v1268
        %v1317 = vadd.f32 %v1046, %v1271
        %v1318 = vadd.f32 %v1048, %v1273
        %v1319 = vadd.f32 %v1051, %v1276
        %v1320 = vadd.f32 %v1053, %v1278
        %v1321 = vadd.f32 %v1056, %v1281
        %v1322 = vadd.f32 %v1058, %v1283
        %v1323 = vadd.f32 %v1061, %v1286
        %v1324 = vadd.f32 %v1063, %v1288
        %v1325 = vadd.f32 %v1066, %v1291
        %v1326 = vadd.f32 %v1068, %v1293
        %v1331 = vrot.slane %v424, 6
        %v1332 = vrot.slane %v1331, 4
        %v1333 = vrot.slane %v425, 6
        %v1334 = vsel %vm633, %v1332, %v1333
        %v1335 = vrot.slane %v1333, 4
        %v1336 = vrot.slane %v426, 6
        %v1337 = vsel %vm633, %v1335, %v1336
        %v1338 = vrot.slane %v429, 6
        %v1339 = vrot.slane %v1338, 4
        %v1340 = vrot.slane %v430, 6
        %v1341 = vsel %vm633, %v1339, %v1340
        %v1342 = vrot.slane %v1340, 4
        %v1343 = vrot.slane %v431, 6
        %v1344 = vsel %vm633, %v1342, %v1343
        %v1345 = vrot.slane %v434, 6
        %v1346 = vrot.slane %v1345, 4
        %v1347 = vrot.slane %v435, 6
        %v1348 = vsel %vm633, %v1346, %v1347
        %v1349 = vrot.slane %v1347, 4
        %v1350 = vrot.slane %v436, 6
        %v1351 = vsel %vm633, %v1349, %v1350
        %v1352 = vrot.slane %v439, 6
        %v1353 = vrot.slane %v1352, 4
        %v1354 = vrot.slane %v440, 6
        %v1355 = vsel %vm633, %v1353, %v1354
        %v1356 = vrot.slane %v1354, 4
        %v1357 = vrot.slane %v441, 6
        %v1358 = vsel %vm633, %v1356, %v1357
        %s1359 = scalar_lea.vmem [#allocation8], 64
        %v1360 = vld [vmem:[%s1359] sm:$0xf]
        %v1361 = vld [vmem:[%s1359 + $0x4] sm:$0xf]
        %v1362 = vld [vmem:[%s1359 + $0x8] sm:$0xf]
        %v1363 = vld [vmem:[%s1359 + $0xc] sm:$0xf]
        %v1364 = vld [vmem:[%s1359 + $0x10] sm:$0xf]
        %v1365 = vld [vmem:[%s1359 + $0x14] sm:$0xf]
        %v1366 = vld [vmem:[%s1359 + $0x18] sm:$0xf]
        %v1367 = vld [vmem:[%s1359 + $0x1c] sm:$0xf]
        %v1368 = vld [vmem:[%s1359 + $0x20] sm:$0xf]
        %v1369 = vld [vmem:[%s1359 + $0x24] sm:$0xf]
        %v1370 = vld [vmem:[%s1359 + $0x28] sm:$0xf]
        %v1371 = vld [vmem:[%s1359 + $0x2c] sm:$0xf]
        %v1372 = vld [vmem:[%s1359 + $0x30] sm:$0xf]
        %v1373 = vld [vmem:[%s1359 + $0x34] sm:$0xf]
        %v1374 = vld [vmem:[%s1359 + $0x38] sm:$0xf]
        %v1375 = vld [vmem:[%s1359 + $0x3c] sm:$0xf]
        %v1376 = vunpack.c.l.b16 %v1334
        %v1377 = vunpack.c.l.b16 %v1337
        %v1378 = vunpack.c.l.b16 %v1341
        %v1379 = vunpack.c.l.b16 %v1344
        %v1380 = vunpack.c.l.b16 %v1348
        %v1381 = vunpack.c.l.b16 %v1351
        %v1382 = vunpack.c.l.b16 %v1355
        %v1383 = vunpack.c.l.b16 %v1358
        %v1384 = vpack.c.b16 %v1377, %v1376
        %v1385 = vpack.c.b16 %v1379, %v1378
        %v1386 = vpack.c.b16 %v1381, %v1380
        %v1387 = vpack.c.b16 %v1383, %v1382
        %v1408 = vunpack.c.l.b16 %v1360
        %v1409 = vunpack.c.l.b16 %v1361
        %v1410 = vunpack.c.l.b16 %v1362
        %v1411 = vunpack.c.l.b16 %v1363
        %v1412 = vunpack.c.l.b16 %v1364
        %v1413 = vunpack.c.l.b16 %v1365
        %v1414 = vunpack.c.l.b16 %v1366
        %v1415 = vunpack.c.l.b16 %v1367
        %v1416 = vunpack.c.l.b16 %v1368
        %v1417 = vunpack.c.l.b16 %v1369
        %v1418 = vunpack.c.l.b16 %v1370
        %v1419 = vunpack.c.l.b16 %v1371
        %v1420 = vunpack.c.l.b16 %v1372
        %v1421 = vunpack.c.l.b16 %v1373
        %v1422 = vunpack.c.l.b16 %v1374
        %v1423 = vunpack.c.l.b16 %v1375
        %v1424 = vpack.c.b16 %v1409, %v1408
        %v1425 = vpack.c.b16 %v1411, %v1410
        %v1426 = vpack.c.b16 %v1413, %v1412
        %v1427 = vpack.c.b16 %v1415, %v1414
        %v1428 = vpack.c.b16 %v1417, %v1416
        %v1429 = vpack.c.b16 %v1419, %v1418
        %v1430 = vpack.c.b16 %v1421, %v1420
        %v1431 = vpack.c.b16 %v1423, %v1422
        %1440 = vmatpush.bf16.msra.mxu0 %v1431
        %1441 = vmatpush.bf16.msra.mxu0 %v1430
        %1442 = vmatpush.bf16.msra.mxu0 %v1429
        %1443 = vmatpush.bf16.msra.mxu0 %v1428
        %1444 = vmatpush.bf16.msra.mxu0 %v1427
        %1445 = vmatpush.bf16.msra.mxu0 %v1426
        %1446 = vmatpush.bf16.msra.mxu0 %v1425
        %1447 = vmatpush.bf16.msra.mxu0 %v1424
        %1448 = vmatmul.bf16.gmra.mxu0 %v1384
        %v1449 = vpop.f32.mrf.mxu0
        %v1450 = vadd.f32 0.0, %v1449
        %v1451 = vpop.f32.mrf.mxu0
        %v1452 = vadd.f32 0.0, %v1451
        %1453 = vmatmul.bf16.gmra.mxu0 %v1385
        %v1454 = vpop.f32.mrf.mxu0
        %v1455 = vadd.f32 0.0, %v1454
        %v1456 = vpop.f32.mrf.mxu0
        %v1457 = vadd.f32 0.0, %v1456
        %1458 = vmatmul.bf16.gmra.mxu0 %v1386
        %v1459 = vpop.f32.mrf.mxu0
        %v1460 = vadd.f32 0.0, %v1459
        %v1461 = vpop.f32.mrf.mxu0
        %v1462 = vadd.f32 0.0, %v1461
        %1463 = vmatmul.bf16.gmra.mxu0 %v1387
        %v1464 = vpop.f32.mrf.mxu0
        %v1465 = vadd.f32 0.0, %v1464
        %v1466 = vpop.f32.mrf.mxu0
        %v1467 = vadd.f32 0.0, %v1466
        %1468 = vmatmul.bf16.gmra.mxu0 %v778
        %v1469 = vpop.f32.mrf.mxu0
        %v1470 = vadd.f32 0.0, %v1469
        %v1471 = vpop.f32.mrf.mxu0
        %v1472 = vadd.f32 0.0, %v1471
        %1473 = vmatmul.bf16.gmra.mxu0 %v779
        %v1474 = vpop.f32.mrf.mxu0
        %v1475 = vadd.f32 0.0, %v1474
        %v1476 = vpop.f32.mrf.mxu0
        %v1477 = vadd.f32 0.0, %v1476
        %1478 = vmatmul.bf16.gmra.mxu0 %v780
        %v1479 = vpop.f32.mrf.mxu0
        %v1480 = vadd.f32 0.0, %v1479
        %v1481 = vpop.f32.mrf.mxu0
        %v1482 = vadd.f32 0.0, %v1481
        %1483 = vmatmul.bf16.gmra.mxu0 %v781
        %v1484 = vpop.f32.mrf.mxu0
        %v1485 = vadd.f32 0.0, %v1484
        %v1486 = vpop.f32.mrf.mxu0
        %v1487 = vadd.f32 0.0, %v1486
        %1488 = vmatmul.bf16.gmra.mxu0 %v782
        %v1489 = vpop.f32.mrf.mxu0
        %v1490 = vadd.f32 0.0, %v1489
        %v1491 = vpop.f32.mrf.mxu0
        %v1492 = vadd.f32 0.0, %v1491
        %1493 = vmatmul.bf16.gmra.mxu0 %v783
        %v1494 = vpop.f32.mrf.mxu0
        %v1495 = vadd.f32 0.0, %v1494
        %v1496 = vpop.f32.mrf.mxu0
        %v1497 = vadd.f32 0.0, %v1496
        %1498 = vmatmul.bf16.gmra.mxu0 %v784
        %v1499 = vpop.f32.mrf.mxu0
        %v1500 = vadd.f32 0.0, %v1499
        %v1501 = vpop.f32.mrf.mxu0
        %v1502 = vadd.f32 0.0, %v1501
        %1503 = vmatmul.bf16.gmra.mxu0 %v785
        %v1504 = vpop.f32.mrf.mxu0
        %v1505 = vadd.f32 0.0, %v1504
        %v1506 = vpop.f32.mrf.mxu0
        %v1507 = vadd.f32 0.0, %v1506
        %1508 = vmatmul.bf16.gmra.mxu0 %v786
        %v1509 = vpop.f32.mrf.mxu0
        %v1510 = vadd.f32 0.0, %v1509
        %v1511 = vpop.f32.mrf.mxu0
        %v1512 = vadd.f32 0.0, %v1511
        %1513 = vmatmul.bf16.gmra.mxu0 %v787
        %v1514 = vpop.f32.mrf.mxu0
        %v1515 = vadd.f32 0.0, %v1514
        %v1516 = vpop.f32.mrf.mxu0
        %v1517 = vadd.f32 0.0, %v1516
        %1518 = vmatmul.bf16.gmra.mxu0 %v788
        %v1519 = vpop.f32.mrf.mxu0
        %v1520 = vadd.f32 0.0, %v1519
        %v1521 = vpop.f32.mrf.mxu0
        %v1522 = vadd.f32 0.0, %v1521
        %1523 = vmatmul.bf16.gmra.mxu0 %v789
        %v1524 = vpop.f32.mrf.mxu0
        %v1525 = vadd.f32 0.0, %v1524
        %v1526 = vpop.f32.mrf.mxu0
        %v1527 = vadd.f32 0.0, %v1526
        %1528 = vdwg.mxu0
        %v1529 = vadd.f32 %v1295, %v1450
        %v1530 = vadd.f32 %v1296, %v1452
        %v1531 = vadd.f32 %v1297, %v1455
        %v1532 = vadd.f32 %v1298, %v1457
        %v1533 = vadd.f32 %v1299, %v1460
        %v1534 = vadd.f32 %v1300, %v1462
        %v1535 = vadd.f32 %v1301, %v1465
        %v1536 = vadd.f32 %v1302, %v1467
        %v1537 = vadd.f32 %v1303, %v1470
        %v1538 = vadd.f32 %v1304, %v1472
        %v1539 = vadd.f32 %v1305, %v1475
        %v1540 = vadd.f32 %v1306, %v1477
        %v1541 = vadd.f32 %v1307, %v1480
        %v1542 = vadd.f32 %v1308, %v1482
        %v1543 = vadd.f32 %v1309, %v1485
        %v1544 = vadd.f32 %v1310, %v1487
        %v1545 = vadd.f32 %v1311, %v1490
        %v1546 = vadd.f32 %v1312, %v1492
        %v1547 = vadd.f32 %v1313, %v1495
        %v1548 = vadd.f32 %v1314, %v1497
        %v1549 = vadd.f32 %v1315, %v1500
        %v1550 = vadd.f32 %v1316, %v1502
        %v1551 = vadd.f32 %v1317, %v1505
        %v1552 = vadd.f32 %v1318, %v1507
        %v1553 = vadd.f32 %v1319, %v1510
        %v1554 = vadd.f32 %v1320, %v1512
        %v1555 = vadd.f32 %v1321, %v1515
        %v1556 = vadd.f32 %v1322, %v1517
        %v1557 = vadd.f32 %v1323, %v1520
        %v1558 = vadd.f32 %v1324, %v1522
        %v1559 = vadd.f32 %v1325, %v1525
        %v1560 = vadd.f32 %v1326, %v1527
        %s1561 = scalar_lea.vmem [#allocation8], 128
        %v1562 = vld [vmem:[%s1561] sm:$0xf]
        %v1563 = vld [vmem:[%s1561 + $0x4] sm:$0xf]
        %v1564 = vld [vmem:[%s1561 + $0x8] sm:$0xf]
        %v1565 = vld [vmem:[%s1561 + $0xc] sm:$0xf]
        %v1566 = vld [vmem:[%s1561 + $0x10] sm:$0xf]
        %v1567 = vld [vmem:[%s1561 + $0x14] sm:$0xf]
        %v1568 = vld [vmem:[%s1561 + $0x18] sm:$0xf]
        %v1569 = vld [vmem:[%s1561 + $0x1c] sm:$0xf]
        %v1570 = vld [vmem:[%s1561 + $0x20] sm:$0xf]
        %v1571 = vld [vmem:[%s1561 + $0x24] sm:$0xf]
        %v1572 = vld [vmem:[%s1561 + $0x28] sm:$0xf]
        %v1573 = vld [vmem:[%s1561 + $0x2c] sm:$0xf]
        %v1574 = vld [vmem:[%s1561 + $0x30] sm:$0xf]
        %v1575 = vld [vmem:[%s1561 + $0x34] sm:$0xf]
        %v1576 = vld [vmem:[%s1561 + $0x38] sm:$0xf]
        %v1577 = vld [vmem:[%s1561 + $0x3c] sm:$0xf]
        %v1578 = vunpack.c.l.b16 %v426
        %v1579 = vunpack.c.l.b16 %v431
        %v1580 = vunpack.c.l.b16 %v436
        %v1581 = vunpack.c.l.b16 %v441
        %v1582 = vunpack.c.l.b16 %v446
        %v1583 = vunpack.c.l.b16 %v451
        %v1584 = vunpack.c.l.b16 %v456
        %v1585 = vunpack.c.l.b16 %v461
        %v1586 = vunpack.c.l.b16 %v466
        %v1587 = vunpack.c.l.b16 %v471
        %v1588 = vunpack.c.l.b16 %v476
        %v1589 = vunpack.c.l.b16 %v481
        %v1590 = vunpack.c.l.b16 %v486
        %v1591 = vunpack.c.l.b16 %v491
        %v1592 = vunpack.c.l.b16 %v496
        %v1593 = vunpack.c.l.b16 %v501
        %v1594 = vpack.c.b16 %v1578, %v1095
        %v1595 = vpack.c.b16 %v1579, %v1097
        %v1596 = vpack.c.b16 %v1580, %v1099
        %v1597 = vpack.c.b16 %v1581, %v1101
        %v1598 = vpack.c.b16 %v1582, %v1103
        %v1599 = vpack.c.b16 %v1583, %v1105
        %v1600 = vpack.c.b16 %v1584, %v1107
        %v1601 = vpack.c.b16 %v1585, %v1109
        %v1602 = vpack.c.b16 %v1586, %v1111
        %v1603 = vpack.c.b16 %v1587, %v1113
        %v1604 = vpack.c.b16 %v1588, %v1115
        %v1605 = vpack.c.b16 %v1589, %v1117
        %v1606 = vpack.c.b16 %v1590, %v1119
        %v1607 = vpack.c.b16 %v1591, %v1121
        %v1608 = vpack.c.b16 %v1592, %v1123
        %v1609 = vpack.c.b16 %v1593, %v1125
        %v1642 = vunpack.c.l.b16 %v1562
        %v1643 = vunpack.c.l.b16 %v1563
        %v1644 = vunpack.c.l.b16 %v1564
        %v1645 = vunpack.c.l.b16 %v1565
        %v1646 = vunpack.c.l.b16 %v1566
        %v1647 = vunpack.c.l.b16 %v1567
        %v1648 = vunpack.c.l.b16 %v1568
        %v1649 = vunpack.c.l.b16 %v1569
        %v1650 = vunpack.c.l.b16 %v1570
        %v1651 = vunpack.c.l.b16 %v1571
        %v1652 = vunpack.c.l.b16 %v1572
        %v1653 = vunpack.c.l.b16 %v1573
        %v1654 = vunpack.c.l.b16 %v1574
        %v1655 = vunpack.c.l.b16 %v1575
        %v1656 = vunpack.c.l.b16 %v1576
        %v1657 = vunpack.c.l.b16 %v1577
        %v1658 = vpack.c.b16 %v1643, %v1642
        %v1659 = vpack.c.b16 %v1645, %v1644
        %v1660 = vpack.c.b16 %v1647, %v1646
        %v1661 = vpack.c.b16 %v1649, %v1648
        %v1662 = vpack.c.b16 %v1651, %v1650
        %v1663 = vpack.c.b16 %v1653, %v1652
        %v1664 = vpack.c.b16 %v1655, %v1654
        %v1665 = vpack.c.b16 %v1657, %v1656
        %1674 = vmatpush.bf16.msra.mxu0 %v1665
        %1675 = vmatpush.bf16.msra.mxu0 %v1664
        %1676 = vmatpush.bf16.msra.mxu0 %v1663
        %1677 = vmatpush.bf16.msra.mxu0 %v1662
        %1678 = vmatpush.bf16.msra.mxu0 %v1661
        %1679 = vmatpush.bf16.msra.mxu0 %v1660
        %1680 = vmatpush.bf16.msra.mxu0 %v1659
        %1681 = vmatpush.bf16.msra.mxu0 %v1658
        %1682 = vmatmul.bf16.gmra.mxu0 %v1594
        %v1683 = vpop.f32.mrf.mxu0
        %v1684 = vadd.f32 0.0, %v1683
        %v1685 = vpop.f32.mrf.mxu0
        %v1686 = vadd.f32 0.0, %v1685
        %1687 = vmatmul.bf16.gmra.mxu0 %v1595
        %v1688 = vpop.f32.mrf.mxu0
        %v1689 = vadd.f32 0.0, %v1688
        %v1690 = vpop.f32.mrf.mxu0
        %v1691 = vadd.f32 0.0, %v1690
        %1692 = vmatmul.bf16.gmra.mxu0 %v1596
        %v1693 = vpop.f32.mrf.mxu0
        %v1694 = vadd.f32 0.0, %v1693
        %v1695 = vpop.f32.mrf.mxu0
        %v1696 = vadd.f32 0.0, %v1695
        %1697 = vmatmul.bf16.gmra.mxu0 %v1597
        %v1698 = vpop.f32.mrf.mxu0
        %v1699 = vadd.f32 0.0, %v1698
        %v1700 = vpop.f32.mrf.mxu0
        %v1701 = vadd.f32 0.0, %v1700
        %1702 = vmatmul.bf16.gmra.mxu0 %v1598
        %v1703 = vpop.f32.mrf.mxu0
        %v1704 = vadd.f32 0.0, %v1703
        %v1705 = vpop.f32.mrf.mxu0
        %v1706 = vadd.f32 0.0, %v1705
        %1707 = vmatmul.bf16.gmra.mxu0 %v1599
        %v1708 = vpop.f32.mrf.mxu0
        %v1709 = vadd.f32 0.0, %v1708
        %v1710 = vpop.f32.mrf.mxu0
        %v1711 = vadd.f32 0.0, %v1710
        %1712 = vmatmul.bf16.gmra.mxu0 %v1600
        %v1713 = vpop.f32.mrf.mxu0
        %v1714 = vadd.f32 0.0, %v1713
        %v1715 = vpop.f32.mrf.mxu0
        %v1716 = vadd.f32 0.0, %v1715
        %1717 = vmatmul.bf16.gmra.mxu0 %v1601
        %v1718 = vpop.f32.mrf.mxu0
        %v1719 = vadd.f32 0.0, %v1718
        %v1720 = vpop.f32.mrf.mxu0
        %v1721 = vadd.f32 0.0, %v1720
        %1722 = vmatmul.bf16.gmra.mxu0 %v1602
        %v1723 = vpop.f32.mrf.mxu0
        %v1724 = vadd.f32 0.0, %v1723
        %v1725 = vpop.f32.mrf.mxu0
        %v1726 = vadd.f32 0.0, %v1725
        %1727 = vmatmul.bf16.gmra.mxu0 %v1603
        %v1728 = vpop.f32.mrf.mxu0
        %v1729 = vadd.f32 0.0, %v1728
        %v1730 = vpop.f32.mrf.mxu0
        %v1731 = vadd.f32 0.0, %v1730
        %1732 = vmatmul.bf16.gmra.mxu0 %v1604
        %v1733 = vpop.f32.mrf.mxu0
        %v1734 = vadd.f32 0.0, %v1733
        %v1735 = vpop.f32.mrf.mxu0
        %v1736 = vadd.f32 0.0, %v1735
        %1737 = vmatmul.bf16.gmra.mxu0 %v1605
        %v1738 = vpop.f32.mrf.mxu0
        %v1739 = vadd.f32 0.0, %v1738
        %v1740 = vpop.f32.mrf.mxu0
        %v1741 = vadd.f32 0.0, %v1740
        %1742 = vmatmul.bf16.gmra.mxu0 %v1606
        %v1743 = vpop.f32.mrf.mxu0
        %v1744 = vadd.f32 0.0, %v1743
        %v1745 = vpop.f32.mrf.mxu0
        %v1746 = vadd.f32 0.0, %v1745
        %1747 = vmatmul.bf16.gmra.mxu0 %v1607
        %v1748 = vpop.f32.mrf.mxu0
        %v1749 = vadd.f32 0.0, %v1748
        %v1750 = vpop.f32.mrf.mxu0
        %v1751 = vadd.f32 0.0, %v1750
        %1752 = vmatmul.bf16.gmra.mxu0 %v1608
        %v1753 = vpop.f32.mrf.mxu0
        %v1754 = vadd.f32 0.0, %v1753
        %v1755 = vpop.f32.mrf.mxu0
        %v1756 = vadd.f32 0.0, %v1755
        %1757 = vmatmul.bf16.gmra.mxu0 %v1609
        %v1758 = vpop.f32.mrf.mxu0
        %v1759 = vadd.f32 0.0, %v1758
        %v1760 = vpop.f32.mrf.mxu0
        %v1761 = vadd.f32 0.0, %v1760
        %1762 = vdwg.mxu0
        %v1763 = vadd.f32 %v1529, %v1684
        %v1764 = vadd.f32 %v1530, %v1686
        %v1765 = vadd.f32 %v1531, %v1689
        %v1766 = vadd.f32 %v1532, %v1691
        %v1767 = vadd.f32 %v1533, %v1694
        %v1768 = vadd.f32 %v1534, %v1696
        %v1769 = vadd.f32 %v1535, %v1699
        %v1770 = vadd.f32 %v1536, %v1701
        %v1771 = vadd.f32 %v1537, %v1704
        %v1772 = vadd.f32 %v1538, %v1706
        %v1773 = vadd.f32 %v1539, %v1709
        %v1774 = vadd.f32 %v1540, %v1711
        %v1775 = vadd.f32 %v1541, %v1714
        %v1776 = vadd.f32 %v1542, %v1716
        %v1777 = vadd.f32 %v1543, %v1719
        %v1778 = vadd.f32 %v1544, %v1721
        %v1779 = vadd.f32 %v1545, %v1724
        %v1780 = vadd.f32 %v1546, %v1726
        %v1781 = vadd.f32 %v1547, %v1729
        %v1782 = vadd.f32 %v1548, %v1731
        %v1783 = vadd.f32 %v1549, %v1734
        %v1784 = vadd.f32 %v1550, %v1736
        %v1785 = vadd.f32 %v1551, %v1739
        %v1786 = vadd.f32 %v1552, %v1741
        %v1787 = vadd.f32 %v1553, %v1744
        %v1788 = vadd.f32 %v1554, %v1746
        %v1789 = vadd.f32 %v1555, %v1749
        %v1790 = vadd.f32 %v1556, %v1751
        %v1791 = vadd.f32 %v1557, %v1754
        %v1792 = vadd.f32 %v1558, %v1756
        %v1793 = vadd.f32 %v1559, %v1759
        %v1794 = vadd.f32 %v1560, %v1761
        %s1795 = scalar_lea.vmem [#allocation8], 192
        %v1796 = vld [vmem:[%s1795] sm:$0xf]
        %v1797 = vld [vmem:[%s1795 + $0x4] sm:$0xf]
        %v1798 = vld [vmem:[%s1795 + $0x8] sm:$0xf]
        %v1799 = vld [vmem:[%s1795 + $0xc] sm:$0xf]
        %v1800 = vld [vmem:[%s1795 + $0x10] sm:$0xf]
        %v1801 = vld [vmem:[%s1795 + $0x14] sm:$0xf]
        %v1802 = vld [vmem:[%s1795 + $0x18] sm:$0xf]
        %v1803 = vld [vmem:[%s1795 + $0x1c] sm:$0xf]
        %v1804 = vld [vmem:[%s1795 + $0x20] sm:$0xf]
        %v1805 = vld [vmem:[%s1795 + $0x24] sm:$0xf]
        %v1806 = vld [vmem:[%s1795 + $0x28] sm:$0xf]
        %v1807 = vld [vmem:[%s1795 + $0x2c] sm:$0xf]
        %v1808 = vld [vmem:[%s1795 + $0x30] sm:$0xf]
        %v1809 = vld [vmem:[%s1795 + $0x34] sm:$0xf]
        %v1810 = vld [vmem:[%s1795 + $0x38] sm:$0xf]
        %v1811 = vld [vmem:[%s1795 + $0x3c] sm:$0xf]
        %v1812 = vunpack.c.l.b16 %v504
        %v1813 = vunpack.c.l.b16 %v505
        %v1814 = vunpack.c.l.b16 %v509
        %v1815 = vunpack.c.l.b16 %v510
        %v1816 = vunpack.c.l.b16 %v514
        %v1817 = vunpack.c.l.b16 %v515
        %v1818 = vunpack.c.l.b16 %v519
        %v1819 = vunpack.c.l.b16 %v520
        %v1820 = vpack.c.b16 %v1813, %v1812
        %v1821 = vpack.c.b16 %v1815, %v1814
        %v1822 = vpack.c.b16 %v1817, %v1816
        %v1823 = vpack.c.b16 %v1819, %v1818
        %v1844 = vunpack.c.l.b16 %v1796
        %v1845 = vunpack.c.l.b16 %v1797
        %v1846 = vunpack.c.l.b16 %v1798
        %v1847 = vunpack.c.l.b16 %v1799
        %v1848 = vunpack.c.l.b16 %v1800
        %v1849 = vunpack.c.l.b16 %v1801
        %v1850 = vunpack.c.l.b16 %v1802
        %v1851 = vunpack.c.l.b16 %v1803
        %v1852 = vunpack.c.l.b16 %v1804
        %v1853 = vunpack.c.l.b16 %v1805
        %v1854 = vunpack.c.l.b16 %v1806
        %v1855 = vunpack.c.l.b16 %v1807
        %v1856 = vunpack.c.l.b16 %v1808
        %v1857 = vunpack.c.l.b16 %v1809
        %v1858 = vunpack.c.l.b16 %v1810
        %v1859 = vunpack.c.l.b16 %v1811
        %v1860 = vpack.c.b16 %v1845, %v1844
        %v1861 = vpack.c.b16 %v1847, %v1846
        %v1862 = vpack.c.b16 %v1849, %v1848
        %v1863 = vpack.c.b16 %v1851, %v1850
        %v1864 = vpack.c.b16 %v1853, %v1852
        %v1865 = vpack.c.b16 %v1855, %v1854
        %v1866 = vpack.c.b16 %v1857, %v1856
        %v1867 = vpack.c.b16 %v1859, %v1858
        %1876 = vmatpush.bf16.msra.mxu0 %v1867
        %1877 = vmatpush.bf16.msra.mxu0 %v1866
        %1878 = vmatpush.bf16.msra.mxu0 %v1865
        %1879 = vmatpush.bf16.msra.mxu0 %v1864
        %1880 = vmatpush.bf16.msra.mxu0 %v1863
        %1881 = vmatpush.bf16.msra.mxu0 %v1862
        %1882 = vmatpush.bf16.msra.mxu0 %v1861
        %1883 = vmatpush.bf16.msra.mxu0 %v1860
        %1884 = vmatmul.bf16.gmra.mxu0 %v1130
        %v1885 = vpop.f32.mrf.mxu0
        %v1886 = vadd.f32 0.0, %v1885
        %v1887 = vpop.f32.mrf.mxu0
        %v1888 = vadd.f32 0.0, %v1887
        %1889 = vmatmul.bf16.gmra.mxu0 %v1131
        %v1890 = vpop.f32.mrf.mxu0
        %v1891 = vadd.f32 0.0, %v1890
        %v1892 = vpop.f32.mrf.mxu0
        %v1893 = vadd.f32 0.0, %v1892
        %1894 = vmatmul.bf16.gmra.mxu0 %v1132
        %v1895 = vpop.f32.mrf.mxu0
        %v1896 = vadd.f32 0.0, %v1895
        %v1897 = vpop.f32.mrf.mxu0
        %v1898 = vadd.f32 0.0, %v1897
        %1899 = vmatmul.bf16.gmra.mxu0 %v1133
        %v1900 = vpop.f32.mrf.mxu0
        %v1901 = vadd.f32 0.0, %v1900
        %v1902 = vpop.f32.mrf.mxu0
        %v1903 = vadd.f32 0.0, %v1902
        %1904 = vmatmul.bf16.gmra.mxu0 %v1134
        %v1905 = vpop.f32.mrf.mxu0
        %v1906 = vadd.f32 0.0, %v1905
        %v1907 = vpop.f32.mrf.mxu0
        %v1908 = vadd.f32 0.0, %v1907
        %1909 = vmatmul.bf16.gmra.mxu0 %v1135
        %v1910 = vpop.f32.mrf.mxu0
        %v1911 = vadd.f32 0.0, %v1910
        %v1912 = vpop.f32.mrf.mxu0
        %v1913 = vadd.f32 0.0, %v1912
        %1914 = vmatmul.bf16.gmra.mxu0 %v1136
        %v1915 = vpop.f32.mrf.mxu0
        %v1916 = vadd.f32 0.0, %v1915
        %v1917 = vpop.f32.mrf.mxu0
        %v1918 = vadd.f32 0.0, %v1917
        %1919 = vmatmul.bf16.gmra.mxu0 %v1137
        %v1920 = vpop.f32.mrf.mxu0
        %v1921 = vadd.f32 0.0, %v1920
        %v1922 = vpop.f32.mrf.mxu0
        %v1923 = vadd.f32 0.0, %v1922
        %1924 = vmatmul.bf16.gmra.mxu0 %v1138
        %v1925 = vpop.f32.mrf.mxu0
        %v1926 = vadd.f32 0.0, %v1925
        %v1927 = vpop.f32.mrf.mxu0
        %v1928 = vadd.f32 0.0, %v1927
        %1929 = vmatmul.bf16.gmra.mxu0 %v1139
        %v1930 = vpop.f32.mrf.mxu0
        %v1931 = vadd.f32 0.0, %v1930
        %v1932 = vpop.f32.mrf.mxu0
        %v1933 = vadd.f32 0.0, %v1932
        %1934 = vmatmul.bf16.gmra.mxu0 %v1140
        %v1935 = vpop.f32.mrf.mxu0
        %v1936 = vadd.f32 0.0, %v1935
        %v1937 = vpop.f32.mrf.mxu0
        %v1938 = vadd.f32 0.0, %v1937
        %1939 = vmatmul.bf16.gmra.mxu0 %v1141
        %v1940 = vpop.f32.mrf.mxu0
        %v1941 = vadd.f32 0.0, %v1940
        %v1942 = vpop.f32.mrf.mxu0
        %v1943 = vadd.f32 0.0, %v1942
        %1944 = vmatmul.bf16.gmra.mxu0 %v1820
        %v1945 = vpop.f32.mrf.mxu0
        %v1946 = vadd.f32 0.0, %v1945
        %v1947 = vpop.f32.mrf.mxu0
        %v1948 = vadd.f32 0.0, %v1947
        %1949 = vmatmul.bf16.gmra.mxu0 %v1821
        %v1950 = vpop.f32.mrf.mxu0
        %v1951 = vadd.f32 0.0, %v1950
        %v1952 = vpop.f32.mrf.mxu0
        %v1953 = vadd.f32 0.0, %v1952
        %1954 = vmatmul.bf16.gmra.mxu0 %v1822
        %v1955 = vpop.f32.mrf.mxu0
        %v1956 = vadd.f32 0.0, %v1955
        %v1957 = vpop.f32.mrf.mxu0
        %v1958 = vadd.f32 0.0, %v1957
        %1959 = vmatmul.bf16.gmra.mxu0 %v1823
        %v1960 = vpop.f32.mrf.mxu0
        %v1961 = vadd.f32 0.0, %v1960
        %v1962 = vpop.f32.mrf.mxu0
        %v1963 = vadd.f32 0.0, %v1962
        %1964 = vdwg.mxu0
        %v1965 = vadd.f32 %v1763, %v1886
        %v1966 = vadd.f32 %v1764, %v1888
        %v1967 = vadd.f32 %v1765, %v1891
        %v1968 = vadd.f32 %v1766, %v1893
        %v1969 = vadd.f32 %v1767, %v1896
        %v1970 = vadd.f32 %v1768, %v1898
        %v1971 = vadd.f32 %v1769, %v1901
        %v1972 = vadd.f32 %v1770, %v1903
        %v1973 = vadd.f32 %v1771, %v1906
        %v1974 = vadd.f32 %v1772, %v1908
        %v1975 = vadd.f32 %v1773, %v1911
        %v1976 = vadd.f32 %v1774, %v1913
        %v1977 = vadd.f32 %v1775, %v1916
        %v1978 = vadd.f32 %v1776, %v1918
        %v1979 = vadd.f32 %v1777, %v1921
        %v1980 = vadd.f32 %v1778, %v1923
        %v1981 = vadd.f32 %v1779, %v1926
        %v1982 = vadd.f32 %v1780, %v1928
        %v1983 = vadd.f32 %v1781, %v1931
        %v1984 = vadd.f32 %v1782, %v1933
        %v1985 = vadd.f32 %v1783, %v1936
        %v1986 = vadd.f32 %v1784, %v1938
        %v1987 = vadd.f32 %v1785, %v1941
        %v1988 = vadd.f32 %v1786, %v1943
        %v1989 = vadd.f32 %v1787, %v1946
        %v1990 = vadd.f32 %v1788, %v1948
        %v1991 = vadd.f32 %v1789, %v1951
        %v1992 = vadd.f32 %v1790, %v1953
        %v1993 = vadd.f32 %v1791, %v1956
        %v1994 = vadd.f32 %v1792, %v1958
        %v1995 = vadd.f32 %v1793, %v1961
        %v1996 = vadd.f32 %v1794, %v1963
        %s1997 = scalar_lea.vmem [#allocation8], 320
        %v1998 = vld [vmem:[%s1997] sm:$0xf]
        %v1999 = vld [vmem:[%s1997 + $0x4] sm:$0xf]
        %v2000 = vld [vmem:[%s1997 + $0x8] sm:$0xf]
        %v2001 = vld [vmem:[%s1997 + $0xc] sm:$0xf]
        %v2002 = vld [vmem:[%s1997 + $0x10] sm:$0xf]
        %v2003 = vld [vmem:[%s1997 + $0x14] sm:$0xf]
        %v2004 = vld [vmem:[%s1997 + $0x18] sm:$0xf]
        %v2005 = vld [vmem:[%s1997 + $0x1c] sm:$0xf]
        %v2006 = vld [vmem:[%s1997 + $0x20] sm:$0xf]
        %v2007 = vld [vmem:[%s1997 + $0x24] sm:$0xf]
        %v2008 = vld [vmem:[%s1997 + $0x28] sm:$0xf]
        %v2009 = vld [vmem:[%s1997 + $0x2c] sm:$0xf]
        %v2010 = vld [vmem:[%s1997 + $0x30] sm:$0xf]
        %v2011 = vld [vmem:[%s1997 + $0x34] sm:$0xf]
        %v2012 = vld [vmem:[%s1997 + $0x38] sm:$0xf]
        %v2013 = vld [vmem:[%s1997 + $0x3c] sm:$0xf]
        %v2014 = vunpack.c.l.b16 %v506
        %v2015 = vunpack.c.l.b16 %v511
        %v2016 = vunpack.c.l.b16 %v516
        %v2017 = vunpack.c.l.b16 %v521
        %v2018 = vpack.c.b16 %v2014, %v1813
        %v2019 = vpack.c.b16 %v2015, %v1815
        %v2020 = vpack.c.b16 %v2016, %v1817
        %v2021 = vpack.c.b16 %v2017, %v1819
        %v2042 = vunpack.c.l.b16 %v1998
        %v2043 = vunpack.c.l.b16 %v1999
        %v2044 = vunpack.c.l.b16 %v2000
        %v2045 = vunpack.c.l.b16 %v2001
        %v2046 = vunpack.c.l.b16 %v2002
        %v2047 = vunpack.c.l.b16 %v2003
        %v2048 = vunpack.c.l.b16 %v2004
        %v2049 = vunpack.c.l.b16 %v2005
        %v2050 = vunpack.c.l.b16 %v2006
        %v2051 = vunpack.c.l.b16 %v2007
        %v2052 = vunpack.c.l.b16 %v2008
        %v2053 = vunpack.c.l.b16 %v2009
        %v2054 = vunpack.c.l.b16 %v2010
        %v2055 = vunpack.c.l.b16 %v2011
        %v2056 = vunpack.c.l.b16 %v2012
        %v2057 = vunpack.c.l.b16 %v2013
        %v2058 = vpack.c.b16 %v2043, %v2042
        %v2059 = vpack.c.b16 %v2045, %v2044
        %v2060 = vpack.c.b16 %v2047, %v2046
        %v2061 = vpack.c.b16 %v2049, %v2048
        %v2062 = vpack.c.b16 %v2051, %v2050
        %v2063 = vpack.c.b16 %v2053, %v2052
        %v2064 = vpack.c.b16 %v2055, %v2054
        %v2065 = vpack.c.b16 %v2057, %v2056
        %2074 = vmatpush.bf16.msra.mxu0 %v2065
        %2075 = vmatpush.bf16.msra.mxu0 %v2064
        %2076 = vmatpush.bf16.msra.mxu0 %v2063
        %2077 = vmatpush.bf16.msra.mxu0 %v2062
        %2078 = vmatpush.bf16.msra.mxu0 %v2061
        %2079 = vmatpush.bf16.msra.mxu0 %v2060
        %2080 = vmatpush.bf16.msra.mxu0 %v2059
        %2081 = vmatpush.bf16.msra.mxu0 %v2058
        %2082 = vmatmul.bf16.gmra.mxu0 %v1598
        %v2083 = vpop.f32.mrf.mxu0
        %v2084 = vadd.f32 0.0, %v2083
        %v2085 = vpop.f32.mrf.mxu0
        %v2086 = vadd.f32 0.0, %v2085
        %2087 = vmatmul.bf16.gmra.mxu0 %v1599
        %v2088 = vpop.f32.mrf.mxu0
        %v2089 = vadd.f32 0.0, %v2088
        %v2090 = vpop.f32.mrf.mxu0
        %v2091 = vadd.f32 0.0, %v2090
        %2092 = vmatmul.bf16.gmra.mxu0 %v1600
        %v2093 = vpop.f32.mrf.mxu0
        %v2094 = vadd.f32 0.0, %v2093
        %v2095 = vpop.f32.mrf.mxu0
        %v2096 = vadd.f32 0.0, %v2095
        %2097 = vmatmul.bf16.gmra.mxu0 %v1601
        %v2098 = vpop.f32.mrf.mxu0
        %v2099 = vadd.f32 0.0, %v2098
        %v2100 = vpop.f32.mrf.mxu0
        %v2101 = vadd.f32 0.0, %v2100
        %2102 = vmatmul.bf16.gmra.mxu0 %v1602
        %v2103 = vpop.f32.mrf.mxu0
        %v2104 = vadd.f32 0.0, %v2103
        %v2105 = vpop.f32.mrf.mxu0
        %v2106 = vadd.f32 0.0, %v2105
        %2107 = vmatmul.bf16.gmra.mxu0 %v1603
        %v2108 = vpop.f32.mrf.mxu0
        %v2109 = vadd.f32 0.0, %v2108
        %v2110 = vpop.f32.mrf.mxu0
        %v2111 = vadd.f32 0.0, %v2110
        %2112 = vmatmul.bf16.gmra.mxu0 %v1604
        %v2113 = vpop.f32.mrf.mxu0
        %v2114 = vadd.f32 0.0, %v2113
        %v2115 = vpop.f32.mrf.mxu0
        %v2116 = vadd.f32 0.0, %v2115
        %2117 = vmatmul.bf16.gmra.mxu0 %v1605
        %v2118 = vpop.f32.mrf.mxu0
        %v2119 = vadd.f32 0.0, %v2118
        %v2120 = vpop.f32.mrf.mxu0
        %v2121 = vadd.f32 0.0, %v2120
        %2122 = vmatmul.bf16.gmra.mxu0 %v1606
        %v2123 = vpop.f32.mrf.mxu0
        %v2124 = vadd.f32 0.0, %v2123
        %v2125 = vpop.f32.mrf.mxu0
        %v2126 = vadd.f32 0.0, %v2125
        %2127 = vmatmul.bf16.gmra.mxu0 %v1607
        %v2128 = vpop.f32.mrf.mxu0
        %v2129 = vadd.f32 0.0, %v2128
        %v2130 = vpop.f32.mrf.mxu0
        %v2131 = vadd.f32 0.0, %v2130
        %2132 = vmatmul.bf16.gmra.mxu0 %v1608
        %v2133 = vpop.f32.mrf.mxu0
        %v2134 = vadd.f32 0.0, %v2133
        %v2135 = vpop.f32.mrf.mxu0
        %v2136 = vadd.f32 0.0, %v2135
        %2137 = vmatmul.bf16.gmra.mxu0 %v1609
        %v2138 = vpop.f32.mrf.mxu0
        %v2139 = vadd.f32 0.0, %v2138
        %v2140 = vpop.f32.mrf.mxu0
        %v2141 = vadd.f32 0.0, %v2140
        %2142 = vmatmul.bf16.gmra.mxu0 %v2018
        %v2143 = vpop.f32.mrf.mxu0
        %v2144 = vadd.f32 0.0, %v2143
        %v2145 = vpop.f32.mrf.mxu0
        %v2146 = vadd.f32 0.0, %v2145
        %2147 = vmatmul.bf16.gmra.mxu0 %v2019
        %v2148 = vpop.f32.mrf.mxu0
        %v2149 = vadd.f32 0.0, %v2148
        %v2150 = vpop.f32.mrf.mxu0
        %v2151 = vadd.f32 0.0, %v2150
        %2152 = vmatmul.bf16.gmra.mxu0 %v2020
        %v2153 = vpop.f32.mrf.mxu0
        %v2154 = vadd.f32 0.0, %v2153
        %v2155 = vpop.f32.mrf.mxu0
        %v2156 = vadd.f32 0.0, %v2155
        %2157 = vmatmul.bf16.gmra.mxu0 %v2021
        %v2158 = vpop.f32.mrf.mxu0
        %v2159 = vadd.f32 0.0, %v2158
        %v2160 = vpop.f32.mrf.mxu0
        %v2161 = vadd.f32 0.0, %v2160
        %2162 = vdwg.mxu0
        %v2163 = vadd.f32 %v1965, %v2084
        %v2164 = vadd.f32 %v1966, %v2086
        %v2165 = vadd.f32 %v1967, %v2089
        %v2166 = vadd.f32 %v1968, %v2091
        %v2167 = vadd.f32 %v1969, %v2094
        %v2168 = vadd.f32 %v1970, %v2096
        %v2169 = vadd.f32 %v1971, %v2099
        %v2170 = vadd.f32 %v1972, %v2101
        %v2171 = vadd.f32 %v1973, %v2104
        %v2172 = vadd.f32 %v1974, %v2106
        %v2173 = vadd.f32 %v1975, %v2109
        %v2174 = vadd.f32 %v1976, %v2111
        %v2175 = vadd.f32 %v1977, %v2114
        %v2176 = vadd.f32 %v1978, %v2116
        %v2177 = vadd.f32 %v1979, %v2119
        %v2178 = vadd.f32 %v1980, %v2121
        %v2179 = vadd.f32 %v1981, %v2124
        %v2180 = vadd.f32 %v1982, %v2126
        %v2181 = vadd.f32 %v1983, %v2129
        %v2182 = vadd.f32 %v1984, %v2131
        %v2183 = vadd.f32 %v1985, %v2134
        %v2184 = vadd.f32 %v1986, %v2136
        %v2185 = vadd.f32 %v1987, %v2139
        %v2186 = vadd.f32 %v1988, %v2141
        %v2187 = vadd.f32 %v1989, %v2144
        %v2188 = vadd.f32 %v1990, %v2146
        %v2189 = vadd.f32 %v1991, %v2149
        %v2190 = vadd.f32 %v1992, %v2151
        %v2191 = vadd.f32 %v1993, %v2154
        %v2192 = vadd.f32 %v1994, %v2156
        %v2193 = vadd.f32 %v1995, %v2159
        %v2194 = vadd.f32 %v1996, %v2161
        %s2195 = scalar_lea.vmem [#allocation8], 384
        %v2196 = vld [vmem:[%s2195] sm:$0xf]
        %v2197 = vld [vmem:[%s2195 + $0x4] sm:$0xf]
        %v2198 = vld [vmem:[%s2195 + $0x8] sm:$0xf]
        %v2199 = vld [vmem:[%s2195 + $0xc] sm:$0xf]
        %v2200 = vld [vmem:[%s2195 + $0x10] sm:$0xf]
        %v2201 = vld [vmem:[%s2195 + $0x14] sm:$0xf]
        %v2202 = vld [vmem:[%s2195 + $0x18] sm:$0xf]
        %v2203 = vld [vmem:[%s2195 + $0x1c] sm:$0xf]
        %v2204 = vld [vmem:[%s2195 + $0x20] sm:$0xf]
        %v2205 = vld [vmem:[%s2195 + $0x24] sm:$0xf]
        %v2206 = vld [vmem:[%s2195 + $0x28] sm:$0xf]
        %v2207 = vld [vmem:[%s2195 + $0x2c] sm:$0xf]
        %v2208 = vld [vmem:[%s2195 + $0x30] sm:$0xf]
        %v2209 = vld [vmem:[%s2195 + $0x34] sm:$0xf]
        %v2210 = vld [vmem:[%s2195 + $0x38] sm:$0xf]
        %v2211 = vld [vmem:[%s2195 + $0x3c] sm:$0xf]
        %v2220 = vunpack.c.l.b16 %v524
        %v2221 = vunpack.c.l.b16 %v525
        %v2222 = vunpack.c.l.b16 %v529
        %v2223 = vunpack.c.l.b16 %v530
        %v2224 = vunpack.c.l.b16 %v534
        %v2225 = vunpack.c.l.b16 %v535
        %v2226 = vunpack.c.l.b16 %v539
        %v2227 = vunpack.c.l.b16 %v540
        %v2228 = vpack.c.b16 %v2221, %v2220
        %v2229 = vpack.c.b16 %v2223, %v2222
        %v2230 = vpack.c.b16 %v2225, %v2224
        %v2231 = vpack.c.b16 %v2227, %v2226
        %v2252 = vunpack.c.l.b16 %v2196
        %v2253 = vunpack.c.l.b16 %v2197
        %v2254 = vunpack.c.l.b16 %v2198
        %v2255 = vunpack.c.l.b16 %v2199
        %v2256 = vunpack.c.l.b16 %v2200
        %v2257 = vunpack.c.l.b16 %v2201
        %v2258 = vunpack.c.l.b16 %v2202
        %v2259 = vunpack.c.l.b16 %v2203
        %v2260 = vunpack.c.l.b16 %v2204
        %v2261 = vunpack.c.l.b16 %v2205
        %v2262 = vunpack.c.l.b16 %v2206
        %v2263 = vunpack.c.l.b16 %v2207
        %v2264 = vunpack.c.l.b16 %v2208
        %v2265 = vunpack.c.l.b16 %v2209
        %v2266 = vunpack.c.l.b16 %v2210
        %v2267 = vunpack.c.l.b16 %v2211
        %v2268 = vpack.c.b16 %v2253, %v2252
        %v2269 = vpack.c.b16 %v2255, %v2254
        %v2270 = vpack.c.b16 %v2257, %v2256
        %v2271 = vpack.c.b16 %v2259, %v2258
        %v2272 = vpack.c.b16 %v2261, %v2260
        %v2273 = vpack.c.b16 %v2263, %v2262
        %v2274 = vpack.c.b16 %v2265, %v2264
        %v2275 = vpack.c.b16 %v2267, %v2266
        %2284 = vmatpush.bf16.msra.mxu0 %v2275
        %2285 = vmatpush.bf16.msra.mxu0 %v2274
        %2286 = vmatpush.bf16.msra.mxu0 %v2273
        %2287 = vmatpush.bf16.msra.mxu0 %v2272
        %2288 = vmatpush.bf16.msra.mxu0 %v2271
        %2289 = vmatpush.bf16.msra.mxu0 %v2270
        %2290 = vmatpush.bf16.msra.mxu0 %v2269
        %2291 = vmatpush.bf16.msra.mxu0 %v2268
        %2292 = vmatmul.bf16.gmra.mxu0 %v1134
        %v2293 = vpop.f32.mrf.mxu0
        %v2294 = vadd.f32 0.0, %v2293
        %v2295 = vpop.f32.mrf.mxu0
        %v2296 = vadd.f32 0.0, %v2295
        %2297 = vmatmul.bf16.gmra.mxu0 %v1135
        %v2298 = vpop.f32.mrf.mxu0
        %v2299 = vadd.f32 0.0, %v2298
        %v2300 = vpop.f32.mrf.mxu0
        %v2301 = vadd.f32 0.0, %v2300
        %2302 = vmatmul.bf16.gmra.mxu0 %v1136
        %v2303 = vpop.f32.mrf.mxu0
        %v2304 = vadd.f32 0.0, %v2303
        %v2305 = vpop.f32.mrf.mxu0
        %v2306 = vadd.f32 0.0, %v2305
        %2307 = vmatmul.bf16.gmra.mxu0 %v1137
        %v2308 = vpop.f32.mrf.mxu0
        %v2309 = vadd.f32 0.0, %v2308
        %v2310 = vpop.f32.mrf.mxu0
        %v2311 = vadd.f32 0.0, %v2310
        %2312 = vmatmul.bf16.gmra.mxu0 %v1138
        %v2313 = vpop.f32.mrf.mxu0
        %v2314 = vadd.f32 0.0, %v2313
        %v2315 = vpop.f32.mrf.mxu0
        %v2316 = vadd.f32 0.0, %v2315
        %2317 = vmatmul.bf16.gmra.mxu0 %v1139
        %v2318 = vpop.f32.mrf.mxu0
        %v2319 = vadd.f32 0.0, %v2318
        %v2320 = vpop.f32.mrf.mxu0
        %v2321 = vadd.f32 0.0, %v2320
        %2322 = vmatmul.bf16.gmra.mxu0 %v1140
        %v2323 = vpop.f32.mrf.mxu0
        %v2324 = vadd.f32 0.0, %v2323
        %v2325 = vpop.f32.mrf.mxu0
        %v2326 = vadd.f32 0.0, %v2325
        %2327 = vmatmul.bf16.gmra.mxu0 %v1141
        %v2328 = vpop.f32.mrf.mxu0
        %v2329 = vadd.f32 0.0, %v2328
        %v2330 = vpop.f32.mrf.mxu0
        %v2331 = vadd.f32 0.0, %v2330
        %2332 = vmatmul.bf16.gmra.mxu0 %v1820
        %v2333 = vpop.f32.mrf.mxu0
        %v2334 = vadd.f32 0.0, %v2333
        %v2335 = vpop.f32.mrf.mxu0
        %v2336 = vadd.f32 0.0, %v2335
        %2337 = vmatmul.bf16.gmra.mxu0 %v1821
        %v2338 = vpop.f32.mrf.mxu0
        %v2339 = vadd.f32 0.0, %v2338
        %v2340 = vpop.f32.mrf.mxu0
        %v2341 = vadd.f32 0.0, %v2340
        %2342 = vmatmul.bf16.gmra.mxu0 %v1822
        %v2343 = vpop.f32.mrf.mxu0
        %v2344 = vadd.f32 0.0, %v2343
        %v2345 = vpop.f32.mrf.mxu0
        %v2346 = vadd.f32 0.0, %v2345
        %2347 = vmatmul.bf16.gmra.mxu0 %v1823
        %v2348 = vpop.f32.mrf.mxu0
        %v2349 = vadd.f32 0.0, %v2348
        %v2350 = vpop.f32.mrf.mxu0
        %v2351 = vadd.f32 0.0, %v2350
        %2352 = vmatmul.bf16.gmra.mxu0 %v2228
        %v2353 = vpop.f32.mrf.mxu0
        %v2354 = vadd.f32 0.0, %v2353
        %v2355 = vpop.f32.mrf.mxu0
        %v2356 = vadd.f32 0.0, %v2355
        %2357 = vmatmul.bf16.gmra.mxu0 %v2229
        %v2358 = vpop.f32.mrf.mxu0
        %v2359 = vadd.f32 0.0, %v2358
        %v2360 = vpop.f32.mrf.mxu0
        %v2361 = vadd.f32 0.0, %v2360
        %2362 = vmatmul.bf16.gmra.mxu0 %v2230
        %v2363 = vpop.f32.mrf.mxu0
        %v2364 = vadd.f32 0.0, %v2363
        %v2365 = vpop.f32.mrf.mxu0
        %v2366 = vadd.f32 0.0, %v2365
        %2367 = vmatmul.bf16.gmra.mxu0 %v2231
        %v2368 = vpop.f32.mrf.mxu0
        %v2369 = vadd.f32 0.0, %v2368
        %v2370 = vpop.f32.mrf.mxu0
        %v2371 = vadd.f32 0.0, %v2370
        %2372 = vdwg.mxu0
        %v2373 = vadd.f32 %v2163, %v2294
        %v2374 = vadd.f32 %v2164, %v2296
        %v2375 = vadd.f32 %v2165, %v2299
        %v2376 = vadd.f32 %v2166, %v2301
        %v2377 = vadd.f32 %v2167, %v2304
        %v2378 = vadd.f32 %v2168, %v2306
        %v2379 = vadd.f32 %v2169, %v2309
        %v2380 = vadd.f32 %v2170, %v2311
        %v2381 = vadd.f32 %v2171, %v2314
        %v2382 = vadd.f32 %v2172, %v2316
        %v2383 = vadd.f32 %v2173, %v2319
        %v2384 = vadd.f32 %v2174, %v2321
        %v2385 = vadd.f32 %v2175, %v2324
        %v2386 = vadd.f32 %v2176, %v2326
        %v2387 = vadd.f32 %v2177, %v2329
        %v2388 = vadd.f32 %v2178, %v2331
        %v2389 = vadd.f32 %v2179, %v2334
        %v2390 = vadd.f32 %v2180, %v2336
        %v2391 = vadd.f32 %v2181, %v2339
        %v2392 = vadd.f32 %v2182, %v2341
        %v2393 = vadd.f32 %v2183, %v2344
        %v2394 = vadd.f32 %v2184, %v2346
        %v2395 = vadd.f32 %v2185, %v2349
        %v2396 = vadd.f32 %v2186, %v2351
        %v2397 = vadd.f32 %v2187, %v2354
        %v2398 = vadd.f32 %v2188, %v2356
        %v2399 = vadd.f32 %v2189, %v2359
        %v2400 = vadd.f32 %v2190, %v2361
        %v2401 = vadd.f32 %v2191, %v2364
        %v2402 = vadd.f32 %v2192, %v2366
        %v2403 = vadd.f32 %v2193, %v2369
        %v2404 = vadd.f32 %v2194, %v2371
        %v2409 = vrot.slane %v524, 6
        %v2410 = vrot.slane %v2409, 4
        %v2411 = vrot.slane %v525, 6
        %v2412 = vsel %vm633, %v2410, %v2411
        %v2413 = vrot.slane %v2411, 4
        %v2414 = vrot.slane %v526, 6
        %v2415 = vsel %vm633, %v2413, %v2414
        %v2416 = vrot.slane %v529, 6
        %v2417 = vrot.slane %v2416, 4
        %v2418 = vrot.slane %v530, 6
        %v2419 = vsel %vm633, %v2417, %v2418
        %v2420 = vrot.slane %v2418, 4
        %v2421 = vrot.slane %v531, 6
        %v2422 = vsel %vm633, %v2420, %v2421
        %v2423 = vrot.slane %v534, 6
        %v2424 = vrot.slane %v2423, 4
        %v2425 = vrot.slane %v535, 6
        %v2426 = vsel %vm633, %v2424, %v2425
        %v2427 = vrot.slane %v2425, 4
        %v2428 = vrot.slane %v536, 6
        %v2429 = vsel %vm633, %v2427, %v2428
        %v2430 = vrot.slane %v539, 6
        %v2431 = vrot.slane %v2430, 4
        %v2432 = vrot.slane %v540, 6
        %v2433 = vsel %vm633, %v2431, %v2432
        %v2434 = vrot.slane %v2432, 4
        %v2435 = vrot.slane %v541, 6
        %v2436 = vsel %vm633, %v2434, %v2435
        %s2437 = scalar_lea.vmem [#allocation8], 448
        %v2438 = vld [vmem:[%s2437] sm:$0xf]
        %v2439 = vld [vmem:[%s2437 + $0x4] sm:$0xf]
        %v2440 = vld [vmem:[%s2437 + $0x8] sm:$0xf]
        %v2441 = vld [vmem:[%s2437 + $0xc] sm:$0xf]
        %v2442 = vld [vmem:[%s2437 + $0x10] sm:$0xf]
        %v2443 = vld [vmem:[%s2437 + $0x14] sm:$0xf]
        %v2444 = vld [vmem:[%s2437 + $0x18] sm:$0xf]
        %v2445 = vld [vmem:[%s2437 + $0x1c] sm:$0xf]
        %v2446 = vld [vmem:[%s2437 + $0x20] sm:$0xf]
        %v2447 = vld [vmem:[%s2437 + $0x24] sm:$0xf]
        %v2448 = vld [vmem:[%s2437 + $0x28] sm:$0xf]
        %v2449 = vld [vmem:[%s2437 + $0x2c] sm:$0xf]
        %v2450 = vld [vmem:[%s2437 + $0x30] sm:$0xf]
        %v2451 = vld [vmem:[%s2437 + $0x34] sm:$0xf]
        %v2452 = vld [vmem:[%s2437 + $0x38] sm:$0xf]
        %v2453 = vld [vmem:[%s2437 + $0x3c] sm:$0xf]
        %v2454 = vunpack.c.l.b16 %v2412
        %v2455 = vunpack.c.l.b16 %v2415
        %v2456 = vunpack.c.l.b16 %v2419
        %v2457 = vunpack.c.l.b16 %v2422
        %v2458 = vunpack.c.l.b16 %v2426
        %v2459 = vunpack.c.l.b16 %v2429
        %v2460 = vunpack.c.l.b16 %v2433
        %v2461 = vunpack.c.l.b16 %v2436
        %v2462 = vpack.c.b16 %v2455, %v2454
        %v2463 = vpack.c.b16 %v2457, %v2456
        %v2464 = vpack.c.b16 %v2459, %v2458
        %v2465 = vpack.c.b16 %v2461, %v2460
        %v2486 = vunpack.c.l.b16 %v2438
        %v2487 = vunpack.c.l.b16 %v2439
        %v2488 = vunpack.c.l.b16 %v2440
        %v2489 = vunpack.c.l.b16 %v2441
        %v2490 = vunpack.c.l.b16 %v2442
        %v2491 = vunpack.c.l.b16 %v2443
        %v2492 = vunpack.c.l.b16 %v2444
        %v2493 = vunpack.c.l.b16 %v2445
        %v2494 = vunpack.c.l.b16 %v2446
        %v2495 = vunpack.c.l.b16 %v2447
        %v2496 = vunpack.c.l.b16 %v2448
        %v2497 = vunpack.c.l.b16 %v2449
        %v2498 = vunpack.c.l.b16 %v2450
        %v2499 = vunpack.c.l.b16 %v2451
        %v2500 = vunpack.c.l.b16 %v2452
        %v2501 = vunpack.c.l.b16 %v2453
        %v2502 = vpack.c.b16 %v2487, %v2486
        %v2503 = vpack.c.b16 %v2489, %v2488
        %v2504 = vpack.c.b16 %v2491, %v2490
        %v2505 = vpack.c.b16 %v2493, %v2492
        %v2506 = vpack.c.b16 %v2495, %v2494
        %v2507 = vpack.c.b16 %v2497, %v2496
        %v2508 = vpack.c.b16 %v2499, %v2498
        %v2509 = vpack.c.b16 %v2501, %v2500
        %2518 = vmatpush.bf16.msra.mxu0 %v2509
        %2519 = vmatpush.bf16.msra.mxu0 %v2508
        %2520 = vmatpush.bf16.msra.mxu0 %v2507
        %2521 = vmatpush.bf16.msra.mxu0 %v2506
        %2522 = vmatpush.bf16.msra.mxu0 %v2505
        %2523 = vmatpush.bf16.msra.mxu0 %v2504
        %2524 = vmatpush.bf16.msra.mxu0 %v2503
        %2525 = vmatpush.bf16.msra.mxu0 %v2502
        %2526 = vmatmul.bf16.gmra.mxu0 %v782
        %v2527 = vpop.f32.mrf.mxu0
        %v2528 = vadd.f32 0.0, %v2527
        %v2529 = vpop.f32.mrf.mxu0
        %v2530 = vadd.f32 0.0, %v2529
        %2531 = vmatmul.bf16.gmra.mxu0 %v783
        %v2532 = vpop.f32.mrf.mxu0
        %v2533 = vadd.f32 0.0, %v2532
        %v2534 = vpop.f32.mrf.mxu0
        %v2535 = vadd.f32 0.0, %v2534
        %2536 = vmatmul.bf16.gmra.mxu0 %v784
        %v2537 = vpop.f32.mrf.mxu0
        %v2538 = vadd.f32 0.0, %v2537
        %v2539 = vpop.f32.mrf.mxu0
        %v2540 = vadd.f32 0.0, %v2539
        %2541 = vmatmul.bf16.gmra.mxu0 %v785
        %v2542 = vpop.f32.mrf.mxu0
        %v2543 = vadd.f32 0.0, %v2542
        %v2544 = vpop.f32.mrf.mxu0
        %v2545 = vadd.f32 0.0, %v2544
        %2546 = vmatmul.bf16.gmra.mxu0 %v786
        %v2547 = vpop.f32.mrf.mxu0
        %v2548 = vadd.f32 0.0, %v2547
        %v2549 = vpop.f32.mrf.mxu0
        %v2550 = vadd.f32 0.0, %v2549
        %2551 = vmatmul.bf16.gmra.mxu0 %v787
        %v2552 = vpop.f32.mrf.mxu0
        %v2553 = vadd.f32 0.0, %v2552
        %v2554 = vpop.f32.mrf.mxu0
        %v2555 = vadd.f32 0.0, %v2554
        %2556 = vmatmul.bf16.gmra.mxu0 %v788
        %v2557 = vpop.f32.mrf.mxu0
        %v2558 = vadd.f32 0.0, %v2557
        %v2559 = vpop.f32.mrf.mxu0
        %v2560 = vadd.f32 0.0, %v2559
        %2561 = vmatmul.bf16.gmra.mxu0 %v789
        %v2562 = vpop.f32.mrf.mxu0
        %v2563 = vadd.f32 0.0, %v2562
        %v2564 = vpop.f32.mrf.mxu0
        %v2565 = vadd.f32 0.0, %v2564
        %2566 = vmatmul.bf16.gmra.mxu0 %v790
        %v2567 = vpop.f32.mrf.mxu0
        %v2568 = vadd.f32 0.0, %v2567
        %v2569 = vpop.f32.mrf.mxu0
        %v2570 = vadd.f32 0.0, %v2569
        %2571 = vmatmul.bf16.gmra.mxu0 %v791
        %v2572 = vpop.f32.mrf.mxu0
        %v2573 = vadd.f32 0.0, %v2572
        %v2574 = vpop.f32.mrf.mxu0
        %v2575 = vadd.f32 0.0, %v2574
        %2576 = vmatmul.bf16.gmra.mxu0 %v792
        %v2577 = vpop.f32.mrf.mxu0
        %v2578 = vadd.f32 0.0, %v2577
        %v2579 = vpop.f32.mrf.mxu0
        %v2580 = vadd.f32 0.0, %v2579
        %2581 = vmatmul.bf16.gmra.mxu0 %v793
        %v2582 = vpop.f32.mrf.mxu0
        %v2583 = vadd.f32 0.0, %v2582
        %v2584 = vpop.f32.mrf.mxu0
        %v2585 = vadd.f32 0.0, %v2584
        %2586 = vmatmul.bf16.gmra.mxu0 %v2462
        %v2587 = vpop.f32.mrf.mxu0
        %v2588 = vadd.f32 0.0, %v2587
        %v2589 = vpop.f32.mrf.mxu0
        %v2590 = vadd.f32 0.0, %v2589
        %2591 = vmatmul.bf16.gmra.mxu0 %v2463
        %v2592 = vpop.f32.mrf.mxu0
        %v2593 = vadd.f32 0.0, %v2592
        %v2594 = vpop.f32.mrf.mxu0
        %v2595 = vadd.f32 0.0, %v2594
        %2596 = vmatmul.bf16.gmra.mxu0 %v2464
        %v2597 = vpop.f32.mrf.mxu0
        %v2598 = vadd.f32 0.0, %v2597
        %v2599 = vpop.f32.mrf.mxu0
        %v2600 = vadd.f32 0.0, %v2599
        %2601 = vmatmul.bf16.gmra.mxu0 %v2465
        %v2602 = vpop.f32.mrf.mxu0
        %v2603 = vadd.f32 0.0, %v2602
        %v2604 = vpop.f32.mrf.mxu0
        %v2605 = vadd.f32 0.0, %v2604
        %2606 = vdwg.mxu0
        %v2607 = vadd.f32 %v2373, %v2528
        %v2608 = vadd.f32 %v2374, %v2530
        %v2609 = vadd.f32 %v2375, %v2533
        %v2610 = vadd.f32 %v2376, %v2535
        %v2611 = vadd.f32 %v2377, %v2538
        %v2612 = vadd.f32 %v2378, %v2540
        %v2613 = vadd.f32 %v2379, %v2543
        %v2614 = vadd.f32 %v2380, %v2545
        %v2615 = vadd.f32 %v2381, %v2548
        %v2616 = vadd.f32 %v2382, %v2550
        %v2617 = vadd.f32 %v2383, %v2553
        %v2618 = vadd.f32 %v2384, %v2555
        %v2619 = vadd.f32 %v2385, %v2558
        %v2620 = vadd.f32 %v2386, %v2560
        %v2621 = vadd.f32 %v2387, %v2563
        %v2622 = vadd.f32 %v2388, %v2565
        %v2623 = vadd.f32 %v2389, %v2568
        %v2624 = vadd.f32 %v2390, %v2570
        %v2625 = vadd.f32 %v2391, %v2573
        %v2626 = vadd.f32 %v2392, %v2575
        %v2627 = vadd.f32 %v2393, %v2578
        %v2628 = vadd.f32 %v2394, %v2580
        %v2629 = vadd.f32 %v2395, %v2583
        %v2630 = vadd.f32 %v2396, %v2585
        %v2631 = vadd.f32 %v2397, %v2588
        %v2632 = vadd.f32 %v2398, %v2590
        %v2633 = vadd.f32 %v2399, %v2593
        %v2634 = vadd.f32 %v2400, %v2595
        %v2635 = vadd.f32 %v2401, %v2598
        %v2636 = vadd.f32 %v2402, %v2600
        %v2637 = vadd.f32 %v2403, %v2603
        %v2638 = vadd.f32 %v2404, %v2605
        %s2639 = scalar_lea.vmem [#allocation8], 512
        %v2640 = vld [vmem:[%s2639] sm:$0xf]
        %v2641 = vld [vmem:[%s2639 + $0x4] sm:$0xf]
        %v2642 = vld [vmem:[%s2639 + $0x8] sm:$0xf]
        %v2643 = vld [vmem:[%s2639 + $0xc] sm:$0xf]
        %v2644 = vld [vmem:[%s2639 + $0x10] sm:$0xf]
        %v2645 = vld [vmem:[%s2639 + $0x14] sm:$0xf]
        %v2646 = vld [vmem:[%s2639 + $0x18] sm:$0xf]
        %v2647 = vld [vmem:[%s2639 + $0x1c] sm:$0xf]
        %v2648 = vld [vmem:[%s2639 + $0x20] sm:$0xf]
        %v2649 = vld [vmem:[%s2639 + $0x24] sm:$0xf]
        %v2650 = vld [vmem:[%s2639 + $0x28] sm:$0xf]
        %v2651 = vld [vmem:[%s2639 + $0x2c] sm:$0xf]
        %v2652 = vld [vmem:[%s2639 + $0x30] sm:$0xf]
        %v2653 = vld [vmem:[%s2639 + $0x34] sm:$0xf]
        %v2654 = vld [vmem:[%s2639 + $0x38] sm:$0xf]
        %v2655 = vld [vmem:[%s2639 + $0x3c] sm:$0xf]
        %v2656 = vunpack.c.l.b16 %v526
        %v2657 = vunpack.c.l.b16 %v531
        %v2658 = vunpack.c.l.b16 %v536
        %v2659 = vunpack.c.l.b16 %v541
        %v2660 = vpack.c.b16 %v2656, %v2221
        %v2661 = vpack.c.b16 %v2657, %v2223
        %v2662 = vpack.c.b16 %v2658, %v2225
        %v2663 = vpack.c.b16 %v2659, %v2227
        %v2684 = vunpack.c.l.b16 %v2640
        %v2685 = vunpack.c.l.b16 %v2641
        %v2686 = vunpack.c.l.b16 %v2642
        %v2687 = vunpack.c.l.b16 %v2643
        %v2688 = vunpack.c.l.b16 %v2644
        %v2689 = vunpack.c.l.b16 %v2645
        %v2690 = vunpack.c.l.b16 %v2646
        %v2691 = vunpack.c.l.b16 %v2647
        %v2692 = vunpack.c.l.b16 %v2648
        %v2693 = vunpack.c.l.b16 %v2649
        %v2694 = vunpack.c.l.b16 %v2650
        %v2695 = vunpack.c.l.b16 %v2651
        %v2696 = vunpack.c.l.b16 %v2652
        %v2697 = vunpack.c.l.b16 %v2653
        %v2698 = vunpack.c.l.b16 %v2654
        %v2699 = vunpack.c.l.b16 %v2655
        %v2700 = vpack.c.b16 %v2685, %v2684
        %v2701 = vpack.c.b16 %v2687, %v2686
        %v2702 = vpack.c.b16 %v2689, %v2688
        %v2703 = vpack.c.b16 %v2691, %v2690
        %v2704 = vpack.c.b16 %v2693, %v2692
        %v2705 = vpack.c.b16 %v2695, %v2694
        %v2706 = vpack.c.b16 %v2697, %v2696
        %v2707 = vpack.c.b16 %v2699, %v2698
        %2716 = vmatpush.bf16.msra.mxu0 %v2707
        %2717 = vmatpush.bf16.msra.mxu0 %v2706
        %2718 = vmatpush.bf16.msra.mxu0 %v2705
        %2719 = vmatpush.bf16.msra.mxu0 %v2704
        %2720 = vmatpush.bf16.msra.mxu0 %v2703
        %2721 = vmatpush.bf16.msra.mxu0 %v2702
        %2722 = vmatpush.bf16.msra.mxu0 %v2701
        %2723 = vmatpush.bf16.msra.mxu0 %v2700
        %2724 = vmatmul.bf16.gmra.mxu0 %v1602
        %v2725 = vpop.f32.mrf.mxu0
        %v2726 = vadd.f32 0.0, %v2725
        %v2727 = vpop.f32.mrf.mxu0
        %v2728 = vadd.f32 0.0, %v2727
        %2729 = vmatmul.bf16.gmra.mxu0 %v1603
        %v2730 = vpop.f32.mrf.mxu0
        %v2731 = vadd.f32 0.0, %v2730
        %v2732 = vpop.f32.mrf.mxu0
        %v2733 = vadd.f32 0.0, %v2732
        %2734 = vmatmul.bf16.gmra.mxu0 %v1604
        %v2735 = vpop.f32.mrf.mxu0
        %v2736 = vadd.f32 0.0, %v2735
        %v2737 = vpop.f32.mrf.mxu0
        %v2738 = vadd.f32 0.0, %v2737
        %2739 = vmatmul.bf16.gmra.mxu0 %v1605
        %v2740 = vpop.f32.mrf.mxu0
        %v2741 = vadd.f32 0.0, %v2740
        %v2742 = vpop.f32.mrf.mxu0
        %v2743 = vadd.f32 0.0, %v2742
        %2744 = vmatmul.bf16.gmra.mxu0 %v1606
        %v2745 = vpop.f32.mrf.mxu0
        %v2746 = vadd.f32 0.0, %v2745
        %v2747 = vpop.f32.mrf.mxu0
        %v2748 = vadd.f32 0.0, %v2747
        %2749 = vmatmul.bf16.gmra.mxu0 %v1607
        %v2750 = vpop.f32.mrf.mxu0
        %v2751 = vadd.f32 0.0, %v2750
        %v2752 = vpop.f32.mrf.mxu0
        %v2753 = vadd.f32 0.0, %v2752
        %2754 = vmatmul.bf16.gmra.mxu0 %v1608
        %v2755 = vpop.f32.mrf.mxu0
        %v2756 = vadd.f32 0.0, %v2755
        %v2757 = vpop.f32.mrf.mxu0
        %v2758 = vadd.f32 0.0, %v2757
        %2759 = vmatmul.bf16.gmra.mxu0 %v1609
        %v2760 = vpop.f32.mrf.mxu0
        %v2761 = vadd.f32 0.0, %v2760
        %v2762 = vpop.f32.mrf.mxu0
        %v2763 = vadd.f32 0.0, %v2762
        %2764 = vmatmul.bf16.gmra.mxu0 %v2018
        %v2765 = vpop.f32.mrf.mxu0
        %v2766 = vadd.f32 0.0, %v2765
        %v2767 = vpop.f32.mrf.mxu0
        %v2768 = vadd.f32 0.0, %v2767
        %2769 = vmatmul.bf16.gmra.mxu0 %v2019
        %v2770 = vpop.f32.mrf.mxu0
        %v2771 = vadd.f32 0.0, %v2770
        %v2772 = vpop.f32.mrf.mxu0
        %v2773 = vadd.f32 0.0, %v2772
        %2774 = vmatmul.bf16.gmra.mxu0 %v2020
        %v2775 = vpop.f32.mrf.mxu0
        %v2776 = vadd.f32 0.0, %v2775
        %v2777 = vpop.f32.mrf.mxu0
        %v2778 = vadd.f32 0.0, %v2777
        %2779 = vmatmul.bf16.gmra.mxu0 %v2021
        %v2780 = vpop.f32.mrf.mxu0
        %v2781 = vadd.f32 0.0, %v2780
        %v2782 = vpop.f32.mrf.mxu0
        %v2783 = vadd.f32 0.0, %v2782
        %2784 = vmatmul.bf16.gmra.mxu0 %v2660
        %v2785 = vpop.f32.mrf.mxu0
        %v2786 = vadd.f32 0.0, %v2785
        %v2787 = vpop.f32.mrf.mxu0
        %v2788 = vadd.f32 0.0, %v2787
        %2789 = vmatmul.bf16.gmra.mxu0 %v2661
        %v2790 = vpop.f32.mrf.mxu0
        %v2791 = vadd.f32 0.0, %v2790
        %v2792 = vpop.f32.mrf.mxu0
        %v2793 = vadd.f32 0.0, %v2792
        %2794 = vmatmul.bf16.gmra.mxu0 %v2662
        %v2795 = vpop.f32.mrf.mxu0
        %v2796 = vadd.f32 0.0, %v2795
        %v2797 = vpop.f32.mrf.mxu0
        %v2798 = vadd.f32 0.0, %v2797
        %2799 = vmatmul.bf16.gmra.mxu0 %v2663
        %v2800 = vpop.f32.mrf.mxu0
        %v2801 = vadd.f32 0.0, %v2800
        %v2802 = vpop.f32.mrf.mxu0
        %v2803 = vadd.f32 0.0, %v2802
        %2804 = vdwg.mxu0
        %v2805 = vadd.f32 %v2607, %v2726
        %v2806 = vadd.f32 %v2608, %v2728
        %v2807 = vadd.f32 %v2609, %v2731
        %v2808 = vadd.f32 %v2610, %v2733
        %v2809 = vadd.f32 %v2611, %v2736
        %v2810 = vadd.f32 %v2612, %v2738
        %v2811 = vadd.f32 %v2613, %v2741
        %v2812 = vadd.f32 %v2614, %v2743
        %v2813 = vadd.f32 %v2615, %v2746
        %v2814 = vadd.f32 %v2616, %v2748
        %v2815 = vadd.f32 %v2617, %v2751
        %v2816 = vadd.f32 %v2618, %v2753
        %v2817 = vadd.f32 %v2619, %v2756
        %v2818 = vadd.f32 %v2620, %v2758
        %v2819 = vadd.f32 %v2621, %v2761
        %v2820 = vadd.f32 %v2622, %v2763
        %v2821 = vadd.f32 %v2623, %v2766
        %v2822 = vadd.f32 %v2624, %v2768
        %v2823 = vadd.f32 %v2625, %v2771
        %v2824 = vadd.f32 %v2626, %v2773
        %v2825 = vadd.f32 %v2627, %v2776
        %v2826 = vadd.f32 %v2628, %v2778
        %v2827 = vadd.f32 %v2629, %v2781
        %v2828 = vadd.f32 %v2630, %v2783
        %v2829 = vadd.f32 %v2631, %v2786
        %v2830 = vadd.f32 %v2632, %v2788
        %v2831 = vadd.f32 %v2633, %v2791
        %v2832 = vadd.f32 %v2634, %v2793
        %v2833 = vadd.f32 %v2635, %v2796
        %v2834 = vadd.f32 %v2636, %v2798
        %v2835 = vadd.f32 %v2637, %v2801
        %v2836 = vadd.f32 %v2638, %v2803
        %v2861 = vrot.slane %v403, 6
        %v2862 = vrot.slane %v2861, 4
        %v2863 = vrot.slane %v404, 6
        %v2864 = vsel %vm633, %v2862, %v2863
        %v2865 = vrot.slane %v2863, 4
        %v2866 = vrot.slane %v405, 6
        %v2867 = vsel %vm633, %v2865, %v2866
        %v2868 = vrot.slane %v408, 6
        %v2869 = vrot.slane %v2868, 4
        %v2870 = vrot.slane %v409, 6
        %v2871 = vsel %vm633, %v2869, %v2870
        %v2872 = vrot.slane %v2870, 4
        %v2873 = vrot.slane %v410, 6
        %v2874 = vsel %vm633, %v2872, %v2873
        %v2875 = vrot.slane %v413, 6
        %v2876 = vrot.slane %v2875, 4
        %v2877 = vrot.slane %v414, 6
        %v2878 = vsel %vm633, %v2876, %v2877
        %v2879 = vrot.slane %v2877, 4
        %v2880 = vrot.slane %v415, 6
        %v2881 = vsel %vm633, %v2879, %v2880
        %v2882 = vrot.slane %v418, 6
        %v2883 = vrot.slane %v2882, 4
        %v2884 = vrot.slane %v419, 6
        %v2885 = vsel %vm633, %v2883, %v2884
        %v2886 = vrot.slane %v2884, 4
        %v2887 = vrot.slane %v420, 6
        %v2888 = vsel %vm633, %v2886, %v2887
        %v2889 = vrot.slane %v423, 6
        %v2890 = vrot.slane %v2889, 4
        %v2891 = vsel %vm633, %v2890, %v1331
        %v2892 = vrot.slane %v428, 6
        %v2893 = vrot.slane %v2892, 4
        %v2894 = vsel %vm633, %v2893, %v1338
        %v2895 = vrot.slane %v433, 6
        %v2896 = vrot.slane %v2895, 4
        %v2897 = vsel %vm633, %v2896, %v1345
        %v2898 = vrot.slane %v438, 6
        %v2899 = vrot.slane %v2898, 4
        %v2900 = vsel %vm633, %v2899, %v1352
        %v2901 = vrot.slane %v443, 6
        %v2902 = vrot.slane %v2901, 4
        %v2903 = vsel %vm633, %v2902, %v634
        %v2904 = vrot.slane %v448, 6
        %v2905 = vrot.slane %v2904, 4
        %v2906 = vsel %vm633, %v2905, %v641
        %v2907 = vrot.slane %v453, 6
        %v2908 = vrot.slane %v2907, 4
        %v2909 = vsel %vm633, %v2908, %v648
        %v2910 = vrot.slane %v458, 6
        %v2911 = vrot.slane %v2910, 4
        %v2912 = vsel %vm633, %v2911, %v655
        %v2913 = vrot.slane %v463, 6
        %v2914 = vrot.slane %v2913, 4
        %v2915 = vsel %vm633, %v2914, %v662
        %v2916 = vrot.slane %v468, 6
        %v2917 = vrot.slane %v2916, 4
        %v2918 = vsel %vm633, %v2917, %v669
        %v2919 = vrot.slane %v473, 6
        %v2920 = vrot.slane %v2919, 4
        %v2921 = vsel %vm633, %v2920, %v676
        %v2922 = vrot.slane %v478, 6
        %v2923 = vrot.slane %v2922, 4
        %v2924 = vsel %vm633, %v2923, %v683
        %v2925 = vld [vmem:[#allocation10] sm:$0xf]
        %v2926 = vld [vmem:[#allocation10 + $0x4] sm:$0xf]
        %v2927 = vld [vmem:[#allocation10 + $0x8] sm:$0xf]
        %v2928 = vld [vmem:[#allocation10 + $0xc] sm:$0xf]
        %v2929 = vld [vmem:[#allocation10 + $0x10] sm:$0xf]
        %v2930 = vld [vmem:[#allocation10 + $0x14] sm:$0xf]
        %v2931 = vld [vmem:[#allocation10 + $0x18] sm:$0xf]
        %v2932 = vld [vmem:[#allocation10 + $0x1c] sm:$0xf]
        %v2933 = vld [vmem:[#allocation10 + $0x20] sm:$0xf]
        %v2934 = vld [vmem:[#allocation10 + $0x24] sm:$0xf]
        %v2935 = vld [vmem:[#allocation10 + $0x28] sm:$0xf]
        %v2936 = vld [vmem:[#allocation10 + $0x2c] sm:$0xf]
        %v2937 = vld [vmem:[#allocation10 + $0x30] sm:$0xf]
        %v2938 = vld [vmem:[#allocation10 + $0x34] sm:$0xf]
        %v2939 = vld [vmem:[#allocation10 + $0x38] sm:$0xf]
        %v2940 = vld [vmem:[#allocation10 + $0x3c] sm:$0xf]
        %v2941 = vunpack.c.l.b16 %v2864
        %v2942 = vunpack.c.l.b16 %v2867
        %v2943 = vunpack.c.l.b16 %v2871
        %v2944 = vunpack.c.l.b16 %v2874
        %v2945 = vunpack.c.l.b16 %v2878
        %v2946 = vunpack.c.l.b16 %v2881
        %v2947 = vunpack.c.l.b16 %v2885
        %v2948 = vunpack.c.l.b16 %v2888
        %v2949 = vunpack.c.l.b16 %v2891
        %v2950 = vunpack.c.l.b16 %v2894
        %v2951 = vunpack.c.l.b16 %v2897
        %v2952 = vunpack.c.l.b16 %v2900
        %v2953 = vunpack.c.l.b16 %v2903
        %v2954 = vunpack.c.l.b16 %v2906
        %v2955 = vunpack.c.l.b16 %v2909
        %v2956 = vunpack.c.l.b16 %v2912
        %v2957 = vunpack.c.l.b16 %v2915
        %v2958 = vunpack.c.l.b16 %v2918
        %v2959 = vunpack.c.l.b16 %v2921
        %v2960 = vunpack.c.l.b16 %v2924
        %v2961 = vpack.c.b16 %v2942, %v2941
        %v2962 = vpack.c.b16 %v2944, %v2943
        %v2963 = vpack.c.b16 %v2946, %v2945
        %v2964 = vpack.c.b16 %v2948, %v2947
        %v2965 = vpack.c.b16 %v1376, %v2949
        %v2966 = vpack.c.b16 %v1378, %v2950
        %v2967 = vpack.c.b16 %v1380, %v2951
        %v2968 = vpack.c.b16 %v1382, %v2952
        %v2969 = vpack.c.b16 %v746, %v2953
        %v2970 = vpack.c.b16 %v748, %v2954
        %v2971 = vpack.c.b16 %v750, %v2955
        %v2972 = vpack.c.b16 %v752, %v2956
        %v2973 = vpack.c.b16 %v754, %v2957
        %v2974 = vpack.c.b16 %v756, %v2958
        %v2975 = vpack.c.b16 %v758, %v2959
        %v2976 = vpack.c.b16 %v760, %v2960
        %v3009 = vunpack.c.l.b16 %v2925
        %v3010 = vunpack.c.l.b16 %v2926
        %v3011 = vunpack.c.l.b16 %v2927
        %v3012 = vunpack.c.l.b16 %v2928
        %v3013 = vunpack.c.l.b16 %v2929
        %v3014 = vunpack.c.l.b16 %v2930
        %v3015 = vunpack.c.l.b16 %v2931
        %v3016 = vunpack.c.l.b16 %v2932
        %v3017 = vunpack.c.l.b16 %v2933
        %v3018 = vunpack.c.l.b16 %v2934
        %v3019 = vunpack.c.l.b16 %v2935
        %v3020 = vunpack.c.l.b16 %v2936
        %v3021 = vunpack.c.l.b16 %v2937
        %v3022 = vunpack.c.l.b16 %v2938
        %v3023 = vunpack.c.l.b16 %v2939
        %v3024 = vunpack.c.l.b16 %v2940
        %v3025 = vpack.c.b16 %v3010, %v3009
        %v3026 = vpack.c.b16 %v3012, %v3011
        %v3027 = vpack.c.b16 %v3014, %v3013
        %v3028 = vpack.c.b16 %v3016, %v3015
        %v3029 = vpack.c.b16 %v3018, %v3017
        %v3030 = vpack.c.b16 %v3020, %v3019
        %v3031 = vpack.c.b16 %v3022, %v3021
        %v3032 = vpack.c.b16 %v3024, %v3023
        %3041 = vmatpush.bf16.msra.mxu0 %v3032
        %3042 = vmatpush.bf16.msra.mxu0 %v3031
        %3043 = vmatpush.bf16.msra.mxu0 %v3030
        %3044 = vmatpush.bf16.msra.mxu0 %v3029
        %3045 = vmatpush.bf16.msra.mxu0 %v3028
        %3046 = vmatpush.bf16.msra.mxu0 %v3027
        %3047 = vmatpush.bf16.msra.mxu0 %v3026
        %3048 = vmatpush.bf16.msra.mxu0 %v3025
        %3049 = vmatmul.bf16.gmra.mxu0 %v2961
        %v3050 = vpop.f32.mrf.mxu0
        %v3051 = vadd.f32 0.0, %v3050
        %v3052 = vpop.f32.mrf.mxu0
        %v3053 = vadd.f32 0.0, %v3052
        %3054 = vmatmul.bf16.gmra.mxu0 %v2962
        %v3055 = vpop.f32.mrf.mxu0
        %v3056 = vadd.f32 0.0, %v3055
        %v3057 = vpop.f32.mrf.mxu0
        %v3058 = vadd.f32 0.0, %v3057
        %3059 = vmatmul.bf16.gmra.mxu0 %v2963
        %v3060 = vpop.f32.mrf.mxu0
        %v3061 = vadd.f32 0.0, %v3060
        %v3062 = vpop.f32.mrf.mxu0
        %v3063 = vadd.f32 0.0, %v3062
        %3064 = vmatmul.bf16.gmra.mxu0 %v2964
        %v3065 = vpop.f32.mrf.mxu0
        %v3066 = vadd.f32 0.0, %v3065
        %v3067 = vpop.f32.mrf.mxu0
        %v3068 = vadd.f32 0.0, %v3067
        %3069 = vmatmul.bf16.gmra.mxu0 %v2965
        %v3070 = vpop.f32.mrf.mxu0
        %v3071 = vadd.f32 0.0, %v3070
        %v3072 = vpop.f32.mrf.mxu0
        %v3073 = vadd.f32 0.0, %v3072
        %3074 = vmatmul.bf16.gmra.mxu0 %v2966
        %v3075 = vpop.f32.mrf.mxu0
        %v3076 = vadd.f32 0.0, %v3075
        %v3077 = vpop.f32.mrf.mxu0
        %v3078 = vadd.f32 0.0, %v3077
        %3079 = vmatmul.bf16.gmra.mxu0 %v2967
        %v3080 = vpop.f32.mrf.mxu0
        %v3081 = vadd.f32 0.0, %v3080
        %v3082 = vpop.f32.mrf.mxu0
        %v3083 = vadd.f32 0.0, %v3082
        %3084 = vmatmul.bf16.gmra.mxu0 %v2968
        %v3085 = vpop.f32.mrf.mxu0
        %v3086 = vadd.f32 0.0, %v3085
        %v3087 = vpop.f32.mrf.mxu0
        %v3088 = vadd.f32 0.0, %v3087
        %3089 = vmatmul.bf16.gmra.mxu0 %v2969
        %v3090 = vpop.f32.mrf.mxu0
        %v3091 = vadd.f32 0.0, %v3090
        %v3092 = vpop.f32.mrf.mxu0
        %v3093 = vadd.f32 0.0, %v3092
        %3094 = vmatmul.bf16.gmra.mxu0 %v2970
        %v3095 = vpop.f32.mrf.mxu0
        %v3096 = vadd.f32 0.0, %v3095
        %v3097 = vpop.f32.mrf.mxu0
        %v3098 = vadd.f32 0.0, %v3097
        %3099 = vmatmul.bf16.gmra.mxu0 %v2971
        %v3100 = vpop.f32.mrf.mxu0
        %v3101 = vadd.f32 0.0, %v3100
        %v3102 = vpop.f32.mrf.mxu0
        %v3103 = vadd.f32 0.0, %v3102
        %3104 = vmatmul.bf16.gmra.mxu0 %v2972
        %v3105 = vpop.f32.mrf.mxu0
        %v3106 = vadd.f32 0.0, %v3105
        %v3107 = vpop.f32.mrf.mxu0
        %v3108 = vadd.f32 0.0, %v3107
        %3109 = vmatmul.bf16.gmra.mxu0 %v2973
        %v3110 = vpop.f32.mrf.mxu0
        %v3111 = vadd.f32 0.0, %v3110
        %v3112 = vpop.f32.mrf.mxu0
        %v3113 = vadd.f32 0.0, %v3112
        %3114 = vmatmul.bf16.gmra.mxu0 %v2974
        %v3115 = vpop.f32.mrf.mxu0
        %v3116 = vadd.f32 0.0, %v3115
        %v3117 = vpop.f32.mrf.mxu0
        %v3118 = vadd.f32 0.0, %v3117
        %3119 = vmatmul.bf16.gmra.mxu0 %v2975
        %v3120 = vpop.f32.mrf.mxu0
        %v3121 = vadd.f32 0.0, %v3120
        %v3122 = vpop.f32.mrf.mxu0
        %v3123 = vadd.f32 0.0, %v3122
        %3124 = vmatmul.bf16.gmra.mxu0 %v2976
        %v3125 = vpop.f32.mrf.mxu0
        %v3126 = vadd.f32 0.0, %v3125
        %v3127 = vpop.f32.mrf.mxu0
        %v3128 = vadd.f32 0.0, %v3127
        %3129 = vdwg.mxu0
        %v3130 = vadd.f32 %v2805, %v3051
        %v3131 = vadd.f32 %v2806, %v3053
        %v3132 = vadd.f32 %v2807, %v3056
        %v3133 = vadd.f32 %v2808, %v3058
        %v3134 = vadd.f32 %v2809, %v3061
        %v3135 = vadd.f32 %v2810, %v3063
        %v3136 = vadd.f32 %v2811, %v3066
        %v3137 = vadd.f32 %v2812, %v3068
        %v3138 = vadd.f32 %v2813, %v3071
        %v3139 = vadd.f32 %v2814, %v3073
        %v3140 = vadd.f32 %v2815, %v3076
        %v3141 = vadd.f32 %v2816, %v3078
        %v3142 = vadd.f32 %v2817, %v3081
        %v3143 = vadd.f32 %v2818, %v3083
        %v3144 = vadd.f32 %v2819, %v3086
        %v3145 = vadd.f32 %v2820, %v3088
        %v3146 = vadd.f32 %v2821, %v3091
        %v3147 = vadd.f32 %v2822, %v3093
        %v3148 = vadd.f32 %v2823, %v3096
        %v3149 = vadd.f32 %v2824, %v3098
        %v3150 = vadd.f32 %v2825, %v3101
        %v3151 = vadd.f32 %v2826, %v3103
        %v3152 = vadd.f32 %v2827, %v3106
        %v3153 = vadd.f32 %v2828, %v3108
        %v3154 = vadd.f32 %v2829, %v3111
        %v3155 = vadd.f32 %v2830, %v3113
        %v3156 = vadd.f32 %v2831, %v3116
        %v3157 = vadd.f32 %v2832, %v3118
        %v3158 = vadd.f32 %v2833, %v3121
        %v3159 = vadd.f32 %v2834, %v3123
        %v3160 = vadd.f32 %v2835, %v3126
        %v3161 = vadd.f32 %v2836, %v3128
        %v3166 = vrot.slane %v2866, 4
        %v3167 = vrot.slane %v406, 6
        %v3168 = vsel %vm633, %v3166, %v3167
        %v3169 = vrot.slane %v2873, 4
        %v3170 = vrot.slane %v411, 6
        %v3171 = vsel %vm633, %v3169, %v3170
        %v3172 = vrot.slane %v2880, 4
        %v3173 = vrot.slane %v416, 6
        %v3174 = vsel %vm633, %v3172, %v3173
        %v3175 = vrot.slane %v2887, 4
        %v3176 = vrot.slane %v421, 6
        %v3177 = vsel %vm633, %v3175, %v3176
        %s3178 = scalar_lea.vmem [#allocation10], 64
        %v3179 = vld [vmem:[%s3178] sm:$0xf]
        %v3180 = vld [vmem:[%s3178 + $0x4] sm:$0xf]
        %v3181 = vld [vmem:[%s3178 + $0x8] sm:$0xf]
        %v3182 = vld [vmem:[%s3178 + $0xc] sm:$0xf]
        %v3183 = vld [vmem:[%s3178 + $0x10] sm:$0xf]
        %v3184 = vld [vmem:[%s3178 + $0x14] sm:$0xf]
        %v3185 = vld [vmem:[%s3178 + $0x18] sm:$0xf]
        %v3186 = vld [vmem:[%s3178 + $0x1c] sm:$0xf]
        %v3187 = vld [vmem:[%s3178 + $0x20] sm:$0xf]
        %v3188 = vld [vmem:[%s3178 + $0x24] sm:$0xf]
        %v3189 = vld [vmem:[%s3178 + $0x28] sm:$0xf]
        %v3190 = vld [vmem:[%s3178 + $0x2c] sm:$0xf]
        %v3191 = vld [vmem:[%s3178 + $0x30] sm:$0xf]
        %v3192 = vld [vmem:[%s3178 + $0x34] sm:$0xf]
        %v3193 = vld [vmem:[%s3178 + $0x38] sm:$0xf]
        %v3194 = vld [vmem:[%s3178 + $0x3c] sm:$0xf]
        %v3195 = vunpack.c.l.b16 %v3168
        %v3196 = vunpack.c.l.b16 %v3171
        %v3197 = vunpack.c.l.b16 %v3174
        %v3198 = vunpack.c.l.b16 %v3177
        %v3199 = vpack.c.b16 %v3195, %v2942
        %v3200 = vpack.c.b16 %v3196, %v2944
        %v3201 = vpack.c.b16 %v3197, %v2946
        %v3202 = vpack.c.b16 %v3198, %v2948
        %v3223 = vunpack.c.l.b16 %v3179
        %v3224 = vunpack.c.l.b16 %v3180
        %v3225 = vunpack.c.l.b16 %v3181
        %v3226 = vunpack.c.l.b16 %v3182
        %v3227 = vunpack.c.l.b16 %v3183
        %v3228 = vunpack.c.l.b16 %v3184
        %v3229 = vunpack.c.l.b16 %v3185
        %v3230 = vunpack.c.l.b16 %v3186
        %v3231 = vunpack.c.l.b16 %v3187
        %v3232 = vunpack.c.l.b16 %v3188
        %v3233 = vunpack.c.l.b16 %v3189
        %v3234 = vunpack.c.l.b16 %v3190
        %v3235 = vunpack.c.l.b16 %v3191
        %v3236 = vunpack.c.l.b16 %v3192
        %v3237 = vunpack.c.l.b16 %v3193
        %v3238 = vunpack.c.l.b16 %v3194
        %v3239 = vpack.c.b16 %v3224, %v3223
        %v3240 = vpack.c.b16 %v3226, %v3225
        %v3241 = vpack.c.b16 %v3228, %v3227
        %v3242 = vpack.c.b16 %v3230, %v3229
        %v3243 = vpack.c.b16 %v3232, %v3231
        %v3244 = vpack.c.b16 %v3234, %v3233
        %v3245 = vpack.c.b16 %v3236, %v3235
        %v3246 = vpack.c.b16 %v3238, %v3237
        %3255 = vmatpush.bf16.msra.mxu0 %v3246
        %3256 = vmatpush.bf16.msra.mxu0 %v3245
        %3257 = vmatpush.bf16.msra.mxu0 %v3244
        %3258 = vmatpush.bf16.msra.mxu0 %v3243
        %3259 = vmatpush.bf16.msra.mxu0 %v3242
        %3260 = vmatpush.bf16.msra.mxu0 %v3241
        %3261 = vmatpush.bf16.msra.mxu0 %v3240
        %3262 = vmatpush.bf16.msra.mxu0 %v3239
        %3263 = vmatmul.bf16.gmra.mxu0 %v3199
        %v3264 = vpop.f32.mrf.mxu0
        %v3265 = vadd.f32 0.0, %v3264
        %v3266 = vpop.f32.mrf.mxu0
        %v3267 = vadd.f32 0.0, %v3266
        %3268 = vmatmul.bf16.gmra.mxu0 %v3200
        %v3269 = vpop.f32.mrf.mxu0
        %v3270 = vadd.f32 0.0, %v3269
        %v3271 = vpop.f32.mrf.mxu0
        %v3272 = vadd.f32 0.0, %v3271
        %3273 = vmatmul.bf16.gmra.mxu0 %v3201
        %v3274 = vpop.f32.mrf.mxu0
        %v3275 = vadd.f32 0.0, %v3274
        %v3276 = vpop.f32.mrf.mxu0
        %v3277 = vadd.f32 0.0, %v3276
        %3278 = vmatmul.bf16.gmra.mxu0 %v3202
        %v3279 = vpop.f32.mrf.mxu0
        %v3280 = vadd.f32 0.0, %v3279
        %v3281 = vpop.f32.mrf.mxu0
        %v3282 = vadd.f32 0.0, %v3281
        %3283 = vmatmul.bf16.gmra.mxu0 %v1384
        %v3284 = vpop.f32.mrf.mxu0
        %v3285 = vadd.f32 0.0, %v3284
        %v3286 = vpop.f32.mrf.mxu0
        %v3287 = vadd.f32 0.0, %v3286
        %3288 = vmatmul.bf16.gmra.mxu0 %v1385
        %v3289 = vpop.f32.mrf.mxu0
        %v3290 = vadd.f32 0.0, %v3289
        %v3291 = vpop.f32.mrf.mxu0
        %v3292 = vadd.f32 0.0, %v3291
        %3293 = vmatmul.bf16.gmra.mxu0 %v1386
        %v3294 = vpop.f32.mrf.mxu0
        %v3295 = vadd.f32 0.0, %v3294
        %v3296 = vpop.f32.mrf.mxu0
        %v3297 = vadd.f32 0.0, %v3296
        %3298 = vmatmul.bf16.gmra.mxu0 %v1387
        %v3299 = vpop.f32.mrf.mxu0
        %v3300 = vadd.f32 0.0, %v3299
        %v3301 = vpop.f32.mrf.mxu0
        %v3302 = vadd.f32 0.0, %v3301
        %3303 = vmatmul.bf16.gmra.mxu0 %v778
        %v3304 = vpop.f32.mrf.mxu0
        %v3305 = vadd.f32 0.0, %v3304
        %v3306 = vpop.f32.mrf.mxu0
        %v3307 = vadd.f32 0.0, %v3306
        %3308 = vmatmul.bf16.gmra.mxu0 %v779
        %v3309 = vpop.f32.mrf.mxu0
        %v3310 = vadd.f32 0.0, %v3309
        %v3311 = vpop.f32.mrf.mxu0
        %v3312 = vadd.f32 0.0, %v3311
        %3313 = vmatmul.bf16.gmra.mxu0 %v780
        %v3314 = vpop.f32.mrf.mxu0
        %v3315 = vadd.f32 0.0, %v3314
        %v3316 = vpop.f32.mrf.mxu0
        %v3317 = vadd.f32 0.0, %v3316
        %3318 = vmatmul.bf16.gmra.mxu0 %v781
        %v3319 = vpop.f32.mrf.mxu0
        %v3320 = vadd.f32 0.0, %v3319
        %v3321 = vpop.f32.mrf.mxu0
        %v3322 = vadd.f32 0.0, %v3321
        %3323 = vmatmul.bf16.gmra.mxu0 %v782
        %v3324 = vpop.f32.mrf.mxu0
        %v3325 = vadd.f32 0.0, %v3324
        %v3326 = vpop.f32.mrf.mxu0
        %v3327 = vadd.f32 0.0, %v3326
        %3328 = vmatmul.bf16.gmra.mxu0 %v783
        %v3329 = vpop.f32.mrf.mxu0
        %v3330 = vadd.f32 0.0, %v3329
        %v3331 = vpop.f32.mrf.mxu0
        %v3332 = vadd.f32 0.0, %v3331
        %3333 = vmatmul.bf16.gmra.mxu0 %v784
        %v3334 = vpop.f32.mrf.mxu0
        %v3335 = vadd.f32 0.0, %v3334
        %v3336 = vpop.f32.mrf.mxu0
        %v3337 = vadd.f32 0.0, %v3336
        %3338 = vmatmul.bf16.gmra.mxu0 %v785
        %v3339 = vpop.f32.mrf.mxu0
        %v3340 = vadd.f32 0.0, %v3339
        %v3341 = vpop.f32.mrf.mxu0
        %v3342 = vadd.f32 0.0, %v3341
        %3343 = vdwg.mxu0
        %v3344 = vadd.f32 %v3130, %v3265
        %v3345 = vadd.f32 %v3131, %v3267
        %v3346 = vadd.f32 %v3132, %v3270
        %v3347 = vadd.f32 %v3133, %v3272
        %v3348 = vadd.f32 %v3134, %v3275
        %v3349 = vadd.f32 %v3135, %v3277
        %v3350 = vadd.f32 %v3136, %v3280
        %v3351 = vadd.f32 %v3137, %v3282
        %v3352 = vadd.f32 %v3138, %v3285
        %v3353 = vadd.f32 %v3139, %v3287
        %v3354 = vadd.f32 %v3140, %v3290
        %v3355 = vadd.f32 %v3141, %v3292
        %v3356 = vadd.f32 %v3142, %v3295
        %v3357 = vadd.f32 %v3143, %v3297
        %v3358 = vadd.f32 %v3144, %v3300
        %v3359 = vadd.f32 %v3145, %v3302
        %v3360 = vadd.f32 %v3146, %v3305
        %v3361 = vadd.f32 %v3147, %v3307
        %v3362 = vadd.f32 %v3148, %v3310
        %v3363 = vadd.f32 %v3149, %v3312
        %v3364 = vadd.f32 %v3150, %v3315
        %v3365 = vadd.f32 %v3151, %v3317
        %v3366 = vadd.f32 %v3152, %v3320
        %v3367 = vadd.f32 %v3153, %v3322
        %v3368 = vadd.f32 %v3154, %v3325
        %v3369 = vadd.f32 %v3155, %v3327
        %v3370 = vadd.f32 %v3156, %v3330
        %v3371 = vadd.f32 %v3157, %v3332
        %v3372 = vadd.f32 %v3158, %v3335
        %v3373 = vadd.f32 %v3159, %v3337
        %v3374 = vadd.f32 %v3160, %v3340
        %v3375 = vadd.f32 %v3161, %v3342
        %v3392 = vrot.slane %v3167, 4
        %v3393 = vrot.slane %v407, 6
        %v3394 = vsel %vm633, %v3392, %v3393
        %v3395 = vrot.slane %v3170, 4
        %v3396 = vrot.slane %v412, 6
        %v3397 = vsel %vm633, %v3395, %v3396
        %v3398 = vrot.slane %v3173, 4
        %v3399 = vrot.slane %v417, 6
        %v3400 = vsel %vm633, %v3398, %v3399
        %v3401 = vrot.slane %v3176, 4
        %v3402 = vrot.slane %v422, 6
        %v3403 = vsel %vm633, %v3401, %v3402
        %v3404 = vrot.slane %v1336, 4
        %v3405 = vrot.slane %v427, 6
        %v3406 = vsel %vm633, %v3404, %v3405
        %v3407 = vrot.slane %v1343, 4
        %v3408 = vrot.slane %v432, 6
        %v3409 = vsel %vm633, %v3407, %v3408
        %v3410 = vrot.slane %v1350, 4
        %v3411 = vrot.slane %v437, 6
        %v3412 = vsel %vm633, %v3410, %v3411
        %v3413 = vrot.slane %v1357, 4
        %v3414 = vrot.slane %v442, 6
        %v3415 = vsel %vm633, %v3413, %v3414
        %v3416 = vrot.slane %v639, 4
        %v3417 = vrot.slane %v447, 6
        %v3418 = vsel %vm633, %v3416, %v3417
        %v3419 = vrot.slane %v646, 4
        %v3420 = vrot.slane %v452, 6
        %v3421 = vsel %vm633, %v3419, %v3420
        %v3422 = vrot.slane %v653, 4
        %v3423 = vrot.slane %v457, 6
        %v3424 = vsel %vm633, %v3422, %v3423
        %v3425 = vrot.slane %v660, 4
        %v3426 = vrot.slane %v462, 6
        %v3427 = vsel %vm633, %v3425, %v3426
        %v3428 = vrot.slane %v667, 4
        %v3429 = vrot.slane %v467, 6
        %v3430 = vsel %vm633, %v3428, %v3429
        %v3431 = vrot.slane %v674, 4
        %v3432 = vrot.slane %v472, 6
        %v3433 = vsel %vm633, %v3431, %v3432
        %v3434 = vrot.slane %v681, 4
        %v3435 = vrot.slane %v477, 6
        %v3436 = vsel %vm633, %v3434, %v3435
        %v3437 = vrot.slane %v688, 4
        %v3438 = vrot.slane %v482, 6
        %v3439 = vsel %vm633, %v3437, %v3438
        %s3440 = scalar_lea.vmem [#allocation10], 128
        %v3441 = vld [vmem:[%s3440] sm:$0xf]
        %v3442 = vld [vmem:[%s3440 + $0x4] sm:$0xf]
        %v3443 = vld [vmem:[%s3440 + $0x8] sm:$0xf]
        %v3444 = vld [vmem:[%s3440 + $0xc] sm:$0xf]
        %v3445 = vld [vmem:[%s3440 + $0x10] sm:$0xf]
        %v3446 = vld [vmem:[%s3440 + $0x14] sm:$0xf]
        %v3447 = vld [vmem:[%s3440 + $0x18] sm:$0xf]
        %v3448 = vld [vmem:[%s3440 + $0x1c] sm:$0xf]
        %v3449 = vld [vmem:[%s3440 + $0x20] sm:$0xf]
        %v3450 = vld [vmem:[%s3440 + $0x24] sm:$0xf]
        %v3451 = vld [vmem:[%s3440 + $0x28] sm:$0xf]
        %v3452 = vld [vmem:[%s3440 + $0x2c] sm:$0xf]
        %v3453 = vld [vmem:[%s3440 + $0x30] sm:$0xf]
        %v3454 = vld [vmem:[%s3440 + $0x34] sm:$0xf]
        %v3455 = vld [vmem:[%s3440 + $0x38] sm:$0xf]
        %v3456 = vld [vmem:[%s3440 + $0x3c] sm:$0xf]
        %v3457 = vunpack.c.l.b16 %v3394
        %v3458 = vunpack.c.l.b16 %v3397
        %v3459 = vunpack.c.l.b16 %v3400
        %v3460 = vunpack.c.l.b16 %v3403
        %v3461 = vunpack.c.l.b16 %v3406
        %v3462 = vunpack.c.l.b16 %v3409
        %v3463 = vunpack.c.l.b16 %v3412
        %v3464 = vunpack.c.l.b16 %v3415
        %v3465 = vunpack.c.l.b16 %v3418
        %v3466 = vunpack.c.l.b16 %v3421
        %v3467 = vunpack.c.l.b16 %v3424
        %v3468 = vunpack.c.l.b16 %v3427
        %v3469 = vunpack.c.l.b16 %v3430
        %v3470 = vunpack.c.l.b16 %v3433
        %v3471 = vunpack.c.l.b16 %v3436
        %v3472 = vunpack.c.l.b16 %v3439
        %v3473 = vpack.c.b16 %v3457, %v3195
        %v3474 = vpack.c.b16 %v3458, %v3196
        %v3475 = vpack.c.b16 %v3459, %v3197
        %v3476 = vpack.c.b16 %v3460, %v3198
        %v3477 = vpack.c.b16 %v3461, %v1377
        %v3478 = vpack.c.b16 %v3462, %v1379
        %v3479 = vpack.c.b16 %v3463, %v1381
        %v3480 = vpack.c.b16 %v3464, %v1383
        %v3481 = vpack.c.b16 %v3465, %v747
        %v3482 = vpack.c.b16 %v3466, %v749
        %v3483 = vpack.c.b16 %v3467, %v751
        %v3484 = vpack.c.b16 %v3468, %v753
        %v3485 = vpack.c.b16 %v3469, %v755
        %v3486 = vpack.c.b16 %v3470, %v757
        %v3487 = vpack.c.b16 %v3471, %v759
        %v3488 = vpack.c.b16 %v3472, %v761
        %v3521 = vunpack.c.l.b16 %v3441
        %v3522 = vunpack.c.l.b16 %v3442
        %v3523 = vunpack.c.l.b16 %v3443
        %v3524 = vunpack.c.l.b16 %v3444
        %v3525 = vunpack.c.l.b16 %v3445
        %v3526 = vunpack.c.l.b16 %v3446
        %v3527 = vunpack.c.l.b16 %v3447
        %v3528 = vunpack.c.l.b16 %v3448
        %v3529 = vunpack.c.l.b16 %v3449
        %v3530 = vunpack.c.l.b16 %v3450
        %v3531 = vunpack.c.l.b16 %v3451
        %v3532 = vunpack.c.l.b16 %v3452
        %v3533 = vunpack.c.l.b16 %v3453
        %v3534 = vunpack.c.l.b16 %v3454
        %v3535 = vunpack.c.l.b16 %v3455
        %v3536 = vunpack.c.l.b16 %v3456
        %v3537 = vpack.c.b16 %v3522, %v3521
        %v3538 = vpack.c.b16 %v3524, %v3523
        %v3539 = vpack.c.b16 %v3526, %v3525
        %v3540 = vpack.c.b16 %v3528, %v3527
        %v3541 = vpack.c.b16 %v3530, %v3529
        %v3542 = vpack.c.b16 %v3532, %v3531
        %v3543 = vpack.c.b16 %v3534, %v3533
        %v3544 = vpack.c.b16 %v3536, %v3535
        %3553 = vmatpush.bf16.msra.mxu0 %v3544
        %3554 = vmatpush.bf16.msra.mxu0 %v3543
        %3555 = vmatpush.bf16.msra.mxu0 %v3542
        %3556 = vmatpush.bf16.msra.mxu0 %v3541
        %3557 = vmatpush.bf16.msra.mxu0 %v3540
        %3558 = vmatpush.bf16.msra.mxu0 %v3539
        %3559 = vmatpush.bf16.msra.mxu0 %v3538
        %3560 = vmatpush.bf16.msra.mxu0 %v3537
        %3561 = vmatmul.bf16.gmra.mxu0 %v3473
        %v3562 = vpop.f32.mrf.mxu0
        %v3563 = vadd.f32 0.0, %v3562
        %v3564 = vpop.f32.mrf.mxu0
        %v3565 = vadd.f32 0.0, %v3564
        %3566 = vmatmul.bf16.gmra.mxu0 %v3474
        %v3567 = vpop.f32.mrf.mxu0
        %v3568 = vadd.f32 0.0, %v3567
        %v3569 = vpop.f32.mrf.mxu0
        %v3570 = vadd.f32 0.0, %v3569
        %3571 = vmatmul.bf16.gmra.mxu0 %v3475
        %v3572 = vpop.f32.mrf.mxu0
        %v3573 = vadd.f32 0.0, %v3572
        %v3574 = vpop.f32.mrf.mxu0
        %v3575 = vadd.f32 0.0, %v3574
        %3576 = vmatmul.bf16.gmra.mxu0 %v3476
        %v3577 = vpop.f32.mrf.mxu0
        %v3578 = vadd.f32 0.0, %v3577
        %v3579 = vpop.f32.mrf.mxu0
        %v3580 = vadd.f32 0.0, %v3579
        %3581 = vmatmul.bf16.gmra.mxu0 %v3477
        %v3582 = vpop.f32.mrf.mxu0
        %v3583 = vadd.f32 0.0, %v3582
        %v3584 = vpop.f32.mrf.mxu0
        %v3585 = vadd.f32 0.0, %v3584
        %3586 = vmatmul.bf16.gmra.mxu0 %v3478
        %v3587 = vpop.f32.mrf.mxu0
        %v3588 = vadd.f32 0.0, %v3587
        %v3589 = vpop.f32.mrf.mxu0
        %v3590 = vadd.f32 0.0, %v3589
        %3591 = vmatmul.bf16.gmra.mxu0 %v3479
        %v3592 = vpop.f32.mrf.mxu0
        %v3593 = vadd.f32 0.0, %v3592
        %v3594 = vpop.f32.mrf.mxu0
        %v3595 = vadd.f32 0.0, %v3594
        %3596 = vmatmul.bf16.gmra.mxu0 %v3480
        %v3597 = vpop.f32.mrf.mxu0
        %v3598 = vadd.f32 0.0, %v3597
        %v3599 = vpop.f32.mrf.mxu0
        %v3600 = vadd.f32 0.0, %v3599
        %3601 = vmatmul.bf16.gmra.mxu0 %v3481
        %v3602 = vpop.f32.mrf.mxu0
        %v3603 = vadd.f32 0.0, %v3602
        %v3604 = vpop.f32.mrf.mxu0
        %v3605 = vadd.f32 0.0, %v3604
        %3606 = vmatmul.bf16.gmra.mxu0 %v3482
        %v3607 = vpop.f32.mrf.mxu0
        %v3608 = vadd.f32 0.0, %v3607
        %v3609 = vpop.f32.mrf.mxu0
        %v3610 = vadd.f32 0.0, %v3609
        %3611 = vmatmul.bf16.gmra.mxu0 %v3483
        %v3612 = vpop.f32.mrf.mxu0
        %v3613 = vadd.f32 0.0, %v3612
        %v3614 = vpop.f32.mrf.mxu0
        %v3615 = vadd.f32 0.0, %v3614
        %3616 = vmatmul.bf16.gmra.mxu0 %v3484
        %v3617 = vpop.f32.mrf.mxu0
        %v3618 = vadd.f32 0.0, %v3617
        %v3619 = vpop.f32.mrf.mxu0
        %v3620 = vadd.f32 0.0, %v3619
        %3621 = vmatmul.bf16.gmra.mxu0 %v3485
        %v3622 = vpop.f32.mrf.mxu0
        %v3623 = vadd.f32 0.0, %v3622
        %v3624 = vpop.f32.mrf.mxu0
        %v3625 = vadd.f32 0.0, %v3624
        %3626 = vmatmul.bf16.gmra.mxu0 %v3486
        %v3627 = vpop.f32.mrf.mxu0
        %v3628 = vadd.f32 0.0, %v3627
        %v3629 = vpop.f32.mrf.mxu0
        %v3630 = vadd.f32 0.0, %v3629
        %3631 = vmatmul.bf16.gmra.mxu0 %v3487
        %v3632 = vpop.f32.mrf.mxu0
        %v3633 = vadd.f32 0.0, %v3632
        %v3634 = vpop.f32.mrf.mxu0
        %v3635 = vadd.f32 0.0, %v3634
        %3636 = vmatmul.bf16.gmra.mxu0 %v3488
        %v3637 = vpop.f32.mrf.mxu0
        %v3638 = vadd.f32 0.0, %v3637
        %v3639 = vpop.f32.mrf.mxu0
        %v3640 = vadd.f32 0.0, %v3639
        %3641 = vdwg.mxu0
        %v3642 = vadd.f32 %v3344, %v3563
        %v3643 = vadd.f32 %v3345, %v3565
        %v3644 = vadd.f32 %v3346, %v3568
        %v3645 = vadd.f32 %v3347, %v3570
        %v3646 = vadd.f32 %v3348, %v3573
        %v3647 = vadd.f32 %v3349, %v3575
        %v3648 = vadd.f32 %v3350, %v3578
        %v3649 = vadd.f32 %v3351, %v3580
        %v3650 = vadd.f32 %v3352, %v3583
        %v3651 = vadd.f32 %v3353, %v3585
        %v3652 = vadd.f32 %v3354, %v3588
        %v3653 = vadd.f32 %v3355, %v3590
        %v3654 = vadd.f32 %v3356, %v3593
        %v3655 = vadd.f32 %v3357, %v3595
        %v3656 = vadd.f32 %v3358, %v3598
        %v3657 = vadd.f32 %v3359, %v3600
        %v3658 = vadd.f32 %v3360, %v3603
        %v3659 = vadd.f32 %v3361, %v3605
        %v3660 = vadd.f32 %v3362, %v3608
        %v3661 = vadd.f32 %v3363, %v3610
        %v3662 = vadd.f32 %v3364, %v3613
        %v3663 = vadd.f32 %v3365, %v3615
        %v3664 = vadd.f32 %v3366, %v3618
        %v3665 = vadd.f32 %v3367, %v3620
        %v3666 = vadd.f32 %v3368, %v3623
        %v3667 = vadd.f32 %v3369, %v3625
        %v3668 = vadd.f32 %v3370, %v3628
        %v3669 = vadd.f32 %v3371, %v3630
        %v3670 = vadd.f32 %v3372, %v3633
        %v3671 = vadd.f32 %v3373, %v3635
        %v3672 = vadd.f32 %v3374, %v3638
        %v3673 = vadd.f32 %v3375, %v3640
        %v3682 = vrot.slane %v483, 6
        %v3683 = vrot.slane %v3682, 4
        %v3684 = vsel %vm633, %v3683, %v690
        %v3685 = vrot.slane %v488, 6
        %v3686 = vrot.slane %v3685, 4
        %v3687 = vsel %vm633, %v3686, %v697
        %v3688 = vrot.slane %v493, 6
        %v3689 = vrot.slane %v3688, 4
        %v3690 = vsel %vm633, %v3689, %v704
        %v3691 = vrot.slane %v498, 6
        %v3692 = vrot.slane %v3691, 4
        %v3693 = vsel %vm633, %v3692, %v711
        %v3694 = vrot.slane %v503, 6
        %v3695 = vrot.slane %v3694, 4
        %v3696 = vsel %vm633, %v3695, %v718
        %v3697 = vrot.slane %v508, 6
        %v3698 = vrot.slane %v3697, 4
        %v3699 = vsel %vm633, %v3698, %v725
        %v3700 = vrot.slane %v513, 6
        %v3701 = vrot.slane %v3700, 4
        %v3702 = vsel %vm633, %v3701, %v732
        %v3703 = vrot.slane %v518, 6
        %v3704 = vrot.slane %v3703, 4
        %v3705 = vsel %vm633, %v3704, %v739
        %s3706 = scalar_lea.vmem [#allocation10], 192
        %v3707 = vld [vmem:[%s3706] sm:$0xf]
        %v3708 = vld [vmem:[%s3706 + $0x4] sm:$0xf]
        %v3709 = vld [vmem:[%s3706 + $0x8] sm:$0xf]
        %v3710 = vld [vmem:[%s3706 + $0xc] sm:$0xf]
        %v3711 = vld [vmem:[%s3706 + $0x10] sm:$0xf]
        %v3712 = vld [vmem:[%s3706 + $0x14] sm:$0xf]
        %v3713 = vld [vmem:[%s3706 + $0x18] sm:$0xf]
        %v3714 = vld [vmem:[%s3706 + $0x1c] sm:$0xf]
        %v3715 = vld [vmem:[%s3706 + $0x20] sm:$0xf]
        %v3716 = vld [vmem:[%s3706 + $0x24] sm:$0xf]
        %v3717 = vld [vmem:[%s3706 + $0x28] sm:$0xf]
        %v3718 = vld [vmem:[%s3706 + $0x2c] sm:$0xf]
        %v3719 = vld [vmem:[%s3706 + $0x30] sm:$0xf]
        %v3720 = vld [vmem:[%s3706 + $0x34] sm:$0xf]
        %v3721 = vld [vmem:[%s3706 + $0x38] sm:$0xf]
        %v3722 = vld [vmem:[%s3706 + $0x3c] sm:$0xf]
        %v3723 = vunpack.c.l.b16 %v3684
        %v3724 = vunpack.c.l.b16 %v3687
        %v3725 = vunpack.c.l.b16 %v3690
        %v3726 = vunpack.c.l.b16 %v3693
        %v3727 = vunpack.c.l.b16 %v3696
        %v3728 = vunpack.c.l.b16 %v3699
        %v3729 = vunpack.c.l.b16 %v3702
        %v3730 = vunpack.c.l.b16 %v3705
        %v3731 = vpack.c.b16 %v762, %v3723
        %v3732 = vpack.c.b16 %v764, %v3724
        %v3733 = vpack.c.b16 %v766, %v3725
        %v3734 = vpack.c.b16 %v768, %v3726
        %v3735 = vpack.c.b16 %v770, %v3727
        %v3736 = vpack.c.b16 %v772, %v3728
        %v3737 = vpack.c.b16 %v774, %v3729
        %v3738 = vpack.c.b16 %v776, %v3730
        %v3763 = vunpack.c.l.b16 %v3707
        %v3764 = vunpack.c.l.b16 %v3708
        %v3765 = vunpack.c.l.b16 %v3709
        %v3766 = vunpack.c.l.b16 %v3710
        %v3767 = vunpack.c.l.b16 %v3711
        %v3768 = vunpack.c.l.b16 %v3712
        %v3769 = vunpack.c.l.b16 %v3713
        %v3770 = vunpack.c.l.b16 %v3714
        %v3771 = vunpack.c.l.b16 %v3715
        %v3772 = vunpack.c.l.b16 %v3716
        %v3773 = vunpack.c.l.b16 %v3717
        %v3774 = vunpack.c.l.b16 %v3718
        %v3775 = vunpack.c.l.b16 %v3719
        %v3776 = vunpack.c.l.b16 %v3720
        %v3777 = vunpack.c.l.b16 %v3721
        %v3778 = vunpack.c.l.b16 %v3722
        %v3779 = vpack.c.b16 %v3764, %v3763
        %v3780 = vpack.c.b16 %v3766, %v3765
        %v3781 = vpack.c.b16 %v3768, %v3767
        %v3782 = vpack.c.b16 %v3770, %v3769
        %v3783 = vpack.c.b16 %v3772, %v3771
        %v3784 = vpack.c.b16 %v3774, %v3773
        %v3785 = vpack.c.b16 %v3776, %v3775
        %v3786 = vpack.c.b16 %v3778, %v3777
        %3795 = vmatpush.bf16.msra.mxu0 %v3786
        %3796 = vmatpush.bf16.msra.mxu0 %v3785
        %3797 = vmatpush.bf16.msra.mxu0 %v3784
        %3798 = vmatpush.bf16.msra.mxu0 %v3783
        %3799 = vmatpush.bf16.msra.mxu0 %v3782
        %3800 = vmatpush.bf16.msra.mxu0 %v3781
        %3801 = vmatpush.bf16.msra.mxu0 %v3780
        %3802 = vmatpush.bf16.msra.mxu0 %v3779
        %3803 = vmatmul.bf16.gmra.mxu0 %v2969
        %v3804 = vpop.f32.mrf.mxu0
        %v3805 = vadd.f32 0.0, %v3804
        %v3806 = vpop.f32.mrf.mxu0
        %v3807 = vadd.f32 0.0, %v3806
        %3808 = vmatmul.bf16.gmra.mxu0 %v2970
        %v3809 = vpop.f32.mrf.mxu0
        %v3810 = vadd.f32 0.0, %v3809
        %v3811 = vpop.f32.mrf.mxu0
        %v3812 = vadd.f32 0.0, %v3811
        %3813 = vmatmul.bf16.gmra.mxu0 %v2971
        %v3814 = vpop.f32.mrf.mxu0
        %v3815 = vadd.f32 0.0, %v3814
        %v3816 = vpop.f32.mrf.mxu0
        %v3817 = vadd.f32 0.0, %v3816
        %3818 = vmatmul.bf16.gmra.mxu0 %v2972
        %v3819 = vpop.f32.mrf.mxu0
        %v3820 = vadd.f32 0.0, %v3819
        %v3821 = vpop.f32.mrf.mxu0
        %v3822 = vadd.f32 0.0, %v3821
        %3823 = vmatmul.bf16.gmra.mxu0 %v2973
        %v3824 = vpop.f32.mrf.mxu0
        %v3825 = vadd.f32 0.0, %v3824
        %v3826 = vpop.f32.mrf.mxu0
        %v3827 = vadd.f32 0.0, %v3826
        %3828 = vmatmul.bf16.gmra.mxu0 %v2974
        %v3829 = vpop.f32.mrf.mxu0
        %v3830 = vadd.f32 0.0, %v3829
        %v3831 = vpop.f32.mrf.mxu0
        %v3832 = vadd.f32 0.0, %v3831
        %3833 = vmatmul.bf16.gmra.mxu0 %v2975
        %v3834 = vpop.f32.mrf.mxu0
        %v3835 = vadd.f32 0.0, %v3834
        %v3836 = vpop.f32.mrf.mxu0
        %v3837 = vadd.f32 0.0, %v3836
        %3838 = vmatmul.bf16.gmra.mxu0 %v2976
        %v3839 = vpop.f32.mrf.mxu0
        %v3840 = vadd.f32 0.0, %v3839
        %v3841 = vpop.f32.mrf.mxu0
        %v3842 = vadd.f32 0.0, %v3841
        %3843 = vmatmul.bf16.gmra.mxu0 %v3731
        %v3844 = vpop.f32.mrf.mxu0
        %v3845 = vadd.f32 0.0, %v3844
        %v3846 = vpop.f32.mrf.mxu0
        %v3847 = vadd.f32 0.0, %v3846
        %3848 = vmatmul.bf16.gmra.mxu0 %v3732
        %v3849 = vpop.f32.mrf.mxu0
        %v3850 = vadd.f32 0.0, %v3849
        %v3851 = vpop.f32.mrf.mxu0
        %v3852 = vadd.f32 0.0, %v3851
        %3853 = vmatmul.bf16.gmra.mxu0 %v3733
        %v3854 = vpop.f32.mrf.mxu0
        %v3855 = vadd.f32 0.0, %v3854
        %v3856 = vpop.f32.mrf.mxu0
        %v3857 = vadd.f32 0.0, %v3856
        %3858 = vmatmul.bf16.gmra.mxu0 %v3734
        %v3859 = vpop.f32.mrf.mxu0
        %v3860 = vadd.f32 0.0, %v3859
        %v3861 = vpop.f32.mrf.mxu0
        %v3862 = vadd.f32 0.0, %v3861
        %3863 = vmatmul.bf16.gmra.mxu0 %v3735
        %v3864 = vpop.f32.mrf.mxu0
        %v3865 = vadd.f32 0.0, %v3864
        %v3866 = vpop.f32.mrf.mxu0
        %v3867 = vadd.f32 0.0, %v3866
        %3868 = vmatmul.bf16.gmra.mxu0 %v3736
        %v3869 = vpop.f32.mrf.mxu0
        %v3870 = vadd.f32 0.0, %v3869
        %v3871 = vpop.f32.mrf.mxu0
        %v3872 = vadd.f32 0.0, %v3871
        %3873 = vmatmul.bf16.gmra.mxu0 %v3737
        %v3874 = vpop.f32.mrf.mxu0
        %v3875 = vadd.f32 0.0, %v3874
        %v3876 = vpop.f32.mrf.mxu0
        %v3877 = vadd.f32 0.0, %v3876
        %3878 = vmatmul.bf16.gmra.mxu0 %v3738
        %v3879 = vpop.f32.mrf.mxu0
        %v3880 = vadd.f32 0.0, %v3879
        %v3881 = vpop.f32.mrf.mxu0
        %v3882 = vadd.f32 0.0, %v3881
        %3883 = vdwg.mxu0
        %v3884 = vadd.f32 %v3642, %v3805
        %v3885 = vadd.f32 %v3643, %v3807
        %v3886 = vadd.f32 %v3644, %v3810
        %v3887 = vadd.f32 %v3645, %v3812
        %v3888 = vadd.f32 %v3646, %v3815
        %v3889 = vadd.f32 %v3647, %v3817
        %v3890 = vadd.f32 %v3648, %v3820
        %v3891 = vadd.f32 %v3649, %v3822
        %v3892 = vadd.f32 %v3650, %v3825
        %v3893 = vadd.f32 %v3651, %v3827
        %v3894 = vadd.f32 %v3652, %v3830
        %v3895 = vadd.f32 %v3653, %v3832
        %v3896 = vadd.f32 %v3654, %v3835
        %v3897 = vadd.f32 %v3655, %v3837
        %v3898 = vadd.f32 %v3656, %v3840
        %v3899 = vadd.f32 %v3657, %v3842
        %v3900 = vadd.f32 %v3658, %v3845
        %v3901 = vadd.f32 %v3659, %v3847
        %v3902 = vadd.f32 %v3660, %v3850
        %v3903 = vadd.f32 %v3661, %v3852
        %v3904 = vadd.f32 %v3662, %v3855
        %v3905 = vadd.f32 %v3663, %v3857
        %v3906 = vadd.f32 %v3664, %v3860
        %v3907 = vadd.f32 %v3665, %v3862
        %v3908 = vadd.f32 %v3666, %v3865
        %v3909 = vadd.f32 %v3667, %v3867
        %v3910 = vadd.f32 %v3668, %v3870
        %v3911 = vadd.f32 %v3669, %v3872
        %v3912 = vadd.f32 %v3670, %v3875
        %v3913 = vadd.f32 %v3671, %v3877
        %v3914 = vadd.f32 %v3672, %v3880
        %v3915 = vadd.f32 %v3673, %v3882
        %v3924 = vrot.slane %v695, 4
        %v3925 = vrot.slane %v487, 6
        %v3926 = vsel %vm633, %v3924, %v3925
        %v3927 = vrot.slane %v702, 4
        %v3928 = vrot.slane %v492, 6
        %v3929 = vsel %vm633, %v3927, %v3928
        %v3930 = vrot.slane %v709, 4
        %v3931 = vrot.slane %v497, 6
        %v3932 = vsel %vm633, %v3930, %v3931
        %v3933 = vrot.slane %v716, 4
        %v3934 = vrot.slane %v502, 6
        %v3935 = vsel %vm633, %v3933, %v3934
        %v3936 = vrot.slane %v723, 4
        %v3937 = vrot.slane %v507, 6
        %v3938 = vsel %vm633, %v3936, %v3937
        %v3939 = vrot.slane %v730, 4
        %v3940 = vrot.slane %v512, 6
        %v3941 = vsel %vm633, %v3939, %v3940
        %v3942 = vrot.slane %v737, 4
        %v3943 = vrot.slane %v517, 6
        %v3944 = vsel %vm633, %v3942, %v3943
        %v3945 = vrot.slane %v744, 4
        %v3946 = vrot.slane %v522, 6
        %v3947 = vsel %vm633, %v3945, %v3946
        %s3948 = scalar_lea.vmem [#allocation10], 320
        %v3949 = vld [vmem:[%s3948] sm:$0xf]
        %v3950 = vld [vmem:[%s3948 + $0x4] sm:$0xf]
        %v3951 = vld [vmem:[%s3948 + $0x8] sm:$0xf]
        %v3952 = vld [vmem:[%s3948 + $0xc] sm:$0xf]
        %v3953 = vld [vmem:[%s3948 + $0x10] sm:$0xf]
        %v3954 = vld [vmem:[%s3948 + $0x14] sm:$0xf]
        %v3955 = vld [vmem:[%s3948 + $0x18] sm:$0xf]
        %v3956 = vld [vmem:[%s3948 + $0x1c] sm:$0xf]
        %v3957 = vld [vmem:[%s3948 + $0x20] sm:$0xf]
        %v3958 = vld [vmem:[%s3948 + $0x24] sm:$0xf]
        %v3959 = vld [vmem:[%s3948 + $0x28] sm:$0xf]
        %v3960 = vld [vmem:[%s3948 + $0x2c] sm:$0xf]
        %v3961 = vld [vmem:[%s3948 + $0x30] sm:$0xf]
        %v3962 = vld [vmem:[%s3948 + $0x34] sm:$0xf]
        %v3963 = vld [vmem:[%s3948 + $0x38] sm:$0xf]
        %v3964 = vld [vmem:[%s3948 + $0x3c] sm:$0xf]
        %v3965 = vunpack.c.l.b16 %v3926
        %v3966 = vunpack.c.l.b16 %v3929
        %v3967 = vunpack.c.l.b16 %v3932
        %v3968 = vunpack.c.l.b16 %v3935
        %v3969 = vunpack.c.l.b16 %v3938
        %v3970 = vunpack.c.l.b16 %v3941
        %v3971 = vunpack.c.l.b16 %v3944
        %v3972 = vunpack.c.l.b16 %v3947
        %v3973 = vpack.c.b16 %v3965, %v763
        %v3974 = vpack.c.b16 %v3966, %v765
        %v3975 = vpack.c.b16 %v3967, %v767
        %v3976 = vpack.c.b16 %v3968, %v769
        %v3977 = vpack.c.b16 %v3969, %v771
        %v3978 = vpack.c.b16 %v3970, %v773
        %v3979 = vpack.c.b16 %v3971, %v775
        %v3980 = vpack.c.b16 %v3972, %v777
        %v4005 = vunpack.c.l.b16 %v3949
        %v4006 = vunpack.c.l.b16 %v3950
        %v4007 = vunpack.c.l.b16 %v3951
        %v4008 = vunpack.c.l.b16 %v3952
        %v4009 = vunpack.c.l.b16 %v3953
        %v4010 = vunpack.c.l.b16 %v3954
        %v4011 = vunpack.c.l.b16 %v3955
        %v4012 = vunpack.c.l.b16 %v3956
        %v4013 = vunpack.c.l.b16 %v3957
        %v4014 = vunpack.c.l.b16 %v3958
        %v4015 = vunpack.c.l.b16 %v3959
        %v4016 = vunpack.c.l.b16 %v3960
        %v4017 = vunpack.c.l.b16 %v3961
        %v4018 = vunpack.c.l.b16 %v3962
        %v4019 = vunpack.c.l.b16 %v3963
        %v4020 = vunpack.c.l.b16 %v3964
        %v4021 = vpack.c.b16 %v4006, %v4005
        %v4022 = vpack.c.b16 %v4008, %v4007
        %v4023 = vpack.c.b16 %v4010, %v4009
        %v4024 = vpack.c.b16 %v4012, %v4011
        %v4025 = vpack.c.b16 %v4014, %v4013
        %v4026 = vpack.c.b16 %v4016, %v4015
        %v4027 = vpack.c.b16 %v4018, %v4017
        %v4028 = vpack.c.b16 %v4020, %v4019
        %4037 = vmatpush.bf16.msra.mxu0 %v4028
        %4038 = vmatpush.bf16.msra.mxu0 %v4027
        %4039 = vmatpush.bf16.msra.mxu0 %v4026
        %4040 = vmatpush.bf16.msra.mxu0 %v4025
        %4041 = vmatpush.bf16.msra.mxu0 %v4024
        %4042 = vmatpush.bf16.msra.mxu0 %v4023
        %4043 = vmatpush.bf16.msra.mxu0 %v4022
        %4044 = vmatpush.bf16.msra.mxu0 %v4021
        %4045 = vmatmul.bf16.gmra.mxu0 %v3481
        %v4046 = vpop.f32.mrf.mxu0
        %v4047 = vadd.f32 0.0, %v4046
        %v4048 = vpop.f32.mrf.mxu0
        %v4049 = vadd.f32 0.0, %v4048
        %4050 = vmatmul.bf16.gmra.mxu0 %v3482
        %v4051 = vpop.f32.mrf.mxu0
        %v4052 = vadd.f32 0.0, %v4051
        %v4053 = vpop.f32.mrf.mxu0
        %v4054 = vadd.f32 0.0, %v4053
        %4055 = vmatmul.bf16.gmra.mxu0 %v3483
        %v4056 = vpop.f32.mrf.mxu0
        %v4057 = vadd.f32 0.0, %v4056
        %v4058 = vpop.f32.mrf.mxu0
        %v4059 = vadd.f32 0.0, %v4058
        %4060 = vmatmul.bf16.gmra.mxu0 %v3484
        %v4061 = vpop.f32.mrf.mxu0
        %v4062 = vadd.f32 0.0, %v4061
        %v4063 = vpop.f32.mrf.mxu0
        %v4064 = vadd.f32 0.0, %v4063
        %4065 = vmatmul.bf16.gmra.mxu0 %v3485
        %v4066 = vpop.f32.mrf.mxu0
        %v4067 = vadd.f32 0.0, %v4066
        %v4068 = vpop.f32.mrf.mxu0
        %v4069 = vadd.f32 0.0, %v4068
        %4070 = vmatmul.bf16.gmra.mxu0 %v3486
        %v4071 = vpop.f32.mrf.mxu0
        %v4072 = vadd.f32 0.0, %v4071
        %v4073 = vpop.f32.mrf.mxu0
        %v4074 = vadd.f32 0.0, %v4073
        %4075 = vmatmul.bf16.gmra.mxu0 %v3487
        %v4076 = vpop.f32.mrf.mxu0
        %v4077 = vadd.f32 0.0, %v4076
        %v4078 = vpop.f32.mrf.mxu0
        %v4079 = vadd.f32 0.0, %v4078
        %4080 = vmatmul.bf16.gmra.mxu0 %v3488
        %v4081 = vpop.f32.mrf.mxu0
        %v4082 = vadd.f32 0.0, %v4081
        %v4083 = vpop.f32.mrf.mxu0
        %v4084 = vadd.f32 0.0, %v4083
        %4085 = vmatmul.bf16.gmra.mxu0 %v3973
        %v4086 = vpop.f32.mrf.mxu0
        %v4087 = vadd.f32 0.0, %v4086
        %v4088 = vpop.f32.mrf.mxu0
        %v4089 = vadd.f32 0.0, %v4088
        %4090 = vmatmul.bf16.gmra.mxu0 %v3974
        %v4091 = vpop.f32.mrf.mxu0
        %v4092 = vadd.f32 0.0, %v4091
        %v4093 = vpop.f32.mrf.mxu0
        %v4094 = vadd.f32 0.0, %v4093
        %4095 = vmatmul.bf16.gmra.mxu0 %v3975
        %v4096 = vpop.f32.mrf.mxu0
        %v4097 = vadd.f32 0.0, %v4096
        %v4098 = vpop.f32.mrf.mxu0
        %v4099 = vadd.f32 0.0, %v4098
        %4100 = vmatmul.bf16.gmra.mxu0 %v3976
        %v4101 = vpop.f32.mrf.mxu0
        %v4102 = vadd.f32 0.0, %v4101
        %v4103 = vpop.f32.mrf.mxu0
        %v4104 = vadd.f32 0.0, %v4103
        %4105 = vmatmul.bf16.gmra.mxu0 %v3977
        %v4106 = vpop.f32.mrf.mxu0
        %v4107 = vadd.f32 0.0, %v4106
        %v4108 = vpop.f32.mrf.mxu0
        %v4109 = vadd.f32 0.0, %v4108
        %4110 = vmatmul.bf16.gmra.mxu0 %v3978
        %v4111 = vpop.f32.mrf.mxu0
        %v4112 = vadd.f32 0.0, %v4111
        %v4113 = vpop.f32.mrf.mxu0
        %v4114 = vadd.f32 0.0, %v4113
        %4115 = vmatmul.bf16.gmra.mxu0 %v3979
        %v4116 = vpop.f32.mrf.mxu0
        %v4117 = vadd.f32 0.0, %v4116
        %v4118 = vpop.f32.mrf.mxu0
        %v4119 = vadd.f32 0.0, %v4118
        %4120 = vmatmul.bf16.gmra.mxu0 %v3980
        %v4121 = vpop.f32.mrf.mxu0
        %v4122 = vadd.f32 0.0, %v4121
        %v4123 = vpop.f32.mrf.mxu0
        %v4124 = vadd.f32 0.0, %v4123
        %4125 = vdwg.mxu0
        %v4126 = vadd.f32 %v3884, %v4047
        %v4127 = vadd.f32 %v3885, %v4049
        %v4128 = vadd.f32 %v3886, %v4052
        %v4129 = vadd.f32 %v3887, %v4054
        %v4130 = vadd.f32 %v3888, %v4057
        %v4131 = vadd.f32 %v3889, %v4059
        %v4132 = vadd.f32 %v3890, %v4062
        %v4133 = vadd.f32 %v3891, %v4064
        %v4134 = vadd.f32 %v3892, %v4067
        %v4135 = vadd.f32 %v3893, %v4069
        %v4136 = vadd.f32 %v3894, %v4072
        %v4137 = vadd.f32 %v3895, %v4074
        %v4138 = vadd.f32 %v3896, %v4077
        %v4139 = vadd.f32 %v3897, %v4079
        %v4140 = vadd.f32 %v3898, %v4082
        %v4141 = vadd.f32 %v3899, %v4084
        %v4142 = vadd.f32 %v3900, %v4087
        %v4143 = vadd.f32 %v3901, %v4089
        %v4144 = vadd.f32 %v3902, %v4092
        %v4145 = vadd.f32 %v3903, %v4094
        %v4146 = vadd.f32 %v3904, %v4097
        %v4147 = vadd.f32 %v3905, %v4099
        %v4148 = vadd.f32 %v3906, %v4102
        %v4149 = vadd.f32 %v3907, %v4104
        %v4150 = vadd.f32 %v3908, %v4107
        %v4151 = vadd.f32 %v3909, %v4109
        %v4152 = vadd.f32 %v3910, %v4112
        %v4153 = vadd.f32 %v3911, %v4114
        %v4154 = vadd.f32 %v3912, %v4117
        %v4155 = vadd.f32 %v3913, %v4119
        %v4156 = vadd.f32 %v3914, %v4122
        %v4157 = vadd.f32 %v3915, %v4124
        %v4174 = vrot.slane %v523, 6
        %v4175 = vrot.slane %v4174, 4
        %v4176 = vsel %vm633, %v4175, %v2409
        %v4177 = vrot.slane %v528, 6
        %v4178 = vrot.slane %v4177, 4
        %v4179 = vsel %vm633, %v4178, %v2416
        %v4180 = vrot.slane %v533, 6
        %v4181 = vrot.slane %v4180, 4
        %v4182 = vsel %vm633, %v4181, %v2423
        %v4183 = vrot.slane %v538, 6
        %v4184 = vrot.slane %v4183, 4
        %v4185 = vsel %vm633, %v4184, %v2430
        %v4186 = vrot.slane %v543, 6
        %v4187 = vrot.slane %v4186, 4
        %v4188 = vrot.slane %v544, 6
        %v4189 = vsel %vm633, %v4187, %v4188
        %v4190 = vrot.slane %v4188, 4
        %v4191 = vrot.slane %v545, 6
        %v4192 = vsel %vm633, %v4190, %v4191
        %v4193 = vrot.slane %v548, 6
        %v4194 = vrot.slane %v4193, 4
        %v4195 = vrot.slane %v549, 6
        %v4196 = vsel %vm633, %v4194, %v4195
        %v4197 = vrot.slane %v4195, 4
        %v4198 = vrot.slane %v550, 6
        %v4199 = vsel %vm633, %v4197, %v4198
        %v4200 = vrot.slane %v553, 6
        %v4201 = vrot.slane %v4200, 4
        %v4202 = vrot.slane %v554, 6
        %v4203 = vsel %vm633, %v4201, %v4202
        %v4204 = vrot.slane %v4202, 4
        %v4205 = vrot.slane %v555, 6
        %v4206 = vsel %vm633, %v4204, %v4205
        %v4207 = vrot.slane %v558, 6
        %v4208 = vrot.slane %v4207, 4
        %v4209 = vrot.slane %v559, 6
        %v4210 = vsel %vm633, %v4208, %v4209
        %v4211 = vrot.slane %v4209, 4
        %v4212 = vrot.slane %v560, 6
        %v4213 = vsel %vm633, %v4211, %v4212
        %s4214 = scalar_lea.vmem [#allocation10], 384
        %v4215 = vld [vmem:[%s4214] sm:$0xf]
        %v4216 = vld [vmem:[%s4214 + $0x4] sm:$0xf]
        %v4217 = vld [vmem:[%s4214 + $0x8] sm:$0xf]
        %v4218 = vld [vmem:[%s4214 + $0xc] sm:$0xf]
        %v4219 = vld [vmem:[%s4214 + $0x10] sm:$0xf]
        %v4220 = vld [vmem:[%s4214 + $0x14] sm:$0xf]
        %v4221 = vld [vmem:[%s4214 + $0x18] sm:$0xf]
        %v4222 = vld [vmem:[%s4214 + $0x1c] sm:$0xf]
        %v4223 = vld [vmem:[%s4214 + $0x20] sm:$0xf]
        %v4224 = vld [vmem:[%s4214 + $0x24] sm:$0xf]
        %v4225 = vld [vmem:[%s4214 + $0x28] sm:$0xf]
        %v4226 = vld [vmem:[%s4214 + $0x2c] sm:$0xf]
        %v4227 = vld [vmem:[%s4214 + $0x30] sm:$0xf]
        %v4228 = vld [vmem:[%s4214 + $0x34] sm:$0xf]
        %v4229 = vld [vmem:[%s4214 + $0x38] sm:$0xf]
        %v4230 = vld [vmem:[%s4214 + $0x3c] sm:$0xf]
        %v4231 = vunpack.c.l.b16 %v4176
        %v4232 = vunpack.c.l.b16 %v4179
        %v4233 = vunpack.c.l.b16 %v4182
        %v4234 = vunpack.c.l.b16 %v4185
        %v4235 = vunpack.c.l.b16 %v4189
        %v4236 = vunpack.c.l.b16 %v4192
        %v4237 = vunpack.c.l.b16 %v4196
        %v4238 = vunpack.c.l.b16 %v4199
        %v4239 = vunpack.c.l.b16 %v4203
        %v4240 = vunpack.c.l.b16 %v4206
        %v4241 = vunpack.c.l.b16 %v4210
        %v4242 = vunpack.c.l.b16 %v4213
        %v4243 = vpack.c.b16 %v2454, %v4231
        %v4244 = vpack.c.b16 %v2456, %v4232
        %v4245 = vpack.c.b16 %v2458, %v4233
        %v4246 = vpack.c.b16 %v2460, %v4234
        %v4247 = vpack.c.b16 %v4236, %v4235
        %v4248 = vpack.c.b16 %v4238, %v4237
        %v4249 = vpack.c.b16 %v4240, %v4239
        %v4250 = vpack.c.b16 %v4242, %v4241
        %v4275 = vunpack.c.l.b16 %v4215
        %v4276 = vunpack.c.l.b16 %v4216
        %v4277 = vunpack.c.l.b16 %v4217
        %v4278 = vunpack.c.l.b16 %v4218
        %v4279 = vunpack.c.l.b16 %v4219
        %v4280 = vunpack.c.l.b16 %v4220
        %v4281 = vunpack.c.l.b16 %v4221
        %v4282 = vunpack.c.l.b16 %v4222
        %v4283 = vunpack.c.l.b16 %v4223
        %v4284 = vunpack.c.l.b16 %v4224
        %v4285 = vunpack.c.l.b16 %v4225
        %v4286 = vunpack.c.l.b16 %v4226
        %v4287 = vunpack.c.l.b16 %v4227
        %v4288 = vunpack.c.l.b16 %v4228
        %v4289 = vunpack.c.l.b16 %v4229
        %v4290 = vunpack.c.l.b16 %v4230
        %v4291 = vpack.c.b16 %v4276, %v4275
        %v4292 = vpack.c.b16 %v4278, %v4277
        %v4293 = vpack.c.b16 %v4280, %v4279
        %v4294 = vpack.c.b16 %v4282, %v4281
        %v4295 = vpack.c.b16 %v4284, %v4283
        %v4296 = vpack.c.b16 %v4286, %v4285
        %v4297 = vpack.c.b16 %v4288, %v4287
        %v4298 = vpack.c.b16 %v4290, %v4289
        %4307 = vmatpush.bf16.msra.mxu0 %v4298
        %4308 = vmatpush.bf16.msra.mxu0 %v4297
        %4309 = vmatpush.bf16.msra.mxu0 %v4296
        %4310 = vmatpush.bf16.msra.mxu0 %v4295
        %4311 = vmatpush.bf16.msra.mxu0 %v4294
        %4312 = vmatpush.bf16.msra.mxu0 %v4293
        %4313 = vmatpush.bf16.msra.mxu0 %v4292
        %4314 = vmatpush.bf16.msra.mxu0 %v4291
        %4315 = vmatmul.bf16.gmra.mxu0 %v3731
        %v4316 = vpop.f32.mrf.mxu0
        %v4317 = vadd.f32 0.0, %v4316
        %v4318 = vpop.f32.mrf.mxu0
        %v4319 = vadd.f32 0.0, %v4318
        %4320 = vmatmul.bf16.gmra.mxu0 %v3732
        %v4321 = vpop.f32.mrf.mxu0
        %v4322 = vadd.f32 0.0, %v4321
        %v4323 = vpop.f32.mrf.mxu0
        %v4324 = vadd.f32 0.0, %v4323
        %4325 = vmatmul.bf16.gmra.mxu0 %v3733
        %v4326 = vpop.f32.mrf.mxu0
        %v4327 = vadd.f32 0.0, %v4326
        %v4328 = vpop.f32.mrf.mxu0
        %v4329 = vadd.f32 0.0, %v4328
        %4330 = vmatmul.bf16.gmra.mxu0 %v3734
        %v4331 = vpop.f32.mrf.mxu0
        %v4332 = vadd.f32 0.0, %v4331
        %v4333 = vpop.f32.mrf.mxu0
        %v4334 = vadd.f32 0.0, %v4333
        %4335 = vmatmul.bf16.gmra.mxu0 %v3735
        %v4336 = vpop.f32.mrf.mxu0
        %v4337 = vadd.f32 0.0, %v4336
        %v4338 = vpop.f32.mrf.mxu0
        %v4339 = vadd.f32 0.0, %v4338
        %4340 = vmatmul.bf16.gmra.mxu0 %v3736
        %v4341 = vpop.f32.mrf.mxu0
        %v4342 = vadd.f32 0.0, %v4341
        %v4343 = vpop.f32.mrf.mxu0
        %v4344 = vadd.f32 0.0, %v4343
        %4345 = vmatmul.bf16.gmra.mxu0 %v3737
        %v4346 = vpop.f32.mrf.mxu0
        %v4347 = vadd.f32 0.0, %v4346
        %v4348 = vpop.f32.mrf.mxu0
        %v4349 = vadd.f32 0.0, %v4348
        %4350 = vmatmul.bf16.gmra.mxu0 %v3738
        %v4351 = vpop.f32.mrf.mxu0
        %v4352 = vadd.f32 0.0, %v4351
        %v4353 = vpop.f32.mrf.mxu0
        %v4354 = vadd.f32 0.0, %v4353
        %4355 = vmatmul.bf16.gmra.mxu0 %v4243
        %v4356 = vpop.f32.mrf.mxu0
        %v4357 = vadd.f32 0.0, %v4356
        %v4358 = vpop.f32.mrf.mxu0
        %v4359 = vadd.f32 0.0, %v4358
        %4360 = vmatmul.bf16.gmra.mxu0 %v4244
        %v4361 = vpop.f32.mrf.mxu0
        %v4362 = vadd.f32 0.0, %v4361
        %v4363 = vpop.f32.mrf.mxu0
        %v4364 = vadd.f32 0.0, %v4363
        %4365 = vmatmul.bf16.gmra.mxu0 %v4245
        %v4366 = vpop.f32.mrf.mxu0
        %v4367 = vadd.f32 0.0, %v4366
        %v4368 = vpop.f32.mrf.mxu0
        %v4369 = vadd.f32 0.0, %v4368
        %4370 = vmatmul.bf16.gmra.mxu0 %v4246
        %v4371 = vpop.f32.mrf.mxu0
        %v4372 = vadd.f32 0.0, %v4371
        %v4373 = vpop.f32.mrf.mxu0
        %v4374 = vadd.f32 0.0, %v4373
        %4375 = vmatmul.bf16.gmra.mxu0 %v4247
        %v4376 = vpop.f32.mrf.mxu0
        %v4377 = vadd.f32 0.0, %v4376
        %v4378 = vpop.f32.mrf.mxu0
        %v4379 = vadd.f32 0.0, %v4378
        %4380 = vmatmul.bf16.gmra.mxu0 %v4248
        %v4381 = vpop.f32.mrf.mxu0
        %v4382 = vadd.f32 0.0, %v4381
        %v4383 = vpop.f32.mrf.mxu0
        %v4384 = vadd.f32 0.0, %v4383
        %4385 = vmatmul.bf16.gmra.mxu0 %v4249
        %v4386 = vpop.f32.mrf.mxu0
        %v4387 = vadd.f32 0.0, %v4386
        %v4388 = vpop.f32.mrf.mxu0
        %v4389 = vadd.f32 0.0, %v4388
        %4390 = vmatmul.bf16.gmra.mxu0 %v4250
        %v4391 = vpop.f32.mrf.mxu0
        %v4392 = vadd.f32 0.0, %v4391
        %v4393 = vpop.f32.mrf.mxu0
        %v4394 = vadd.f32 0.0, %v4393
        %4395 = vdwg.mxu0
        %v4396 = vadd.f32 %v4126, %v4317
        %v4397 = vadd.f32 %v4127, %v4319
        %v4398 = vadd.f32 %v4128, %v4322
        %v4399 = vadd.f32 %v4129, %v4324
        %v4400 = vadd.f32 %v4130, %v4327
        %v4401 = vadd.f32 %v4131, %v4329
        %v4402 = vadd.f32 %v4132, %v4332
        %v4403 = vadd.f32 %v4133, %v4334
        %v4404 = vadd.f32 %v4134, %v4337
        %v4405 = vadd.f32 %v4135, %v4339
        %v4406 = vadd.f32 %v4136, %v4342
        %v4407 = vadd.f32 %v4137, %v4344
        %v4408 = vadd.f32 %v4138, %v4347
        %v4409 = vadd.f32 %v4139, %v4349
        %v4410 = vadd.f32 %v4140, %v4352
        %v4411 = vadd.f32 %v4141, %v4354
        %v4412 = vadd.f32 %v4142, %v4357
        %v4413 = vadd.f32 %v4143, %v4359
        %v4414 = vadd.f32 %v4144, %v4362
        %v4415 = vadd.f32 %v4145, %v4364
        %v4416 = vadd.f32 %v4146, %v4367
        %v4417 = vadd.f32 %v4147, %v4369
        %v4418 = vadd.f32 %v4148, %v4372
        %v4419 = vadd.f32 %v4149, %v4374
        %v4420 = vadd.f32 %v4150, %v4377
        %v4421 = vadd.f32 %v4151, %v4379
        %v4422 = vadd.f32 %v4152, %v4382
        %v4423 = vadd.f32 %v4153, %v4384
        %v4424 = vadd.f32 %v4154, %v4387
        %v4425 = vadd.f32 %v4155, %v4389
        %v4426 = vadd.f32 %v4156, %v4392
        %v4427 = vadd.f32 %v4157, %v4394
        %v4432 = vrot.slane %v4191, 4
        %v4433 = vrot.slane %v546, 6
        %v4434 = vsel %vm633, %v4432, %v4433
        %v4435 = vrot.slane %v4198, 4
        %v4436 = vrot.slane %v551, 6
        %v4437 = vsel %vm633, %v4435, %v4436
        %v4438 = vrot.slane %v4205, 4
        %v4439 = vrot.slane %v556, 6
        %v4440 = vsel %vm633, %v4438, %v4439
        %v4441 = vrot.slane %v4212, 4
        %v4442 = vrot.slane %v561, 6
        %v4443 = vsel %vm633, %v4441, %v4442
        %s4444 = scalar_lea.vmem [#allocation10], 448
        %v4445 = vld [vmem:[%s4444] sm:$0xf]
        %v4446 = vld [vmem:[%s4444 + $0x4] sm:$0xf]
        %v4447 = vld [vmem:[%s4444 + $0x8] sm:$0xf]
        %v4448 = vld [vmem:[%s4444 + $0xc] sm:$0xf]
        %v4449 = vld [vmem:[%s4444 + $0x10] sm:$0xf]
        %v4450 = vld [vmem:[%s4444 + $0x14] sm:$0xf]
        %v4451 = vld [vmem:[%s4444 + $0x18] sm:$0xf]
        %v4452 = vld [vmem:[%s4444 + $0x1c] sm:$0xf]
        %v4453 = vld [vmem:[%s4444 + $0x20] sm:$0xf]
        %v4454 = vld [vmem:[%s4444 + $0x24] sm:$0xf]
        %v4455 = vld [vmem:[%s4444 + $0x28] sm:$0xf]
        %v4456 = vld [vmem:[%s4444 + $0x2c] sm:$0xf]
        %v4457 = vld [vmem:[%s4444 + $0x30] sm:$0xf]
        %v4458 = vld [vmem:[%s4444 + $0x34] sm:$0xf]
        %v4459 = vld [vmem:[%s4444 + $0x38] sm:$0xf]
        %v4460 = vld [vmem:[%s4444 + $0x3c] sm:$0xf]
        %v4461 = vunpack.c.l.b16 %v4434
        %v4462 = vunpack.c.l.b16 %v4437
        %v4463 = vunpack.c.l.b16 %v4440
        %v4464 = vunpack.c.l.b16 %v4443
        %v4465 = vpack.c.b16 %v4461, %v4236
        %v4466 = vpack.c.b16 %v4462, %v4238
        %v4467 = vpack.c.b16 %v4463, %v4240
        %v4468 = vpack.c.b16 %v4464, %v4242
        %v4489 = vunpack.c.l.b16 %v4445
        %v4490 = vunpack.c.l.b16 %v4446
        %v4491 = vunpack.c.l.b16 %v4447
        %v4492 = vunpack.c.l.b16 %v4448
        %v4493 = vunpack.c.l.b16 %v4449
        %v4494 = vunpack.c.l.b16 %v4450
        %v4495 = vunpack.c.l.b16 %v4451
        %v4496 = vunpack.c.l.b16 %v4452
        %v4497 = vunpack.c.l.b16 %v4453
        %v4498 = vunpack.c.l.b16 %v4454
        %v4499 = vunpack.c.l.b16 %v4455
        %v4500 = vunpack.c.l.b16 %v4456
        %v4501 = vunpack.c.l.b16 %v4457
        %v4502 = vunpack.c.l.b16 %v4458
        %v4503 = vunpack.c.l.b16 %v4459
        %v4504 = vunpack.c.l.b16 %v4460
        %v4505 = vpack.c.b16 %v4490, %v4489
        %v4506 = vpack.c.b16 %v4492, %v4491
        %v4507 = vpack.c.b16 %v4494, %v4493
        %v4508 = vpack.c.b16 %v4496, %v4495
        %v4509 = vpack.c.b16 %v4498, %v4497
        %v4510 = vpack.c.b16 %v4500, %v4499
        %v4511 = vpack.c.b16 %v4502, %v4501
        %v4512 = vpack.c.b16 %v4504, %v4503
        %4521 = vmatpush.bf16.msra.mxu0 %v4512
        %4522 = vmatpush.bf16.msra.mxu0 %v4511
        %4523 = vmatpush.bf16.msra.mxu0 %v4510
        %4524 = vmatpush.bf16.msra.mxu0 %v4509
        %4525 = vmatpush.bf16.msra.mxu0 %v4508
        %4526 = vmatpush.bf16.msra.mxu0 %v4507
        %4527 = vmatpush.bf16.msra.mxu0 %v4506
        %4528 = vmatpush.bf16.msra.mxu0 %v4505
        %4529 = vmatmul.bf16.gmra.mxu0 %v786
        %v4530 = vpop.f32.mrf.mxu0
        %v4531 = vadd.f32 0.0, %v4530
        %v4532 = vpop.f32.mrf.mxu0
        %v4533 = vadd.f32 0.0, %v4532
        %4534 = vmatmul.bf16.gmra.mxu0 %v787
        %v4535 = vpop.f32.mrf.mxu0
        %v4536 = vadd.f32 0.0, %v4535
        %v4537 = vpop.f32.mrf.mxu0
        %v4538 = vadd.f32 0.0, %v4537
        %4539 = vmatmul.bf16.gmra.mxu0 %v788
        %v4540 = vpop.f32.mrf.mxu0
        %v4541 = vadd.f32 0.0, %v4540
        %v4542 = vpop.f32.mrf.mxu0
        %v4543 = vadd.f32 0.0, %v4542
        %4544 = vmatmul.bf16.gmra.mxu0 %v789
        %v4545 = vpop.f32.mrf.mxu0
        %v4546 = vadd.f32 0.0, %v4545
        %v4547 = vpop.f32.mrf.mxu0
        %v4548 = vadd.f32 0.0, %v4547
        %4549 = vmatmul.bf16.gmra.mxu0 %v790
        %v4550 = vpop.f32.mrf.mxu0
        %v4551 = vadd.f32 0.0, %v4550
        %v4552 = vpop.f32.mrf.mxu0
        %v4553 = vadd.f32 0.0, %v4552
        %4554 = vmatmul.bf16.gmra.mxu0 %v791
        %v4555 = vpop.f32.mrf.mxu0
        %v4556 = vadd.f32 0.0, %v4555
        %v4557 = vpop.f32.mrf.mxu0
        %v4558 = vadd.f32 0.0, %v4557
        %4559 = vmatmul.bf16.gmra.mxu0 %v792
        %v4560 = vpop.f32.mrf.mxu0
        %v4561 = vadd.f32 0.0, %v4560
        %v4562 = vpop.f32.mrf.mxu0
        %v4563 = vadd.f32 0.0, %v4562
        %4564 = vmatmul.bf16.gmra.mxu0 %v793
        %v4565 = vpop.f32.mrf.mxu0
        %v4566 = vadd.f32 0.0, %v4565
        %v4567 = vpop.f32.mrf.mxu0
        %v4568 = vadd.f32 0.0, %v4567
        %4569 = vmatmul.bf16.gmra.mxu0 %v2462
        %v4570 = vpop.f32.mrf.mxu0
        %v4571 = vadd.f32 0.0, %v4570
        %v4572 = vpop.f32.mrf.mxu0
        %v4573 = vadd.f32 0.0, %v4572
        %4574 = vmatmul.bf16.gmra.mxu0 %v2463
        %v4575 = vpop.f32.mrf.mxu0
        %v4576 = vadd.f32 0.0, %v4575
        %v4577 = vpop.f32.mrf.mxu0
        %v4578 = vadd.f32 0.0, %v4577
        %4579 = vmatmul.bf16.gmra.mxu0 %v2464
        %v4580 = vpop.f32.mrf.mxu0
        %v4581 = vadd.f32 0.0, %v4580
        %v4582 = vpop.f32.mrf.mxu0
        %v4583 = vadd.f32 0.0, %v4582
        %4584 = vmatmul.bf16.gmra.mxu0 %v2465
        %v4585 = vpop.f32.mrf.mxu0
        %v4586 = vadd.f32 0.0, %v4585
        %v4587 = vpop.f32.mrf.mxu0
        %v4588 = vadd.f32 0.0, %v4587
        %4589 = vmatmul.bf16.gmra.mxu0 %v4465
        %v4590 = vpop.f32.mrf.mxu0
        %v4591 = vadd.f32 0.0, %v4590
        %v4592 = vpop.f32.mrf.mxu0
        %v4593 = vadd.f32 0.0, %v4592
        %4594 = vmatmul.bf16.gmra.mxu0 %v4466
        %v4595 = vpop.f32.mrf.mxu0
        %v4596 = vadd.f32 0.0, %v4595
        %v4597 = vpop.f32.mrf.mxu0
        %v4598 = vadd.f32 0.0, %v4597
        %4599 = vmatmul.bf16.gmra.mxu0 %v4467
        %v4600 = vpop.f32.mrf.mxu0
        %v4601 = vadd.f32 0.0, %v4600
        %v4602 = vpop.f32.mrf.mxu0
        %v4603 = vadd.f32 0.0, %v4602
        %4604 = vmatmul.bf16.gmra.mxu0 %v4468
        %v4605 = vpop.f32.mrf.mxu0
        %v4606 = vadd.f32 0.0, %v4605
        %v4607 = vpop.f32.mrf.mxu0
        %v4608 = vadd.f32 0.0, %v4607
        %4609 = vdwg.mxu0
        %v4610 = vadd.f32 %v4396, %v4531
        %v4611 = vadd.f32 %v4397, %v4533
        %v4612 = vadd.f32 %v4398, %v4536
        %v4613 = vadd.f32 %v4399, %v4538
        %v4614 = vadd.f32 %v4400, %v4541
        %v4615 = vadd.f32 %v4401, %v4543
        %v4616 = vadd.f32 %v4402, %v4546
        %v4617 = vadd.f32 %v4403, %v4548
        %v4618 = vadd.f32 %v4404, %v4551
        %v4619 = vadd.f32 %v4405, %v4553
        %v4620 = vadd.f32 %v4406, %v4556
        %v4621 = vadd.f32 %v4407, %v4558
        %v4622 = vadd.f32 %v4408, %v4561
        %v4623 = vadd.f32 %v4409, %v4563
        %v4624 = vadd.f32 %v4410, %v4566
        %v4625 = vadd.f32 %v4411, %v4568
        %v4626 = vadd.f32 %v4412, %v4571
        %v4627 = vadd.f32 %v4413, %v4573
        %v4628 = vadd.f32 %v4414, %v4576
        %v4629 = vadd.f32 %v4415, %v4578
        %v4630 = vadd.f32 %v4416, %v4581
        %v4631 = vadd.f32 %v4417, %v4583
        %v4632 = vadd.f32 %v4418, %v4586
        %v4633 = vadd.f32 %v4419, %v4588
        %v4634 = vadd.f32 %v4420, %v4591
        %v4635 = vadd.f32 %v4421, %v4593
        %v4636 = vadd.f32 %v4422, %v4596
        %v4637 = vadd.f32 %v4423, %v4598
        %v4638 = vadd.f32 %v4424, %v4601
        %v4639 = vadd.f32 %v4425, %v4603
        %v4640 = vadd.f32 %v4426, %v4606
        %v4641 = vadd.f32 %v4427, %v4608
        %v4650 = vrot.slane %v2414, 4
        %v4651 = vrot.slane %v527, 6
        %v4652 = vsel %vm633, %v4650, %v4651
        %v4653 = vrot.slane %v2421, 4
        %v4654 = vrot.slane %v532, 6
        %v4655 = vsel %vm633, %v4653, %v4654
        %v4656 = vrot.slane %v2428, 4
        %v4657 = vrot.slane %v537, 6
        %v4658 = vsel %vm633, %v4656, %v4657
        %v4659 = vrot.slane %v2435, 4
        %v4660 = vrot.slane %v542, 6
        %v4661 = vsel %vm633, %v4659, %v4660
        %v4662 = vrot.slane %v4433, 4
        %v4663 = vrot.slane %v547, 6
        %v4664 = vsel %vm633, %v4662, %v4663
        %v4665 = vrot.slane %v4436, 4
        %v4666 = vrot.slane %v552, 6
        %v4667 = vsel %vm633, %v4665, %v4666
        %v4668 = vrot.slane %v4439, 4
        %v4669 = vrot.slane %v557, 6
        %v4670 = vsel %vm633, %v4668, %v4669
        %v4671 = vrot.slane %v4442, 4
        %v4672 = vrot.slane %v562, 6
        %v4673 = vsel %vm633, %v4671, %v4672
        %s4674 = scalar_lea.vmem [#allocation10], 512
        %v4675 = vld [vmem:[%s4674] sm:$0xf]
        %v4676 = vld [vmem:[%s4674 + $0x4] sm:$0xf]
        %v4677 = vld [vmem:[%s4674 + $0x8] sm:$0xf]
        %v4678 = vld [vmem:[%s4674 + $0xc] sm:$0xf]
        %v4679 = vld [vmem:[%s4674 + $0x10] sm:$0xf]
        %v4680 = vld [vmem:[%s4674 + $0x14] sm:$0xf]
        %v4681 = vld [vmem:[%s4674 + $0x18] sm:$0xf]
        %v4682 = vld [vmem:[%s4674 + $0x1c] sm:$0xf]
        %v4683 = vld [vmem:[%s4674 + $0x20] sm:$0xf]
        %v4684 = vld [vmem:[%s4674 + $0x24] sm:$0xf]
        %v4685 = vld [vmem:[%s4674 + $0x28] sm:$0xf]
        %v4686 = vld [vmem:[%s4674 + $0x2c] sm:$0xf]
        %v4687 = vld [vmem:[%s4674 + $0x30] sm:$0xf]
        %v4688 = vld [vmem:[%s4674 + $0x34] sm:$0xf]
        %v4689 = vld [vmem:[%s4674 + $0x38] sm:$0xf]
        %v4690 = vld [vmem:[%s4674 + $0x3c] sm:$0xf]
        %v4691 = vunpack.c.l.b16 %v4652
        %v4692 = vunpack.c.l.b16 %v4655
        %v4693 = vunpack.c.l.b16 %v4658
        %v4694 = vunpack.c.l.b16 %v4661
        %v4695 = vunpack.c.l.b16 %v4664
        %v4696 = vunpack.c.l.b16 %v4667
        %v4697 = vunpack.c.l.b16 %v4670
        %v4698 = vunpack.c.l.b16 %v4673
        %v4699 = vpack.c.b16 %v4691, %v2455
        %v4700 = vpack.c.b16 %v4692, %v2457
        %v4701 = vpack.c.b16 %v4693, %v2459
        %v4702 = vpack.c.b16 %v4694, %v2461
        %v4703 = vpack.c.b16 %v4695, %v4461
        %v4704 = vpack.c.b16 %v4696, %v4462
        %v4705 = vpack.c.b16 %v4697, %v4463
        %v4706 = vpack.c.b16 %v4698, %v4464
        %v4731 = vunpack.c.l.b16 %v4675
        %v4732 = vunpack.c.l.b16 %v4676
        %v4733 = vunpack.c.l.b16 %v4677
        %v4734 = vunpack.c.l.b16 %v4678
        %v4735 = vunpack.c.l.b16 %v4679
        %v4736 = vunpack.c.l.b16 %v4680
        %v4737 = vunpack.c.l.b16 %v4681
        %v4738 = vunpack.c.l.b16 %v4682
        %v4739 = vunpack.c.l.b16 %v4683
        %v4740 = vunpack.c.l.b16 %v4684
        %v4741 = vunpack.c.l.b16 %v4685
        %v4742 = vunpack.c.l.b16 %v4686
        %v4743 = vunpack.c.l.b16 %v4687
        %v4744 = vunpack.c.l.b16 %v4688
        %v4745 = vunpack.c.l.b16 %v4689
        %v4746 = vunpack.c.l.b16 %v4690
        %v4747 = vpack.c.b16 %v4732, %v4731
        %v4748 = vpack.c.b16 %v4734, %v4733
        %v4749 = vpack.c.b16 %v4736, %v4735
        %v4750 = vpack.c.b16 %v4738, %v4737
        %v4751 = vpack.c.b16 %v4740, %v4739
        %v4752 = vpack.c.b16 %v4742, %v4741
        %v4753 = vpack.c.b16 %v4744, %v4743
        %v4754 = vpack.c.b16 %v4746, %v4745
        %4763 = vmatpush.bf16.msra.mxu0 %v4754
        %4764 = vmatpush.bf16.msra.mxu0 %v4753
        %4765 = vmatpush.bf16.msra.mxu0 %v4752
        %4766 = vmatpush.bf16.msra.mxu0 %v4751
        %4767 = vmatpush.bf16.msra.mxu0 %v4750
        %4768 = vmatpush.bf16.msra.mxu0 %v4749
        %4769 = vmatpush.bf16.msra.mxu0 %v4748
        %4770 = vmatpush.bf16.msra.mxu0 %v4747
        %4771 = vmatmul.bf16.gmra.mxu0 %v3973
        %v4772 = vpop.f32.mrf.mxu0
        %v4773 = vadd.f32 0.0, %v4772
        %v4774 = vpop.f32.mrf.mxu0
        %v4775 = vadd.f32 0.0, %v4774
        %4776 = vmatmul.bf16.gmra.mxu0 %v3974
        %v4777 = vpop.f32.mrf.mxu0
        %v4778 = vadd.f32 0.0, %v4777
        %v4779 = vpop.f32.mrf.mxu0
        %v4780 = vadd.f32 0.0, %v4779
        %4781 = vmatmul.bf16.gmra.mxu0 %v3975
        %v4782 = vpop.f32.mrf.mxu0
        %v4783 = vadd.f32 0.0, %v4782
        %v4784 = vpop.f32.mrf.mxu0
        %v4785 = vadd.f32 0.0, %v4784
        %4786 = vmatmul.bf16.gmra.mxu0 %v3976
        %v4787 = vpop.f32.mrf.mxu0
        %v4788 = vadd.f32 0.0, %v4787
        %v4789 = vpop.f32.mrf.mxu0
        %v4790 = vadd.f32 0.0, %v4789
        %4791 = vmatmul.bf16.gmra.mxu0 %v3977
        %v4792 = vpop.f32.mrf.mxu0
        %v4793 = vadd.f32 0.0, %v4792
        %v4794 = vpop.f32.mrf.mxu0
        %v4795 = vadd.f32 0.0, %v4794
        %4796 = vmatmul.bf16.gmra.mxu0 %v3978
        %v4797 = vpop.f32.mrf.mxu0
        %v4798 = vadd.f32 0.0, %v4797
        %v4799 = vpop.f32.mrf.mxu0
        %v4800 = vadd.f32 0.0, %v4799
        %4801 = vmatmul.bf16.gmra.mxu0 %v3979
        %v4802 = vpop.f32.mrf.mxu0
        %v4803 = vadd.f32 0.0, %v4802
        %v4804 = vpop.f32.mrf.mxu0
        %v4805 = vadd.f32 0.0, %v4804
        %4806 = vmatmul.bf16.gmra.mxu0 %v3980
        %v4807 = vpop.f32.mrf.mxu0
        %v4808 = vadd.f32 0.0, %v4807
        %v4809 = vpop.f32.mrf.mxu0
        %v4810 = vadd.f32 0.0, %v4809
        %4811 = vmatmul.bf16.gmra.mxu0 %v4699
        %v4812 = vpop.f32.mrf.mxu0
        %v4813 = vadd.f32 0.0, %v4812
        %v4814 = vpop.f32.mrf.mxu0
        %v4815 = vadd.f32 0.0, %v4814
        %4816 = vmatmul.bf16.gmra.mxu0 %v4700
        %v4817 = vpop.f32.mrf.mxu0
        %v4818 = vadd.f32 0.0, %v4817
        %v4819 = vpop.f32.mrf.mxu0
        %v4820 = vadd.f32 0.0, %v4819
        %4821 = vmatmul.bf16.gmra.mxu0 %v4701
        %v4822 = vpop.f32.mrf.mxu0
        %v4823 = vadd.f32 0.0, %v4822
        %v4824 = vpop.f32.mrf.mxu0
        %v4825 = vadd.f32 0.0, %v4824
        %4826 = vmatmul.bf16.gmra.mxu0 %v4702
        %v4827 = vpop.f32.mrf.mxu0
        %v4828 = vadd.f32 0.0, %v4827
        %v4829 = vpop.f32.mrf.mxu0
        %v4830 = vadd.f32 0.0, %v4829
        %4831 = vmatmul.bf16.gmra.mxu0 %v4703
        %v4832 = vpop.f32.mrf.mxu0
        %v4833 = vadd.f32 0.0, %v4832
        %v4834 = vpop.f32.mrf.mxu0
        %v4835 = vadd.f32 0.0, %v4834
        %4836 = vmatmul.bf16.gmra.mxu0 %v4704
        %v4837 = vpop.f32.mrf.mxu0
        %v4838 = vadd.f32 0.0, %v4837
        %v4839 = vpop.f32.mrf.mxu0
        %v4840 = vadd.f32 0.0, %v4839
        %4841 = vmatmul.bf16.gmra.mxu0 %v4705
        %v4842 = vpop.f32.mrf.mxu0
        %v4843 = vadd.f32 0.0, %v4842
        %v4844 = vpop.f32.mrf.mxu0
        %v4845 = vadd.f32 0.0, %v4844
        %4846 = vmatmul.bf16.gmra.mxu0 %v4706
        %v4847 = vpop.f32.mrf.mxu0
        %v4848 = vadd.f32 0.0, %v4847
        %v4849 = vpop.f32.mrf.mxu0
        %v4850 = vadd.f32 0.0, %v4849
        %4851 = vdwg.mxu0
        %v4852 = vadd.f32 %v4610, %v4773
        %v4853 = vadd.f32 %v4611, %v4775
        %v4854 = vadd.f32 %v4612, %v4778
        %v4855 = vadd.f32 %v4613, %v4780
        %v4856 = vadd.f32 %v4614, %v4783
        %v4857 = vadd.f32 %v4615, %v4785
        %v4858 = vadd.f32 %v4616, %v4788
        %v4859 = vadd.f32 %v4617, %v4790
        %v4860 = vadd.f32 %v4618, %v4793
        %v4861 = vadd.f32 %v4619, %v4795
        %v4862 = vadd.f32 %v4620, %v4798
        %v4863 = vadd.f32 %v4621, %v4800
        %v4864 = vadd.f32 %v4622, %v4803
        %v4865 = vadd.f32 %v4623, %v4805
        %v4866 = vadd.f32 %v4624, %v4808
        %v4867 = vadd.f32 %v4625, %v4810
        %v4868 = vadd.f32 %v4626, %v4813
        %v4869 = vadd.f32 %v4627, %v4815
        %v4870 = vadd.f32 %v4628, %v4818
        %v4871 = vadd.f32 %v4629, %v4820
        %v4872 = vadd.f32 %v4630, %v4823
        %v4873 = vadd.f32 %v4631, %v4825
        %v4874 = vadd.f32 %v4632, %v4828
        %v4875 = vadd.f32 %v4633, %v4830
        %v4876 = vadd.f32 %v4634, %v4833
        %v4877 = vadd.f32 %v4635, %v4835
        %v4878 = vadd.f32 %v4636, %v4838
        %v4879 = vadd.f32 %v4637, %v4840
        %v4880 = vadd.f32 %v4638, %v4843
        %v4881 = vadd.f32 %v4639, %v4845
        %v4882 = vadd.f32 %v4640, %v4848
        %v4883 = vadd.f32 %v4641, %v4850
        %v4884 = vld [vmem:[#allocation11] sm:$0xf]
        %v4885 = vld [vmem:[#allocation11 + $0x4] sm:$0xf]
        %v4886 = vld [vmem:[#allocation11 + $0x8] sm:$0xf]
        %v4887 = vld [vmem:[#allocation11 + $0xc] sm:$0xf]
        %v4888 = vld [vmem:[#allocation11 + $0x10] sm:$0xf]
        %v4889 = vld [vmem:[#allocation11 + $0x14] sm:$0xf]
        %v4890 = vld [vmem:[#allocation11 + $0x18] sm:$0xf]
        %v4891 = vld [vmem:[#allocation11 + $0x1c] sm:$0xf]
        %v4892 = vld [vmem:[#allocation11 + $0x20] sm:$0xf]
        %v4893 = vld [vmem:[#allocation11 + $0x24] sm:$0xf]
        %v4894 = vld [vmem:[#allocation11 + $0x28] sm:$0xf]
        %v4895 = vld [vmem:[#allocation11 + $0x2c] sm:$0xf]
        %v4896 = vld [vmem:[#allocation11 + $0x30] sm:$0xf]
        %v4897 = vld [vmem:[#allocation11 + $0x34] sm:$0xf]
        %v4898 = vld [vmem:[#allocation11 + $0x38] sm:$0xf]
        %v4899 = vld [vmem:[#allocation11 + $0x3c] sm:$0xf]
        %v4908 = vunpack.c.l.b16 %v383
        %v4909 = vunpack.c.l.b16 %v384
        %v4910 = vunpack.c.l.b16 %v388
        %v4911 = vunpack.c.l.b16 %v389
        %v4912 = vunpack.c.l.b16 %v393
        %v4913 = vunpack.c.l.b16 %v394
        %v4914 = vunpack.c.l.b16 %v398
        %v4915 = vunpack.c.l.b16 %v399
        %v4916 = vunpack.c.l.b16 %v403
        %v4917 = vunpack.c.l.b16 %v404
        %v4918 = vunpack.c.l.b16 %v408
        %v4919 = vunpack.c.l.b16 %v409
        %v4920 = vunpack.c.l.b16 %v413
        %v4921 = vunpack.c.l.b16 %v414
        %v4922 = vunpack.c.l.b16 %v418
        %v4923 = vunpack.c.l.b16 %v419
        %v4924 = vunpack.c.l.b16 %v423
        %v4925 = vunpack.c.l.b16 %v428
        %v4926 = vunpack.c.l.b16 %v433
        %v4927 = vunpack.c.l.b16 %v438
        %v4928 = vunpack.c.l.b16 %v443
        %v4929 = vunpack.c.l.b16 %v448
        %v4930 = vunpack.c.l.b16 %v453
        %v4931 = vunpack.c.l.b16 %v458
        %v4932 = vpack.c.b16 %v4909, %v4908
        %v4933 = vpack.c.b16 %v4911, %v4910
        %v4934 = vpack.c.b16 %v4913, %v4912
        %v4935 = vpack.c.b16 %v4915, %v4914
        %v4936 = vpack.c.b16 %v4917, %v4916
        %v4937 = vpack.c.b16 %v4919, %v4918
        %v4938 = vpack.c.b16 %v4921, %v4920
        %v4939 = vpack.c.b16 %v4923, %v4922
        %v4940 = vpack.c.b16 %v1094, %v4924
        %v4941 = vpack.c.b16 %v1096, %v4925
        %v4942 = vpack.c.b16 %v1098, %v4926
        %v4943 = vpack.c.b16 %v1100, %v4927
        %v4944 = vpack.c.b16 %v1102, %v4928
        %v4945 = vpack.c.b16 %v1104, %v4929
        %v4946 = vpack.c.b16 %v1106, %v4930
        %v4947 = vpack.c.b16 %v1108, %v4931
        %v4980 = vunpack.c.l.b16 %v4884
        %v4981 = vunpack.c.l.b16 %v4885
        %v4982 = vunpack.c.l.b16 %v4886
        %v4983 = vunpack.c.l.b16 %v4887
        %v4984 = vunpack.c.l.b16 %v4888
        %v4985 = vunpack.c.l.b16 %v4889
        %v4986 = vunpack.c.l.b16 %v4890
        %v4987 = vunpack.c.l.b16 %v4891
        %v4988 = vunpack.c.l.b16 %v4892
        %v4989 = vunpack.c.l.b16 %v4893
        %v4990 = vunpack.c.l.b16 %v4894
        %v4991 = vunpack.c.l.b16 %v4895
        %v4992 = vunpack.c.l.b16 %v4896
        %v4993 = vunpack.c.l.b16 %v4897
        %v4994 = vunpack.c.l.b16 %v4898
        %v4995 = vunpack.c.l.b16 %v4899
        %v4996 = vpack.c.b16 %v4981, %v4980
        %v4997 = vpack.c.b16 %v4983, %v4982
        %v4998 = vpack.c.b16 %v4985, %v4984
        %v4999 = vpack.c.b16 %v4987, %v4986
        %v5000 = vpack.c.b16 %v4989, %v4988
        %v5001 = vpack.c.b16 %v4991, %v4990
        %v5002 = vpack.c.b16 %v4993, %v4992
        %v5003 = vpack.c.b16 %v4995, %v4994
        %5012 = vmatpush.bf16.msra.mxu0 %v5003
        %5013 = vmatpush.bf16.msra.mxu0 %v5002
        %5014 = vmatpush.bf16.msra.mxu0 %v5001
        %5015 = vmatpush.bf16.msra.mxu0 %v5000
        %5016 = vmatpush.bf16.msra.mxu0 %v4999
        %5017 = vmatpush.bf16.msra.mxu0 %v4998
        %5018 = vmatpush.bf16.msra.mxu0 %v4997
        %5019 = vmatpush.bf16.msra.mxu0 %v4996
        %5020 = vmatmul.bf16.gmra.mxu0 %v4932
        %v5021 = vpop.f32.mrf.mxu0
        %v5022 = vadd.f32 0.0, %v5021
        %v5023 = vpop.f32.mrf.mxu0
        %v5024 = vadd.f32 0.0, %v5023
        %5025 = vmatmul.bf16.gmra.mxu0 %v4933
        %v5026 = vpop.f32.mrf.mxu0
        %v5027 = vadd.f32 0.0, %v5026
        %v5028 = vpop.f32.mrf.mxu0
        %v5029 = vadd.f32 0.0, %v5028
        %5030 = vmatmul.bf16.gmra.mxu0 %v4934
        %v5031 = vpop.f32.mrf.mxu0
        %v5032 = vadd.f32 0.0, %v5031
        %v5033 = vpop.f32.mrf.mxu0
        %v5034 = vadd.f32 0.0, %v5033
        %5035 = vmatmul.bf16.gmra.mxu0 %v4935
        %v5036 = vpop.f32.mrf.mxu0
        %v5037 = vadd.f32 0.0, %v5036
        %v5038 = vpop.f32.mrf.mxu0
        %v5039 = vadd.f32 0.0, %v5038
        %5040 = vmatmul.bf16.gmra.mxu0 %v4936
        %v5041 = vpop.f32.mrf.mxu0
        %v5042 = vadd.f32 0.0, %v5041
        %v5043 = vpop.f32.mrf.mxu0
        %v5044 = vadd.f32 0.0, %v5043
        %5045 = vmatmul.bf16.gmra.mxu0 %v4937
        %v5046 = vpop.f32.mrf.mxu0
        %v5047 = vadd.f32 0.0, %v5046
        %v5048 = vpop.f32.mrf.mxu0
        %v5049 = vadd.f32 0.0, %v5048
        %5050 = vmatmul.bf16.gmra.mxu0 %v4938
        %v5051 = vpop.f32.mrf.mxu0
        %v5052 = vadd.f32 0.0, %v5051
        %v5053 = vpop.f32.mrf.mxu0
        %v5054 = vadd.f32 0.0, %v5053
        %5055 = vmatmul.bf16.gmra.mxu0 %v4939
        %v5056 = vpop.f32.mrf.mxu0
        %v5057 = vadd.f32 0.0, %v5056
        %v5058 = vpop.f32.mrf.mxu0
        %v5059 = vadd.f32 0.0, %v5058
        %5060 = vmatmul.bf16.gmra.mxu0 %v4940
        %v5061 = vpop.f32.mrf.mxu0
        %v5062 = vadd.f32 0.0, %v5061
        %v5063 = vpop.f32.mrf.mxu0
        %v5064 = vadd.f32 0.0, %v5063
        %5065 = vmatmul.bf16.gmra.mxu0 %v4941
        %v5066 = vpop.f32.mrf.mxu0
        %v5067 = vadd.f32 0.0, %v5066
        %v5068 = vpop.f32.mrf.mxu0
        %v5069 = vadd.f32 0.0, %v5068
        %5070 = vmatmul.bf16.gmra.mxu0 %v4942
        %v5071 = vpop.f32.mrf.mxu0
        %v5072 = vadd.f32 0.0, %v5071
        %v5073 = vpop.f32.mrf.mxu0
        %v5074 = vadd.f32 0.0, %v5073
        %5075 = vmatmul.bf16.gmra.mxu0 %v4943
        %v5076 = vpop.f32.mrf.mxu0
        %v5077 = vadd.f32 0.0, %v5076
        %v5078 = vpop.f32.mrf.mxu0
        %v5079 = vadd.f32 0.0, %v5078
        %5080 = vmatmul.bf16.gmra.mxu0 %v4944
        %v5081 = vpop.f32.mrf.mxu0
        %v5082 = vadd.f32 0.0, %v5081
        %v5083 = vpop.f32.mrf.mxu0
        %v5084 = vadd.f32 0.0, %v5083
        %5085 = vmatmul.bf16.gmra.mxu0 %v4945
        %v5086 = vpop.f32.mrf.mxu0
        %v5087 = vadd.f32 0.0, %v5086
        %v5088 = vpop.f32.mrf.mxu0
        %v5089 = vadd.f32 0.0, %v5088
        %5090 = vmatmul.bf16.gmra.mxu0 %v4946
        %v5091 = vpop.f32.mrf.mxu0
        %v5092 = vadd.f32 0.0, %v5091
        %v5093 = vpop.f32.mrf.mxu0
        %v5094 = vadd.f32 0.0, %v5093
        %5095 = vmatmul.bf16.gmra.mxu0 %v4947
        %v5096 = vpop.f32.mrf.mxu0
        %v5097 = vadd.f32 0.0, %v5096
        %v5098 = vpop.f32.mrf.mxu0
        %v5099 = vadd.f32 0.0, %v5098
        %5100 = vdwg.mxu0
        %v5101 = vadd.f32 %v4852, %v5022
        %v5102 = vadd.f32 %v4853, %v5024
        %v5103 = vadd.f32 %v4854, %v5027
        %v5104 = vadd.f32 %v4855, %v5029
        %v5105 = vadd.f32 %v4856, %v5032
        %v5106 = vadd.f32 %v4857, %v5034
        %v5107 = vadd.f32 %v4858, %v5037
        %v5108 = vadd.f32 %v4859, %v5039
        %v5109 = vadd.f32 %v4860, %v5042
        %v5110 = vadd.f32 %v4861, %v5044
        %v5111 = vadd.f32 %v4862, %v5047
        %v5112 = vadd.f32 %v4863, %v5049
        %v5113 = vadd.f32 %v4864, %v5052
        %v5114 = vadd.f32 %v4865, %v5054
        %v5115 = vadd.f32 %v4866, %v5057
        %v5116 = vadd.f32 %v4867, %v5059
        %v5117 = vadd.f32 %v4868, %v5062
        %v5118 = vadd.f32 %v4869, %v5064
        %v5119 = vadd.f32 %v4870, %v5067
        %v5120 = vadd.f32 %v4871, %v5069
        %v5121 = vadd.f32 %v4872, %v5072
        %v5122 = vadd.f32 %v4873, %v5074
        %v5123 = vadd.f32 %v4874, %v5077
        %v5124 = vadd.f32 %v4875, %v5079
        %v5125 = vadd.f32 %v4876, %v5082
        %v5126 = vadd.f32 %v4877, %v5084
        %v5127 = vadd.f32 %v4878, %v5087
        %v5128 = vadd.f32 %v4879, %v5089
        %v5129 = vadd.f32 %v4880, %v5092
        %v5130 = vadd.f32 %v4881, %v5094
        %v5131 = vadd.f32 %v4882, %v5097
        %v5132 = vadd.f32 %v4883, %v5099
        %v5141 = vrot.slane %v384, 6
        %v5142 = vrot.slane %v5141, 4
        %v5143 = vrot.slane %v385, 6
        %v5144 = vsel %vm633, %v5142, %v5143
        %v5145 = vrot.slane %v5143, 4
        %v5146 = vrot.slane %v386, 6
        %v5147 = vsel %vm633, %v5145, %v5146
        %v5148 = vrot.slane %v389, 6
        %v5149 = vrot.slane %v5148, 4
        %v5150 = vrot.slane %v390, 6
        %v5151 = vsel %vm633, %v5149, %v5150
        %v5152 = vrot.slane %v5150, 4
        %v5153 = vrot.slane %v391, 6
        %v5154 = vsel %vm633, %v5152, %v5153
        %v5155 = vrot.slane %v394, 6
        %v5156 = vrot.slane %v5155, 4
        %v5157 = vrot.slane %v395, 6
        %v5158 = vsel %vm633, %v5156, %v5157
        %v5159 = vrot.slane %v5157, 4
        %v5160 = vrot.slane %v396, 6
        %v5161 = vsel %vm633, %v5159, %v5160
        %v5162 = vrot.slane %v399, 6
        %v5163 = vrot.slane %v5162, 4
        %v5164 = vrot.slane %v400, 6
        %v5165 = vsel %vm633, %v5163, %v5164
        %v5166 = vrot.slane %v5164, 4
        %v5167 = vrot.slane %v401, 6
        %v5168 = vsel %vm633, %v5166, %v5167
        %s5169 = scalar_lea.vmem [#allocation11], 64
        %v5170 = vld [vmem:[%s5169] sm:$0xf]
        %v5171 = vld [vmem:[%s5169 + $0x4] sm:$0xf]
        %v5172 = vld [vmem:[%s5169 + $0x8] sm:$0xf]
        %v5173 = vld [vmem:[%s5169 + $0xc] sm:$0xf]
        %v5174 = vld [vmem:[%s5169 + $0x10] sm:$0xf]
        %v5175 = vld [vmem:[%s5169 + $0x14] sm:$0xf]
        %v5176 = vld [vmem:[%s5169 + $0x18] sm:$0xf]
        %v5177 = vld [vmem:[%s5169 + $0x1c] sm:$0xf]
        %v5178 = vld [vmem:[%s5169 + $0x20] sm:$0xf]
        %v5179 = vld [vmem:[%s5169 + $0x24] sm:$0xf]
        %v5180 = vld [vmem:[%s5169 + $0x28] sm:$0xf]
        %v5181 = vld [vmem:[%s5169 + $0x2c] sm:$0xf]
        %v5182 = vld [vmem:[%s5169 + $0x30] sm:$0xf]
        %v5183 = vld [vmem:[%s5169 + $0x34] sm:$0xf]
        %v5184 = vld [vmem:[%s5169 + $0x38] sm:$0xf]
        %v5185 = vld [vmem:[%s5169 + $0x3c] sm:$0xf]
        %v5186 = vunpack.c.l.b16 %v5144
        %v5187 = vunpack.c.l.b16 %v5147
        %v5188 = vunpack.c.l.b16 %v5151
        %v5189 = vunpack.c.l.b16 %v5154
        %v5190 = vunpack.c.l.b16 %v5158
        %v5191 = vunpack.c.l.b16 %v5161
        %v5192 = vunpack.c.l.b16 %v5165
        %v5193 = vunpack.c.l.b16 %v5168
        %v5194 = vpack.c.b16 %v5187, %v5186
        %v5195 = vpack.c.b16 %v5189, %v5188
        %v5196 = vpack.c.b16 %v5191, %v5190
        %v5197 = vpack.c.b16 %v5193, %v5192
        %v5218 = vunpack.c.l.b16 %v5170
        %v5219 = vunpack.c.l.b16 %v5171
        %v5220 = vunpack.c.l.b16 %v5172
        %v5221 = vunpack.c.l.b16 %v5173
        %v5222 = vunpack.c.l.b16 %v5174
        %v5223 = vunpack.c.l.b16 %v5175
        %v5224 = vunpack.c.l.b16 %v5176
        %v5225 = vunpack.c.l.b16 %v5177
        %v5226 = vunpack.c.l.b16 %v5178
        %v5227 = vunpack.c.l.b16 %v5179
        %v5228 = vunpack.c.l.b16 %v5180
        %v5229 = vunpack.c.l.b16 %v5181
        %v5230 = vunpack.c.l.b16 %v5182
        %v5231 = vunpack.c.l.b16 %v5183
        %v5232 = vunpack.c.l.b16 %v5184
        %v5233 = vunpack.c.l.b16 %v5185
        %v5234 = vpack.c.b16 %v5219, %v5218
        %v5235 = vpack.c.b16 %v5221, %v5220
        %v5236 = vpack.c.b16 %v5223, %v5222
        %v5237 = vpack.c.b16 %v5225, %v5224
        %v5238 = vpack.c.b16 %v5227, %v5226
        %v5239 = vpack.c.b16 %v5229, %v5228
        %v5240 = vpack.c.b16 %v5231, %v5230
        %v5241 = vpack.c.b16 %v5233, %v5232
        %5250 = vmatpush.bf16.msra.mxu0 %v5241
        %5251 = vmatpush.bf16.msra.mxu0 %v5240
        %5252 = vmatpush.bf16.msra.mxu0 %v5239
        %5253 = vmatpush.bf16.msra.mxu0 %v5238
        %5254 = vmatpush.bf16.msra.mxu0 %v5237
        %5255 = vmatpush.bf16.msra.mxu0 %v5236
        %5256 = vmatpush.bf16.msra.mxu0 %v5235
        %5257 = vmatpush.bf16.msra.mxu0 %v5234
        %5258 = vmatmul.bf16.gmra.mxu0 %v5194
        %v5259 = vpop.f32.mrf.mxu0
        %v5260 = vadd.f32 0.0, %v5259
        %v5261 = vpop.f32.mrf.mxu0
        %v5262 = vadd.f32 0.0, %v5261
        %5263 = vmatmul.bf16.gmra.mxu0 %v5195
        %v5264 = vpop.f32.mrf.mxu0
        %v5265 = vadd.f32 0.0, %v5264
        %v5266 = vpop.f32.mrf.mxu0
        %v5267 = vadd.f32 0.0, %v5266
        %5268 = vmatmul.bf16.gmra.mxu0 %v5196
        %v5269 = vpop.f32.mrf.mxu0
        %v5270 = vadd.f32 0.0, %v5269
        %v5271 = vpop.f32.mrf.mxu0
        %v5272 = vadd.f32 0.0, %v5271
        %5273 = vmatmul.bf16.gmra.mxu0 %v5197
        %v5274 = vpop.f32.mrf.mxu0
        %v5275 = vadd.f32 0.0, %v5274
        %v5276 = vpop.f32.mrf.mxu0
        %v5277 = vadd.f32 0.0, %v5276
        %5278 = vmatmul.bf16.gmra.mxu0 %v3199
        %v5279 = vpop.f32.mrf.mxu0
        %v5280 = vadd.f32 0.0, %v5279
        %v5281 = vpop.f32.mrf.mxu0
        %v5282 = vadd.f32 0.0, %v5281
        %5283 = vmatmul.bf16.gmra.mxu0 %v3200
        %v5284 = vpop.f32.mrf.mxu0
        %v5285 = vadd.f32 0.0, %v5284
        %v5286 = vpop.f32.mrf.mxu0
        %v5287 = vadd.f32 0.0, %v5286
        %5288 = vmatmul.bf16.gmra.mxu0 %v3201
        %v5289 = vpop.f32.mrf.mxu0
        %v5290 = vadd.f32 0.0, %v5289
        %v5291 = vpop.f32.mrf.mxu0
        %v5292 = vadd.f32 0.0, %v5291
        %5293 = vmatmul.bf16.gmra.mxu0 %v3202
        %v5294 = vpop.f32.mrf.mxu0
        %v5295 = vadd.f32 0.0, %v5294
        %v5296 = vpop.f32.mrf.mxu0
        %v5297 = vadd.f32 0.0, %v5296
        %5298 = vmatmul.bf16.gmra.mxu0 %v1384
        %v5299 = vpop.f32.mrf.mxu0
        %v5300 = vadd.f32 0.0, %v5299
        %v5301 = vpop.f32.mrf.mxu0
        %v5302 = vadd.f32 0.0, %v5301
        %5303 = vmatmul.bf16.gmra.mxu0 %v1385
        %v5304 = vpop.f32.mrf.mxu0
        %v5305 = vadd.f32 0.0, %v5304
        %v5306 = vpop.f32.mrf.mxu0
        %v5307 = vadd.f32 0.0, %v5306
        %5308 = vmatmul.bf16.gmra.mxu0 %v1386
        %v5309 = vpop.f32.mrf.mxu0
        %v5310 = vadd.f32 0.0, %v5309
        %v5311 = vpop.f32.mrf.mxu0
        %v5312 = vadd.f32 0.0, %v5311
        %5313 = vmatmul.bf16.gmra.mxu0 %v1387
        %v5314 = vpop.f32.mrf.mxu0
        %v5315 = vadd.f32 0.0, %v5314
        %v5316 = vpop.f32.mrf.mxu0
        %v5317 = vadd.f32 0.0, %v5316
        %5318 = vmatmul.bf16.gmra.mxu0 %v778
        %v5319 = vpop.f32.mrf.mxu0
        %v5320 = vadd.f32 0.0, %v5319
        %v5321 = vpop.f32.mrf.mxu0
        %v5322 = vadd.f32 0.0, %v5321
        %5323 = vmatmul.bf16.gmra.mxu0 %v779
        %v5324 = vpop.f32.mrf.mxu0
        %v5325 = vadd.f32 0.0, %v5324
        %v5326 = vpop.f32.mrf.mxu0
        %v5327 = vadd.f32 0.0, %v5326
        %5328 = vmatmul.bf16.gmra.mxu0 %v780
        %v5329 = vpop.f32.mrf.mxu0
        %v5330 = vadd.f32 0.0, %v5329
        %v5331 = vpop.f32.mrf.mxu0
        %v5332 = vadd.f32 0.0, %v5331
        %5333 = vmatmul.bf16.gmra.mxu0 %v781
        %v5334 = vpop.f32.mrf.mxu0
        %v5335 = vadd.f32 0.0, %v5334
        %v5336 = vpop.f32.mrf.mxu0
        %v5337 = vadd.f32 0.0, %v5336
        %5338 = vdwg.mxu0
        %v5339 = vadd.f32 %v5101, %v5260
        %v5340 = vadd.f32 %v5102, %v5262
        %v5341 = vadd.f32 %v5103, %v5265
        %v5342 = vadd.f32 %v5104, %v5267
        %v5343 = vadd.f32 %v5105, %v5270
        %v5344 = vadd.f32 %v5106, %v5272
        %v5345 = vadd.f32 %v5107, %v5275
        %v5346 = vadd.f32 %v5108, %v5277
        %v5347 = vadd.f32 %v5109, %v5280
        %v5348 = vadd.f32 %v5110, %v5282
        %v5349 = vadd.f32 %v5111, %v5285
        %v5350 = vadd.f32 %v5112, %v5287
        %v5351 = vadd.f32 %v5113, %v5290
        %v5352 = vadd.f32 %v5114, %v5292
        %v5353 = vadd.f32 %v5115, %v5295
        %v5354 = vadd.f32 %v5116, %v5297
        %v5355 = vadd.f32 %v5117, %v5300
        %v5356 = vadd.f32 %v5118, %v5302
        %v5357 = vadd.f32 %v5119, %v5305
        %v5358 = vadd.f32 %v5120, %v5307
        %v5359 = vadd.f32 %v5121, %v5310
        %v5360 = vadd.f32 %v5122, %v5312
        %v5361 = vadd.f32 %v5123, %v5315
        %v5362 = vadd.f32 %v5124, %v5317
        %v5363 = vadd.f32 %v5125, %v5320
        %v5364 = vadd.f32 %v5126, %v5322
        %v5365 = vadd.f32 %v5127, %v5325
        %v5366 = vadd.f32 %v5128, %v5327
        %v5367 = vadd.f32 %v5129, %v5330
        %v5368 = vadd.f32 %v5130, %v5332
        %v5369 = vadd.f32 %v5131, %v5335
        %v5370 = vadd.f32 %v5132, %v5337
        %s5371 = scalar_lea.vmem [#allocation11], 128
        %v5372 = vld [vmem:[%s5371] sm:$0xf]
        %v5373 = vld [vmem:[%s5371 + $0x4] sm:$0xf]
        %v5374 = vld [vmem:[%s5371 + $0x8] sm:$0xf]
        %v5375 = vld [vmem:[%s5371 + $0xc] sm:$0xf]
        %v5376 = vld [vmem:[%s5371 + $0x10] sm:$0xf]
        %v5377 = vld [vmem:[%s5371 + $0x14] sm:$0xf]
        %v5378 = vld [vmem:[%s5371 + $0x18] sm:$0xf]
        %v5379 = vld [vmem:[%s5371 + $0x1c] sm:$0xf]
        %v5380 = vld [vmem:[%s5371 + $0x20] sm:$0xf]
        %v5381 = vld [vmem:[%s5371 + $0x24] sm:$0xf]
        %v5382 = vld [vmem:[%s5371 + $0x28] sm:$0xf]
        %v5383 = vld [vmem:[%s5371 + $0x2c] sm:$0xf]
        %v5384 = vld [vmem:[%s5371 + $0x30] sm:$0xf]
        %v5385 = vld [vmem:[%s5371 + $0x34] sm:$0xf]
        %v5386 = vld [vmem:[%s5371 + $0x38] sm:$0xf]
        %v5387 = vld [vmem:[%s5371 + $0x3c] sm:$0xf]
        %v5392 = vunpack.c.l.b16 %v386
        %v5393 = vunpack.c.l.b16 %v387
        %v5394 = vunpack.c.l.b16 %v391
        %v5395 = vunpack.c.l.b16 %v392
        %v5396 = vunpack.c.l.b16 %v396
        %v5397 = vunpack.c.l.b16 %v397
        %v5398 = vunpack.c.l.b16 %v401
        %v5399 = vunpack.c.l.b16 %v402
        %v5400 = vunpack.c.l.b16 %v406
        %v5401 = vunpack.c.l.b16 %v407
        %v5402 = vunpack.c.l.b16 %v411
        %v5403 = vunpack.c.l.b16 %v412
        %v5404 = vunpack.c.l.b16 %v416
        %v5405 = vunpack.c.l.b16 %v417
        %v5406 = vunpack.c.l.b16 %v421
        %v5407 = vunpack.c.l.b16 %v422
        %v5408 = vunpack.c.l.b16 %v427
        %v5409 = vunpack.c.l.b16 %v432
        %v5410 = vunpack.c.l.b16 %v437
        %v5411 = vunpack.c.l.b16 %v442
        %v5412 = vunpack.c.l.b16 %v447
        %v5413 = vunpack.c.l.b16 %v452
        %v5414 = vunpack.c.l.b16 %v457
        %v5415 = vunpack.c.l.b16 %v462
        %v5416 = vpack.c.b16 %v5393, %v5392
        %v5417 = vpack.c.b16 %v5395, %v5394
        %v5418 = vpack.c.b16 %v5397, %v5396
        %v5419 = vpack.c.b16 %v5399, %v5398
        %v5420 = vpack.c.b16 %v5401, %v5400
        %v5421 = vpack.c.b16 %v5403, %v5402
        %v5422 = vpack.c.b16 %v5405, %v5404
        %v5423 = vpack.c.b16 %v5407, %v5406
        %v5424 = vpack.c.b16 %v5408, %v1578
        %v5425 = vpack.c.b16 %v5409, %v1579
        %v5426 = vpack.c.b16 %v5410, %v1580
        %v5427 = vpack.c.b16 %v5411, %v1581
        %v5428 = vpack.c.b16 %v5412, %v1582
        %v5429 = vpack.c.b16 %v5413, %v1583
        %v5430 = vpack.c.b16 %v5414, %v1584
        %v5431 = vpack.c.b16 %v5415, %v1585
        %v5464 = vunpack.c.l.b16 %v5372
        %v5465 = vunpack.c.l.b16 %v5373
        %v5466 = vunpack.c.l.b16 %v5374
        %v5467 = vunpack.c.l.b16 %v5375
        %v5468 = vunpack.c.l.b16 %v5376
        %v5469 = vunpack.c.l.b16 %v5377
        %v5470 = vunpack.c.l.b16 %v5378
        %v5471 = vunpack.c.l.b16 %v5379
        %v5472 = vunpack.c.l.b16 %v5380
        %v5473 = vunpack.c.l.b16 %v5381
        %v5474 = vunpack.c.l.b16 %v5382
        %v5475 = vunpack.c.l.b16 %v5383
        %v5476 = vunpack.c.l.b16 %v5384
        %v5477 = vunpack.c.l.b16 %v5385
        %v5478 = vunpack.c.l.b16 %v5386
        %v5479 = vunpack.c.l.b16 %v5387
        %v5480 = vpack.c.b16 %v5465, %v5464
        %v5481 = vpack.c.b16 %v5467, %v5466
        %v5482 = vpack.c.b16 %v5469, %v5468
        %v5483 = vpack.c.b16 %v5471, %v5470
        %v5484 = vpack.c.b16 %v5473, %v5472
        %v5485 = vpack.c.b16 %v5475, %v5474
        %v5486 = vpack.c.b16 %v5477, %v5476
        %v5487 = vpack.c.b16 %v5479, %v5478
        %5496 = vmatpush.bf16.msra.mxu0 %v5487
        %5497 = vmatpush.bf16.msra.mxu0 %v5486
        %5498 = vmatpush.bf16.msra.mxu0 %v5485
        %5499 = vmatpush.bf16.msra.mxu0 %v5484
        %5500 = vmatpush.bf16.msra.mxu0 %v5483
        %5501 = vmatpush.bf16.msra.mxu0 %v5482
        %5502 = vmatpush.bf16.msra.mxu0 %v5481
        %5503 = vmatpush.bf16.msra.mxu0 %v5480
        %5504 = vmatmul.bf16.gmra.mxu0 %v5416
        %v5505 = vpop.f32.mrf.mxu0
        %v5506 = vadd.f32 0.0, %v5505
        %v5507 = vpop.f32.mrf.mxu0
        %v5508 = vadd.f32 0.0, %v5507
        %5509 = vmatmul.bf16.gmra.mxu0 %v5417
        %v5510 = vpop.f32.mrf.mxu0
        %v5511 = vadd.f32 0.0, %v5510
        %v5512 = vpop.f32.mrf.mxu0
        %v5513 = vadd.f32 0.0, %v5512
        %5514 = vmatmul.bf16.gmra.mxu0 %v5418
        %v5515 = vpop.f32.mrf.mxu0
        %v5516 = vadd.f32 0.0, %v5515
        %v5517 = vpop.f32.mrf.mxu0
        %v5518 = vadd.f32 0.0, %v5517
        %5519 = vmatmul.bf16.gmra.mxu0 %v5419
        %v5520 = vpop.f32.mrf.mxu0
        %v5521 = vadd.f32 0.0, %v5520
        %v5522 = vpop.f32.mrf.mxu0
        %v5523 = vadd.f32 0.0, %v5522
        %5524 = vmatmul.bf16.gmra.mxu0 %v5420
        %v5525 = vpop.f32.mrf.mxu0
        %v5526 = vadd.f32 0.0, %v5525
        %v5527 = vpop.f32.mrf.mxu0
        %v5528 = vadd.f32 0.0, %v5527
        %5529 = vmatmul.bf16.gmra.mxu0 %v5421
        %v5530 = vpop.f32.mrf.mxu0
        %v5531 = vadd.f32 0.0, %v5530
        %v5532 = vpop.f32.mrf.mxu0
        %v5533 = vadd.f32 0.0, %v5532
        %5534 = vmatmul.bf16.gmra.mxu0 %v5422
        %v5535 = vpop.f32.mrf.mxu0
        %v5536 = vadd.f32 0.0, %v5535
        %v5537 = vpop.f32.mrf.mxu0
        %v5538 = vadd.f32 0.0, %v5537
        %5539 = vmatmul.bf16.gmra.mxu0 %v5423
        %v5540 = vpop.f32.mrf.mxu0
        %v5541 = vadd.f32 0.0, %v5540
        %v5542 = vpop.f32.mrf.mxu0
        %v5543 = vadd.f32 0.0, %v5542
        %5544 = vmatmul.bf16.gmra.mxu0 %v5424
        %v5545 = vpop.f32.mrf.mxu0
        %v5546 = vadd.f32 0.0, %v5545
        %v5547 = vpop.f32.mrf.mxu0
        %v5548 = vadd.f32 0.0, %v5547
        %5549 = vmatmul.bf16.gmra.mxu0 %v5425
        %v5550 = vpop.f32.mrf.mxu0
        %v5551 = vadd.f32 0.0, %v5550
        %v5552 = vpop.f32.mrf.mxu0
        %v5553 = vadd.f32 0.0, %v5552
        %5554 = vmatmul.bf16.gmra.mxu0 %v5426
        %v5555 = vpop.f32.mrf.mxu0
        %v5556 = vadd.f32 0.0, %v5555
        %v5557 = vpop.f32.mrf.mxu0
        %v5558 = vadd.f32 0.0, %v5557
        %5559 = vmatmul.bf16.gmra.mxu0 %v5427
        %v5560 = vpop.f32.mrf.mxu0
        %v5561 = vadd.f32 0.0, %v5560
        %v5562 = vpop.f32.mrf.mxu0
        %v5563 = vadd.f32 0.0, %v5562
        %5564 = vmatmul.bf16.gmra.mxu0 %v5428
        %v5565 = vpop.f32.mrf.mxu0
        %v5566 = vadd.f32 0.0, %v5565
        %v5567 = vpop.f32.mrf.mxu0
        %v5568 = vadd.f32 0.0, %v5567
        %5569 = vmatmul.bf16.gmra.mxu0 %v5429
        %v5570 = vpop.f32.mrf.mxu0
        %v5571 = vadd.f32 0.0, %v5570
        %v5572 = vpop.f32.mrf.mxu0
        %v5573 = vadd.f32 0.0, %v5572
        %5574 = vmatmul.bf16.gmra.mxu0 %v5430
        %v5575 = vpop.f32.mrf.mxu0
        %v5576 = vadd.f32 0.0, %v5575
        %v5577 = vpop.f32.mrf.mxu0
        %v5578 = vadd.f32 0.0, %v5577
        %5579 = vmatmul.bf16.gmra.mxu0 %v5431
        %v5580 = vpop.f32.mrf.mxu0
        %v5581 = vadd.f32 0.0, %v5580
        %v5582 = vpop.f32.mrf.mxu0
        %v5583 = vadd.f32 0.0, %v5582
        %5584 = vdwg.mxu0
        %v5585 = vadd.f32 %v5339, %v5506
        %v5586 = vadd.f32 %v5340, %v5508
        %v5587 = vadd.f32 %v5341, %v5511
        %v5588 = vadd.f32 %v5342, %v5513
        %v5589 = vadd.f32 %v5343, %v5516
        %v5590 = vadd.f32 %v5344, %v5518
        %v5591 = vadd.f32 %v5345, %v5521
        %v5592 = vadd.f32 %v5346, %v5523
        %v5593 = vadd.f32 %v5347, %v5526
        %v5594 = vadd.f32 %v5348, %v5528
        %v5595 = vadd.f32 %v5349, %v5531
        %v5596 = vadd.f32 %v5350, %v5533
        %v5597 = vadd.f32 %v5351, %v5536
        %v5598 = vadd.f32 %v5352, %v5538
        %v5599 = vadd.f32 %v5353, %v5541
        %v5600 = vadd.f32 %v5354, %v5543
        %v5601 = vadd.f32 %v5355, %v5546
        %v5602 = vadd.f32 %v5356, %v5548
        %v5603 = vadd.f32 %v5357, %v5551
        %v5604 = vadd.f32 %v5358, %v5553
        %v5605 = vadd.f32 %v5359, %v5556
        %v5606 = vadd.f32 %v5360, %v5558
        %v5607 = vadd.f32 %v5361, %v5561
        %v5608 = vadd.f32 %v5362, %v5563
        %v5609 = vadd.f32 %v5363, %v5566
        %v5610 = vadd.f32 %v5364, %v5568
        %v5611 = vadd.f32 %v5365, %v5571
        %v5612 = vadd.f32 %v5366, %v5573
        %v5613 = vadd.f32 %v5367, %v5576
        %v5614 = vadd.f32 %v5368, %v5578
        %v5615 = vadd.f32 %v5369, %v5581
        %v5616 = vadd.f32 %v5370, %v5583
        %s5617 = scalar_lea.vmem [#allocation11], 192
        %v5618 = vld [vmem:[%s5617] sm:$0xf]
        %v5619 = vld [vmem:[%s5617 + $0x4] sm:$0xf]
        %v5620 = vld [vmem:[%s5617 + $0x8] sm:$0xf]
        %v5621 = vld [vmem:[%s5617 + $0xc] sm:$0xf]
        %v5622 = vld [vmem:[%s5617 + $0x10] sm:$0xf]
        %v5623 = vld [vmem:[%s5617 + $0x14] sm:$0xf]
        %v5624 = vld [vmem:[%s5617 + $0x18] sm:$0xf]
        %v5625 = vld [vmem:[%s5617 + $0x1c] sm:$0xf]
        %v5626 = vld [vmem:[%s5617 + $0x20] sm:$0xf]
        %v5627 = vld [vmem:[%s5617 + $0x24] sm:$0xf]
        %v5628 = vld [vmem:[%s5617 + $0x28] sm:$0xf]
        %v5629 = vld [vmem:[%s5617 + $0x2c] sm:$0xf]
        %v5630 = vld [vmem:[%s5617 + $0x30] sm:$0xf]
        %v5631 = vld [vmem:[%s5617 + $0x34] sm:$0xf]
        %v5632 = vld [vmem:[%s5617 + $0x38] sm:$0xf]
        %v5633 = vld [vmem:[%s5617 + $0x3c] sm:$0xf]
        %v5634 = vunpack.c.l.b16 %v463
        %v5635 = vunpack.c.l.b16 %v468
        %v5636 = vunpack.c.l.b16 %v473
        %v5637 = vunpack.c.l.b16 %v478
        %v5638 = vunpack.c.l.b16 %v483
        %v5639 = vunpack.c.l.b16 %v488
        %v5640 = vunpack.c.l.b16 %v493
        %v5641 = vunpack.c.l.b16 %v498
        %v5642 = vunpack.c.l.b16 %v503
        %v5643 = vunpack.c.l.b16 %v508
        %v5644 = vunpack.c.l.b16 %v513
        %v5645 = vunpack.c.l.b16 %v518
        %v5646 = vpack.c.b16 %v1110, %v5634
        %v5647 = vpack.c.b16 %v1112, %v5635
        %v5648 = vpack.c.b16 %v1114, %v5636
        %v5649 = vpack.c.b16 %v1116, %v5637
        %v5650 = vpack.c.b16 %v1118, %v5638
        %v5651 = vpack.c.b16 %v1120, %v5639
        %v5652 = vpack.c.b16 %v1122, %v5640
        %v5653 = vpack.c.b16 %v1124, %v5641
        %v5654 = vpack.c.b16 %v1812, %v5642
        %v5655 = vpack.c.b16 %v1814, %v5643
        %v5656 = vpack.c.b16 %v1816, %v5644
        %v5657 = vpack.c.b16 %v1818, %v5645
        %v5686 = vunpack.c.l.b16 %v5618
        %v5687 = vunpack.c.l.b16 %v5619
        %v5688 = vunpack.c.l.b16 %v5620
        %v5689 = vunpack.c.l.b16 %v5621
        %v5690 = vunpack.c.l.b16 %v5622
        %v5691 = vunpack.c.l.b16 %v5623
        %v5692 = vunpack.c.l.b16 %v5624
        %v5693 = vunpack.c.l.b16 %v5625
        %v5694 = vunpack.c.l.b16 %v5626
        %v5695 = vunpack.c.l.b16 %v5627
        %v5696 = vunpack.c.l.b16 %v5628
        %v5697 = vunpack.c.l.b16 %v5629
        %v5698 = vunpack.c.l.b16 %v5630
        %v5699 = vunpack.c.l.b16 %v5631
        %v5700 = vunpack.c.l.b16 %v5632
        %v5701 = vunpack.c.l.b16 %v5633
        %v5702 = vpack.c.b16 %v5687, %v5686
        %v5703 = vpack.c.b16 %v5689, %v5688
        %v5704 = vpack.c.b16 %v5691, %v5690
        %v5705 = vpack.c.b16 %v5693, %v5692
        %v5706 = vpack.c.b16 %v5695, %v5694
        %v5707 = vpack.c.b16 %v5697, %v5696
        %v5708 = vpack.c.b16 %v5699, %v5698
        %v5709 = vpack.c.b16 %v5701, %v5700
        %5718 = vmatpush.bf16.msra.mxu0 %v5709
        %5719 = vmatpush.bf16.msra.mxu0 %v5708
        %5720 = vmatpush.bf16.msra.mxu0 %v5707
        %5721 = vmatpush.bf16.msra.mxu0 %v5706
        %5722 = vmatpush.bf16.msra.mxu0 %v5705
        %5723 = vmatpush.bf16.msra.mxu0 %v5704
        %5724 = vmatpush.bf16.msra.mxu0 %v5703
        %5725 = vmatpush.bf16.msra.mxu0 %v5702
        %5726 = vmatmul.bf16.gmra.mxu0 %v4944
        %v5727 = vpop.f32.mrf.mxu0
        %v5728 = vadd.f32 0.0, %v5727
        %v5729 = vpop.f32.mrf.mxu0
        %v5730 = vadd.f32 0.0, %v5729
        %5731 = vmatmul.bf16.gmra.mxu0 %v4945
        %v5732 = vpop.f32.mrf.mxu0
        %v5733 = vadd.f32 0.0, %v5732
        %v5734 = vpop.f32.mrf.mxu0
        %v5735 = vadd.f32 0.0, %v5734
        %5736 = vmatmul.bf16.gmra.mxu0 %v4946
        %v5737 = vpop.f32.mrf.mxu0
        %v5738 = vadd.f32 0.0, %v5737
        %v5739 = vpop.f32.mrf.mxu0
        %v5740 = vadd.f32 0.0, %v5739
        %5741 = vmatmul.bf16.gmra.mxu0 %v4947
        %v5742 = vpop.f32.mrf.mxu0
        %v5743 = vadd.f32 0.0, %v5742
        %v5744 = vpop.f32.mrf.mxu0
        %v5745 = vadd.f32 0.0, %v5744
        %5746 = vmatmul.bf16.gmra.mxu0 %v5646
        %v5747 = vpop.f32.mrf.mxu0
        %v5748 = vadd.f32 0.0, %v5747
        %v5749 = vpop.f32.mrf.mxu0
        %v5750 = vadd.f32 0.0, %v5749
        %5751 = vmatmul.bf16.gmra.mxu0 %v5647
        %v5752 = vpop.f32.mrf.mxu0
        %v5753 = vadd.f32 0.0, %v5752
        %v5754 = vpop.f32.mrf.mxu0
        %v5755 = vadd.f32 0.0, %v5754
        %5756 = vmatmul.bf16.gmra.mxu0 %v5648
        %v5757 = vpop.f32.mrf.mxu0
        %v5758 = vadd.f32 0.0, %v5757
        %v5759 = vpop.f32.mrf.mxu0
        %v5760 = vadd.f32 0.0, %v5759
        %5761 = vmatmul.bf16.gmra.mxu0 %v5649
        %v5762 = vpop.f32.mrf.mxu0
        %v5763 = vadd.f32 0.0, %v5762
        %v5764 = vpop.f32.mrf.mxu0
        %v5765 = vadd.f32 0.0, %v5764
        %5766 = vmatmul.bf16.gmra.mxu0 %v5650
        %v5767 = vpop.f32.mrf.mxu0
        %v5768 = vadd.f32 0.0, %v5767
        %v5769 = vpop.f32.mrf.mxu0
        %v5770 = vadd.f32 0.0, %v5769
        %5771 = vmatmul.bf16.gmra.mxu0 %v5651
        %v5772 = vpop.f32.mrf.mxu0
        %v5773 = vadd.f32 0.0, %v5772
        %v5774 = vpop.f32.mrf.mxu0
        %v5775 = vadd.f32 0.0, %v5774
        %5776 = vmatmul.bf16.gmra.mxu0 %v5652
        %v5777 = vpop.f32.mrf.mxu0
        %v5778 = vadd.f32 0.0, %v5777
        %v5779 = vpop.f32.mrf.mxu0
        %v5780 = vadd.f32 0.0, %v5779
        %5781 = vmatmul.bf16.gmra.mxu0 %v5653
        %v5782 = vpop.f32.mrf.mxu0
        %v5783 = vadd.f32 0.0, %v5782
        %v5784 = vpop.f32.mrf.mxu0
        %v5785 = vadd.f32 0.0, %v5784
        %5786 = vmatmul.bf16.gmra.mxu0 %v5654
        %v5787 = vpop.f32.mrf.mxu0
        %v5788 = vadd.f32 0.0, %v5787
        %v5789 = vpop.f32.mrf.mxu0
        %v5790 = vadd.f32 0.0, %v5789
        %5791 = vmatmul.bf16.gmra.mxu0 %v5655
        %v5792 = vpop.f32.mrf.mxu0
        %v5793 = vadd.f32 0.0, %v5792
        %v5794 = vpop.f32.mrf.mxu0
        %v5795 = vadd.f32 0.0, %v5794
        %5796 = vmatmul.bf16.gmra.mxu0 %v5656
        %v5797 = vpop.f32.mrf.mxu0
        %v5798 = vadd.f32 0.0, %v5797
        %v5799 = vpop.f32.mrf.mxu0
        %v5800 = vadd.f32 0.0, %v5799
        %5801 = vmatmul.bf16.gmra.mxu0 %v5657
        %v5802 = vpop.f32.mrf.mxu0
        %v5803 = vadd.f32 0.0, %v5802
        %v5804 = vpop.f32.mrf.mxu0
        %v5805 = vadd.f32 0.0, %v5804
        %5806 = vdwg.mxu0
        %v5807 = vadd.f32 %v5585, %v5728
        %v5808 = vadd.f32 %v5586, %v5730
        %v5809 = vadd.f32 %v5587, %v5733
        %v5810 = vadd.f32 %v5588, %v5735
        %v5811 = vadd.f32 %v5589, %v5738
        %v5812 = vadd.f32 %v5590, %v5740
        %v5813 = vadd.f32 %v5591, %v5743
        %v5814 = vadd.f32 %v5592, %v5745
        %v5815 = vadd.f32 %v5593, %v5748
        %v5816 = vadd.f32 %v5594, %v5750
        %v5817 = vadd.f32 %v5595, %v5753
        %v5818 = vadd.f32 %v5596, %v5755
        %v5819 = vadd.f32 %v5597, %v5758
        %v5820 = vadd.f32 %v5598, %v5760
        %v5821 = vadd.f32 %v5599, %v5763
        %v5822 = vadd.f32 %v5600, %v5765
        %v5823 = vadd.f32 %v5601, %v5768
        %v5824 = vadd.f32 %v5602, %v5770
        %v5825 = vadd.f32 %v5603, %v5773
        %v5826 = vadd.f32 %v5604, %v5775
        %v5827 = vadd.f32 %v5605, %v5778
        %v5828 = vadd.f32 %v5606, %v5780
        %v5829 = vadd.f32 %v5607, %v5783
        %v5830 = vadd.f32 %v5608, %v5785
        %v5831 = vadd.f32 %v5609, %v5788
        %v5832 = vadd.f32 %v5610, %v5790
        %v5833 = vadd.f32 %v5611, %v5793
        %v5834 = vadd.f32 %v5612, %v5795
        %v5835 = vadd.f32 %v5613, %v5798
        %v5836 = vadd.f32 %v5614, %v5800
        %v5837 = vadd.f32 %v5615, %v5803
        %v5838 = vadd.f32 %v5616, %v5805
        %s5839 = scalar_lea.vmem [#allocation11], 320
        %v5840 = vld [vmem:[%s5839] sm:$0xf]
        %v5841 = vld [vmem:[%s5839 + $0x4] sm:$0xf]
        %v5842 = vld [vmem:[%s5839 + $0x8] sm:$0xf]
        %v5843 = vld [vmem:[%s5839 + $0xc] sm:$0xf]
        %v5844 = vld [vmem:[%s5839 + $0x10] sm:$0xf]
        %v5845 = vld [vmem:[%s5839 + $0x14] sm:$0xf]
        %v5846 = vld [vmem:[%s5839 + $0x18] sm:$0xf]
        %v5847 = vld [vmem:[%s5839 + $0x1c] sm:$0xf]
        %v5848 = vld [vmem:[%s5839 + $0x20] sm:$0xf]
        %v5849 = vld [vmem:[%s5839 + $0x24] sm:$0xf]
        %v5850 = vld [vmem:[%s5839 + $0x28] sm:$0xf]
        %v5851 = vld [vmem:[%s5839 + $0x2c] sm:$0xf]
        %v5852 = vld [vmem:[%s5839 + $0x30] sm:$0xf]
        %v5853 = vld [vmem:[%s5839 + $0x34] sm:$0xf]
        %v5854 = vld [vmem:[%s5839 + $0x38] sm:$0xf]
        %v5855 = vld [vmem:[%s5839 + $0x3c] sm:$0xf]
        %v5856 = vunpack.c.l.b16 %v467
        %v5857 = vunpack.c.l.b16 %v472
        %v5858 = vunpack.c.l.b16 %v477
        %v5859 = vunpack.c.l.b16 %v482
        %v5860 = vunpack.c.l.b16 %v487
        %v5861 = vunpack.c.l.b16 %v492
        %v5862 = vunpack.c.l.b16 %v497
        %v5863 = vunpack.c.l.b16 %v502
        %v5864 = vunpack.c.l.b16 %v507
        %v5865 = vunpack.c.l.b16 %v512
        %v5866 = vunpack.c.l.b16 %v517
        %v5867 = vunpack.c.l.b16 %v522
        %v5868 = vpack.c.b16 %v5856, %v1586
        %v5869 = vpack.c.b16 %v5857, %v1587
        %v5870 = vpack.c.b16 %v5858, %v1588
        %v5871 = vpack.c.b16 %v5859, %v1589
        %v5872 = vpack.c.b16 %v5860, %v1590
        %v5873 = vpack.c.b16 %v5861, %v1591
        %v5874 = vpack.c.b16 %v5862, %v1592
        %v5875 = vpack.c.b16 %v5863, %v1593
        %v5876 = vpack.c.b16 %v5864, %v2014
        %v5877 = vpack.c.b16 %v5865, %v2015
        %v5878 = vpack.c.b16 %v5866, %v2016
        %v5879 = vpack.c.b16 %v5867, %v2017
        %v5908 = vunpack.c.l.b16 %v5840
        %v5909 = vunpack.c.l.b16 %v5841
        %v5910 = vunpack.c.l.b16 %v5842
        %v5911 = vunpack.c.l.b16 %v5843
        %v5912 = vunpack.c.l.b16 %v5844
        %v5913 = vunpack.c.l.b16 %v5845
        %v5914 = vunpack.c.l.b16 %v5846
        %v5915 = vunpack.c.l.b16 %v5847
        %v5916 = vunpack.c.l.b16 %v5848
        %v5917 = vunpack.c.l.b16 %v5849
        %v5918 = vunpack.c.l.b16 %v5850
        %v5919 = vunpack.c.l.b16 %v5851
        %v5920 = vunpack.c.l.b16 %v5852
        %v5921 = vunpack.c.l.b16 %v5853
        %v5922 = vunpack.c.l.b16 %v5854
        %v5923 = vunpack.c.l.b16 %v5855
        %v5924 = vpack.c.b16 %v5909, %v5908
        %v5925 = vpack.c.b16 %v5911, %v5910
        %v5926 = vpack.c.b16 %v5913, %v5912
        %v5927 = vpack.c.b16 %v5915, %v5914
        %v5928 = vpack.c.b16 %v5917, %v5916
        %v5929 = vpack.c.b16 %v5919, %v5918
        %v5930 = vpack.c.b16 %v5921, %v5920
        %v5931 = vpack.c.b16 %v5923, %v5922
        %5940 = vmatpush.bf16.msra.mxu0 %v5931
        %5941 = vmatpush.bf16.msra.mxu0 %v5930
        %5942 = vmatpush.bf16.msra.mxu0 %v5929
        %5943 = vmatpush.bf16.msra.mxu0 %v5928
        %5944 = vmatpush.bf16.msra.mxu0 %v5927
        %5945 = vmatpush.bf16.msra.mxu0 %v5926
        %5946 = vmatpush.bf16.msra.mxu0 %v5925
        %5947 = vmatpush.bf16.msra.mxu0 %v5924
        %5948 = vmatmul.bf16.gmra.mxu0 %v5428
        %v5949 = vpop.f32.mrf.mxu0
        %v5950 = vadd.f32 0.0, %v5949
        %v5951 = vpop.f32.mrf.mxu0
        %v5952 = vadd.f32 0.0, %v5951
        %5953 = vmatmul.bf16.gmra.mxu0 %v5429
        %v5954 = vpop.f32.mrf.mxu0
        %v5955 = vadd.f32 0.0, %v5954
        %v5956 = vpop.f32.mrf.mxu0
        %v5957 = vadd.f32 0.0, %v5956
        %5958 = vmatmul.bf16.gmra.mxu0 %v5430
        %v5959 = vpop.f32.mrf.mxu0
        %v5960 = vadd.f32 0.0, %v5959
        %v5961 = vpop.f32.mrf.mxu0
        %v5962 = vadd.f32 0.0, %v5961
        %5963 = vmatmul.bf16.gmra.mxu0 %v5431
        %v5964 = vpop.f32.mrf.mxu0
        %v5965 = vadd.f32 0.0, %v5964
        %v5966 = vpop.f32.mrf.mxu0
        %v5967 = vadd.f32 0.0, %v5966
        %5968 = vmatmul.bf16.gmra.mxu0 %v5868
        %v5969 = vpop.f32.mrf.mxu0
        %v5970 = vadd.f32 0.0, %v5969
        %v5971 = vpop.f32.mrf.mxu0
        %v5972 = vadd.f32 0.0, %v5971
        %5973 = vmatmul.bf16.gmra.mxu0 %v5869
        %v5974 = vpop.f32.mrf.mxu0
        %v5975 = vadd.f32 0.0, %v5974
        %v5976 = vpop.f32.mrf.mxu0
        %v5977 = vadd.f32 0.0, %v5976
        %5978 = vmatmul.bf16.gmra.mxu0 %v5870
        %v5979 = vpop.f32.mrf.mxu0
        %v5980 = vadd.f32 0.0, %v5979
        %v5981 = vpop.f32.mrf.mxu0
        %v5982 = vadd.f32 0.0, %v5981
        %5983 = vmatmul.bf16.gmra.mxu0 %v5871
        %v5984 = vpop.f32.mrf.mxu0
        %v5985 = vadd.f32 0.0, %v5984
        %v5986 = vpop.f32.mrf.mxu0
        %v5987 = vadd.f32 0.0, %v5986
        %5988 = vmatmul.bf16.gmra.mxu0 %v5872
        %v5989 = vpop.f32.mrf.mxu0
        %v5990 = vadd.f32 0.0, %v5989
        %v5991 = vpop.f32.mrf.mxu0
        %v5992 = vadd.f32 0.0, %v5991
        %5993 = vmatmul.bf16.gmra.mxu0 %v5873
        %v5994 = vpop.f32.mrf.mxu0
        %v5995 = vadd.f32 0.0, %v5994
        %v5996 = vpop.f32.mrf.mxu0
        %v5997 = vadd.f32 0.0, %v5996
        %5998 = vmatmul.bf16.gmra.mxu0 %v5874
        %v5999 = vpop.f32.mrf.mxu0
        %v6000 = vadd.f32 0.0, %v5999
        %v6001 = vpop.f32.mrf.mxu0
        %v6002 = vadd.f32 0.0, %v6001
        %6003 = vmatmul.bf16.gmra.mxu0 %v5875
        %v6004 = vpop.f32.mrf.mxu0
        %v6005 = vadd.f32 0.0, %v6004
        %v6006 = vpop.f32.mrf.mxu0
        %v6007 = vadd.f32 0.0, %v6006
        %6008 = vmatmul.bf16.gmra.mxu0 %v5876
        %v6009 = vpop.f32.mrf.mxu0
        %v6010 = vadd.f32 0.0, %v6009
        %v6011 = vpop.f32.mrf.mxu0
        %v6012 = vadd.f32 0.0, %v6011
        %6013 = vmatmul.bf16.gmra.mxu0 %v5877
        %v6014 = vpop.f32.mrf.mxu0
        %v6015 = vadd.f32 0.0, %v6014
        %v6016 = vpop.f32.mrf.mxu0
        %v6017 = vadd.f32 0.0, %v6016
        %6018 = vmatmul.bf16.gmra.mxu0 %v5878
        %v6019 = vpop.f32.mrf.mxu0
        %v6020 = vadd.f32 0.0, %v6019
        %v6021 = vpop.f32.mrf.mxu0
        %v6022 = vadd.f32 0.0, %v6021
        %6023 = vmatmul.bf16.gmra.mxu0 %v5879
        %v6024 = vpop.f32.mrf.mxu0
        %v6025 = vadd.f32 0.0, %v6024
        %v6026 = vpop.f32.mrf.mxu0
        %v6027 = vadd.f32 0.0, %v6026
        %6028 = vdwg.mxu0
        %v6029 = vadd.f32 %v5807, %v5950
        %v6030 = vadd.f32 %v5808, %v5952
        %v6031 = vadd.f32 %v5809, %v5955
        %v6032 = vadd.f32 %v5810, %v5957
        %v6033 = vadd.f32 %v5811, %v5960
        %v6034 = vadd.f32 %v5812, %v5962
        %v6035 = vadd.f32 %v5813, %v5965
        %v6036 = vadd.f32 %v5814, %v5967
        %v6037 = vadd.f32 %v5815, %v5970
        %v6038 = vadd.f32 %v5816, %v5972
        %v6039 = vadd.f32 %v5817, %v5975
        %v6040 = vadd.f32 %v5818, %v5977
        %v6041 = vadd.f32 %v5819, %v5980
        %v6042 = vadd.f32 %v5820, %v5982
        %v6043 = vadd.f32 %v5821, %v5985
        %v6044 = vadd.f32 %v5822, %v5987
        %v6045 = vadd.f32 %v5823, %v5990
        %v6046 = vadd.f32 %v5824, %v5992
        %v6047 = vadd.f32 %v5825, %v5995
        %v6048 = vadd.f32 %v5826, %v5997
        %v6049 = vadd.f32 %v5827, %v6000
        %v6050 = vadd.f32 %v5828, %v6002
        %v6051 = vadd.f32 %v5829, %v6005
        %v6052 = vadd.f32 %v5830, %v6007
        %v6053 = vadd.f32 %v5831, %v6010
        %v6054 = vadd.f32 %v5832, %v6012
        %v6055 = vadd.f32 %v5833, %v6015
        %v6056 = vadd.f32 %v5834, %v6017
        %v6057 = vadd.f32 %v5835, %v6020
        %v6058 = vadd.f32 %v5836, %v6022
        %v6059 = vadd.f32 %v5837, %v6025
        %v6060 = vadd.f32 %v5838, %v6027
        %s6061 = scalar_lea.vmem [#allocation11], 384
        %v6062 = vld [vmem:[%s6061] sm:$0xf]
        %v6063 = vld [vmem:[%s6061 + $0x4] sm:$0xf]
        %v6064 = vld [vmem:[%s6061 + $0x8] sm:$0xf]
        %v6065 = vld [vmem:[%s6061 + $0xc] sm:$0xf]
        %v6066 = vld [vmem:[%s6061 + $0x10] sm:$0xf]
        %v6067 = vld [vmem:[%s6061 + $0x14] sm:$0xf]
        %v6068 = vld [vmem:[%s6061 + $0x18] sm:$0xf]
        %v6069 = vld [vmem:[%s6061 + $0x1c] sm:$0xf]
        %v6070 = vld [vmem:[%s6061 + $0x20] sm:$0xf]
        %v6071 = vld [vmem:[%s6061 + $0x24] sm:$0xf]
        %v6072 = vld [vmem:[%s6061 + $0x28] sm:$0xf]
        %v6073 = vld [vmem:[%s6061 + $0x2c] sm:$0xf]
        %v6074 = vld [vmem:[%s6061 + $0x30] sm:$0xf]
        %v6075 = vld [vmem:[%s6061 + $0x34] sm:$0xf]
        %v6076 = vld [vmem:[%s6061 + $0x38] sm:$0xf]
        %v6077 = vld [vmem:[%s6061 + $0x3c] sm:$0xf]
        %v6086 = vunpack.c.l.b16 %v523
        %v6087 = vunpack.c.l.b16 %v528
        %v6088 = vunpack.c.l.b16 %v533
        %v6089 = vunpack.c.l.b16 %v538
        %v6090 = vunpack.c.l.b16 %v543
        %v6091 = vunpack.c.l.b16 %v544
        %v6092 = vunpack.c.l.b16 %v548
        %v6093 = vunpack.c.l.b16 %v549
        %v6094 = vunpack.c.l.b16 %v553
        %v6095 = vunpack.c.l.b16 %v554
        %v6096 = vunpack.c.l.b16 %v558
        %v6097 = vunpack.c.l.b16 %v559
        %v6098 = vunpack.c.l.b16 %v563
        %v6099 = vunpack.c.l.b16 %v564
        %v6100 = vunpack.c.l.b16 %v568
        %v6101 = vunpack.c.l.b16 %v569
        %v6102 = vunpack.c.l.b16 %v573
        %v6103 = vunpack.c.l.b16 %v574
        %v6104 = vunpack.c.l.b16 %v578
        %v6105 = vunpack.c.l.b16 %v579
        %v6106 = vpack.c.b16 %v2220, %v6086
        %v6107 = vpack.c.b16 %v2222, %v6087
        %v6108 = vpack.c.b16 %v2224, %v6088
        %v6109 = vpack.c.b16 %v2226, %v6089
        %v6110 = vpack.c.b16 %v6091, %v6090
        %v6111 = vpack.c.b16 %v6093, %v6092
        %v6112 = vpack.c.b16 %v6095, %v6094
        %v6113 = vpack.c.b16 %v6097, %v6096
        %v6114 = vpack.c.b16 %v6099, %v6098
        %v6115 = vpack.c.b16 %v6101, %v6100
        %v6116 = vpack.c.b16 %v6103, %v6102
        %v6117 = vpack.c.b16 %v6105, %v6104
        %v6146 = vunpack.c.l.b16 %v6062
        %v6147 = vunpack.c.l.b16 %v6063
        %v6148 = vunpack.c.l.b16 %v6064
        %v6149 = vunpack.c.l.b16 %v6065
        %v6150 = vunpack.c.l.b16 %v6066
        %v6151 = vunpack.c.l.b16 %v6067
        %v6152 = vunpack.c.l.b16 %v6068
        %v6153 = vunpack.c.l.b16 %v6069
        %v6154 = vunpack.c.l.b16 %v6070
        %v6155 = vunpack.c.l.b16 %v6071
        %v6156 = vunpack.c.l.b16 %v6072
        %v6157 = vunpack.c.l.b16 %v6073
        %v6158 = vunpack.c.l.b16 %v6074
        %v6159 = vunpack.c.l.b16 %v6075
        %v6160 = vunpack.c.l.b16 %v6076
        %v6161 = vunpack.c.l.b16 %v6077
        %v6162 = vpack.c.b16 %v6147, %v6146
        %v6163 = vpack.c.b16 %v6149, %v6148
        %v6164 = vpack.c.b16 %v6151, %v6150
        %v6165 = vpack.c.b16 %v6153, %v6152
        %v6166 = vpack.c.b16 %v6155, %v6154
        %v6167 = vpack.c.b16 %v6157, %v6156
        %v6168 = vpack.c.b16 %v6159, %v6158
        %v6169 = vpack.c.b16 %v6161, %v6160
        %6178 = vmatpush.bf16.msra.mxu0 %v6169
        %6179 = vmatpush.bf16.msra.mxu0 %v6168
        %6180 = vmatpush.bf16.msra.mxu0 %v6167
        %6181 = vmatpush.bf16.msra.mxu0 %v6166
        %6182 = vmatpush.bf16.msra.mxu0 %v6165
        %6183 = vmatpush.bf16.msra.mxu0 %v6164
        %6184 = vmatpush.bf16.msra.mxu0 %v6163
        %6185 = vmatpush.bf16.msra.mxu0 %v6162
        %6186 = vmatmul.bf16.gmra.mxu0 %v5654
        %v6187 = vpop.f32.mrf.mxu0
        %v6188 = vadd.f32 0.0, %v6187
        %v6189 = vpop.f32.mrf.mxu0
        %v6190 = vadd.f32 0.0, %v6189
        %6191 = vmatmul.bf16.gmra.mxu0 %v5655
        %v6192 = vpop.f32.mrf.mxu0
        %v6193 = vadd.f32 0.0, %v6192
        %v6194 = vpop.f32.mrf.mxu0
        %v6195 = vadd.f32 0.0, %v6194
        %6196 = vmatmul.bf16.gmra.mxu0 %v5656
        %v6197 = vpop.f32.mrf.mxu0
        %v6198 = vadd.f32 0.0, %v6197
        %v6199 = vpop.f32.mrf.mxu0
        %v6200 = vadd.f32 0.0, %v6199
        %6201 = vmatmul.bf16.gmra.mxu0 %v5657
        %v6202 = vpop.f32.mrf.mxu0
        %v6203 = vadd.f32 0.0, %v6202
        %v6204 = vpop.f32.mrf.mxu0
        %v6205 = vadd.f32 0.0, %v6204
        %6206 = vmatmul.bf16.gmra.mxu0 %v6106
        %v6207 = vpop.f32.mrf.mxu0
        %v6208 = vadd.f32 0.0, %v6207
        %v6209 = vpop.f32.mrf.mxu0
        %v6210 = vadd.f32 0.0, %v6209
        %6211 = vmatmul.bf16.gmra.mxu0 %v6107
        %v6212 = vpop.f32.mrf.mxu0
        %v6213 = vadd.f32 0.0, %v6212
        %v6214 = vpop.f32.mrf.mxu0
        %v6215 = vadd.f32 0.0, %v6214
        %6216 = vmatmul.bf16.gmra.mxu0 %v6108
        %v6217 = vpop.f32.mrf.mxu0
        %v6218 = vadd.f32 0.0, %v6217
        %v6219 = vpop.f32.mrf.mxu0
        %v6220 = vadd.f32 0.0, %v6219
        %6221 = vmatmul.bf16.gmra.mxu0 %v6109
        %v6222 = vpop.f32.mrf.mxu0
        %v6223 = vadd.f32 0.0, %v6222
        %v6224 = vpop.f32.mrf.mxu0
        %v6225 = vadd.f32 0.0, %v6224
        %6226 = vmatmul.bf16.gmra.mxu0 %v6110
        %v6227 = vpop.f32.mrf.mxu0
        %v6228 = vadd.f32 0.0, %v6227
        %v6229 = vpop.f32.mrf.mxu0
        %v6230 = vadd.f32 0.0, %v6229
        %6231 = vmatmul.bf16.gmra.mxu0 %v6111
        %v6232 = vpop.f32.mrf.mxu0
        %v6233 = vadd.f32 0.0, %v6232
        %v6234 = vpop.f32.mrf.mxu0
        %v6235 = vadd.f32 0.0, %v6234
        %6236 = vmatmul.bf16.gmra.mxu0 %v6112
        %v6237 = vpop.f32.mrf.mxu0
        %v6238 = vadd.f32 0.0, %v6237
        %v6239 = vpop.f32.mrf.mxu0
        %v6240 = vadd.f32 0.0, %v6239
        %6241 = vmatmul.bf16.gmra.mxu0 %v6113
        %v6242 = vpop.f32.mrf.mxu0
        %v6243 = vadd.f32 0.0, %v6242
        %v6244 = vpop.f32.mrf.mxu0
        %v6245 = vadd.f32 0.0, %v6244
        %6246 = vmatmul.bf16.gmra.mxu0 %v6114
        %v6247 = vpop.f32.mrf.mxu0
        %v6248 = vadd.f32 0.0, %v6247
        %v6249 = vpop.f32.mrf.mxu0
        %v6250 = vadd.f32 0.0, %v6249
        %6251 = vmatmul.bf16.gmra.mxu0 %v6115
        %v6252 = vpop.f32.mrf.mxu0
        %v6253 = vadd.f32 0.0, %v6252
        %v6254 = vpop.f32.mrf.mxu0
        %v6255 = vadd.f32 0.0, %v6254
        %6256 = vmatmul.bf16.gmra.mxu0 %v6116
        %v6257 = vpop.f32.mrf.mxu0
        %v6258 = vadd.f32 0.0, %v6257
        %v6259 = vpop.f32.mrf.mxu0
        %v6260 = vadd.f32 0.0, %v6259
        %6261 = vmatmul.bf16.gmra.mxu0 %v6117
        %v6262 = vpop.f32.mrf.mxu0
        %v6263 = vadd.f32 0.0, %v6262
        %v6264 = vpop.f32.mrf.mxu0
        %v6265 = vadd.f32 0.0, %v6264
        %6266 = vdwg.mxu0
        %v6267 = vadd.f32 %v6029, %v6188
        %v6268 = vadd.f32 %v6030, %v6190
        %v6269 = vadd.f32 %v6031, %v6193
        %v6270 = vadd.f32 %v6032, %v6195
        %v6271 = vadd.f32 %v6033, %v6198
        %v6272 = vadd.f32 %v6034, %v6200
        %v6273 = vadd.f32 %v6035, %v6203
        %v6274 = vadd.f32 %v6036, %v6205
        %v6275 = vadd.f32 %v6037, %v6208
        %v6276 = vadd.f32 %v6038, %v6210
        %v6277 = vadd.f32 %v6039, %v6213
        %v6278 = vadd.f32 %v6040, %v6215
        %v6279 = vadd.f32 %v6041, %v6218
        %v6280 = vadd.f32 %v6042, %v6220
        %v6281 = vadd.f32 %v6043, %v6223
        %v6282 = vadd.f32 %v6044, %v6225
        %v6283 = vadd.f32 %v6045, %v6228
        %v6284 = vadd.f32 %v6046, %v6230
        %v6285 = vadd.f32 %v6047, %v6233
        %v6286 = vadd.f32 %v6048, %v6235
        %v6287 = vadd.f32 %v6049, %v6238
        %v6288 = vadd.f32 %v6050, %v6240
        %v6289 = vadd.f32 %v6051, %v6243
        %v6290 = vadd.f32 %v6052, %v6245
        %v6291 = vadd.f32 %v6053, %v6248
        %v6292 = vadd.f32 %v6054, %v6250
        %v6293 = vadd.f32 %v6055, %v6253
        %v6294 = vadd.f32 %v6056, %v6255
        %v6295 = vadd.f32 %v6057, %v6258
        %v6296 = vadd.f32 %v6058, %v6260
        %v6297 = vadd.f32 %v6059, %v6263
        %v6298 = vadd.f32 %v6060, %v6265
        %v6307 = vrot.slane %v564, 6
        %v6308 = vrot.slane %v6307, 4
        %v6309 = vrot.slane %v565, 6
        %v6310 = vsel %vm633, %v6308, %v6309
        %v6311 = vrot.slane %v6309, 4
        %v6312 = vrot.slane %v566, 6
        %v6313 = vsel %vm633, %v6311, %v6312
        %v6314 = vrot.slane %v569, 6
        %v6315 = vrot.slane %v6314, 4
        %v6316 = vrot.slane %v570, 6
        %v6317 = vsel %vm633, %v6315, %v6316
        %v6318 = vrot.slane %v6316, 4
        %v6319 = vrot.slane %v571, 6
        %v6320 = vsel %vm633, %v6318, %v6319
        %v6321 = vrot.slane %v574, 6
        %v6322 = vrot.slane %v6321, 4
        %v6323 = vrot.slane %v575, 6
        %v6324 = vsel %vm633, %v6322, %v6323
        %v6325 = vrot.slane %v6323, 4
        %v6326 = vrot.slane %v576, 6
        %v6327 = vsel %vm633, %v6325, %v6326
        %v6328 = vrot.slane %v579, 6
        %v6329 = vrot.slane %v6328, 4
        %v6330 = vrot.slane %v580, 6
        %v6331 = vsel %vm633, %v6329, %v6330
        %v6332 = vrot.slane %v6330, 4
        %v6333 = vrot.slane %v581, 6
        %v6334 = vsel %vm633, %v6332, %v6333
        %s6335 = scalar_lea.vmem [#allocation11], 448
        %v6336 = vld [vmem:[%s6335] sm:$0xf]
        %v6337 = vld [vmem:[%s6335 + $0x4] sm:$0xf]
        %v6338 = vld [vmem:[%s6335 + $0x8] sm:$0xf]
        %v6339 = vld [vmem:[%s6335 + $0xc] sm:$0xf]
        %v6340 = vld [vmem:[%s6335 + $0x10] sm:$0xf]
        %v6341 = vld [vmem:[%s6335 + $0x14] sm:$0xf]
        %v6342 = vld [vmem:[%s6335 + $0x18] sm:$0xf]
        %v6343 = vld [vmem:[%s6335 + $0x1c] sm:$0xf]
        %v6344 = vld [vmem:[%s6335 + $0x20] sm:$0xf]
        %v6345 = vld [vmem:[%s6335 + $0x24] sm:$0xf]
        %v6346 = vld [vmem:[%s6335 + $0x28] sm:$0xf]
        %v6347 = vld [vmem:[%s6335 + $0x2c] sm:$0xf]
        %v6348 = vld [vmem:[%s6335 + $0x30] sm:$0xf]
        %v6349 = vld [vmem:[%s6335 + $0x34] sm:$0xf]
        %v6350 = vld [vmem:[%s6335 + $0x38] sm:$0xf]
        %v6351 = vld [vmem:[%s6335 + $0x3c] sm:$0xf]
        %v6352 = vunpack.c.l.b16 %v6310
        %v6353 = vunpack.c.l.b16 %v6313
        %v6354 = vunpack.c.l.b16 %v6317
        %v6355 = vunpack.c.l.b16 %v6320
        %v6356 = vunpack.c.l.b16 %v6324
        %v6357 = vunpack.c.l.b16 %v6327
        %v6358 = vunpack.c.l.b16 %v6331
        %v6359 = vunpack.c.l.b16 %v6334
        %v6360 = vpack.c.b16 %v6353, %v6352
        %v6361 = vpack.c.b16 %v6355, %v6354
        %v6362 = vpack.c.b16 %v6357, %v6356
        %v6363 = vpack.c.b16 %v6359, %v6358
        %v6384 = vunpack.c.l.b16 %v6336
        %v6385 = vunpack.c.l.b16 %v6337
        %v6386 = vunpack.c.l.b16 %v6338
        %v6387 = vunpack.c.l.b16 %v6339
        %v6388 = vunpack.c.l.b16 %v6340
        %v6389 = vunpack.c.l.b16 %v6341
        %v6390 = vunpack.c.l.b16 %v6342
        %v6391 = vunpack.c.l.b16 %v6343
        %v6392 = vunpack.c.l.b16 %v6344
        %v6393 = vunpack.c.l.b16 %v6345
        %v6394 = vunpack.c.l.b16 %v6346
        %v6395 = vunpack.c.l.b16 %v6347
        %v6396 = vunpack.c.l.b16 %v6348
        %v6397 = vunpack.c.l.b16 %v6349
        %v6398 = vunpack.c.l.b16 %v6350
        %v6399 = vunpack.c.l.b16 %v6351
        %v6400 = vpack.c.b16 %v6385, %v6384
        %v6401 = vpack.c.b16 %v6387, %v6386
        %v6402 = vpack.c.b16 %v6389, %v6388
        %v6403 = vpack.c.b16 %v6391, %v6390
        %v6404 = vpack.c.b16 %v6393, %v6392
        %v6405 = vpack.c.b16 %v6395, %v6394
        %v6406 = vpack.c.b16 %v6397, %v6396
        %v6407 = vpack.c.b16 %v6399, %v6398
        %6416 = vmatpush.bf16.msra.mxu0 %v6407
        %6417 = vmatpush.bf16.msra.mxu0 %v6406
        %6418 = vmatpush.bf16.msra.mxu0 %v6405
        %6419 = vmatpush.bf16.msra.mxu0 %v6404
        %6420 = vmatpush.bf16.msra.mxu0 %v6403
        %6421 = vmatpush.bf16.msra.mxu0 %v6402
        %6422 = vmatpush.bf16.msra.mxu0 %v6401
        %6423 = vmatpush.bf16.msra.mxu0 %v6400
        %6424 = vmatmul.bf16.gmra.mxu0 %v790
        %v6425 = vpop.f32.mrf.mxu0
        %v6426 = vadd.f32 0.0, %v6425
        %v6427 = vpop.f32.mrf.mxu0
        %v6428 = vadd.f32 0.0, %v6427
        %6429 = vmatmul.bf16.gmra.mxu0 %v791
        %v6430 = vpop.f32.mrf.mxu0
        %v6431 = vadd.f32 0.0, %v6430
        %v6432 = vpop.f32.mrf.mxu0
        %v6433 = vadd.f32 0.0, %v6432
        %6434 = vmatmul.bf16.gmra.mxu0 %v792
        %v6435 = vpop.f32.mrf.mxu0
        %v6436 = vadd.f32 0.0, %v6435
        %v6437 = vpop.f32.mrf.mxu0
        %v6438 = vadd.f32 0.0, %v6437
        %6439 = vmatmul.bf16.gmra.mxu0 %v793
        %v6440 = vpop.f32.mrf.mxu0
        %v6441 = vadd.f32 0.0, %v6440
        %v6442 = vpop.f32.mrf.mxu0
        %v6443 = vadd.f32 0.0, %v6442
        %6444 = vmatmul.bf16.gmra.mxu0 %v2462
        %v6445 = vpop.f32.mrf.mxu0
        %v6446 = vadd.f32 0.0, %v6445
        %v6447 = vpop.f32.mrf.mxu0
        %v6448 = vadd.f32 0.0, %v6447
        %6449 = vmatmul.bf16.gmra.mxu0 %v2463
        %v6450 = vpop.f32.mrf.mxu0
        %v6451 = vadd.f32 0.0, %v6450
        %v6452 = vpop.f32.mrf.mxu0
        %v6453 = vadd.f32 0.0, %v6452
        %6454 = vmatmul.bf16.gmra.mxu0 %v2464
        %v6455 = vpop.f32.mrf.mxu0
        %v6456 = vadd.f32 0.0, %v6455
        %v6457 = vpop.f32.mrf.mxu0
        %v6458 = vadd.f32 0.0, %v6457
        %6459 = vmatmul.bf16.gmra.mxu0 %v2465
        %v6460 = vpop.f32.mrf.mxu0
        %v6461 = vadd.f32 0.0, %v6460
        %v6462 = vpop.f32.mrf.mxu0
        %v6463 = vadd.f32 0.0, %v6462
        %6464 = vmatmul.bf16.gmra.mxu0 %v4465
        %v6465 = vpop.f32.mrf.mxu0
        %v6466 = vadd.f32 0.0, %v6465
        %v6467 = vpop.f32.mrf.mxu0
        %v6468 = vadd.f32 0.0, %v6467
        %6469 = vmatmul.bf16.gmra.mxu0 %v4466
        %v6470 = vpop.f32.mrf.mxu0
        %v6471 = vadd.f32 0.0, %v6470
        %v6472 = vpop.f32.mrf.mxu0
        %v6473 = vadd.f32 0.0, %v6472
        %6474 = vmatmul.bf16.gmra.mxu0 %v4467
        %v6475 = vpop.f32.mrf.mxu0
        %v6476 = vadd.f32 0.0, %v6475
        %v6477 = vpop.f32.mrf.mxu0
        %v6478 = vadd.f32 0.0, %v6477
        %6479 = vmatmul.bf16.gmra.mxu0 %v4468
        %v6480 = vpop.f32.mrf.mxu0
        %v6481 = vadd.f32 0.0, %v6480
        %v6482 = vpop.f32.mrf.mxu0
        %v6483 = vadd.f32 0.0, %v6482
        %6484 = vmatmul.bf16.gmra.mxu0 %v6360
        %v6485 = vpop.f32.mrf.mxu0
        %v6486 = vadd.f32 0.0, %v6485
        %v6487 = vpop.f32.mrf.mxu0
        %v6488 = vadd.f32 0.0, %v6487
        %6489 = vmatmul.bf16.gmra.mxu0 %v6361
        %v6490 = vpop.f32.mrf.mxu0
        %v6491 = vadd.f32 0.0, %v6490
        %v6492 = vpop.f32.mrf.mxu0
        %v6493 = vadd.f32 0.0, %v6492
        %6494 = vmatmul.bf16.gmra.mxu0 %v6362
        %v6495 = vpop.f32.mrf.mxu0
        %v6496 = vadd.f32 0.0, %v6495
        %v6497 = vpop.f32.mrf.mxu0
        %v6498 = vadd.f32 0.0, %v6497
        %6499 = vmatmul.bf16.gmra.mxu0 %v6363
        %v6500 = vpop.f32.mrf.mxu0
        %v6501 = vadd.f32 0.0, %v6500
        %v6502 = vpop.f32.mrf.mxu0
        %v6503 = vadd.f32 0.0, %v6502
        %6504 = vdwg.mxu0
        %v6505 = vadd.f32 %v6267, %v6426
        %v6506 = vadd.f32 %v6268, %v6428
        %v6507 = vadd.f32 %v6269, %v6431
        %v6508 = vadd.f32 %v6270, %v6433
        %v6509 = vadd.f32 %v6271, %v6436
        %v6510 = vadd.f32 %v6272, %v6438
        %v6511 = vadd.f32 %v6273, %v6441
        %v6512 = vadd.f32 %v6274, %v6443
        %v6513 = vadd.f32 %v6275, %v6446
        %v6514 = vadd.f32 %v6276, %v6448
        %v6515 = vadd.f32 %v6277, %v6451
        %v6516 = vadd.f32 %v6278, %v6453
        %v6517 = vadd.f32 %v6279, %v6456
        %v6518 = vadd.f32 %v6280, %v6458
        %v6519 = vadd.f32 %v6281, %v6461
        %v6520 = vadd.f32 %v6282, %v6463
        %v6521 = vadd.f32 %v6283, %v6466
        %v6522 = vadd.f32 %v6284, %v6468
        %v6523 = vadd.f32 %v6285, %v6471
        %v6524 = vadd.f32 %v6286, %v6473
        %v6525 = vadd.f32 %v6287, %v6476
        %v6526 = vadd.f32 %v6288, %v6478
        %v6527 = vadd.f32 %v6289, %v6481
        %v6528 = vadd.f32 %v6290, %v6483
        %v6529 = vadd.f32 %v6291, %v6486
        %v6530 = vadd.f32 %v6292, %v6488
        %v6531 = vadd.f32 %v6293, %v6491
        %v6532 = vadd.f32 %v6294, %v6493
        %v6533 = vadd.f32 %v6295, %v6496
        %v6534 = vadd.f32 %v6296, %v6498
        %v6535 = vadd.f32 %v6297, %v6501
        %v6536 = vadd.f32 %v6298, %v6503
        %s6537 = scalar_lea.vmem [#allocation11], 512
        %v6538 = vld [vmem:[%s6537] sm:$0xf]
        %v6539 = vld [vmem:[%s6537 + $0x4] sm:$0xf]
        %v6540 = vld [vmem:[%s6537 + $0x8] sm:$0xf]
        %v6541 = vld [vmem:[%s6537 + $0xc] sm:$0xf]
        %v6542 = vld [vmem:[%s6537 + $0x10] sm:$0xf]
        %v6543 = vld [vmem:[%s6537 + $0x14] sm:$0xf]
        %v6544 = vld [vmem:[%s6537 + $0x18] sm:$0xf]
        %v6545 = vld [vmem:[%s6537 + $0x1c] sm:$0xf]
        %v6546 = vld [vmem:[%s6537 + $0x20] sm:$0xf]
        %v6547 = vld [vmem:[%s6537 + $0x24] sm:$0xf]
        %v6548 = vld [vmem:[%s6537 + $0x28] sm:$0xf]
        %v6549 = vld [vmem:[%s6537 + $0x2c] sm:$0xf]
        %v6550 = vld [vmem:[%s6537 + $0x30] sm:$0xf]
        %v6551 = vld [vmem:[%s6537 + $0x34] sm:$0xf]
        %v6552 = vld [vmem:[%s6537 + $0x38] sm:$0xf]
        %v6553 = vld [vmem:[%s6537 + $0x3c] sm:$0xf]
        %v6558 = vunpack.c.l.b16 %v527
        %v6559 = vunpack.c.l.b16 %v532
        %v6560 = vunpack.c.l.b16 %v537
        %v6561 = vunpack.c.l.b16 %v542
        %v6562 = vunpack.c.l.b16 %v546
        %v6563 = vunpack.c.l.b16 %v547
        %v6564 = vunpack.c.l.b16 %v551
        %v6565 = vunpack.c.l.b16 %v552
        %v6566 = vunpack.c.l.b16 %v556
        %v6567 = vunpack.c.l.b16 %v557
        %v6568 = vunpack.c.l.b16 %v561
        %v6569 = vunpack.c.l.b16 %v562
        %v6570 = vunpack.c.l.b16 %v566
        %v6571 = vunpack.c.l.b16 %v567
        %v6572 = vunpack.c.l.b16 %v571
        %v6573 = vunpack.c.l.b16 %v572
        %v6574 = vunpack.c.l.b16 %v576
        %v6575 = vunpack.c.l.b16 %v577
        %v6576 = vunpack.c.l.b16 %v581
        %v6577 = vunpack.c.l.b16 %v582
        %v6578 = vpack.c.b16 %v6558, %v2656
        %v6579 = vpack.c.b16 %v6559, %v2657
        %v6580 = vpack.c.b16 %v6560, %v2658
        %v6581 = vpack.c.b16 %v6561, %v2659
        %v6582 = vpack.c.b16 %v6563, %v6562
        %v6583 = vpack.c.b16 %v6565, %v6564
        %v6584 = vpack.c.b16 %v6567, %v6566
        %v6585 = vpack.c.b16 %v6569, %v6568
        %v6586 = vpack.c.b16 %v6571, %v6570
        %v6587 = vpack.c.b16 %v6573, %v6572
        %v6588 = vpack.c.b16 %v6575, %v6574
        %v6589 = vpack.c.b16 %v6577, %v6576
        %v6618 = vunpack.c.l.b16 %v6538
        %v6619 = vunpack.c.l.b16 %v6539
        %v6620 = vunpack.c.l.b16 %v6540
        %v6621 = vunpack.c.l.b16 %v6541
        %v6622 = vunpack.c.l.b16 %v6542
        %v6623 = vunpack.c.l.b16 %v6543
        %v6624 = vunpack.c.l.b16 %v6544
        %v6625 = vunpack.c.l.b16 %v6545
        %v6626 = vunpack.c.l.b16 %v6546
        %v6627 = vunpack.c.l.b16 %v6547
        %v6628 = vunpack.c.l.b16 %v6548
        %v6629 = vunpack.c.l.b16 %v6549
        %v6630 = vunpack.c.l.b16 %v6550
        %v6631 = vunpack.c.l.b16 %v6551
        %v6632 = vunpack.c.l.b16 %v6552
        %v6633 = vunpack.c.l.b16 %v6553
        %v6634 = vpack.c.b16 %v6619, %v6618
        %v6635 = vpack.c.b16 %v6621, %v6620
        %v6636 = vpack.c.b16 %v6623, %v6622
        %v6637 = vpack.c.b16 %v6625, %v6624
        %v6638 = vpack.c.b16 %v6627, %v6626
        %v6639 = vpack.c.b16 %v6629, %v6628
        %v6640 = vpack.c.b16 %v6631, %v6630
        %v6641 = vpack.c.b16 %v6633, %v6632
        %6650 = vmatpush.bf16.msra.mxu0 %v6641
        %6651 = vmatpush.bf16.msra.mxu0 %v6640
        %6652 = vmatpush.bf16.msra.mxu0 %v6639
        %6653 = vmatpush.bf16.msra.mxu0 %v6638
        %6654 = vmatpush.bf16.msra.mxu0 %v6637
        %6655 = vmatpush.bf16.msra.mxu0 %v6636
        %6656 = vmatpush.bf16.msra.mxu0 %v6635
        %6657 = vmatpush.bf16.msra.mxu0 %v6634
        %6658 = vmatmul.bf16.gmra.mxu0 %v5876
        %v6659 = vpop.f32.mrf.mxu0
        %v6660 = vadd.f32 0.0, %v6659
        %v6661 = vpop.f32.mrf.mxu0
        %v6662 = vadd.f32 0.0, %v6661
        %6663 = vmatmul.bf16.gmra.mxu0 %v5877
        %v6664 = vpop.f32.mrf.mxu0
        %v6665 = vadd.f32 0.0, %v6664
        %v6666 = vpop.f32.mrf.mxu0
        %v6667 = vadd.f32 0.0, %v6666
        %6668 = vmatmul.bf16.gmra.mxu0 %v5878
        %v6669 = vpop.f32.mrf.mxu0
        %v6670 = vadd.f32 0.0, %v6669
        %v6671 = vpop.f32.mrf.mxu0
        %v6672 = vadd.f32 0.0, %v6671
        %6673 = vmatmul.bf16.gmra.mxu0 %v5879
        %v6674 = vpop.f32.mrf.mxu0
        %v6675 = vadd.f32 0.0, %v6674
        %v6676 = vpop.f32.mrf.mxu0
        %v6677 = vadd.f32 0.0, %v6676
        %6678 = vmatmul.bf16.gmra.mxu0 %v6578
        %v6679 = vpop.f32.mrf.mxu0
        %v6680 = vadd.f32 0.0, %v6679
        %v6681 = vpop.f32.mrf.mxu0
        %v6682 = vadd.f32 0.0, %v6681
        %6683 = vmatmul.bf16.gmra.mxu0 %v6579
        %v6684 = vpop.f32.mrf.mxu0
        %v6685 = vadd.f32 0.0, %v6684
        %v6686 = vpop.f32.mrf.mxu0
        %v6687 = vadd.f32 0.0, %v6686
        %6688 = vmatmul.bf16.gmra.mxu0 %v6580
        %v6689 = vpop.f32.mrf.mxu0
        %v6690 = vadd.f32 0.0, %v6689
        %v6691 = vpop.f32.mrf.mxu0
        %v6692 = vadd.f32 0.0, %v6691
        %6693 = vmatmul.bf16.gmra.mxu0 %v6581
        %v6694 = vpop.f32.mrf.mxu0
        %v6695 = vadd.f32 0.0, %v6694
        %v6696 = vpop.f32.mrf.mxu0
        %v6697 = vadd.f32 0.0, %v6696
        %6698 = vmatmul.bf16.gmra.mxu0 %v6582
        %v6699 = vpop.f32.mrf.mxu0
        %v6700 = vadd.f32 0.0, %v6699
        %v6701 = vpop.f32.mrf.mxu0
        %v6702 = vadd.f32 0.0, %v6701
        %6703 = vmatmul.bf16.gmra.mxu0 %v6583
        %v6704 = vpop.f32.mrf.mxu0
        %v6705 = vadd.f32 0.0, %v6704
        %v6706 = vpop.f32.mrf.mxu0
        %v6707 = vadd.f32 0.0, %v6706
        %6708 = vmatmul.bf16.gmra.mxu0 %v6584
        %v6709 = vpop.f32.mrf.mxu0
        %v6710 = vadd.f32 0.0, %v6709
        %v6711 = vpop.f32.mrf.mxu0
        %v6712 = vadd.f32 0.0, %v6711
        %6713 = vmatmul.bf16.gmra.mxu0 %v6585
        %v6714 = vpop.f32.mrf.mxu0
        %v6715 = vadd.f32 0.0, %v6714
        %v6716 = vpop.f32.mrf.mxu0
        %v6717 = vadd.f32 0.0, %v6716
        %6718 = vmatmul.bf16.gmra.mxu0 %v6586
        %v6719 = vpop.f32.mrf.mxu0
        %v6720 = vadd.f32 0.0, %v6719
        %v6721 = vpop.f32.mrf.mxu0
        %v6722 = vadd.f32 0.0, %v6721
        %6723 = vmatmul.bf16.gmra.mxu0 %v6587
        %v6724 = vpop.f32.mrf.mxu0
        %v6725 = vadd.f32 0.0, %v6724
        %v6726 = vpop.f32.mrf.mxu0
        %v6727 = vadd.f32 0.0, %v6726
        %6728 = vmatmul.bf16.gmra.mxu0 %v6588
        %v6729 = vpop.f32.mrf.mxu0
        %v6730 = vadd.f32 0.0, %v6729
        %v6731 = vpop.f32.mrf.mxu0
        %v6732 = vadd.f32 0.0, %v6731
        %6733 = vmatmul.bf16.gmra.mxu0 %v6589
        %v6734 = vpop.f32.mrf.mxu0
        %v6735 = vadd.f32 0.0, %v6734
        %v6736 = vpop.f32.mrf.mxu0
        %v6737 = vadd.f32 0.0, %v6736
        %6738 = vdwg.mxu0
        %v6739 = vadd.f32 %v6505, %v6660
        %v6740 = vadd.f32 %v6506, %v6662
        %v6741 = vadd.f32 %v6507, %v6665
        %v6742 = vadd.f32 %v6508, %v6667
        %v6743 = vadd.f32 %v6509, %v6670
        %v6744 = vadd.f32 %v6510, %v6672
        %v6745 = vadd.f32 %v6511, %v6675
        %v6746 = vadd.f32 %v6512, %v6677
        %v6747 = vadd.f32 %v6513, %v6680
        %v6748 = vadd.f32 %v6514, %v6682
        %v6749 = vadd.f32 %v6515, %v6685
        %v6750 = vadd.f32 %v6516, %v6687
        %v6751 = vadd.f32 %v6517, %v6690
        %v6752 = vadd.f32 %v6518, %v6692
        %v6753 = vadd.f32 %v6519, %v6695
        %v6754 = vadd.f32 %v6520, %v6697
        %v6755 = vadd.f32 %v6521, %v6700
        %v6756 = vadd.f32 %v6522, %v6702
        %v6757 = vadd.f32 %v6523, %v6705
        %v6758 = vadd.f32 %v6524, %v6707
        %v6759 = vadd.f32 %v6525, %v6710
        %v6760 = vadd.f32 %v6526, %v6712
        %v6761 = vadd.f32 %v6527, %v6715
        %v6762 = vadd.f32 %v6528, %v6717
        %v6763 = vadd.f32 %v6529, %v6720
        %v6764 = vadd.f32 %v6530, %v6722
        %v6765 = vadd.f32 %v6531, %v6725
        %v6766 = vadd.f32 %v6532, %v6727
        %v6767 = vadd.f32 %v6533, %v6730
        %v6768 = vadd.f32 %v6534, %v6732
        %v6769 = vadd.f32 %v6535, %v6735
        %v6770 = vadd.f32 %v6536, %v6737
        %6771 = vst [vmem:[%s381] sm:$0xff] %v6739
        %6772 = vst [vmem:[%s381 + $0x8] sm:$0xff] %v6740
        %6773 = vst [vmem:[%s381 + $0x10] sm:$0xff] %v6741
        %6774 = vst [vmem:[%s381 + $0x18] sm:$0xff] %v6742
        %6775 = vst [vmem:[%s381 + $0x20] sm:$0xff] %v6743
        %6776 = vst [vmem:[%s381 + $0x28] sm:$0xff] %v6744
        %6777 = vst [vmem:[%s381 + $0x30] sm:$0xff] %v6745
        %6778 = vst [vmem:[%s381 + $0x38] sm:$0xff] %v6746
        %6779 = vst [vmem:[%s381 + $0x40] sm:$0xff] %v6747
        %6780 = vst [vmem:[%s381 + $0x48] sm:$0xff] %v6748
        %6781 = vst [vmem:[%s381 + $0x50] sm:$0xff] %v6749
        %6782 = vst [vmem:[%s381 + $0x58] sm:$0xff] %v6750
        %6783 = vst [vmem:[%s381 + $0x60] sm:$0xff] %v6751
        %6784 = vst [vmem:[%s381 + $0x68] sm:$0xff] %v6752
        %6785 = vst [vmem:[%s381 + $0x70] sm:$0xff] %v6753
        %6786 = vst [vmem:[%s381 + $0x78] sm:$0xff] %v6754
        %6787 = vst [vmem:[%s381 + $0x80] sm:$0xff] %v6755
        %6788 = vst [vmem:[%s381 + $0x88] sm:$0xff] %v6756
        %6789 = vst [vmem:[%s381 + $0x90] sm:$0xff] %v6757
        %6790 = vst [vmem:[%s381 + $0x98] sm:$0xff] %v6758
        %6791 = vst [vmem:[%s381 + $0xa0] sm:$0xff] %v6759
        %6792 = vst [vmem:[%s381 + $0xa8] sm:$0xff] %v6760
        %6793 = vst [vmem:[%s381 + $0xb0] sm:$0xff] %v6761
        %6794 = vst [vmem:[%s381 + $0xb8] sm:$0xff] %v6762
        %6795 = vst [vmem:[%s381 + $0xc0] sm:$0xff] %v6763
        %6796 = vst [vmem:[%s381 + $0xc8] sm:$0xff] %v6764
        %6797 = vst [vmem:[%s381 + $0xd0] sm:$0xff] %v6765
        %6798 = vst [vmem:[%s381 + $0xd8] sm:$0xff] %v6766
        %6799 = vst [vmem:[%s381 + $0xe0] sm:$0xff] %v6767
        %6800 = vst [vmem:[%s381 + $0xe8] sm:$0xff] %v6768
        %6801 = vst [vmem:[%s381 + $0xf0] sm:$0xff] %v6769
        %6802 = vst [vmem:[%s381 + $0xf8] sm:$0xff] %v6770
        %s6803 = sand.u32 %s187, 1
        %s6804 = scalar_lea.sflag [#allocation4], %s6803
        %s6805 = sand.u32 %s187, 1
        %s6806 = smul.addr %s6805, 256
        %s6807 = scalar_lea.vmem [#allocation13], %s6806
        // Predicated region
        $region73: #{tpu_custom_call.1} parent=47 // pred_check
          %p6808 = pneg %p197
        $region74: #{tpu_custom_call.1} parent=47 // pred_check_branch
          %6810 = sbr.rel (%p6808) target = $region76
        $region75: #{tpu_custom_call.1} parent=47 // pred_region
          %6812 = vsyncadd %s6804, 0
          %s6813 = smul.addr %s27, 32
          %s6814 = smul.addr %s6813, 8
          %s6815 = scalar_lea.hbm %s7, %s6814
          %s6816 = sshll.u32 %s6807, 4
          %s6817 = int_to_ptr.vmem [resolvable:$true] %s6816
          %s6818 = sshll.u32 %s6815, 4
          %s6819 = int_to_ptr.hbm [resolvable:$true] %s6818
          %6824 = dma.vmem_to_hbm [thread:$0]  %s6817, 4096, %s6819, %s6804, 128, 128, 8
        $region76: #{tpu_custom_call.1} parent=47 // pred_fallthru
          _
      $region48: #{tpu_custom_call.1} parent=5 // pred_fallthru
        _
      %p6825 = scmp.le.s32.totalorder 2, %s22
      // Predicated region
      $region77: #{tpu_custom_call.1} parent=5 // pred_check
        %p6826 = pneg %p6825
      $region78: #{tpu_custom_call.1} parent=5 // pred_check_branch
        %6828 = sbr.rel (%p6826) target = $region80
      $region79: #{tpu_custom_call.1} parent=5 // pred_region
        %s6829 = ssub.s32 %s22, 2
        // Predicated region
        $region81: #{tpu_custom_call.1} parent=79 // pred_check
          %p6830 = pneg %p203
        $region82: #{tpu_custom_call.1} parent=79 // pred_check_branch
          %6832 = sbr.rel (%p6830) target = $region84
        $region83: #{tpu_custom_call.1} parent=79 // pred_region
          %s6833 = sand.u32 %s188, 1
          %s6834 = scalar_lea.sflag [#allocation4], %s6833
          %s6835 = sand.u32 %s188, 1
          %s6836 = smul.addr %s6835, 256
          %s6837 = scalar_lea.vmem [#allocation13], %s6836
          %6839 = dma.done %s6834, 4096
        $region84: #{tpu_custom_call.1} parent=79 // pred_fallthru
          _
      $region80: #{tpu_custom_call.1} parent=5 // pred_fallthru
        _
    $region6: #{tpu_custom_call.1} parent=1 // loop_footer
      %s26 = sadd.s32 1, %s22
    $region7: #{tpu_custom_call.1} parent=1 // loop_footer_branch
      %21 = sbr.rel target = $region3
    $region8: #{tpu_custom_call.1} parent=1 // loop_exit
      _
    %6840 = vsyncpa [#allocation3], 1
    %s6841 = scalar_lea.sflag [#allocation3], 1
    %6842 = vsyncpa %s6841, 1
    %6843 = vsyncpa [#allocation6], 1
    %6844 = vsyncpa [#allocation9], 1
    %6845 = vsyncpa [#allocation12], 1
    %6846 = vsyncpa [#allocation4], 1
    %s6847 = scalar_lea.sflag [#allocation4], 1
    %6848 = vsyncpa %s6847, 1

</llo_original>
